<compile_context>
chip_gen: v6e
topology: v6e:2x2x1
jax: 0.10.0
libtpu: 0.0.40
codegen_flags: <defaults>
</compile_context>

<pallas_src>
import functools

import jax
import jax.numpy as jnp
from jax.experimental import pallas as pl
from jax.experimental.pallas import tpu as pltpu


def _rcab_kernel(patch1_ref, xskip_ref, w1_ref, b1_ref, alpha_ref,
                 w2_ref, b2_ref, wd1_ref, bd1_ref, wd2_ref, bd2_ref,
                 mask_ref, maskp_ref, out_ref, t_scr_ref, *, H, W):
    # patch1 : (1, M, 9*Cp) mxu dtype -- conv1 im2col patches (padded-width rows)
    # xskip  : (1, M, Cp)  f32        -- skip-connection pixels
    # w1     : (9*Cp, Cp) block-diag K-packed conv1 weights (mxu dtype)
    # w2     : (9, Cp, Cp) block-diag conv2 taps (mxu dtype)
    # b1/b2  : (1, Cp) f32; alpha (1,) f32 in SMEM (nn.PReLU() default: 1 slope)
    # wd1    : (Cp, G*Cr), bd1 (1, G*Cr), wd2 (G*Cr, Cp), bd2 (1, Cp) -- CA (f32)
    # mask   : (M, 1) f32 column-validity mask; maskp = mask / (H*W)
    # out    : (1, M, Cp) f32 padded-width output (wrapper drops pad columns)
    # t_scr  : (Lp2, Cp) mxu dtype scratch = conv2's zero-padded input
    Cp = out_ref.shape[2]
    W2 = W + 2
    M = H * W2
    Lp2 = t_scr_ref.shape[0]

    # Zero the head/tail halo rows of the conv2 scratch only once: the scratch
    # persists across grid steps and these rows are never overwritten.  The
    # masked garbage columns of the staged activation supply the left/right
    # zero padding for conv2.
    @pl.when(pl.program_id(0) == 0)
    def _():
        t_scr_ref[pl.ds(0, W2 + 1), :] = jnp.zeros((W2 + 1, Cp), t_scr_ref.dtype)
        tail = Lp2 - M - W2 - 1
        t_scr_ref[pl.ds(M + W2 + 1, tail), :] = jnp.zeros((tail, Cp),
                                                          t_scr_ref.dtype)

    mask = mask_ref[...]                                   # (M, 1)

    # ---- conv1: single K-packed MXU matmul (K = 9*Cp), f32 accumulation ----
    acc1 = jnp.dot(patch1_ref[0], w1_ref[...],
                   preferred_element_type=jnp.float32) + b1_ref[...]

    # ---- PReLU (single shared slope) + padded-width column masking ----
    alpha = alpha_ref[0]
    t = jnp.where(acc1 > 0, acc1, alpha * acc1) * mask

    # ---- stage conv1 activation as conv2's zero-padded input (single cast) ----
    t_scr_ref[pl.ds(W2 + 1, M), :] = t.astype(t_scr_ref.dtype)

    # ---- conv2: 9 per-tap matmuls from the bf16 scratch (block-diag taps) ----
    acc2 = jnp.zeros((M, Cp), jnp.float32)
    for kh in range(3):
        for kw in range(3):
            off = kh * W2 + kw                              # static flat offset
            acc2 = acc2 + jnp.dot(t_scr_ref[pl.ds(off, M), :],
                                  w2_ref[kh * 3 + kw],
                                  preferred_element_type=jnp.float32)
    acc2 = acc2 + b2_ref[...]

    # ---- channel attention: masked mean pool -> 1x1 -> ReLU -> 1x1 -> sigmoid
    pooled = jnp.sum(acc2 * maskp_ref[...], axis=0, keepdims=True)      # (1, Cp)
    y1 = jnp.maximum(jnp.dot(pooled, wd1_ref[...],
                             preferred_element_type=jnp.float32) + bd1_ref[...],
                     0.0)
    y2 = jax.nn.sigmoid(jnp.dot(y1, wd2_ref[...],
                                preferred_element_type=jnp.float32) + bd2_ref[...])

    # ---- skip add (f32).  Garbage columns (w >= W) are junk; wrapper drops them.
    out_ref[...] = (xskip_ref[0] + acc2 * y2)[None].astype(out_ref.dtype)


def residual_ca_block(x_nchw, params, *, use_bf16=True, group=4):
    """params = (w1, b1, alpha, w2, b2, wd1, bd1, wd2, bd2); 3x3 weights HWIO."""
    w1, b1, alpha, w2, b2, wd1, bd1, wd2, bd2 = params
    N, C, H, W = x_nchw.shape
    Cr = wd1.shape[1]
    G = group
    mxu_dtype = jnp.bfloat16 if use_bf16 else jnp.float32

    # Pad batch to a multiple of the lane-packing group size.
    Np = ((N + G - 1) // G) * G
    if Np != N:
        x_nchw = jnp.pad(x_nchw, ((0, Np - N), (0, 0), (0, 0), (0, 0)))
    NG = Np // G
    Cp = G * C                      # packed lane width (128 for C=32, G=4)
    W2 = W + 2
    M = H * W2                      # padded-width output rows
    Lp = (H + 3) * W2               # flattened padded input rows
    Lp2 = (H + 3) * W2              # conv2 scratch rows

    # NCHW -> NHWC f32, pack G images into the lane axis: (NG, H, W, G*C).
    x = jnp.transpose(x_nchw, (0, 2, 3, 1)).astype(jnp.float32)
    xg = x.reshape(NG, G, H, W, C).transpose(0, 2, 3, 1, 4).reshape(NG, H, W, Cp)
    # Zero pad (top=1, bottom=2 halo, left=1, right=1) and flatten padded-width.
    xp = jnp.pad(xg, ((0, 0), (1, 2), (1, 1), (0, 0)))      # (NG, H+3, W2, Cp)
    xflat = xp.reshape(NG, Lp, Cp)

    # Wrapper-side im2col for conv1 (lane order: tap-major, then [image, ch]).
    offs = [kh * W2 + kw for kh in range(3) for kw in range(3)]
    patch1 = jnp.stack([xflat[:, o:o + M, :] for o in offs], axis=2)
    patch1 = patch1.reshape(NG, M, 9 * Cp).astype(mxu_dtype)

    # f32 skip slice (interior pixels of the padded input).
    xskip = xflat[:, W2 + 1:W2 + 1 + M, :]

    eye = jnp.eye(G, dtype=jnp.float32)

    def blockdiag_taps(w):          # (3,3,C,C) HWIO -> (9, Cp, Cp) block-diag
        wt = w.reshape(9, C, C).astype(jnp.float32)
        return jnp.einsum('kab,gh->kgahb', wt, eye).reshape(9, Cp, Cp)

    w1_blk = blockdiag_taps(w1).reshape(9 * Cp, Cp).astype(mxu_dtype)
    w2_blk = blockdiag_taps(w2).astype(mxu_dtype)
    b1_blk = jnp.tile(b1.reshape(1, C).astype(jnp.float32), (1, G))
    b2_blk = jnp.tile(b2.reshape(1, C).astype(jnp.float32), (1, G))
    wd1_blk = jnp.einsum('ab,gh->gahb', wd1.astype(jnp.float32),
                         eye).reshape(Cp, G * Cr)
    wd2_blk = jnp.einsum('ab,gh->gahb', wd2.astype(jnp.float32),
                         eye).reshape(G * Cr, Cp)
    bd1_blk = jnp.tile(bd1.reshape(1, Cr).astype(jnp.float32), (1, G))
    bd2_blk = jnp.tile(bd2.reshape(1, C).astype(jnp.float32), (1, G))
    alpha_k = jnp.reshape(alpha, (1,)).astype(jnp.float32)

    # Column-validity mask (1 for w < W) and pooling mask with 1/(H*W) folded in.
    col = jnp.arange(M, dtype=jnp.int32) % W2
    mask = (col < W).astype(jnp.float32).reshape(M, 1)
    maskp = mask * (1.0 / (H * W))

    kernel = functools.partial(_rcab_kernel, H=H, W=W)

    def const_spec(shape):
        nd = len(shape)
        return pl.BlockSpec(shape, lambda n, _nd=nd: (0,) * _nd)

    out_flat = pl.pallas_call(
        kernel,
        out_shape=jax.ShapeDtypeStruct((NG, M, Cp), jnp.float32),
        grid=(NG,),
        in_specs=[
            pl.BlockSpec((1, M, 9 * Cp), lambda n: (n, 0, 0)),    # conv1 im2col
            pl.BlockSpec((1, M, Cp), lambda n: (n, 0, 0)),        # f32 skip
            const_spec((9 * Cp, Cp)),                             # w1 (K-packed)
            const_spec((1, Cp)),                                  # b1
            pl.BlockSpec(memory_space=pltpu.MemorySpace.SMEM),    # alpha
            const_spec((9, Cp, Cp)),                              # w2 taps
            const_spec((1, Cp)),                                  # b2
            const_spec((Cp, G * Cr)),                             # wd1
            const_spec((1, G * Cr)),                              # bd1
            const_spec((G * Cr, Cp)),                             # wd2
            const_spec((1, Cp)),                                  # bd2
            const_spec((M, 1)),                                   # column mask
            const_spec((M, 1)),                                   # pooling mask
        ],
        out_specs=pl.BlockSpec((1, M, Cp), lambda n: (n, 0, 0)),
        scratch_shapes=[pltpu.VMEM((Lp2, Cp), mxu_dtype)],
        compiler_params=pltpu.CompilerParams(
            dimension_semantics=("parallel",)),
    )(patch1, xskip, w1_blk, b1_blk, alpha_k, w2_blk, b2_blk,
      wd1_blk, bd1_blk, wd2_blk, bd2_blk, mask, maskp)

    # Drop the padded-width garbage columns, unpack lanes back to batch, NCHW.
    out = out_flat.reshape(NG, H, W2, G, C)[:, :, :W, :, :]
    out = jnp.transpose(out, (0, 3, 4, 1, 2)).reshape(Np, C, H, W)
    return out[:N]


def _reference(x_nchw, params):
    """Pure-JAX reference (NHWC convs) matching the PyTorch forward."""
    w1, b1, alpha, w2, b2, wd1, bd1, wd2, bd2 = params
    x = jnp.transpose(x_nchw, (0, 2, 3, 1)).astype(jnp.float32)
    dn = ('NHWC', 'HWIO', 'NHWC')

    def conv3(v, w, b):
        return jax.lax.conv_general_dilated(v, w, (1, 1), 'SAME',
                                            dimension_numbers=dn) + b

    t = conv3(x, w1, b1)
    t = jnp.where(t > 0, t, alpha * t)            # PReLU
    r = conv3(t, w2, b2)
    pooled = jnp.mean(r, axis=(1, 2), keepdims=True)
    y = jax.nn.relu(jnp.einsum('nhwc,cd->nhwd', pooled, wd1) + bd1)
    y = jax.nn.sigmoid(jnp.einsum('nhwc,cd->nhwd', y, wd2) + bd2)
    out = x + r * y
    return jnp.transpose(out, (0, 3, 1, 2))


if __name__ == "__main__":
    # Small but valid config: reduction=16 requires channels >= 16.
    # N=6 exercises both a multi-step grid (2 packed groups) and batch padding.
    N, C, H, W = 6, 32, 16, 16
    reduction = 16
    Cr = C // reduction

    key = jax.random.PRNGKey(0)
    ks = jax.random.split(key, 9)
    w1 = jax.random.normal(ks[0], (3, 3, C, C), jnp.float32) * 0.05
    b1 = jax.random.normal(ks[1], (C,), jnp.float32) * 0.05
    alpha = jnp.float32(0.25)                      # nn.PReLU() default init
    w2 = jax.random.normal(ks[2], (3, 3, C, C), jnp.float32) * 0.05
    b2 = jax.random.normal(ks[3], (C,), jnp.float32) * 0.05
    wd1 = jax.random.normal(ks[4], (C, Cr), jnp.float32) * 0.1
    bd1 = jax.random.normal(ks[5], (Cr,), jnp.float32) * 0.1
    wd2 = jax.random.normal(ks[6], (Cr, C), jnp.float32) * 0.1
    bd2 = jax.random.normal(ks[7], (C,), jnp.float32) * 0.1
    params = (w1, b1, alpha, w2, b2, wd1, bd1, wd2, bd2)

    x = jax.random.normal(ks[8], (N, C, H, W), jnp.float32)
    ref = _reference(x, params)

    # Exact-precision path (f32 MXU operands): tight tolerance.
    out_f32 = jax.block_until_ready(residual_ca_block(x, params, use_bf16=False))
    assert out_f32.shape == (N, C, H, W), out_f32.shape
    err32 = float(jnp.max(jnp.abs(out_f32 - ref)))
    assert jnp.allclose(out_f32, ref, atol=1e-4, rtol=1e-4), f"f32 max abs err {err32}"

    # Fast path (bf16 MXU operands, f32 accumulation + f32 elementwise).
    out_bf16 = jax.block_until_ready(residual_ca_block(x, params, use_bf16=True))
    errbf = float(jnp.max(jnp.abs(out_bf16 - ref)))
    assert jnp.allclose(out_bf16, ref, atol=5e-2, rtol=5e-2), f"bf16 max abs err {errbf}"

    print("KERNEL_OK")
</pallas_src>

<mosaic_0001>
module attributes {stable_mosaic.version = 11 : i64} {
  func.func @_rcab_kernel(%arg0: i32, %arg1: memref<1x288x1152xf32, #tpu.memory_space<vmem>>, %arg2: memref<1x288x128xf32, #tpu.memory_space<vmem>>, %arg3: memref<1152x128xf32, #tpu.memory_space<vmem>>, %arg4: memref<1x128xf32, #tpu.memory_space<vmem>>, %arg5: memref<1xf32, #tpu.memory_space<smem>>, %arg6: memref<9x128x128xf32, #tpu.memory_space<vmem>>, %arg7: memref<1x128xf32, #tpu.memory_space<vmem>>, %arg8: memref<128x8xf32, #tpu.memory_space<vmem>>, %arg9: memref<1x8xf32, #tpu.memory_space<vmem>>, %arg10: memref<8x128xf32, #tpu.memory_space<vmem>>, %arg11: memref<1x128xf32, #tpu.memory_space<vmem>>, %arg12: memref<288x1xf32, #tpu.memory_space<vmem>>, %arg13: memref<288x1xf32, #tpu.memory_space<vmem>>, %arg14: memref<1x288x128xf32, #tpu.memory_space<vmem>>, %arg15: memref<342x128xf32, #tpu.memory_space<vmem>>) attributes {dimension_semantics = [#tpu.dimension_semantics<parallel>], iteration_bounds = array<i64: 2>, scalar_prefetch = 0 : i64, scratch_operands = 1 : i64, tpu.core_type = #tpu.core_type<tc>, window_params = [{transform_indices = @transform_0, window_bounds = array<i64: 1, 288, 1152>}, {transform_indices = @transform_1, window_bounds = array<i64: 1, 288, 128>}, {pipeline_mode = #tpu.pipeline_mode<synchronous>, transform_indices = @transform_2, window_bounds = array<i64: 1152, 128>}, {pipeline_mode = #tpu.pipeline_mode<synchronous>, transform_indices = @transform_3, window_bounds = array<i64: 1, 128>}, {transform_indices = @transform_4, window_bounds = array<i64: 1>}, {pipeline_mode = #tpu.pipeline_mode<synchronous>, transform_indices = @transform_5, window_bounds = array<i64: 9, 128, 128>}, {pipeline_mode = #tpu.pipeline_mode<synchronous>, transform_indices = @transform_6, window_bounds = array<i64: 1, 128>}, {pipeline_mode = #tpu.pipeline_mode<synchronous>, transform_indices = @transform_7, window_bounds = array<i64: 128, 8>}, {pipeline_mode = #tpu.pipeline_mode<synchronous>, transform_indices = @transform_8, window_bounds = array<i64: 1, 8>}, {pipeline_mode = #tpu.pipeline_mode<synchronous>, transform_indices = @transform_9, window_bounds = array<i64: 8, 128>}, {pipeline_mode = #tpu.pipeline_mode<synchronous>, transform_indices = @transform_10, window_bounds = array<i64: 1, 128>}, {pipeline_mode = #tpu.pipeline_mode<synchronous>, transform_indices = @transform_11, window_bounds = array<i64: 288, 1>}, {pipeline_mode = #tpu.pipeline_mode<synchronous>, transform_indices = @transform_12, window_bounds = array<i64: 288, 1>}, {transform_indices = @transform_13, window_bounds = array<i64: 1, 288, 128>}]} {
    %c0_i32 = arith.constant 0 : i32
    %0 = arith.cmpi eq, %arg0, %c0_i32 : i32
    %1 = arith.extui %0 : i1 to i32
    %c0_i32_0 = arith.constant 0 : i32
    %2 = arith.cmpi ne, %1, %c0_i32_0 : i32
    scf.if %2 {
      %cst_77 = arith.constant 0.000000e+00 : f32
      %96 = vector.broadcast %cst_77 : f32 to vector<19x128xf32>
      %c0_78 = arith.constant 0 : index
      %c0_79 = arith.constant 0 : index
      %97 = vector.load %arg15[%c0_78, %c0_79] : memref<342x128xf32, #tpu.memory_space<vmem>>, vector<19x128xf32>
      tpu.vector_store %arg15[%c0_78, %c0_79], %96 {strides = array<i32>} : memref<342x128xf32, #tpu.memory_space<vmem>>, vector<19x128xf32>,
      %cst_80 = arith.constant 0.000000e+00 : f32
      %98 = vector.broadcast %cst_80 : f32 to vector<35x128xf32>
      %c307 = arith.constant 307 : index
      %c0_81 = arith.constant 0 : index
      %99 = vector.load %arg15[%c307, %c0_81] : memref<342x128xf32, #tpu.memory_space<vmem>>, vector<35x128xf32>
      tpu.vector_store %arg15[%c307, %c0_81], %98 {strides = array<i32>} : memref<342x128xf32, #tpu.memory_space<vmem>>, vector<35x128xf32>,
    } else {
    }
    %c0 = arith.constant 0 : index
    %c0_1 = arith.constant 0 : index
    %3 = vector.load %arg12[%c0, %c0_1] : memref<288x1xf32, #tpu.memory_space<vmem>>, vector<288x1xf32>
    %c0_2 = arith.constant 0 : index
    %c0_3 = arith.constant 0 : index
    %c0_4 = arith.constant 0 : index
    %4 = vector.load %arg1[%c0_2, %c0_3, %c0_4] : memref<1x288x1152xf32, #tpu.memory_space<vmem>>, vector<1x288x1152xf32>
    %5 = vector.shape_cast %4 : vector<1x288x1152xf32> to vector<288x1152xf32>
    %c0_5 = arith.constant 0 : index
    %c0_6 = arith.constant 0 : index
    %6 = vector.load %arg3[%c0_5, %c0_6] : memref<1152x128xf32, #tpu.memory_space<vmem>>, vector<1152x128xf32>
    %cst = arith.constant dense<0.000000e+00> : vector<288x128xf32>
    %7 = tpu.matmul %5, %6, %cst {dimension_numbers = #tpu.dot_dimension_numbers<[1], [0], [0], [1], [0, 0, 1, 1], [], []>} : vector<288x1152xf32>, vector<1152x128xf32>, vector<288x128xf32> -> vector<288x128xf32>
    %c0_7 = arith.constant 0 : index
    %c0_8 = arith.constant 0 : index
    %8 = vector.load %arg4[%c0_7, %c0_8] : memref<1x128xf32, #tpu.memory_space<vmem>>, vector<1x128xf32>
    %9 = vector.broadcast %8 : vector<1x128xf32> to vector<288x128xf32>
    %10 = arith.addf %7, %9 : vector<288x128xf32>
    %c0_9 = arith.constant 0 : index
    %11 = memref.load %arg5[%c0_9] : memref<1xf32, #tpu.memory_space<smem>>
    %cst_10 = arith.constant 0.000000e+00 : f32
    %12 = vector.broadcast %cst_10 : f32 to vector<288x128xf32>
    %13 = arith.cmpf ogt, %10, %12 : vector<288x128xf32>
    %14 = vector.broadcast %11 : f32 to vector<288x128xf32>
    %15 = arith.mulf %14, %10 : vector<288x128xf32>
    %16 = arith.select %13, %10, %15 : vector<288x128xi1>, vector<288x128xf32>
    %17 = vector.broadcast %3 : vector<288x1xf32> to vector<288x128xf32>
    %18 = arith.mulf %16, %17 : vector<288x128xf32>
    %c19 = arith.constant 19 : index
    %c0_11 = arith.constant 0 : index
    %19 = vector.load %arg15[%c19, %c0_11] : memref<342x128xf32, #tpu.memory_space<vmem>>, vector<288x128xf32>
    tpu.vector_store %arg15[%c19, %c0_11], %18 {strides = array<i32>} : memref<342x128xf32, #tpu.memory_space<vmem>>, vector<288x128xf32>,
    %cst_12 = arith.constant 0.000000e+00 : f32
    %20 = vector.broadcast %cst_12 : f32 to vector<288x128xf32>
    %c0_13 = arith.constant 0 : index
    %c0_14 = arith.constant 0 : index
    %21 = vector.load %arg15[%c0_13, %c0_14] : memref<342x128xf32, #tpu.memory_space<vmem>>, vector<288x128xf32>
    %c0_15 = arith.constant 0 : index
    %c0_16 = arith.constant 0 : index
    %c0_17 = arith.constant 0 : index
    %22 = vector.load %arg6[%c0_15, %c0_16, %c0_17] : memref<9x128x128xf32, #tpu.memory_space<vmem>>, vector<1x128x128xf32>
    %23 = vector.shape_cast %22 : vector<1x128x128xf32> to vector<128x128xf32>
    %cst_18 = arith.constant dense<0.000000e+00> : vector<288x128xf32>
    %24 = tpu.matmul %21, %23, %cst_18 {dimension_numbers = #tpu.dot_dimension_numbers<[1], [0], [0], [1], [0, 0, 1, 1], [], []>} : vector<288x128xf32>, vector<128x128xf32>, vector<288x128xf32> -> vector<288x128xf32>
    %25 = arith.addf %20, %24 : vector<288x128xf32>
    %c1 = arith.constant 1 : index
    %c0_19 = arith.constant 0 : index
    %26 = vector.load %arg15[%c1, %c0_19] : memref<342x128xf32, #tpu.memory_space<vmem>>, vector<288x128xf32>
    %c1_20 = arith.constant 1 : index
    %c0_21 = arith.constant 0 : index
    %c0_22 = arith.constant 0 : index
    %27 = vector.load %arg6[%c1_20, %c0_21, %c0_22] : memref<9x128x128xf32, #tpu.memory_space<vmem>>, vector<1x128x128xf32>
    %28 = vector.shape_cast %27 : vector<1x128x128xf32> to vector<128x128xf32>
    %cst_23 = arith.constant dense<0.000000e+00> : vector<288x128xf32>
    %29 = tpu.matmul %26, %28, %cst_23 {dimension_numbers = #tpu.dot_dimension_numbers<[1], [0], [0], [1], [0, 0, 1, 1], [], []>} : vector<288x128xf32>, vector<128x128xf32>, vector<288x128xf32> -> vector<288x128xf32>
    %30 = arith.addf %25, %29 : vector<288x128xf32>
    %c2 = arith.constant 2 : index
    %c0_24 = arith.constant 0 : index
    %31 = vector.load %arg15[%c2, %c0_24] : memref<342x128xf32, #tpu.memory_space<vmem>>, vector<288x128xf32>
    %c2_25 = arith.constant 2 : index
    %c0_26 = arith.constant 0 : index
    %c0_27 = arith.constant 0 : index
    %32 = vector.load %arg6[%c2_25, %c0_26, %c0_27] : memref<9x128x128xf32, #tpu.memory_space<vmem>>, vector<1x128x128xf32>
    %33 = vector.shape_cast %32 : vector<1x128x128xf32> to vector<128x128xf32>
    %cst_28 = arith.constant dense<0.000000e+00> : vector<288x128xf32>
    %34 = tpu.matmul %31, %33, %cst_28 {dimension_numbers = #tpu.dot_dimension_numbers<[1], [0], [0], [1], [0, 0, 1, 1], [], []>} : vector<288x128xf32>, vector<128x128xf32>, vector<288x128xf32> -> vector<288x128xf32>
    %35 = arith.addf %30, %34 : vector<288x128xf32>
    %c18 = arith.constant 18 : index
    %c0_29 = arith.constant 0 : index
    %36 = vector.load %arg15[%c18, %c0_29] : memref<342x128xf32, #tpu.memory_space<vmem>>, vector<288x128xf32>
    %c3 = arith.constant 3 : index
    %c0_30 = arith.constant 0 : index
    %c0_31 = arith.constant 0 : index
    %37 = vector.load %arg6[%c3, %c0_30, %c0_31] : memref<9x128x128xf32, #tpu.memory_space<vmem>>, vector<1x128x128xf32>
    %38 = vector.shape_cast %37 : vector<1x128x128xf32> to vector<128x128xf32>
    %cst_32 = arith.constant dense<0.000000e+00> : vector<288x128xf32>
    %39 = tpu.matmul %36, %38, %cst_32 {dimension_numbers = #tpu.dot_dimension_numbers<[1], [0], [0], [1], [0, 0, 1, 1], [], []>} : vector<288x128xf32>, vector<128x128xf32>, vector<288x128xf32> -> vector<288x128xf32>
    %40 = arith.addf %35, %39 : vector<288x128xf32>
    %c19_33 = arith.constant 19 : index
    %c0_34 = arith.constant 0 : index
    %41 = vector.load %arg15[%c19_33, %c0_34] : memref<342x128xf32, #tpu.memory_space<vmem>>, vector<288x128xf32>
    %c4 = arith.constant 4 : index
    %c0_35 = arith.constant 0 : index
    %c0_36 = arith.constant 0 : index
    %42 = vector.load %arg6[%c4, %c0_35, %c0_36] : memref<9x128x128xf32, #tpu.memory_space<vmem>>, vector<1x128x128xf32>
    %43 = vector.shape_cast %42 : vector<1x128x128xf32> to vector<128x128xf32>
    %cst_37 = arith.constant dense<0.000000e+00> : vector<288x128xf32>
    %44 = tpu.matmul %41, %43, %cst_37 {dimension_numbers = #tpu.dot_dimension_numbers<[1], [0], [0], [1], [0, 0, 1, 1], [], []>} : vector<288x128xf32>, vector<128x128xf32>, vector<288x128xf32> -> vector<288x128xf32>
    %45 = arith.addf %40, %44 : vector<288x128xf32>
    %c20 = arith.constant 20 : index
    %c0_38 = arith.constant 0 : index
    %46 = vector.load %arg15[%c20, %c0_38] : memref<342x128xf32, #tpu.memory_space<vmem>>, vector<288x128xf32>
    %c5 = arith.constant 5 : index
    %c0_39 = arith.constant 0 : index
    %c0_40 = arith.constant 0 : index
    %47 = vector.load %arg6[%c5, %c0_39, %c0_40] : memref<9x128x128xf32, #tpu.memory_space<vmem>>, vector<1x128x128xf32>
    %48 = vector.shape_cast %47 : vector<1x128x128xf32> to vector<128x128xf32>
    %cst_41 = arith.constant dense<0.000000e+00> : vector<288x128xf32>
    %49 = tpu.matmul %46, %48, %cst_41 {dimension_numbers = #tpu.dot_dimension_numbers<[1], [0], [0], [1], [0, 0, 1, 1], [], []>} : vector<288x128xf32>, vector<128x128xf32>, vector<288x128xf32> -> vector<288x128xf32>
    %50 = arith.addf %45, %49 : vector<288x128xf32>
    %c36 = arith.constant 36 : index
    %c0_42 = arith.constant 0 : index
    %51 = vector.load %arg15[%c36, %c0_42] : memref<342x128xf32, #tpu.memory_space<vmem>>, vector<288x128xf32>
    %c6 = arith.constant 6 : index
    %c0_43 = arith.constant 0 : index
    %c0_44 = arith.constant 0 : index
    %52 = vector.load %arg6[%c6, %c0_43, %c0_44] : memref<9x128x128xf32, #tpu.memory_space<vmem>>, vector<1x128x128xf32>
    %53 = vector.shape_cast %52 : vector<1x128x128xf32> to vector<128x128xf32>
    %cst_45 = arith.constant dense<0.000000e+00> : vector<288x128xf32>
    %54 = tpu.matmul %51, %53, %cst_45 {dimension_numbers = #tpu.dot_dimension_numbers<[1], [0], [0], [1], [0, 0, 1, 1], [], []>} : vector<288x128xf32>, vector<128x128xf32>, vector<288x128xf32> -> vector<288x128xf32>
    %55 = arith.addf %50, %54 : vector<288x128xf32>
    %c37 = arith.constant 37 : index
    %c0_46 = arith.constant 0 : index
    %56 = vector.load %arg15[%c37, %c0_46] : memref<342x128xf32, #tpu.memory_space<vmem>>, vector<288x128xf32>
    %c7 = arith.constant 7 : index
    %c0_47 = arith.constant 0 : index
    %c0_48 = arith.constant 0 : index
    %57 = vector.load %arg6[%c7, %c0_47, %c0_48] : memref<9x128x128xf32, #tpu.memory_space<vmem>>, vector<1x128x128xf32>
    %58 = vector.shape_cast %57 : vector<1x128x128xf32> to vector<128x128xf32>
    %cst_49 = arith.constant dense<0.000000e+00> : vector<288x128xf32>
    %59 = tpu.matmul %56, %58, %cst_49 {dimension_numbers = #tpu.dot_dimension_numbers<[1], [0], [0], [1], [0, 0, 1, 1], [], []>} : vector<288x128xf32>, vector<128x128xf32>, vector<288x128xf32> -> vector<288x128xf32>
    %60 = arith.addf %55, %59 : vector<288x128xf32>
    %c38 = arith.constant 38 : index
    %c0_50 = arith.constant 0 : index
    %61 = vector.load %arg15[%c38, %c0_50] : memref<342x128xf32, #tpu.memory_space<vmem>>, vector<288x128xf32>
    %c8 = arith.constant 8 : index
    %c0_51 = arith.constant 0 : index
    %c0_52 = arith.constant 0 : index
    %62 = vector.load %arg6[%c8, %c0_51, %c0_52] : memref<9x128x128xf32, #tpu.memory_space<vmem>>, vector<1x128x128xf32>
    %63 = vector.shape_cast %62 : vector<1x128x128xf32> to vector<128x128xf32>
    %cst_53 = arith.constant dense<0.000000e+00> : vector<288x128xf32>
    %64 = tpu.matmul %61, %63, %cst_53 {dimension_numbers = #tpu.dot_dimension_numbers<[1], [0], [0], [1], [0, 0, 1, 1], [], []>} : vector<288x128xf32>, vector<128x128xf32>, vector<288x128xf32> -> vector<288x128xf32>
    %65 = arith.addf %60, %64 : vector<288x128xf32>
    %c0_54 = arith.constant 0 : index
    %c0_55 = arith.constant 0 : index
    %66 = vector.load %arg7[%c0_54, %c0_55] : memref<1x128xf32, #tpu.memory_space<vmem>>, vector<1x128xf32>
    %67 = vector.broadcast %66 : vector<1x128xf32> to vector<288x128xf32>
    %68 = arith.addf %65, %67 : vector<288x128xf32>
    %c0_56 = arith.constant 0 : index
    %c0_57 = arith.constant 0 : index
    %69 = vector.load %arg13[%c0_56, %c0_57] : memref<288x1xf32, #tpu.memory_space<vmem>>, vector<288x1xf32>
    %70 = vector.broadcast %69 : vector<288x1xf32> to vector<288x128xf32>
    %71 = arith.mulf %68, %70 : vector<288x128xf32>
    %cst_58 = arith.constant dense<0.000000e+00> : vector<128xf32>
    %72 = vector.multi_reduction <add>, %71, %cst_58 [0] : vector<288x128xf32> to vector<128xf32>
    %73 = vector.shape_cast %72 : vector<128xf32> to vector<1x128xf32>
    %c0_59 = arith.constant 0 : index
    %c0_60 = arith.constant 0 : index
    %74 = vector.load %arg8[%c0_59, %c0_60] : memref<128x8xf32, #tpu.memory_space<vmem>>, vector<128x8xf32>
    %cst_61 = arith.constant dense<0.000000e+00> : vector<1x8xf32>
    %75 = tpu.matmul %73, %74, %cst_61 {dimension_numbers = #tpu.dot_dimension_numbers<[1], [0], [0], [1], [0, 0, 1, 1], [], []>} : vector<1x128xf32>, vector<128x8xf32>, vector<1x8xf32> -> vector<1x8xf32>
    %c0_62 = arith.constant 0 : index
    %c0_63 = arith.constant 0 : index
    %76 = vector.load %arg9[%c0_62, %c0_63] : memref<1x8xf32, #tpu.memory_space<vmem>>, vector<1x8xf32>
    %77 = arith.addf %75, %76 : vector<1x8xf32>
    %cst_64 = arith.constant 0.000000e+00 : f32
    %78 = vector.broadcast %cst_64 : f32 to vector<1x8xf32>
    %79 = arith.maximumf %77, %78 : vector<1x8xf32>
    %c0_65 = arith.constant 0 : index
    %c0_66 = arith.constant 0 : index
    %80 = vector.load %arg10[%c0_65, %c0_66] : memref<8x128xf32, #tpu.memory_space<vmem>>, vector<8x128xf32>
    %cst_67 = arith.constant dense<0.000000e+00> : vector<1x128xf32>
    %81 = tpu.matmul %79, %80, %cst_67 {dimension_numbers = #tpu.dot_dimension_numbers<[1], [0], [0], [1], [0, 0, 1, 1], [], []>} : vector<1x8xf32>, vector<8x128xf32>, vector<1x128xf32> -> vector<1x128xf32>
    %c0_68 = arith.constant 0 : index
    %c0_69 = arith.constant 0 : index
    %82 = vector.load %arg11[%c0_68, %c0_69] : memref<1x128xf32, #tpu.memory_space<vmem>>, vector<1x128xf32>
    %83 = arith.addf %81, %82 : vector<1x128xf32>
    %84 = arith.negf %83 : vector<1x128xf32>
    %85 = math.exp %84 : vector<1x128xf32>
    %cst_70 = arith.constant 1.000000e+00 : f32
    %86 = vector.broadcast %cst_70 : f32 to vector<1x128xf32>
    %87 = arith.addf %86, %85 : vector<1x128xf32>
    %88 = arith.divf %86, %87 : vector<1x128xf32>
    %c0_71 = arith.constant 0 : index
    %c0_72 = arith.constant 0 : index
    %c0_73 = arith.constant 0 : index
    %89 = vector.load %arg2[%c0_71, %c0_72, %c0_73] : memref<1x288x128xf32, #tpu.memory_space<vmem>>, vector<1x288x128xf32>
    %90 = vector.shape_cast %89 : vector<1x288x128xf32> to vector<288x128xf32>
    %91 = vector.broadcast %88 : vector<1x128xf32> to vector<288x128xf32>
    %92 = arith.mulf %68, %91 : vector<288x128xf32>
    %93 = arith.addf %90, %92 : vector<288x128xf32>
    %94 = vector.shape_cast %93 : vector<288x128xf32> to vector<1x288x128xf32>
    %c0_74 = arith.constant 0 : index
    %c0_75 = arith.constant 0 : index
    %c0_76 = arith.constant 0 : index
    %95 = vector.load %arg14[%c0_74, %c0_75, %c0_76] : memref<1x288x128xf32, #tpu.memory_space<vmem>>, vector<1x288x128xf32>
    tpu.vector_store %arg14[%c0_74, %c0_75, %c0_76], %94 {strides = array<i32>} : memref<1x288x128xf32, #tpu.memory_space<vmem>>, vector<1x288x128xf32>,
    return
  }
  func.func @transform_0(%arg0: i32) -> (i32, i32, i32) {
    %c0_i32 = arith.constant 0 : i32
    %c0_i32_0 = arith.constant 0 : i32
    %c0_i32_1 = arith.constant 0 : i32
    return %arg0, %c0_i32, %c0_i32_0 : i32, i32, i32
  }
  func.func @transform_1(%arg0: i32) -> (i32, i32, i32) {
    %c0_i32 = arith.constant 0 : i32
    %c0_i32_0 = arith.constant 0 : i32
    %c0_i32_1 = arith.constant 0 : i32
    return %arg0, %c0_i32, %c0_i32_0 : i32, i32, i32
  }
  func.func @transform_2(%arg0: i32) -> (i32, i32) {
    %c0_i32 = arith.constant 0 : i32
    %c0_i32_0 = arith.constant 0 : i32
    %c0_i32_1 = arith.constant 0 : i32
    return %c0_i32, %c0_i32_0 : i32, i32
  }
  func.func @transform_3(%arg0: i32) -> (i32, i32) {
    %c0_i32 = arith.constant 0 : i32
    %c0_i32_0 = arith.constant 0 : i32
    %c0_i32_1 = arith.constant 0 : i32
    return %c0_i32, %c0_i32_0 : i32, i32
  }
  func.func @transform_4(%arg0: i32) -> i32 {
    %c0_i32 = arith.constant 0 : i32
    %c0_i32_0 = arith.constant 0 : i32
    return %c0_i32 : i32
  }
  func.func @transform_5(%arg0: i32) -> (i32, i32, i32) {
    %c0_i32 = arith.constant 0 : i32
    %c0_i32_0 = arith.constant 0 : i32
    %c0_i32_1 = arith.constant 0 : i32
    %c0_i32_2 = arith.constant 0 : i32
    return %c0_i32, %c0_i32_0, %c0_i32_1 : i32, i32, i32
  }
  func.func @transform_6(%arg0: i32) -> (i32, i32) {
    %c0_i32 = arith.constant 0 : i32
    %c0_i32_0 = arith.constant 0 : i32
    %c0_i32_1 = arith.constant 0 : i32
    return %c0_i32, %c0_i32_0 : i32, i32
  }
  func.func @transform_7(%arg0: i32) -> (i32, i32) {
    %c0_i32 = arith.constant 0 : i32
    %c0_i32_0 = arith.constant 0 : i32
    %c0_i32_1 = arith.constant 0 : i32
    return %c0_i32, %c0_i32_0 : i32, i32
  }
  func.func @transform_8(%arg0: i32) -> (i32, i32) {
    %c0_i32 = arith.constant 0 : i32
    %c0_i32_0 = arith.constant 0 : i32
    %c0_i32_1 = arith.constant 0 : i32
    return %c0_i32, %c0_i32_0 : i32, i32
  }
  func.func @transform_9(%arg0: i32) -> (i32, i32) {
    %c0_i32 = arith.constant 0 : i32
    %c0_i32_0 = arith.constant 0 : i32
    %c0_i32_1 = arith.constant 0 : i32
    return %c0_i32, %c0_i32_0 : i32, i32
  }
  func.func @transform_10(%arg0: i32) -> (i32, i32) {
    %c0_i32 = arith.constant 0 : i32
    %c0_i32_0 = arith.constant 0 : i32
    %c0_i32_1 = arith.constant 0 : i32
    return %c0_i32, %c0_i32_0 : i32, i32
  }
  func.func @transform_11(%arg0: i32) -> (i32, i32) {
    %c0_i32 = arith.constant 0 : i32
    %c0_i32_0 = arith.constant 0 : i32
    %c0_i32_1 = arith.constant 0 : i32
    return %c0_i32, %c0_i32_0 : i32, i32
  }
  func.func @transform_12(%arg0: i32) -> (i32, i32) {
    %c0_i32 = arith.constant 0 : i32
    %c0_i32_0 = arith.constant 0 : i32
    %c0_i32_1 = arith.constant 0 : i32
    return %c0_i32, %c0_i32_0 : i32, i32
  }
  func.func @transform_13(%arg0: i32) -> (i32, i32, i32) {
    %c0_i32 = arith.constant 0 : i32
    %c0_i32_0 = arith.constant 0 : i32
    %c0_i32_1 = arith.constant 0 : i32
    return %arg0, %c0_i32, %c0_i32_0 : i32, i32, i32
  }
}

</mosaic_0001>

<llo_original>
// kernel: tpu_custom_call.1
$region0: #{tpu_custom_call.1}
  #allocation0 [shape = 'u32[]', space=smem, size = 0x4, offset = 0x4, fixed_abs, tag = 'smem constant byte address 0x4 - core index']
  #allocation1 [shape = 'u32[144,128]{1,0:T(1,128)}', space=vmem, size = 0x12000, scoped, tag = 'internal scratch']
  #allocation2 [shape = 'f32[342,128]{1,0:T(8,128)}', space=vmem, size = 0x2b000, scoped, tag = 'scratch operand']
  #allocation3 [shape = 'f32[1]{0:T(128)S(6)}', space=smem, size = 0x200, scoped, tag = 'scoped memory for tpu_custom_call.1']
  %s0 = inlined_call_operand.hbm [shape: f32[2,288,1152], index: 0, kind: input, shape index: {}]
  %s1 = inlined_call_operand.hbm [shape: f32[2,288,128], index: 1, kind: input, shape index: {}]
  %s2 = inlined_call_operand.hbm [shape: f32[1152,128], index: 2, kind: input, shape index: {}]
  %s3 = inlined_call_operand.hbm [shape: f32[1,128], index: 3, kind: input, shape index: {}]
  %s4 = inlined_call_operand.<no memory space> [shape: f32[1], index: 4, kind: input, shape index: {}]
  %s5 = inlined_call_operand.hbm [shape: f32[9,128,128], index: 5, kind: input, shape index: {}]
  %s6 = inlined_call_operand.hbm [shape: f32[1,128], index: 6, kind: input, shape index: {}]
  %s7 = inlined_call_operand.vmem [shape: f32[128,8], index: 7, kind: input, shape index: {}]
  %s8 = inlined_call_operand.hbm [shape: f32[1,8], index: 8, kind: input, shape index: {}]
  %s9 = inlined_call_operand.hbm [shape: f32[8,128], index: 9, kind: input, shape index: {}]
  %s10 = inlined_call_operand.hbm [shape: f32[1,128], index: 10, kind: input, shape index: {}]
  %s11 = inlined_call_operand.vmem [shape: f32[288,1], index: 11, kind: input, shape index: {}]
  %s12 = inlined_call_operand.vmem [shape: f32[288,1], index: 12, kind: input, shape index: {}]
  %s13 = inlined_call_operand.hbm [shape: f32[2,288,128], index: 13, kind: output, shape index: {}]
  %s14 = sld [smem:[#allocation0]]
  $region125: #{tpu_custom_call.1} parent=0
    _
  %s16 = ssub.s32 1, %s14
  %s17 = scalar_select 0, %s16, %s14
  %18 = sst [smem:[#allocation3]] %s4
  $region1: #{tpu_custom_call.1} parent=0
    #allocation4 [shape = 'u8[2654208]{0}', space=vmem, size = 0x288000, scoped, tag = 'input window, operand 0']
    #allocation5 [shape = 's32[2]{0}', space=sflag, size = 0x8, scoped, tag = 'scoped memory for tpu_custom_call.1']
    #allocation6 [shape = 's32[2]{0}', space=sflag, size = 0x8, scoped, tag = 'scoped memory for tpu_custom_call.1']
    #allocation7 [shape = 'u8[294912]{0}', space=vmem, size = 0x48000, scoped, tag = 'input window, operand 1']
    #allocation8 [shape = 's32[2]{0}', space=sflag, size = 0x8, scoped, tag = 'scoped memory for tpu_custom_call.1']
    #allocation9 [shape = 'u8[589824]{0}', space=vmem, size = 0x90000, scoped, tag = 'input window, operand 2, single buffered']
    #allocation10 [shape = 'u8[512]{0}', space=vmem, size = 0x400, scoped, tag = 'input window, operand 3, single buffered']
    #allocation11 [shape = 's32[1]{0}', space=sflag, size = 0x4, scoped, tag = 'scoped memory for tpu_custom_call.1']
    #allocation12 [shape = 'u8[589824]{0}', space=vmem, size = 0x90000, scoped, tag = 'input window, operand 5, single buffered']
    #allocation13 [shape = 'u8[512]{0}', space=vmem, size = 0x400, scoped, tag = 'input window, operand 6, single buffered']
    #allocation14 [shape = 's32[1]{0}', space=sflag, size = 0x4, scoped, tag = 'scoped memory for tpu_custom_call.1']
    #allocation15 [shape = 'u8[512]{0}', space=vmem, size = 0x400, scoped, tag = 'input window, operand 8, single buffered']
    #allocation16 [shape = 'u8[4096]{0}', space=vmem, size = 0x1000, scoped, tag = 'input window, operand 9, single buffered']
    #allocation17 [shape = 's32[1]{0}', space=sflag, size = 0x4, scoped, tag = 'scoped memory for tpu_custom_call.1']
    #allocation18 [shape = 'u8[512]{0}', space=vmem, size = 0x400, scoped, tag = 'input window, operand 10, single buffered']
    #allocation19 [shape = 'u8[294912]{0}', space=vmem, size = 0x48000, scoped, tag = 'output window, operand 0']
    %19 = vsyncpa [#allocation5], 0
    %s20 = scalar_lea.sflag [#allocation5], 1
    %21 = vsyncpa %s20, 0
    %22 = vsyncpa [#allocation8], 0
    %s23 = scalar_lea.sflag [#allocation8], 1
    %24 = vsyncpa %s23, 0
    %25 = vsyncpa [#allocation11], 0
    %26 = vsyncpa [#allocation14], 0
    %27 = vsyncpa [#allocation17], 0
    %28 = vsyncpa [#allocation6], 0
    %s29 = scalar_lea.sflag [#allocation6], 1
    %30 = vsyncpa %s29, 0
    loop: start=0, step=1, limit=4
    $region2: #{tpu_custom_call.1} parent=1 // loop_pre_header
      _
    $region3: #{tpu_custom_call.1} parent=1 // loop_header
      %s32 = sphi 0, %s36
      %p33 = scmp.ge.s32.totalorder %s32, 4
      %s42 = sphi 0, %s44
      %s45 = sphi 0, %s42
      %s46 = sphi 0, %s45
      %s62 = sphi 0, %s46
      %s68 = sphi 0, %s70
      %s71 = sphi 0, %s68
      %s72 = sphi 0, %s71
      %s88 = sphi 0, %s72
      %s92 = sphi 0, %s92
      %s94 = sphi 0, %s92
      %s95 = sphi 0, %s94
      %s109 = sphi 0, %s95
      %s113 = sphi 0, %s113
      %s115 = sphi 0, %s113
      %s116 = sphi 0, %s115
      %s130 = sphi 0, %s116
      %s134 = sphi 0, %s134
      %s136 = sphi 0, %s134
      %s137 = sphi 0, %s136
      %s151 = sphi 0, %s137
      %s155 = sphi 0, %s155
      %s157 = sphi 0, %s155
      %s158 = sphi 0, %s157
      %s172 = sphi 0, %s158
      %s176 = sphi 0, %s176
      %s178 = sphi 0, %s176
      %s179 = sphi 0, %s178
      %s193 = sphi 0, %s179
      %s197 = sphi 0, %s197
      %s199 = sphi 0, %s197
      %s200 = sphi 0, %s199
      %s214 = sphi 0, %s200
      %s218 = sphi 0, %s218
      %s220 = sphi 0, %s218
      %s221 = sphi 0, %s220
      %s235 = sphi 0, %s221
      %s239 = sphi 0, %s239
      %s241 = sphi 0, %s239
      %s242 = sphi 0, %s241
      %s256 = sphi 0, %s242
      %s260 = sphi 0, %s260
      %s262 = sphi 0, %s260
      %s263 = sphi 0, %s262
      %s277 = sphi 0, %s263
      %s281 = sphi 0, %s281
      %s283 = sphi 0, %s281
      %s284 = sphi 0, %s283
      %s298 = sphi 0, %s284
      %s302 = sphi 0, %s302
      %s304 = sphi 0, %s302
      %s305 = sphi 0, %s304
      %s319 = sphi 0, %s305
      %s325 = sphi 0, %s327
      %s328 = sphi 0, %s325
      %s329 = sphi 0, %s328
      %s345 = sphi 0, %s329
    $region4: #{tpu_custom_call.1} parent=1 // loop_header_branch
      %35 = sbr.rel (%p33) target = $region8
    $region5: #{tpu_custom_call.1} parent=1 // loop_body
      %s37 = ssub.s32 %s32, 1
      %s38 = ssub.s32 %s32, 2
      %s39 = sadd.s32 %s32, 1
      %s40 = ssub.s32 %s32, %s39
      %p41 = scmp.eq.s32.totalorder %s40, 0
      %s43 = sadd.s32 %s42, 1
      %s44 = scalar_select %p41, %s42, %s43
      %p47 = pneg %p41
      %p48 = scmp.eq.s32.totalorder %s32, 1
      %p49 = por %p47, %p48
      %p50 = scmp.ne.s32.totalorder %s42, %s45
      %p51 = scmp.eq.s32.totalorder %s32, 0
      %p52 = por %p50, %p51
      %p53 = scmp.ne.s32.totalorder %s42, %s45
      %p54 = scmp.eq.s32.totalorder %s37, 1
      %p55 = por %p53, %p54
      %p56 = scmp.ne.s32.totalorder %s45, %s46
      %p57 = scmp.eq.s32.totalorder %s37, 0
      %p58 = por %p56, %p57
      %p59 = scmp.ne.s32.totalorder %s45, %s46
      %p60 = scmp.eq.s32.totalorder %s38, 1
      %p61 = por %p59, %p60
      %p63 = scmp.ne.s32.totalorder %s46, %s62
      %p64 = scmp.eq.s32.totalorder %s38, 0
      %p65 = por %p63, %p64
      %s66 = ssub.s32 %s32, %s39
      %p67 = scmp.eq.s32.totalorder %s66, 0
      %s69 = sadd.s32 %s68, 1
      %s70 = scalar_select %p67, %s68, %s69
      %p73 = pneg %p67
      %p74 = scmp.eq.s32.totalorder %s32, 1
      %p75 = por %p73, %p74
      %p76 = scmp.ne.s32.totalorder %s68, %s71
      %p77 = scmp.eq.s32.totalorder %s32, 0
      %p78 = por %p76, %p77
      %p79 = scmp.ne.s32.totalorder %s68, %s71
      %p80 = scmp.eq.s32.totalorder %s37, 1
      %p81 = por %p79, %p80
      %p82 = scmp.ne.s32.totalorder %s71, %s72
      %p83 = scmp.eq.s32.totalorder %s37, 0
      %p84 = por %p82, %p83
      %p85 = scmp.ne.s32.totalorder %s71, %s72
      %p86 = scmp.eq.s32.totalorder %s38, 1
      %p87 = por %p85, %p86
      %p89 = scmp.ne.s32.totalorder %s72, %s88
      %p90 = scmp.eq.s32.totalorder %s38, 0
      %p91 = por %p89, %p90
      %s93 = sadd.s32 %s92, 1
      %p96 = scmp.eq.s32.totalorder %s32, 1
      %p97 = scmp.ne.s32.totalorder %s92, %s94
      %p98 = scmp.eq.s32.totalorder %s32, 0
      %p99 = por %p97, %p98
      %p100 = scmp.ne.s32.totalorder %s92, %s94
      %p101 = scmp.eq.s32.totalorder %s37, 1
      %p102 = por %p100, %p101
      %p103 = scmp.ne.s32.totalorder %s94, %s95
      %p104 = scmp.eq.s32.totalorder %s37, 0
      %p105 = por %p103, %p104
      %p106 = scmp.ne.s32.totalorder %s94, %s95
      %p107 = scmp.eq.s32.totalorder %s38, 1
      %p108 = por %p106, %p107
      %p110 = scmp.ne.s32.totalorder %s95, %s109
      %p111 = scmp.eq.s32.totalorder %s38, 0
      %p112 = por %p110, %p111
      %s114 = sadd.s32 %s113, 1
      %p117 = scmp.eq.s32.totalorder %s32, 1
      %p118 = scmp.ne.s32.totalorder %s113, %s115
      %p119 = scmp.eq.s32.totalorder %s32, 0
      %p120 = por %p118, %p119
      %p121 = scmp.ne.s32.totalorder %s113, %s115
      %p122 = scmp.eq.s32.totalorder %s37, 1
      %p123 = por %p121, %p122
      %p124 = scmp.ne.s32.totalorder %s115, %s116
      %p125 = scmp.eq.s32.totalorder %s37, 0
      %p126 = por %p124, %p125
      %p127 = scmp.ne.s32.totalorder %s115, %s116
      %p128 = scmp.eq.s32.totalorder %s38, 1
      %p129 = por %p127, %p128
      %p131 = scmp.ne.s32.totalorder %s116, %s130
      %p132 = scmp.eq.s32.totalorder %s38, 0
      %p133 = por %p131, %p132
      %s135 = sadd.s32 %s134, 1
      %p138 = scmp.eq.s32.totalorder %s32, 1
      %p139 = scmp.ne.s32.totalorder %s134, %s136
      %p140 = scmp.eq.s32.totalorder %s32, 0
      %p141 = por %p139, %p140
      %p142 = scmp.ne.s32.totalorder %s134, %s136
      %p143 = scmp.eq.s32.totalorder %s37, 1
      %p144 = por %p142, %p143
      %p145 = scmp.ne.s32.totalorder %s136, %s137
      %p146 = scmp.eq.s32.totalorder %s37, 0
      %p147 = por %p145, %p146
      %p148 = scmp.ne.s32.totalorder %s136, %s137
      %p149 = scmp.eq.s32.totalorder %s38, 1
      %p150 = por %p148, %p149
      %p152 = scmp.ne.s32.totalorder %s137, %s151
      %p153 = scmp.eq.s32.totalorder %s38, 0
      %p154 = por %p152, %p153
      %s156 = sadd.s32 %s155, 1
      %p159 = scmp.eq.s32.totalorder %s32, 1
      %p160 = scmp.ne.s32.totalorder %s155, %s157
      %p161 = scmp.eq.s32.totalorder %s32, 0
      %p162 = por %p160, %p161
      %p163 = scmp.ne.s32.totalorder %s155, %s157
      %p164 = scmp.eq.s32.totalorder %s37, 1
      %p165 = por %p163, %p164
      %p166 = scmp.ne.s32.totalorder %s157, %s158
      %p167 = scmp.eq.s32.totalorder %s37, 0
      %p168 = por %p166, %p167
      %p169 = scmp.ne.s32.totalorder %s157, %s158
      %p170 = scmp.eq.s32.totalorder %s38, 1
      %p171 = por %p169, %p170
      %p173 = scmp.ne.s32.totalorder %s158, %s172
      %p174 = scmp.eq.s32.totalorder %s38, 0
      %p175 = por %p173, %p174
      %s177 = sadd.s32 %s176, 1
      %p180 = scmp.eq.s32.totalorder %s32, 1
      %p181 = scmp.ne.s32.totalorder %s176, %s178
      %p182 = scmp.eq.s32.totalorder %s32, 0
      %p183 = por %p181, %p182
      %p184 = scmp.ne.s32.totalorder %s176, %s178
      %p185 = scmp.eq.s32.totalorder %s37, 1
      %p186 = por %p184, %p185
      %p187 = scmp.ne.s32.totalorder %s178, %s179
      %p188 = scmp.eq.s32.totalorder %s37, 0
      %p189 = por %p187, %p188
      %p190 = scmp.ne.s32.totalorder %s178, %s179
      %p191 = scmp.eq.s32.totalorder %s38, 1
      %p192 = por %p190, %p191
      %p194 = scmp.ne.s32.totalorder %s179, %s193
      %p195 = scmp.eq.s32.totalorder %s38, 0
      %p196 = por %p194, %p195
      %s198 = sadd.s32 %s197, 1
      %p201 = scmp.eq.s32.totalorder %s32, 1
      %p202 = scmp.ne.s32.totalorder %s197, %s199
      %p203 = scmp.eq.s32.totalorder %s32, 0
      %p204 = por %p202, %p203
      %p205 = scmp.ne.s32.totalorder %s197, %s199
      %p206 = scmp.eq.s32.totalorder %s37, 1
      %p207 = por %p205, %p206
      %p208 = scmp.ne.s32.totalorder %s199, %s200
      %p209 = scmp.eq.s32.totalorder %s37, 0
      %p210 = por %p208, %p209
      %p211 = scmp.ne.s32.totalorder %s199, %s200
      %p212 = scmp.eq.s32.totalorder %s38, 1
      %p213 = por %p211, %p212
      %p215 = scmp.ne.s32.totalorder %s200, %s214
      %p216 = scmp.eq.s32.totalorder %s38, 0
      %p217 = por %p215, %p216
      %s219 = sadd.s32 %s218, 1
      %p222 = scmp.eq.s32.totalorder %s32, 1
      %p223 = scmp.ne.s32.totalorder %s218, %s220
      %p224 = scmp.eq.s32.totalorder %s32, 0
      %p225 = por %p223, %p224
      %p226 = scmp.ne.s32.totalorder %s218, %s220
      %p227 = scmp.eq.s32.totalorder %s37, 1
      %p228 = por %p226, %p227
      %p229 = scmp.ne.s32.totalorder %s220, %s221
      %p230 = scmp.eq.s32.totalorder %s37, 0
      %p231 = por %p229, %p230
      %p232 = scmp.ne.s32.totalorder %s220, %s221
      %p233 = scmp.eq.s32.totalorder %s38, 1
      %p234 = por %p232, %p233
      %p236 = scmp.ne.s32.totalorder %s221, %s235
      %p237 = scmp.eq.s32.totalorder %s38, 0
      %p238 = por %p236, %p237
      %s240 = sadd.s32 %s239, 1
      %p243 = scmp.eq.s32.totalorder %s32, 1
      %p244 = scmp.ne.s32.totalorder %s239, %s241
      %p245 = scmp.eq.s32.totalorder %s32, 0
      %p246 = por %p244, %p245
      %p247 = scmp.ne.s32.totalorder %s239, %s241
      %p248 = scmp.eq.s32.totalorder %s37, 1
      %p249 = por %p247, %p248
      %p250 = scmp.ne.s32.totalorder %s241, %s242
      %p251 = scmp.eq.s32.totalorder %s37, 0
      %p252 = por %p250, %p251
      %p253 = scmp.ne.s32.totalorder %s241, %s242
      %p254 = scmp.eq.s32.totalorder %s38, 1
      %p255 = por %p253, %p254
      %p257 = scmp.ne.s32.totalorder %s242, %s256
      %p258 = scmp.eq.s32.totalorder %s38, 0
      %p259 = por %p257, %p258
      %s261 = sadd.s32 %s260, 1
      %p264 = scmp.eq.s32.totalorder %s32, 1
      %p265 = scmp.ne.s32.totalorder %s260, %s262
      %p266 = scmp.eq.s32.totalorder %s32, 0
      %p267 = por %p265, %p266
      %p268 = scmp.ne.s32.totalorder %s260, %s262
      %p269 = scmp.eq.s32.totalorder %s37, 1
      %p270 = por %p268, %p269
      %p271 = scmp.ne.s32.totalorder %s262, %s263
      %p272 = scmp.eq.s32.totalorder %s37, 0
      %p273 = por %p271, %p272
      %p274 = scmp.ne.s32.totalorder %s262, %s263
      %p275 = scmp.eq.s32.totalorder %s38, 1
      %p276 = por %p274, %p275
      %p278 = scmp.ne.s32.totalorder %s263, %s277
      %p279 = scmp.eq.s32.totalorder %s38, 0
      %p280 = por %p278, %p279
      %s282 = sadd.s32 %s281, 1
      %p285 = scmp.eq.s32.totalorder %s32, 1
      %p286 = scmp.ne.s32.totalorder %s281, %s283
      %p287 = scmp.eq.s32.totalorder %s32, 0
      %p288 = por %p286, %p287
      %p289 = scmp.ne.s32.totalorder %s281, %s283
      %p290 = scmp.eq.s32.totalorder %s37, 1
      %p291 = por %p289, %p290
      %p292 = scmp.ne.s32.totalorder %s283, %s284
      %p293 = scmp.eq.s32.totalorder %s37, 0
      %p294 = por %p292, %p293
      %p295 = scmp.ne.s32.totalorder %s283, %s284
      %p296 = scmp.eq.s32.totalorder %s38, 1
      %p297 = por %p295, %p296
      %p299 = scmp.ne.s32.totalorder %s284, %s298
      %p300 = scmp.eq.s32.totalorder %s38, 0
      %p301 = por %p299, %p300
      %s303 = sadd.s32 %s302, 1
      %p306 = scmp.eq.s32.totalorder %s32, 1
      %p307 = scmp.ne.s32.totalorder %s302, %s304
      %p308 = scmp.eq.s32.totalorder %s32, 0
      %p309 = por %p307, %p308
      %p310 = scmp.ne.s32.totalorder %s302, %s304
      %p311 = scmp.eq.s32.totalorder %s37, 1
      %p312 = por %p310, %p311
      %p313 = scmp.ne.s32.totalorder %s304, %s305
      %p314 = scmp.eq.s32.totalorder %s37, 0
      %p315 = por %p313, %p314
      %p316 = scmp.ne.s32.totalorder %s304, %s305
      %p317 = scmp.eq.s32.totalorder %s38, 1
      %p318 = por %p316, %p317
      %p320 = scmp.ne.s32.totalorder %s305, %s319
      %p321 = scmp.eq.s32.totalorder %s38, 0
      %p322 = por %p320, %p321
      %s323 = ssub.s32 %s32, %s39
      %p324 = scmp.eq.s32.totalorder %s323, 0
      %s326 = sadd.s32 %s325, 1
      %s327 = scalar_select %p324, %s325, %s326
      %p330 = pneg %p324
      %p331 = scmp.eq.s32.totalorder %s32, 1
      %p332 = por %p330, %p331
      %p333 = scmp.ne.s32.totalorder %s325, %s328
      %p334 = scmp.eq.s32.totalorder %s32, 0
      %p335 = por %p333, %p334
      %p336 = scmp.ne.s32.totalorder %s325, %s328
      %p337 = scmp.eq.s32.totalorder %s37, 1
      %p338 = por %p336, %p337
      %p339 = scmp.ne.s32.totalorder %s328, %s329
      %p340 = scmp.eq.s32.totalorder %s37, 0
      %p341 = por %p339, %p340
      %p342 = scmp.ne.s32.totalorder %s328, %s329
      %p343 = scmp.eq.s32.totalorder %s38, 1
      %p344 = por %p342, %p343
      %p346 = scmp.ne.s32.totalorder %s329, %s345
      %p347 = scmp.eq.s32.totalorder %s38, 0
      %p348 = por %p346, %p347
      %p349 = scmp.le.s32.totalorder 1, %s32
      %p350 = scmp.lt.s32.totalorder %s32, 3
      %p351 = pnand %p349, %p350
      %p352 = pneg %p351
      // Predicated region
      $region9: #{tpu_custom_call.1} parent=5 // pred_check
        _
      $region10: #{tpu_custom_call.1} parent=5 // pred_check_branch
        %354 = sbr.rel (%p351) target = $region12
      $region11: #{tpu_custom_call.1} parent=5 // pred_region
        %s355 = ssub.s32 %s32, 1
        // Predicated region
        $region13: #{tpu_custom_call.1} parent=11 // pred_check
          %p356 = pneg %p105
        $region14: #{tpu_custom_call.1} parent=11 // pred_check_branch
          %358 = sbr.rel (%p356) target = $region16
        $region15: #{tpu_custom_call.1} parent=11 // pred_region
          %s360 = ssub.s32 18432, 18432
          %361 = vsyncadd [#allocation8], %s360
          %s362 = sshll.u32 [#allocation9], 4
          %s363 = int_to_ptr.vmem [resolvable:$true] %s362
          %368 = dma.hbm_to_vmem [thread:$0]  %s2, 18432, %s363, [#allocation8], 128, 128, 8
        $region16: #{tpu_custom_call.1} parent=11 // pred_fallthru
          _
        // Predicated region
        $region17: #{tpu_custom_call.1} parent=11 // pred_check
          %p369 = pneg %p126
        $region18: #{tpu_custom_call.1} parent=11 // pred_check_branch
          %371 = sbr.rel (%p369) target = $region20
        $region19: #{tpu_custom_call.1} parent=11 // pred_region
          %s373 = ssub.s32 16, 16
          %374 = vsyncadd [#allocation11], %s373
          %s376 = sshll.u32 [#allocation10], 4
          %s377 = int_to_ptr.vmem [resolvable:$true] %s376
          %379 = dma.hbm_to_vmem [thread:$0]  %s3, 16, %s377, [#allocation11]
        $region20: #{tpu_custom_call.1} parent=11 // pred_fallthru
          _
        // Predicated region
        $region21: #{tpu_custom_call.1} parent=11 // pred_check
          %p380 = pneg %p147
        $region22: #{tpu_custom_call.1} parent=11 // pred_check_branch
          %382 = sbr.rel (%p380) target = $region24
        $region23: #{tpu_custom_call.1} parent=11 // pred_region
          _
        $region24: #{tpu_custom_call.1} parent=11 // pred_fallthru
          _
        // Predicated region
        $region25: #{tpu_custom_call.1} parent=11 // pred_check
          %p383 = pneg %p168
        $region26: #{tpu_custom_call.1} parent=11 // pred_check_branch
          %385 = sbr.rel (%p383) target = $region28
        $region27: #{tpu_custom_call.1} parent=11 // pred_region
          %s387 = ssub.s32 18432, 18432
          %388 = vsyncadd [#allocation11], %s387
          %s389 = sshll.u32 [#allocation12], 4
          %s390 = int_to_ptr.vmem [resolvable:$true] %s389
          %395 = dma.hbm_to_vmem [thread:$0]  %s5, 18432, %s390, [#allocation11], 128, 128, 8
        $region28: #{tpu_custom_call.1} parent=11 // pred_fallthru
          _
        // Predicated region
        $region29: #{tpu_custom_call.1} parent=11 // pred_check
          %p396 = pneg %p189
        $region30: #{tpu_custom_call.1} parent=11 // pred_check_branch
          %398 = sbr.rel (%p396) target = $region32
        $region31: #{tpu_custom_call.1} parent=11 // pred_region
          %s400 = ssub.s32 16, 16
          %401 = vsyncadd [#allocation14], %s400
          %s403 = sshll.u32 [#allocation13], 4
          %s404 = int_to_ptr.vmem [resolvable:$true] %s403
          %406 = dma.hbm_to_vmem [thread:$0]  %s6, 16, %s404, [#allocation14]
        $region32: #{tpu_custom_call.1} parent=11 // pred_fallthru
          _
        // Predicated region
        $region33: #{tpu_custom_call.1} parent=11 // pred_check
          %p407 = pneg %p210
        $region34: #{tpu_custom_call.1} parent=11 // pred_check_branch
          %409 = sbr.rel (%p407) target = $region36
        $region35: #{tpu_custom_call.1} parent=11 // pred_region
          _
        $region36: #{tpu_custom_call.1} parent=11 // pred_fallthru
          _
        // Predicated region
        $region37: #{tpu_custom_call.1} parent=11 // pred_check
          %p410 = pneg %p231
        $region38: #{tpu_custom_call.1} parent=11 // pred_check_branch
          %412 = sbr.rel (%p410) target = $region40
        $region39: #{tpu_custom_call.1} parent=11 // pred_region
          %s414 = ssub.s32 16, 16
          %415 = vsyncadd [#allocation14], %s414
          %s417 = sshll.u32 [#allocation15], 4
          %s418 = int_to_ptr.vmem [resolvable:$true] %s417
          %420 = dma.hbm_to_vmem [thread:$0]  %s8, 16, %s418, [#allocation14]
        $region40: #{tpu_custom_call.1} parent=11 // pred_fallthru
          _
        // Predicated region
        $region41: #{tpu_custom_call.1} parent=11 // pred_check
          %p421 = pneg %p252
        $region42: #{tpu_custom_call.1} parent=11 // pred_check_branch
          %423 = sbr.rel (%p421) target = $region44
        $region43: #{tpu_custom_call.1} parent=11 // pred_region
          %s425 = ssub.s32 128, 128
          %426 = vsyncadd [#allocation17], %s425
          %s428 = sshll.u32 [#allocation16], 4
          %s429 = int_to_ptr.vmem [resolvable:$true] %s428
          %431 = dma.hbm_to_vmem [thread:$0]  %s9, 128, %s429, [#allocation17]
        $region44: #{tpu_custom_call.1} parent=11 // pred_fallthru
          _
        // Predicated region
        $region45: #{tpu_custom_call.1} parent=11 // pred_check
          %p432 = pneg %p273
        $region46: #{tpu_custom_call.1} parent=11 // pred_check_branch
          %434 = sbr.rel (%p432) target = $region48
        $region47: #{tpu_custom_call.1} parent=11 // pred_region
          %s436 = ssub.s32 16, 16
          %437 = vsyncadd [#allocation17], %s436
          %s439 = sshll.u32 [#allocation18], 4
          %s440 = int_to_ptr.vmem [resolvable:$true] %s439
          %442 = dma.hbm_to_vmem [thread:$0]  %s10, 16, %s440, [#allocation17]
        $region48: #{tpu_custom_call.1} parent=11 // pred_fallthru
          _
        // Predicated region
        $region49: #{tpu_custom_call.1} parent=11 // pred_check
          %p443 = pneg %p294
        $region50: #{tpu_custom_call.1} parent=11 // pred_check_branch
          %445 = sbr.rel (%p443) target = $region52
        $region51: #{tpu_custom_call.1} parent=11 // pred_region
          _
        $region52: #{tpu_custom_call.1} parent=11 // pred_fallthru
          _
        // Predicated region
        $region53: #{tpu_custom_call.1} parent=11 // pred_check
          %p446 = pneg %p315
        $region54: #{tpu_custom_call.1} parent=11 // pred_check_branch
          %448 = sbr.rel (%p446) target = $region56
        $region55: #{tpu_custom_call.1} parent=11 // pred_region
          _
        $region56: #{tpu_custom_call.1} parent=11 // pred_fallthru
          _
      $region12: #{tpu_custom_call.1} parent=5 // pred_fallthru
        _
      %p449 = scmp.lt.s32.totalorder %s32, 2
      // Predicated region
      $region57: #{tpu_custom_call.1} parent=5 // pred_check
        %p450 = pneg %p449
      $region58: #{tpu_custom_call.1} parent=5 // pred_check_branch
        %452 = sbr.rel (%p450) target = $region60
      $region59: #{tpu_custom_call.1} parent=5 // pred_region
        // Predicated region
        $region61: #{tpu_custom_call.1} parent=59 // pred_check
          %p453 = pneg %p52
        $region62: #{tpu_custom_call.1} parent=59 // pred_check_branch
          %455 = sbr.rel (%p453) target = $region64
        $region63: #{tpu_custom_call.1} parent=59 // pred_region
          %s456 = sand.u32 %s42, 1
          %s457 = scalar_lea.sflag [#allocation5], %s456
          %s458 = sand.u32 %s42, 1
          %s459 = smul.addr %s458, 2592
          %s460 = scalar_lea.vmem [#allocation4], %s459
          %s462 = ssub.s32 41472, 41472
          %463 = vsyncadd %s457, %s462
          %s464 = smul.addr %s32, 324
          %s465 = smul.addr %s464, 128
          %s466 = scalar_lea.hbm %s0, %s465
          %s467 = sshll.u32 %s460, 4
          %s468 = int_to_ptr.vmem [resolvable:$true] %s467
          %473 = dma.hbm_to_vmem [thread:$0]  %s466, 41472, %s468, %s457, 1152, 1152, 72
        $region64: #{tpu_custom_call.1} parent=59 // pred_fallthru
          _
        // Predicated region
        $region65: #{tpu_custom_call.1} parent=59 // pred_check
          %p474 = pneg %p78
        $region66: #{tpu_custom_call.1} parent=59 // pred_check_branch
          %476 = sbr.rel (%p474) target = $region68
        $region67: #{tpu_custom_call.1} parent=59 // pred_region
          %s477 = sand.u32 %s32, 1
          %s478 = scalar_lea.sflag [#allocation8], %s477
          %s479 = sand.u32 %s68, 1
          %s480 = smul.addr %s479, 288
          %s481 = scalar_lea.vmem [#allocation7], %s480
          %s483 = ssub.s32 4608, 4608
          %484 = vsyncadd %s478, %s483
          %s485 = smul.addr %s32, 36
          %s486 = smul.addr %s485, 128
          %s487 = scalar_lea.hbm %s1, %s486
          %s488 = sshll.u32 %s481, 4
          %s489 = int_to_ptr.vmem [resolvable:$true] %s488
          %494 = dma.hbm_to_vmem [thread:$0]  %s487, 4608, %s489, %s478, 128, 128, 8
        $region68: #{tpu_custom_call.1} parent=59 // pred_fallthru
          _
      $region60: #{tpu_custom_call.1} parent=5 // pred_fallthru
        _
      %p495 = scmp.le.s32.totalorder 1, %s32
      %p496 = scmp.lt.s32.totalorder %s32, 3
      %p497 = pnand %p495, %p496
      %p498 = pneg %p497
      // Predicated region
      $region69: #{tpu_custom_call.1} parent=5 // pred_check
        _
      $region70: #{tpu_custom_call.1} parent=5 // pred_check_branch
        %500 = sbr.rel (%p497) target = $region72
      $region71: #{tpu_custom_call.1} parent=5 // pred_region
        %s501 = ssub.s32 %s32, 1
        %s502 = sand.u32 %s45, 1
        %s503 = scalar_lea.sflag [#allocation5], %s502
        %s504 = sand.u32 %s45, 1
        %s505 = smul.addr %s504, 2592
        %s506 = scalar_lea.vmem [#allocation4], %s505
        // Predicated region
        $region73: #{tpu_custom_call.1} parent=71 // pred_check
          %p507 = pneg %p58
        $region74: #{tpu_custom_call.1} parent=71 // pred_check_branch
          %509 = sbr.rel (%p507) target = $region76
        $region75: #{tpu_custom_call.1} parent=71 // pred_region
          %510 = dma.done %s503, 41472
        $region76: #{tpu_custom_call.1} parent=71 // pred_fallthru
          _
        %s511 = sand.u32 %s37, 1
        %s512 = scalar_lea.sflag [#allocation8], %s511
        %s513 = sand.u32 %s71, 1
        %s514 = smul.addr %s513, 288
        %s515 = scalar_lea.vmem [#allocation7], %s514
        // Predicated region
        $region77: #{tpu_custom_call.1} parent=71 // pred_check
          %p516 = pneg %p84
        $region78: #{tpu_custom_call.1} parent=71 // pred_check_branch
          %518 = sbr.rel (%p516) target = $region80
        $region79: #{tpu_custom_call.1} parent=71 // pred_region
          %519 = dma.done %s512, 4608
        $region80: #{tpu_custom_call.1} parent=71 // pred_fallthru
          _
        // Predicated region
        $region81: #{tpu_custom_call.1} parent=71 // pred_check
          %p520 = pneg %p105
        $region82: #{tpu_custom_call.1} parent=71 // pred_check_branch
          %522 = sbr.rel (%p520) target = $region84
        $region83: #{tpu_custom_call.1} parent=71 // pred_region
          %523 = dma.done [#allocation8], 18432
        $region84: #{tpu_custom_call.1} parent=71 // pred_fallthru
          _
        // Predicated region
        $region85: #{tpu_custom_call.1} parent=71 // pred_check
          %p524 = pneg %p126
        $region86: #{tpu_custom_call.1} parent=71 // pred_check_branch
          %526 = sbr.rel (%p524) target = $region88
        $region87: #{tpu_custom_call.1} parent=71 // pred_region
          %527 = dma.done [#allocation11], 16
        $region88: #{tpu_custom_call.1} parent=71 // pred_fallthru
          _
        // Predicated region
        $region89: #{tpu_custom_call.1} parent=71 // pred_check
          %p528 = pneg %p168
        $region90: #{tpu_custom_call.1} parent=71 // pred_check_branch
          %530 = sbr.rel (%p528) target = $region92
        $region91: #{tpu_custom_call.1} parent=71 // pred_region
          %531 = dma.done [#allocation11], 18432
        $region92: #{tpu_custom_call.1} parent=71 // pred_fallthru
          _
        // Predicated region
        $region93: #{tpu_custom_call.1} parent=71 // pred_check
          %p532 = pneg %p189
        $region94: #{tpu_custom_call.1} parent=71 // pred_check_branch
          %534 = sbr.rel (%p532) target = $region96
        $region95: #{tpu_custom_call.1} parent=71 // pred_region
          %535 = dma.done [#allocation14], 16
        $region96: #{tpu_custom_call.1} parent=71 // pred_fallthru
          _
        // Predicated region
        $region97: #{tpu_custom_call.1} parent=71 // pred_check
          %p536 = pneg %p231
        $region98: #{tpu_custom_call.1} parent=71 // pred_check_branch
          %538 = sbr.rel (%p536) target = $region100
        $region99: #{tpu_custom_call.1} parent=71 // pred_region
          %539 = dma.done [#allocation14], 16
        $region100: #{tpu_custom_call.1} parent=71 // pred_fallthru
          _
        // Predicated region
        $region101: #{tpu_custom_call.1} parent=71 // pred_check
          %p540 = pneg %p252
        $region102: #{tpu_custom_call.1} parent=71 // pred_check_branch
          %542 = sbr.rel (%p540) target = $region104
        $region103: #{tpu_custom_call.1} parent=71 // pred_region
          %543 = dma.done [#allocation17], 128
        $region104: #{tpu_custom_call.1} parent=71 // pred_fallthru
          _
        // Predicated region
        $region105: #{tpu_custom_call.1} parent=71 // pred_check
          %p544 = pneg %p273
        $region106: #{tpu_custom_call.1} parent=71 // pred_check_branch
          %546 = sbr.rel (%p544) target = $region108
        $region107: #{tpu_custom_call.1} parent=71 // pred_region
          %547 = dma.done [#allocation17], 16
        $region108: #{tpu_custom_call.1} parent=71 // pred_fallthru
          _
        %s548 = sand.u32 %s45, 1
        %s549 = scalar_lea.sflag [#allocation5], %s548
        %s550 = sand.u32 %s45, 1
        %s551 = smul.addr %s550, 2592
        %s552 = scalar_lea.vmem [#allocation4], %s551
        %p553 = pneg %p58
        %p554 = pneg %p55
        %s555 = sand.u32 %s37, 1
        %s556 = scalar_lea.sflag [#allocation8], %s555
        %s557 = sand.u32 %s71, 1
        %s558 = smul.addr %s557, 288
        %s559 = scalar_lea.vmem [#allocation7], %s558
        %p560 = pneg %p84
        %p561 = pneg %p81
        %p562 = pneg %p105
        %p563 = pneg %p102
        %p564 = pneg %p126
        %p565 = pneg %p123
        %p566 = pneg %p147
        %p567 = pneg %p144
        %p568 = pneg %p168
        %p569 = pneg %p165
        %p570 = pneg %p189
        %p571 = pneg %p186
        %p572 = pneg %p210
        %p573 = pneg %p207
        %p574 = pneg %p231
        %p575 = pneg %p228
        %p576 = pneg %p252
        %p577 = pneg %p249
        %p578 = pneg %p273
        %p579 = pneg %p270
        %p580 = pneg %p294
        %p581 = pneg %p291
        %p582 = pneg %p315
        %p583 = pneg %p312
        %p584 = pneg %p341
        %p585 = pneg %p338
        %s586 = sand.u32 %s328, 1
        %s587 = scalar_lea.sflag [#allocation6], %s586
        %s588 = sand.u32 %s328, 1
        %s589 = smul.addr %s588, 288
        %s590 = scalar_lea.vmem [#allocation19], %s589
        %p591 = scmp.eq.s32.totalorder %s37, 0
        // Predicated region
        $region109: #{tpu_custom_call.1} parent=71 // pred_check
          %p592 = pneg %p591
        $region110: #{tpu_custom_call.1} parent=71 // pred_check_branch
          %594 = sbr.rel (%p592) target = $region112
        $region111: #{tpu_custom_call.1} parent=71 // pred_region
          %595 = vst [vmem:[#allocation2] sm:$0xff] 0.0
          %596 = vst [vmem:[#allocation2 + $0x8] sm:$0xff] 0.0
          %597 = vst [vmem:[#allocation2 + $0x10] sm:$0x7] 0.0
          %598 = vst [vmem:[#allocation2 + $0x133] sm:$0xff] 0.0
          %599 = vst [vmem:[#allocation2 + $0x13b] sm:$0xff] 0.0
          %600 = vst [vmem:[#allocation2 + $0x143] sm:$0xff] 0.0
          %601 = vst [vmem:[#allocation2 + $0x14b] sm:$0xff] 0.0
          %602 = vst [vmem:[#allocation2 + $0x153] sm:$0x7] 0.0
        $region112: #{tpu_custom_call.1} parent=71 // pred_fallthru
          _
        %v603 = vld [vmem:[%s11] sm:$0xff]
        %v604 = vld [vmem:[%s11 + $0x8] sm:$0xff]
        %v605 = vld [vmem:[%s11 + $0x10] sm:$0xff]
        %v606 = vld [vmem:[%s11 + $0x18] sm:$0xff]
        %v607 = vld [vmem:[%s11 + $0x20] sm:$0xff]
        %v608 = vld [vmem:[%s11 + $0x28] sm:$0xff]
        %v609 = vld [vmem:[%s11 + $0x30] sm:$0xff]
        %v610 = vld [vmem:[%s11 + $0x38] sm:$0xff]
        %v611 = vld [vmem:[%s11 + $0x40] sm:$0xff]
        %v612 = vld [vmem:[%s11 + $0x48] sm:$0xff]
        %v613 = vld [vmem:[%s11 + $0x50] sm:$0xff]
        %v614 = vld [vmem:[%s11 + $0x58] sm:$0xff]
        %v615 = vld [vmem:[%s11 + $0x60] sm:$0xff]
        %v616 = vld [vmem:[%s11 + $0x68] sm:$0xff]
        %v617 = vld [vmem:[%s11 + $0x70] sm:$0xff]
        %v618 = vld [vmem:[%s11 + $0x78] sm:$0xff]
        %v619 = vld [vmem:[%s11 + $0x80] sm:$0xff]
        %v620 = vld [vmem:[%s11 + $0x88] sm:$0xff]
        %v621 = vld [vmem:[%s11 + $0x90] sm:$0xff]
        %v622 = vld [vmem:[%s11 + $0x98] sm:$0xff]
        %v623 = vld [vmem:[%s11 + $0xa0] sm:$0xff]
        %v624 = vld [vmem:[%s11 + $0xa8] sm:$0xff]
        %v625 = vld [vmem:[%s11 + $0xb0] sm:$0xff]
        %v626 = vld [vmem:[%s11 + $0xb8] sm:$0xff]
        %v627 = vld [vmem:[%s11 + $0xc0] sm:$0xff]
        %v628 = vld [vmem:[%s11 + $0xc8] sm:$0xff]
        %v629 = vld [vmem:[%s11 + $0xd0] sm:$0xff]
        %v630 = vld [vmem:[%s11 + $0xd8] sm:$0xff]
        %v631 = vld [vmem:[%s11 + $0xe0] sm:$0xff]
        %v632 = vld [vmem:[%s11 + $0xe8] sm:$0xff]
        %v633 = vld [vmem:[%s11 + $0xf0] sm:$0xff]
        %v634 = vld [vmem:[%s11 + $0xf8] sm:$0xff]
        %v635 = vld [vmem:[%s11 + $0x100] sm:$0xff]
        %v636 = vld [vmem:[%s11 + $0x108] sm:$0xff]
        %v637 = vld [vmem:[%s11 + $0x110] sm:$0xff]
        %v638 = vld [vmem:[%s11 + $0x118] sm:$0xff]
        %v639 = vld [vmem:[%s506] sm:$0xff]
        %v640 = vld [vmem:[%s506 + $0x8] sm:$0xff]
        %v641 = vld [vmem:[%s506 + $0x10] sm:$0xff]
        %v642 = vld [vmem:[%s506 + $0x18] sm:$0xff]
        %v643 = vld [vmem:[%s506 + $0x20] sm:$0xff]
        %v644 = vld [vmem:[%s506 + $0x28] sm:$0xff]
        %v645 = vld [vmem:[%s506 + $0x30] sm:$0xff]
        %v646 = vld [vmem:[%s506 + $0x38] sm:$0xff]
        %v647 = vld [vmem:[%s506 + $0x40] sm:$0xff]
        %v648 = vld [vmem:[%s506 + $0x48] sm:$0xff]
        %v649 = vld [vmem:[%s506 + $0x50] sm:$0xff]
        %v650 = vld [vmem:[%s506 + $0x58] sm:$0xff]
        %v651 = vld [vmem:[%s506 + $0x60] sm:$0xff]
        %v652 = vld [vmem:[%s506 + $0x68] sm:$0xff]
        %v653 = vld [vmem:[%s506 + $0x70] sm:$0xff]
        %v654 = vld [vmem:[%s506 + $0x78] sm:$0xff]
        %v655 = vld [vmem:[%s506 + $0x80] sm:$0xff]
        %v656 = vld [vmem:[%s506 + $0x88] sm:$0xff]
        %v657 = vld [vmem:[%s506 + $0x90] sm:$0xff]
        %v658 = vld [vmem:[%s506 + $0x98] sm:$0xff]
        %v659 = vld [vmem:[%s506 + $0xa0] sm:$0xff]
        %v660 = vld [vmem:[%s506 + $0xa8] sm:$0xff]
        %v661 = vld [vmem:[%s506 + $0xb0] sm:$0xff]
        %v662 = vld [vmem:[%s506 + $0xb8] sm:$0xff]
        %v663 = vld [vmem:[%s506 + $0xc0] sm:$0xff]
        %v664 = vld [vmem:[%s506 + $0xc8] sm:$0xff]
        %v665 = vld [vmem:[%s506 + $0xd0] sm:$0xff]
        %v666 = vld [vmem:[%s506 + $0xd8] sm:$0xff]
        %v667 = vld [vmem:[%s506 + $0xe0] sm:$0xff]
        %v668 = vld [vmem:[%s506 + $0xe8] sm:$0xff]
        %v669 = vld [vmem:[%s506 + $0xf0] sm:$0xff]
        %v670 = vld [vmem:[%s506 + $0xf8] sm:$0xff]
        %v671 = vld [vmem:[%s506 + $0x100] sm:$0xff]
        %v672 = vld [vmem:[%s506 + $0x108] sm:$0xff]
        %v673 = vld [vmem:[%s506 + $0x110] sm:$0xff]
        %v674 = vld [vmem:[%s506 + $0x118] sm:$0xff]
        %v675 = vld [vmem:[%s506 + $0x120] sm:$0xff]
        %v676 = vld [vmem:[%s506 + $0x128] sm:$0xff]
        %v677 = vld [vmem:[%s506 + $0x130] sm:$0xff]
        %v678 = vld [vmem:[%s506 + $0x138] sm:$0xff]
        %v679 = vld [vmem:[%s506 + $0x140] sm:$0xff]
        %v680 = vld [vmem:[%s506 + $0x148] sm:$0xff]
        %v681 = vld [vmem:[%s506 + $0x150] sm:$0xff]
        %v682 = vld [vmem:[%s506 + $0x158] sm:$0xff]
        %v683 = vld [vmem:[%s506 + $0x160] sm:$0xff]
        %v684 = vld [vmem:[%s506 + $0x168] sm:$0xff]
        %v685 = vld [vmem:[%s506 + $0x170] sm:$0xff]
        %v686 = vld [vmem:[%s506 + $0x178] sm:$0xff]
        %v687 = vld [vmem:[%s506 + $0x180] sm:$0xff]
        %v688 = vld [vmem:[%s506 + $0x188] sm:$0xff]
        %v689 = vld [vmem:[%s506 + $0x190] sm:$0xff]
        %v690 = vld [vmem:[%s506 + $0x198] sm:$0xff]
        %v691 = vld [vmem:[%s506 + $0x1a0] sm:$0xff]
        %v692 = vld [vmem:[%s506 + $0x1a8] sm:$0xff]
        %v693 = vld [vmem:[%s506 + $0x1b0] sm:$0xff]
        %v694 = vld [vmem:[%s506 + $0x1b8] sm:$0xff]
        %v695 = vld [vmem:[%s506 + $0x1c0] sm:$0xff]
        %v696 = vld [vmem:[%s506 + $0x1c8] sm:$0xff]
        %v697 = vld [vmem:[%s506 + $0x1d0] sm:$0xff]
        %v698 = vld [vmem:[%s506 + $0x1d8] sm:$0xff]
        %v699 = vld [vmem:[%s506 + $0x1e0] sm:$0xff]
        %v700 = vld [vmem:[%s506 + $0x1e8] sm:$0xff]
        %v701 = vld [vmem:[%s506 + $0x1f0] sm:$0xff]
        %v702 = vld [vmem:[%s506 + $0x1f8] sm:$0xff]
        %v703 = vld [vmem:[%s506 + $0x200] sm:$0xff]
        %v704 = vld [vmem:[%s506 + $0x208] sm:$0xff]
        %v705 = vld [vmem:[%s506 + $0x210] sm:$0xff]
        %v706 = vld [vmem:[%s506 + $0x218] sm:$0xff]
        %v707 = vld [vmem:[%s506 + $0x220] sm:$0xff]
        %v708 = vld [vmem:[%s506 + $0x228] sm:$0xff]
        %v709 = vld [vmem:[%s506 + $0x230] sm:$0xff]
        %v710 = vld [vmem:[%s506 + $0x238] sm:$0xff]
        %v711 = vld [vmem:[%s506 + $0x240] sm:$0xff]
        %v712 = vld [vmem:[%s506 + $0x248] sm:$0xff]
        %v713 = vld [vmem:[%s506 + $0x250] sm:$0xff]
        %v714 = vld [vmem:[%s506 + $0x258] sm:$0xff]
        %v715 = vld [vmem:[%s506 + $0x260] sm:$0xff]
        %v716 = vld [vmem:[%s506 + $0x268] sm:$0xff]
        %v717 = vld [vmem:[%s506 + $0x270] sm:$0xff]
        %v718 = vld [vmem:[%s506 + $0x278] sm:$0xff]
        %v719 = vld [vmem:[%s506 + $0x280] sm:$0xff]
        %v720 = vld [vmem:[%s506 + $0x288] sm:$0xff]
        %v721 = vld [vmem:[%s506 + $0x290] sm:$0xff]
        %v722 = vld [vmem:[%s506 + $0x298] sm:$0xff]
        %v723 = vld [vmem:[%s506 + $0x2a0] sm:$0xff]
        %v724 = vld [vmem:[%s506 + $0x2a8] sm:$0xff]
        %v725 = vld [vmem:[%s506 + $0x2b0] sm:$0xff]
        %v726 = vld [vmem:[%s506 + $0x2b8] sm:$0xff]
        %v727 = vld [vmem:[%s506 + $0x2c0] sm:$0xff]
        %v728 = vld [vmem:[%s506 + $0x2c8] sm:$0xff]
        %v729 = vld [vmem:[%s506 + $0x2d0] sm:$0xff]
        %v730 = vld [vmem:[%s506 + $0x2d8] sm:$0xff]
        %v731 = vld [vmem:[%s506 + $0x2e0] sm:$0xff]
        %v732 = vld [vmem:[%s506 + $0x2e8] sm:$0xff]
        %v733 = vld [vmem:[%s506 + $0x2f0] sm:$0xff]
        %v734 = vld [vmem:[%s506 + $0x2f8] sm:$0xff]
        %v735 = vld [vmem:[%s506 + $0x300] sm:$0xff]
        %v736 = vld [vmem:[%s506 + $0x308] sm:$0xff]
        %v737 = vld [vmem:[%s506 + $0x310] sm:$0xff]
        %v738 = vld [vmem:[%s506 + $0x318] sm:$0xff]
        %v739 = vld [vmem:[%s506 + $0x320] sm:$0xff]
        %v740 = vld [vmem:[%s506 + $0x328] sm:$0xff]
        %v741 = vld [vmem:[%s506 + $0x330] sm:$0xff]
        %v742 = vld [vmem:[%s506 + $0x338] sm:$0xff]
        %v743 = vld [vmem:[%s506 + $0x340] sm:$0xff]
        %v744 = vld [vmem:[%s506 + $0x348] sm:$0xff]
        %v745 = vld [vmem:[%s506 + $0x350] sm:$0xff]
        %v746 = vld [vmem:[%s506 + $0x358] sm:$0xff]
        %v747 = vld [vmem:[%s506 + $0x360] sm:$0xff]
        %v748 = vld [vmem:[%s506 + $0x368] sm:$0xff]
        %v749 = vld [vmem:[%s506 + $0x370] sm:$0xff]
        %v750 = vld [vmem:[%s506 + $0x378] sm:$0xff]
        %v751 = vld [vmem:[%s506 + $0x380] sm:$0xff]
        %v752 = vld [vmem:[%s506 + $0x388] sm:$0xff]
        %v753 = vld [vmem:[%s506 + $0x390] sm:$0xff]
        %v754 = vld [vmem:[%s506 + $0x398] sm:$0xff]
        %v755 = vld [vmem:[%s506 + $0x3a0] sm:$0xff]
        %v756 = vld [vmem:[%s506 + $0x3a8] sm:$0xff]
        %v757 = vld [vmem:[%s506 + $0x3b0] sm:$0xff]
        %v758 = vld [vmem:[%s506 + $0x3b8] sm:$0xff]
        %v759 = vld [vmem:[%s506 + $0x3c0] sm:$0xff]
        %v760 = vld [vmem:[%s506 + $0x3c8] sm:$0xff]
        %v761 = vld [vmem:[%s506 + $0x3d0] sm:$0xff]
        %v762 = vld [vmem:[%s506 + $0x3d8] sm:$0xff]
        %v763 = vld [vmem:[%s506 + $0x3e0] sm:$0xff]
        %v764 = vld [vmem:[%s506 + $0x3e8] sm:$0xff]
        %v765 = vld [vmem:[%s506 + $0x3f0] sm:$0xff]
        %v766 = vld [vmem:[%s506 + $0x3f8] sm:$0xff]
        %v767 = vld [vmem:[%s506 + $0x400] sm:$0xff]
        %v768 = vld [vmem:[%s506 + $0x408] sm:$0xff]
        %v769 = vld [vmem:[%s506 + $0x410] sm:$0xff]
        %v770 = vld [vmem:[%s506 + $0x418] sm:$0xff]
        %v771 = vld [vmem:[%s506 + $0x420] sm:$0xff]
        %v772 = vld [vmem:[%s506 + $0x428] sm:$0xff]
        %v773 = vld [vmem:[%s506 + $0x430] sm:$0xff]
        %v774 = vld [vmem:[%s506 + $0x438] sm:$0xff]
        %v775 = vld [vmem:[%s506 + $0x440] sm:$0xff]
        %v776 = vld [vmem:[%s506 + $0x448] sm:$0xff]
        %v777 = vld [vmem:[%s506 + $0x450] sm:$0xff]
        %v778 = vld [vmem:[%s506 + $0x458] sm:$0xff]
        %v779 = vld [vmem:[%s506 + $0x460] sm:$0xff]
        %v780 = vld [vmem:[%s506 + $0x468] sm:$0xff]
        %v781 = vld [vmem:[%s506 + $0x470] sm:$0xff]
        %v782 = vld [vmem:[%s506 + $0x478] sm:$0xff]
        %v783 = vld [vmem:[%s506 + $0x480] sm:$0xff]
        %v784 = vld [vmem:[%s506 + $0x488] sm:$0xff]
        %v785 = vld [vmem:[%s506 + $0x490] sm:$0xff]
        %v786 = vld [vmem:[%s506 + $0x498] sm:$0xff]
        %v787 = vld [vmem:[%s506 + $0x4a0] sm:$0xff]
        %v788 = vld [vmem:[%s506 + $0x4a8] sm:$0xff]
        %v789 = vld [vmem:[%s506 + $0x4b0] sm:$0xff]
        %v790 = vld [vmem:[%s506 + $0x4b8] sm:$0xff]
        %v791 = vld [vmem:[%s506 + $0x4c0] sm:$0xff]
        %v792 = vld [vmem:[%s506 + $0x4c8] sm:$0xff]
        %v793 = vld [vmem:[%s506 + $0x4d0] sm:$0xff]
        %v794 = vld [vmem:[%s506 + $0x4d8] sm:$0xff]
        %v795 = vld [vmem:[%s506 + $0x4e0] sm:$0xff]
        %v796 = vld [vmem:[%s506 + $0x4e8] sm:$0xff]
        %v797 = vld [vmem:[%s506 + $0x4f0] sm:$0xff]
        %v798 = vld [vmem:[%s506 + $0x4f8] sm:$0xff]
        %v799 = vld [vmem:[%s506 + $0x500] sm:$0xff]
        %v800 = vld [vmem:[%s506 + $0x508] sm:$0xff]
        %v801 = vld [vmem:[%s506 + $0x510] sm:$0xff]
        %v802 = vld [vmem:[%s506 + $0x518] sm:$0xff]
        %v803 = vld [vmem:[%s506 + $0x520] sm:$0xff]
        %v804 = vld [vmem:[%s506 + $0x528] sm:$0xff]
        %v805 = vld [vmem:[%s506 + $0x530] sm:$0xff]
        %v806 = vld [vmem:[%s506 + $0x538] sm:$0xff]
        %v807 = vld [vmem:[%s506 + $0x540] sm:$0xff]
        %v808 = vld [vmem:[%s506 + $0x548] sm:$0xff]
        %v809 = vld [vmem:[%s506 + $0x550] sm:$0xff]
        %v810 = vld [vmem:[%s506 + $0x558] sm:$0xff]
        %v811 = vld [vmem:[%s506 + $0x560] sm:$0xff]
        %v812 = vld [vmem:[%s506 + $0x568] sm:$0xff]
        %v813 = vld [vmem:[%s506 + $0x570] sm:$0xff]
        %v814 = vld [vmem:[%s506 + $0x578] sm:$0xff]
        %v815 = vld [vmem:[%s506 + $0x580] sm:$0xff]
        %v816 = vld [vmem:[%s506 + $0x588] sm:$0xff]
        %v817 = vld [vmem:[%s506 + $0x590] sm:$0xff]
        %v818 = vld [vmem:[%s506 + $0x598] sm:$0xff]
        %v819 = vld [vmem:[%s506 + $0x5a0] sm:$0xff]
        %v820 = vld [vmem:[%s506 + $0x5a8] sm:$0xff]
        %v821 = vld [vmem:[%s506 + $0x5b0] sm:$0xff]
        %v822 = vld [vmem:[%s506 + $0x5b8] sm:$0xff]
        %v823 = vld [vmem:[%s506 + $0x5c0] sm:$0xff]
        %v824 = vld [vmem:[%s506 + $0x5c8] sm:$0xff]
        %v825 = vld [vmem:[%s506 + $0x5d0] sm:$0xff]
        %v826 = vld [vmem:[%s506 + $0x5d8] sm:$0xff]
        %v827 = vld [vmem:[%s506 + $0x5e0] sm:$0xff]
        %v828 = vld [vmem:[%s506 + $0x5e8] sm:$0xff]
        %v829 = vld [vmem:[%s506 + $0x5f0] sm:$0xff]
        %v830 = vld [vmem:[%s506 + $0x5f8] sm:$0xff]
        %v831 = vld [vmem:[%s506 + $0x600] sm:$0xff]
        %v832 = vld [vmem:[%s506 + $0x608] sm:$0xff]
        %v833 = vld [vmem:[%s506 + $0x610] sm:$0xff]
        %v834 = vld [vmem:[%s506 + $0x618] sm:$0xff]
        %v835 = vld [vmem:[%s506 + $0x620] sm:$0xff]
        %v836 = vld [vmem:[%s506 + $0x628] sm:$0xff]
        %v837 = vld [vmem:[%s506 + $0x630] sm:$0xff]
        %v838 = vld [vmem:[%s506 + $0x638] sm:$0xff]
        %v839 = vld [vmem:[%s506 + $0x640] sm:$0xff]
        %v840 = vld [vmem:[%s506 + $0x648] sm:$0xff]
        %v841 = vld [vmem:[%s506 + $0x650] sm:$0xff]
        %v842 = vld [vmem:[%s506 + $0x658] sm:$0xff]
        %v843 = vld [vmem:[%s506 + $0x660] sm:$0xff]
        %v844 = vld [vmem:[%s506 + $0x668] sm:$0xff]
        %v845 = vld [vmem:[%s506 + $0x670] sm:$0xff]
        %v846 = vld [vmem:[%s506 + $0x678] sm:$0xff]
        %v847 = vld [vmem:[%s506 + $0x680] sm:$0xff]
        %v848 = vld [vmem:[%s506 + $0x688] sm:$0xff]
        %v849 = vld [vmem:[%s506 + $0x690] sm:$0xff]
        %v850 = vld [vmem:[%s506 + $0x698] sm:$0xff]
        %v851 = vld [vmem:[%s506 + $0x6a0] sm:$0xff]
        %v852 = vld [vmem:[%s506 + $0x6a8] sm:$0xff]
        %v853 = vld [vmem:[%s506 + $0x6b0] sm:$0xff]
        %v854 = vld [vmem:[%s506 + $0x6b8] sm:$0xff]
        %v855 = vld [vmem:[%s506 + $0x6c0] sm:$0xff]
        %v856 = vld [vmem:[%s506 + $0x6c8] sm:$0xff]
        %v857 = vld [vmem:[%s506 + $0x6d0] sm:$0xff]
        %v858 = vld [vmem:[%s506 + $0x6d8] sm:$0xff]
        %v859 = vld [vmem:[%s506 + $0x6e0] sm:$0xff]
        %v860 = vld [vmem:[%s506 + $0x6e8] sm:$0xff]
        %v861 = vld [vmem:[%s506 + $0x6f0] sm:$0xff]
        %v862 = vld [vmem:[%s506 + $0x6f8] sm:$0xff]
        %v863 = vld [vmem:[%s506 + $0x700] sm:$0xff]
        %v864 = vld [vmem:[%s506 + $0x708] sm:$0xff]
        %v865 = vld [vmem:[%s506 + $0x710] sm:$0xff]
        %v866 = vld [vmem:[%s506 + $0x718] sm:$0xff]
        %v867 = vld [vmem:[%s506 + $0x720] sm:$0xff]
        %v868 = vld [vmem:[%s506 + $0x728] sm:$0xff]
        %v869 = vld [vmem:[%s506 + $0x730] sm:$0xff]
        %v870 = vld [vmem:[%s506 + $0x738] sm:$0xff]
        %v871 = vld [vmem:[%s506 + $0x740] sm:$0xff]
        %v872 = vld [vmem:[%s506 + $0x748] sm:$0xff]
        %v873 = vld [vmem:[%s506 + $0x750] sm:$0xff]
        %v874 = vld [vmem:[%s506 + $0x758] sm:$0xff]
        %v875 = vld [vmem:[%s506 + $0x760] sm:$0xff]
        %v876 = vld [vmem:[%s506 + $0x768] sm:$0xff]
        %v877 = vld [vmem:[%s506 + $0x770] sm:$0xff]
        %v878 = vld [vmem:[%s506 + $0x778] sm:$0xff]
        %v879 = vld [vmem:[%s506 + $0x780] sm:$0xff]
        %v880 = vld [vmem:[%s506 + $0x788] sm:$0xff]
        %v881 = vld [vmem:[%s506 + $0x790] sm:$0xff]
        %v882 = vld [vmem:[%s506 + $0x798] sm:$0xff]
        %v883 = vld [vmem:[%s506 + $0x7a0] sm:$0xff]
        %v884 = vld [vmem:[%s506 + $0x7a8] sm:$0xff]
        %v885 = vld [vmem:[%s506 + $0x7b0] sm:$0xff]
        %v886 = vld [vmem:[%s506 + $0x7b8] sm:$0xff]
        %v887 = vld [vmem:[%s506 + $0x7c0] sm:$0xff]
        %v888 = vld [vmem:[%s506 + $0x7c8] sm:$0xff]
        %v889 = vld [vmem:[%s506 + $0x7d0] sm:$0xff]
        %v890 = vld [vmem:[%s506 + $0x7d8] sm:$0xff]
        %v891 = vld [vmem:[%s506 + $0x7e0] sm:$0xff]
        %v892 = vld [vmem:[%s506 + $0x7e8] sm:$0xff]
        %v893 = vld [vmem:[%s506 + $0x7f0] sm:$0xff]
        %v894 = vld [vmem:[%s506 + $0x7f8] sm:$0xff]
        %v895 = vld [vmem:[%s506 + $0x800] sm:$0xff]
        %v896 = vld [vmem:[%s506 + $0x808] sm:$0xff]
        %v897 = vld [vmem:[%s506 + $0x810] sm:$0xff]
        %v898 = vld [vmem:[%s506 + $0x818] sm:$0xff]
        %v899 = vld [vmem:[%s506 + $0x820] sm:$0xff]
        %v900 = vld [vmem:[%s506 + $0x828] sm:$0xff]
        %v901 = vld [vmem:[%s506 + $0x830] sm:$0xff]
        %v902 = vld [vmem:[%s506 + $0x838] sm:$0xff]
        %v903 = vld [vmem:[%s506 + $0x840] sm:$0xff]
        %v904 = vld [vmem:[%s506 + $0x848] sm:$0xff]
        %v905 = vld [vmem:[%s506 + $0x850] sm:$0xff]
        %v906 = vld [vmem:[%s506 + $0x858] sm:$0xff]
        %v907 = vld [vmem:[%s506 + $0x860] sm:$0xff]
        %v908 = vld [vmem:[%s506 + $0x868] sm:$0xff]
        %v909 = vld [vmem:[%s506 + $0x870] sm:$0xff]
        %v910 = vld [vmem:[%s506 + $0x878] sm:$0xff]
        %v911 = vld [vmem:[%s506 + $0x880] sm:$0xff]
        %v912 = vld [vmem:[%s506 + $0x888] sm:$0xff]
        %v913 = vld [vmem:[%s506 + $0x890] sm:$0xff]
        %v914 = vld [vmem:[%s506 + $0x898] sm:$0xff]
        %v915 = vld [vmem:[%s506 + $0x8a0] sm:$0xff]
        %v916 = vld [vmem:[%s506 + $0x8a8] sm:$0xff]
        %v917 = vld [vmem:[%s506 + $0x8b0] sm:$0xff]
        %v918 = vld [vmem:[%s506 + $0x8b8] sm:$0xff]
        %v919 = vld [vmem:[%s506 + $0x8c0] sm:$0xff]
        %v920 = vld [vmem:[%s506 + $0x8c8] sm:$0xff]
        %v921 = vld [vmem:[%s506 + $0x8d0] sm:$0xff]
        %v922 = vld [vmem:[%s506 + $0x8d8] sm:$0xff]
        %v923 = vld [vmem:[%s506 + $0x8e0] sm:$0xff]
        %v924 = vld [vmem:[%s506 + $0x8e8] sm:$0xff]
        %v925 = vld [vmem:[%s506 + $0x8f0] sm:$0xff]
        %v926 = vld [vmem:[%s506 + $0x8f8] sm:$0xff]
        %v927 = vld [vmem:[%s506 + $0x900] sm:$0xff]
        %v928 = vld [vmem:[%s506 + $0x908] sm:$0xff]
        %v929 = vld [vmem:[%s506 + $0x910] sm:$0xff]
        %v930 = vld [vmem:[%s506 + $0x918] sm:$0xff]
        %v931 = vld [vmem:[%s506 + $0x920] sm:$0xff]
        %v932 = vld [vmem:[%s506 + $0x928] sm:$0xff]
        %v933 = vld [vmem:[%s506 + $0x930] sm:$0xff]
        %v934 = vld [vmem:[%s506 + $0x938] sm:$0xff]
        %v935 = vld [vmem:[%s506 + $0x940] sm:$0xff]
        %v936 = vld [vmem:[%s506 + $0x948] sm:$0xff]
        %v937 = vld [vmem:[%s506 + $0x950] sm:$0xff]
        %v938 = vld [vmem:[%s506 + $0x958] sm:$0xff]
        %v939 = vld [vmem:[%s506 + $0x960] sm:$0xff]
        %v940 = vld [vmem:[%s506 + $0x968] sm:$0xff]
        %v941 = vld [vmem:[%s506 + $0x970] sm:$0xff]
        %v942 = vld [vmem:[%s506 + $0x978] sm:$0xff]
        %v943 = vld [vmem:[%s506 + $0x980] sm:$0xff]
        %v944 = vld [vmem:[%s506 + $0x988] sm:$0xff]
        %v945 = vld [vmem:[%s506 + $0x990] sm:$0xff]
        %v946 = vld [vmem:[%s506 + $0x998] sm:$0xff]
        %v947 = vld [vmem:[%s506 + $0x9a0] sm:$0xff]
        %v948 = vld [vmem:[%s506 + $0x9a8] sm:$0xff]
        %v949 = vld [vmem:[%s506 + $0x9b0] sm:$0xff]
        %v950 = vld [vmem:[%s506 + $0x9b8] sm:$0xff]
        %v951 = vld [vmem:[%s506 + $0x9c0] sm:$0xff]
        %v952 = vld [vmem:[%s506 + $0x9c8] sm:$0xff]
        %v953 = vld [vmem:[%s506 + $0x9d0] sm:$0xff]
        %v954 = vld [vmem:[%s506 + $0x9d8] sm:$0xff]
        %v955 = vld [vmem:[%s506 + $0x9e0] sm:$0xff]
        %v956 = vld [vmem:[%s506 + $0x9e8] sm:$0xff]
        %v957 = vld [vmem:[%s506 + $0x9f0] sm:$0xff]
        %v958 = vld [vmem:[%s506 + $0x9f8] sm:$0xff]
        %v959 = vld [vmem:[%s506 + $0xa00] sm:$0xff]
        %v960 = vld [vmem:[%s506 + $0xa08] sm:$0xff]
        %v961 = vld [vmem:[%s506 + $0xa10] sm:$0xff]
        %v962 = vld [vmem:[%s506 + $0xa18] sm:$0xff]
        %v963 = vld [vmem:[#allocation9] sm:$0xff]
        %v964 = vld [vmem:[#allocation9 + $0x8] sm:$0xff]
        %v965 = vld [vmem:[#allocation9 + $0x10] sm:$0xff]
        %v966 = vld [vmem:[#allocation9 + $0x18] sm:$0xff]
        %v967 = vld [vmem:[#allocation9 + $0x20] sm:$0xff]
        %v968 = vld [vmem:[#allocation9 + $0x28] sm:$0xff]
        %v969 = vld [vmem:[#allocation9 + $0x30] sm:$0xff]
        %v970 = vld [vmem:[#allocation9 + $0x38] sm:$0xff]
        %v971 = vld [vmem:[#allocation9 + $0x40] sm:$0xff]
        %v972 = vld [vmem:[#allocation9 + $0x48] sm:$0xff]
        %v973 = vld [vmem:[#allocation9 + $0x50] sm:$0xff]
        %v974 = vld [vmem:[#allocation9 + $0x58] sm:$0xff]
        %v975 = vld [vmem:[#allocation9 + $0x60] sm:$0xff]
        %v976 = vld [vmem:[#allocation9 + $0x68] sm:$0xff]
        %v977 = vld [vmem:[#allocation9 + $0x70] sm:$0xff]
        %v978 = vld [vmem:[#allocation9 + $0x78] sm:$0xff]
        %v979 = vld [vmem:[#allocation9 + $0x80] sm:$0xff]
        %v980 = vld [vmem:[#allocation9 + $0x88] sm:$0xff]
        %v981 = vld [vmem:[#allocation9 + $0x90] sm:$0xff]
        %v982 = vld [vmem:[#allocation9 + $0x98] sm:$0xff]
        %v983 = vld [vmem:[#allocation9 + $0xa0] sm:$0xff]
        %v984 = vld [vmem:[#allocation9 + $0xa8] sm:$0xff]
        %v985 = vld [vmem:[#allocation9 + $0xb0] sm:$0xff]
        %v986 = vld [vmem:[#allocation9 + $0xb8] sm:$0xff]
        %v987 = vld [vmem:[#allocation9 + $0xc0] sm:$0xff]
        %v988 = vld [vmem:[#allocation9 + $0xc8] sm:$0xff]
        %v989 = vld [vmem:[#allocation9 + $0xd0] sm:$0xff]
        %v990 = vld [vmem:[#allocation9 + $0xd8] sm:$0xff]
        %v991 = vld [vmem:[#allocation9 + $0xe0] sm:$0xff]
        %v992 = vld [vmem:[#allocation9 + $0xe8] sm:$0xff]
        %v993 = vld [vmem:[#allocation9 + $0xf0] sm:$0xff]
        %v994 = vld [vmem:[#allocation9 + $0xf8] sm:$0xff]
        %v995 = vld [vmem:[#allocation9 + $0x100] sm:$0xff]
        %v996 = vld [vmem:[#allocation9 + $0x108] sm:$0xff]
        %v997 = vld [vmem:[#allocation9 + $0x110] sm:$0xff]
        %v998 = vld [vmem:[#allocation9 + $0x118] sm:$0xff]
        %v999 = vld [vmem:[#allocation9 + $0x120] sm:$0xff]
        %v1000 = vld [vmem:[#allocation9 + $0x128] sm:$0xff]
        %v1001 = vld [vmem:[#allocation9 + $0x130] sm:$0xff]
        %v1002 = vld [vmem:[#allocation9 + $0x138] sm:$0xff]
        %v1003 = vld [vmem:[#allocation9 + $0x140] sm:$0xff]
        %v1004 = vld [vmem:[#allocation9 + $0x148] sm:$0xff]
        %v1005 = vld [vmem:[#allocation9 + $0x150] sm:$0xff]
        %v1006 = vld [vmem:[#allocation9 + $0x158] sm:$0xff]
        %v1007 = vld [vmem:[#allocation9 + $0x160] sm:$0xff]
        %v1008 = vld [vmem:[#allocation9 + $0x168] sm:$0xff]
        %v1009 = vld [vmem:[#allocation9 + $0x170] sm:$0xff]
        %v1010 = vld [vmem:[#allocation9 + $0x178] sm:$0xff]
        %v1011 = vld [vmem:[#allocation9 + $0x180] sm:$0xff]
        %v1012 = vld [vmem:[#allocation9 + $0x188] sm:$0xff]
        %v1013 = vld [vmem:[#allocation9 + $0x190] sm:$0xff]
        %v1014 = vld [vmem:[#allocation9 + $0x198] sm:$0xff]
        %v1015 = vld [vmem:[#allocation9 + $0x1a0] sm:$0xff]
        %v1016 = vld [vmem:[#allocation9 + $0x1a8] sm:$0xff]
        %v1017 = vld [vmem:[#allocation9 + $0x1b0] sm:$0xff]
        %v1018 = vld [vmem:[#allocation9 + $0x1b8] sm:$0xff]
        %v1019 = vld [vmem:[#allocation9 + $0x1c0] sm:$0xff]
        %v1020 = vld [vmem:[#allocation9 + $0x1c8] sm:$0xff]
        %v1021 = vld [vmem:[#allocation9 + $0x1d0] sm:$0xff]
        %v1022 = vld [vmem:[#allocation9 + $0x1d8] sm:$0xff]
        %v1023 = vld [vmem:[#allocation9 + $0x1e0] sm:$0xff]
        %v1024 = vld [vmem:[#allocation9 + $0x1e8] sm:$0xff]
        %v1025 = vld [vmem:[#allocation9 + $0x1f0] sm:$0xff]
        %v1026 = vld [vmem:[#allocation9 + $0x1f8] sm:$0xff]
        %v1027 = vld [vmem:[#allocation9 + $0x200] sm:$0xff]
        %v1028 = vld [vmem:[#allocation9 + $0x208] sm:$0xff]
        %v1029 = vld [vmem:[#allocation9 + $0x210] sm:$0xff]
        %v1030 = vld [vmem:[#allocation9 + $0x218] sm:$0xff]
        %v1031 = vld [vmem:[#allocation9 + $0x220] sm:$0xff]
        %v1032 = vld [vmem:[#allocation9 + $0x228] sm:$0xff]
        %v1033 = vld [vmem:[#allocation9 + $0x230] sm:$0xff]
        %v1034 = vld [vmem:[#allocation9 + $0x238] sm:$0xff]
        %v1035 = vld [vmem:[#allocation9 + $0x240] sm:$0xff]
        %v1036 = vld [vmem:[#allocation9 + $0x248] sm:$0xff]
        %v1037 = vld [vmem:[#allocation9 + $0x250] sm:$0xff]
        %v1038 = vld [vmem:[#allocation9 + $0x258] sm:$0xff]
        %v1039 = vld [vmem:[#allocation9 + $0x260] sm:$0xff]
        %v1040 = vld [vmem:[#allocation9 + $0x268] sm:$0xff]
        %v1041 = vld [vmem:[#allocation9 + $0x270] sm:$0xff]
        %v1042 = vld [vmem:[#allocation9 + $0x278] sm:$0xff]
        %v1043 = vld [vmem:[#allocation9 + $0x280] sm:$0xff]
        %v1044 = vld [vmem:[#allocation9 + $0x288] sm:$0xff]
        %v1045 = vld [vmem:[#allocation9 + $0x290] sm:$0xff]
        %v1046 = vld [vmem:[#allocation9 + $0x298] sm:$0xff]
        %v1047 = vld [vmem:[#allocation9 + $0x2a0] sm:$0xff]
        %v1048 = vld [vmem:[#allocation9 + $0x2a8] sm:$0xff]
        %v1049 = vld [vmem:[#allocation9 + $0x2b0] sm:$0xff]
        %v1050 = vld [vmem:[#allocation9 + $0x2b8] sm:$0xff]
        %v1051 = vld [vmem:[#allocation9 + $0x2c0] sm:$0xff]
        %v1052 = vld [vmem:[#allocation9 + $0x2c8] sm:$0xff]
        %v1053 = vld [vmem:[#allocation9 + $0x2d0] sm:$0xff]
        %v1054 = vld [vmem:[#allocation9 + $0x2d8] sm:$0xff]
        %v1055 = vld [vmem:[#allocation9 + $0x2e0] sm:$0xff]
        %v1056 = vld [vmem:[#allocation9 + $0x2e8] sm:$0xff]
        %v1057 = vld [vmem:[#allocation9 + $0x2f0] sm:$0xff]
        %v1058 = vld [vmem:[#allocation9 + $0x2f8] sm:$0xff]
        %v1059 = vld [vmem:[#allocation9 + $0x300] sm:$0xff]
        %v1060 = vld [vmem:[#allocation9 + $0x308] sm:$0xff]
        %v1061 = vld [vmem:[#allocation9 + $0x310] sm:$0xff]
        %v1062 = vld [vmem:[#allocation9 + $0x318] sm:$0xff]
        %v1063 = vld [vmem:[#allocation9 + $0x320] sm:$0xff]
        %v1064 = vld [vmem:[#allocation9 + $0x328] sm:$0xff]
        %v1065 = vld [vmem:[#allocation9 + $0x330] sm:$0xff]
        %v1066 = vld [vmem:[#allocation9 + $0x338] sm:$0xff]
        %v1067 = vld [vmem:[#allocation9 + $0x340] sm:$0xff]
        %v1068 = vld [vmem:[#allocation9 + $0x348] sm:$0xff]
        %v1069 = vld [vmem:[#allocation9 + $0x350] sm:$0xff]
        %v1070 = vld [vmem:[#allocation9 + $0x358] sm:$0xff]
        %v1071 = vld [vmem:[#allocation9 + $0x360] sm:$0xff]
        %v1072 = vld [vmem:[#allocation9 + $0x368] sm:$0xff]
        %v1073 = vld [vmem:[#allocation9 + $0x370] sm:$0xff]
        %v1074 = vld [vmem:[#allocation9 + $0x378] sm:$0xff]
        %v1075 = vld [vmem:[#allocation9 + $0x380] sm:$0xff]
        %v1076 = vld [vmem:[#allocation9 + $0x388] sm:$0xff]
        %v1077 = vld [vmem:[#allocation9 + $0x390] sm:$0xff]
        %v1078 = vld [vmem:[#allocation9 + $0x398] sm:$0xff]
        %v1079 = vld [vmem:[#allocation9 + $0x3a0] sm:$0xff]
        %v1080 = vld [vmem:[#allocation9 + $0x3a8] sm:$0xff]
        %v1081 = vld [vmem:[#allocation9 + $0x3b0] sm:$0xff]
        %v1082 = vld [vmem:[#allocation9 + $0x3b8] sm:$0xff]
        %v1083 = vld [vmem:[#allocation9 + $0x3c0] sm:$0xff]
        %v1084 = vld [vmem:[#allocation9 + $0x3c8] sm:$0xff]
        %v1085 = vld [vmem:[#allocation9 + $0x3d0] sm:$0xff]
        %v1086 = vld [vmem:[#allocation9 + $0x3d8] sm:$0xff]
        %v1087 = vld [vmem:[#allocation9 + $0x3e0] sm:$0xff]
        %v1088 = vld [vmem:[#allocation9 + $0x3e8] sm:$0xff]
        %v1089 = vld [vmem:[#allocation9 + $0x3f0] sm:$0xff]
        %v1090 = vld [vmem:[#allocation9 + $0x3f8] sm:$0xff]
        %v1091 = vld [vmem:[#allocation9 + $0x400] sm:$0xff]
        %v1092 = vld [vmem:[#allocation9 + $0x408] sm:$0xff]
        %v1093 = vld [vmem:[#allocation9 + $0x410] sm:$0xff]
        %v1094 = vld [vmem:[#allocation9 + $0x418] sm:$0xff]
        %v1095 = vld [vmem:[#allocation9 + $0x420] sm:$0xff]
        %v1096 = vld [vmem:[#allocation9 + $0x428] sm:$0xff]
        %v1097 = vld [vmem:[#allocation9 + $0x430] sm:$0xff]
        %v1098 = vld [vmem:[#allocation9 + $0x438] sm:$0xff]
        %v1099 = vld [vmem:[#allocation9 + $0x440] sm:$0xff]
        %v1100 = vld [vmem:[#allocation9 + $0x448] sm:$0xff]
        %v1101 = vld [vmem:[#allocation9 + $0x450] sm:$0xff]
        %v1102 = vld [vmem:[#allocation9 + $0x458] sm:$0xff]
        %v1103 = vld [vmem:[#allocation9 + $0x460] sm:$0xff]
        %v1104 = vld [vmem:[#allocation9 + $0x468] sm:$0xff]
        %v1105 = vld [vmem:[#allocation9 + $0x470] sm:$0xff]
        %v1106 = vld [vmem:[#allocation9 + $0x478] sm:$0xff]
        %v1107 = vld [vmem:[#allocation10] sm:$0x1]
        %v1109 = vlaneseq
        %v1110 = vshrl.u32 %v1109, 7
        %v1111 = vsub.s32 0, %v1110
        %v1112 = vrot.slane %v1107, %v1111
        %1114 = vmatprep.subr.mxu0 0.0
        %1115 = vmatpush1.msra.mxu0 %v978
        %1116 = vmatprep.subr.mxu0 0.0
        %1117 = vmatpush1.msra.mxu0 %v977
        %1118 = vmatprep.subr.mxu0 0.0
        %1119 = vmatpush1.msra.mxu0 %v976
        %1120 = vmatprep.subr.mxu0 0.0
        %1121 = vmatpush1.msra.mxu0 %v975
        %1122 = vmatprep.subr.mxu0 0.0
        %1123 = vmatpush1.msra.mxu0 %v974
        %1124 = vmatprep.subr.mxu0 0.0
        %1125 = vmatpush1.msra.mxu0 %v973
        %1126 = vmatprep.subr.mxu0 0.0
        %1127 = vmatpush1.msra.mxu0 %v972
        %1128 = vmatprep.subr.mxu0 0.0
        %1129 = vmatpush1.msra.mxu0 %v971
        %1130 = vmatprep.subr.mxu0 0.0
        %1131 = vmatpush1.msra.mxu0 %v970
        %1132 = vmatprep.subr.mxu0 0.0
        %1133 = vmatpush1.msra.mxu0 %v969
        %1134 = vmatprep.subr.mxu0 0.0
        %1135 = vmatpush1.msra.mxu0 %v968
        %1136 = vmatprep.subr.mxu0 0.0
        %1137 = vmatpush1.msra.mxu0 %v967
        %1138 = vmatprep.subr.mxu0 0.0
        %1139 = vmatpush1.msra.mxu0 %v966
        %1140 = vmatprep.subr.mxu0 0.0
        %1141 = vmatpush1.msra.mxu0 %v965
        %1142 = vmatprep.subr.mxu0 0.0
        %1143 = vmatpush1.msra.mxu0 %v964
        %1144 = vmatprep.subr.mxu0 0.0
        %1145 = vmatpush1.msra.mxu0 %v963
        %1146 = vmatprep.subr.mxu0 0.0
        %1147 = vmatpush2.msra.mxu0 %v994
        %1148 = vmatprep.subr.mxu0 0.0
        %1149 = vmatpush2.msra.mxu0 %v993
        %1150 = vmatprep.subr.mxu0 0.0
        %1151 = vmatpush2.msra.mxu0 %v992
        %1152 = vmatprep.subr.mxu0 0.0
        %1153 = vmatpush2.msra.mxu0 %v991
        %1154 = vmatprep.subr.mxu0 0.0
        %1155 = vmatpush2.msra.mxu0 %v990
        %1156 = vmatprep.subr.mxu0 0.0
        %1157 = vmatpush2.msra.mxu0 %v989
        %1158 = vmatprep.subr.mxu0 0.0
        %1159 = vmatpush2.msra.mxu0 %v988
        %1160 = vmatprep.subr.mxu0 0.0
        %1161 = vmatpush2.msra.mxu0 %v987
        %1162 = vmatprep.subr.mxu0 0.0
        %1163 = vmatpush2.msra.mxu0 %v986
        %1164 = vmatprep.subr.mxu0 0.0
        %1165 = vmatpush2.msra.mxu0 %v985
        %1166 = vmatprep.subr.mxu0 0.0
        %1167 = vmatpush2.msra.mxu0 %v984
        %1168 = vmatprep.subr.mxu0 0.0
        %1169 = vmatpush2.msra.mxu0 %v983
        %1170 = vmatprep.subr.mxu0 0.0
        %1171 = vmatpush2.msra.mxu0 %v982
        %1172 = vmatprep.subr.mxu0 0.0
        %1173 = vmatpush2.msra.mxu0 %v981
        %1174 = vmatprep.subr.mxu0 0.0
        %1175 = vmatpush2.msra.mxu0 %v980
        %1176 = vmatprep.subr.mxu0 0.0
        %1177 = vmatpush2.msra.mxu0 %v979
        %1178 = vmatprep.mubr.f32.mxu0 %v640
        %1179 = vmatmul.mubr.f32.gmra.mxu0 %v639
        %v1180 = vpop.f32.mrf.mxu0
        %v1181 = vadd.f32 %v1112, %v1180
        %v1182 = vpop.f32.mrf.mxu0
        %1183 = vmatprep.mubr.f32.mxu0 %v649
        %1184 = vmatmul.mubr.f32.gmra.mxu0 %v648
        %v1185 = vpop.f32.mrf.mxu0
        %v1186 = vadd.f32 %v1112, %v1185
        %v1187 = vpop.f32.mrf.mxu0
        %1188 = vmatprep.mubr.f32.mxu0 %v658
        %1189 = vmatmul.mubr.f32.gmra.mxu0 %v657
        %v1190 = vpop.f32.mrf.mxu0
        %v1191 = vadd.f32 %v1112, %v1190
        %v1192 = vpop.f32.mrf.mxu0
        %1193 = vmatprep.mubr.f32.mxu0 %v667
        %1194 = vmatmul.mubr.f32.gmra.mxu0 %v666
        %v1195 = vpop.f32.mrf.mxu0
        %v1196 = vadd.f32 %v1112, %v1195
        %v1197 = vpop.f32.mrf.mxu0
        %1198 = vmatprep.mubr.f32.mxu0 %v676
        %1199 = vmatmul.mubr.f32.gmra.mxu0 %v675
        %v1200 = vpop.f32.mrf.mxu0
        %v1201 = vadd.f32 %v1112, %v1200
        %v1202 = vpop.f32.mrf.mxu0
        %1203 = vmatprep.mubr.f32.mxu0 %v685
        %1204 = vmatmul.mubr.f32.gmra.mxu0 %v684
        %v1205 = vpop.f32.mrf.mxu0
        %v1206 = vadd.f32 %v1112, %v1205
        %v1207 = vpop.f32.mrf.mxu0
        %1208 = vmatprep.mubr.f32.mxu0 %v694
        %1209 = vmatmul.mubr.f32.gmra.mxu0 %v693
        %v1210 = vpop.f32.mrf.mxu0
        %v1211 = vadd.f32 %v1112, %v1210
        %v1212 = vpop.f32.mrf.mxu0
        %1213 = vmatprep.mubr.f32.mxu0 %v703
        %1214 = vmatmul.mubr.f32.gmra.mxu0 %v702
        %v1215 = vpop.f32.mrf.mxu0
        %v1216 = vadd.f32 %v1112, %v1215
        %v1217 = vpop.f32.mrf.mxu0
        %1218 = vmatprep.mubr.f32.mxu0 %v712
        %1219 = vmatmul.mubr.f32.gmra.mxu0 %v711
        %v1220 = vpop.f32.mrf.mxu0
        %v1221 = vadd.f32 %v1112, %v1220
        %v1222 = vpop.f32.mrf.mxu0
        %1223 = vmatprep.mubr.f32.mxu0 %v721
        %1224 = vmatmul.mubr.f32.gmra.mxu0 %v720
        %v1225 = vpop.f32.mrf.mxu0
        %v1226 = vadd.f32 %v1112, %v1225
        %v1227 = vpop.f32.mrf.mxu0
        %1228 = vmatprep.mubr.f32.mxu0 %v730
        %1229 = vmatmul.mubr.f32.gmra.mxu0 %v729
        %v1230 = vpop.f32.mrf.mxu0
        %v1231 = vadd.f32 %v1112, %v1230
        %v1232 = vpop.f32.mrf.mxu0
        %1233 = vmatprep.mubr.f32.mxu0 %v739
        %1234 = vmatmul.mubr.f32.gmra.mxu0 %v738
        %v1235 = vpop.f32.mrf.mxu0
        %v1236 = vadd.f32 %v1112, %v1235
        %v1237 = vpop.f32.mrf.mxu0
        %1238 = vmatprep.mubr.f32.mxu0 %v748
        %1239 = vmatmul.mubr.f32.gmra.mxu0 %v747
        %v1240 = vpop.f32.mrf.mxu0
        %v1241 = vadd.f32 %v1112, %v1240
        %v1242 = vpop.f32.mrf.mxu0
        %1243 = vmatprep.mubr.f32.mxu0 %v757
        %1244 = vmatmul.mubr.f32.gmra.mxu0 %v756
        %v1245 = vpop.f32.mrf.mxu0
        %v1246 = vadd.f32 %v1112, %v1245
        %v1247 = vpop.f32.mrf.mxu0
        %1248 = vmatprep.mubr.f32.mxu0 %v766
        %1249 = vmatmul.mubr.f32.gmra.mxu0 %v765
        %v1250 = vpop.f32.mrf.mxu0
        %v1251 = vadd.f32 %v1112, %v1250
        %v1252 = vpop.f32.mrf.mxu0
        %1253 = vmatprep.mubr.f32.mxu0 %v775
        %1254 = vmatmul.mubr.f32.gmra.mxu0 %v774
        %v1255 = vpop.f32.mrf.mxu0
        %v1256 = vadd.f32 %v1112, %v1255
        %v1257 = vpop.f32.mrf.mxu0
        %1258 = vmatprep.mubr.f32.mxu0 %v784
        %1259 = vmatmul.mubr.f32.gmra.mxu0 %v783
        %v1260 = vpop.f32.mrf.mxu0
        %v1261 = vadd.f32 %v1112, %v1260
        %v1262 = vpop.f32.mrf.mxu0
        %1263 = vmatprep.mubr.f32.mxu0 %v793
        %1264 = vmatmul.mubr.f32.gmra.mxu0 %v792
        %v1265 = vpop.f32.mrf.mxu0
        %v1266 = vadd.f32 %v1112, %v1265
        %v1267 = vpop.f32.mrf.mxu0
        %1268 = vmatprep.mubr.f32.mxu0 %v802
        %1269 = vmatmul.mubr.f32.gmra.mxu0 %v801
        %v1270 = vpop.f32.mrf.mxu0
        %v1271 = vadd.f32 %v1112, %v1270
        %v1272 = vpop.f32.mrf.mxu0
        %1273 = vmatprep.mubr.f32.mxu0 %v811
        %1274 = vmatmul.mubr.f32.gmra.mxu0 %v810
        %v1275 = vpop.f32.mrf.mxu0
        %v1276 = vadd.f32 %v1112, %v1275
        %v1277 = vpop.f32.mrf.mxu0
        %1278 = vmatprep.mubr.f32.mxu0 %v820
        %1279 = vmatmul.mubr.f32.gmra.mxu0 %v819
        %v1280 = vpop.f32.mrf.mxu0
        %v1281 = vadd.f32 %v1112, %v1280
        %v1282 = vpop.f32.mrf.mxu0
        %1283 = vmatprep.mubr.f32.mxu0 %v829
        %1284 = vmatmul.mubr.f32.gmra.mxu0 %v828
        %v1285 = vpop.f32.mrf.mxu0
        %v1286 = vadd.f32 %v1112, %v1285
        %v1287 = vpop.f32.mrf.mxu0
        %1288 = vmatprep.mubr.f32.mxu0 %v838
        %1289 = vmatmul.mubr.f32.gmra.mxu0 %v837
        %v1290 = vpop.f32.mrf.mxu0
        %v1291 = vadd.f32 %v1112, %v1290
        %v1292 = vpop.f32.mrf.mxu0
        %1293 = vmatprep.mubr.f32.mxu0 %v847
        %1294 = vmatmul.mubr.f32.gmra.mxu0 %v846
        %v1295 = vpop.f32.mrf.mxu0
        %v1296 = vadd.f32 %v1112, %v1295
        %v1297 = vpop.f32.mrf.mxu0
        %1298 = vmatprep.mubr.f32.mxu0 %v856
        %1299 = vmatmul.mubr.f32.gmra.mxu0 %v855
        %v1300 = vpop.f32.mrf.mxu0
        %v1301 = vadd.f32 %v1112, %v1300
        %v1302 = vpop.f32.mrf.mxu0
        %1303 = vmatprep.mubr.f32.mxu0 %v865
        %1304 = vmatmul.mubr.f32.gmra.mxu0 %v864
        %v1305 = vpop.f32.mrf.mxu0
        %v1306 = vadd.f32 %v1112, %v1305
        %v1307 = vpop.f32.mrf.mxu0
        %1308 = vmatprep.mubr.f32.mxu0 %v874
        %1309 = vmatmul.mubr.f32.gmra.mxu0 %v873
        %v1310 = vpop.f32.mrf.mxu0
        %v1311 = vadd.f32 %v1112, %v1310
        %v1312 = vpop.f32.mrf.mxu0
        %1313 = vmatprep.mubr.f32.mxu0 %v883
        %1314 = vmatmul.mubr.f32.gmra.mxu0 %v882
        %v1315 = vpop.f32.mrf.mxu0
        %v1316 = vadd.f32 %v1112, %v1315
        %v1317 = vpop.f32.mrf.mxu0
        %1318 = vmatprep.mubr.f32.mxu0 %v892
        %1319 = vmatmul.mubr.f32.gmra.mxu0 %v891
        %v1320 = vpop.f32.mrf.mxu0
        %v1321 = vadd.f32 %v1112, %v1320
        %v1322 = vpop.f32.mrf.mxu0
        %1323 = vmatprep.mubr.f32.mxu0 %v901
        %1324 = vmatmul.mubr.f32.gmra.mxu0 %v900
        %v1325 = vpop.f32.mrf.mxu0
        %v1326 = vadd.f32 %v1112, %v1325
        %v1327 = vpop.f32.mrf.mxu0
        %1328 = vmatprep.mubr.f32.mxu0 %v910
        %1329 = vmatmul.mubr.f32.gmra.mxu0 %v909
        %v1330 = vpop.f32.mrf.mxu0
        %v1331 = vadd.f32 %v1112, %v1330
        %v1332 = vpop.f32.mrf.mxu0
        %1333 = vmatprep.mubr.f32.mxu0 %v919
        %1334 = vmatmul.mubr.f32.gmra.mxu0 %v918
        %v1335 = vpop.f32.mrf.mxu0
        %v1336 = vadd.f32 %v1112, %v1335
        %v1337 = vpop.f32.mrf.mxu0
        %1338 = vmatprep.mubr.f32.mxu0 %v928
        %1339 = vmatmul.mubr.f32.gmra.mxu0 %v927
        %v1340 = vpop.f32.mrf.mxu0
        %v1341 = vadd.f32 %v1112, %v1340
        %v1342 = vpop.f32.mrf.mxu0
        %1343 = vmatprep.mubr.f32.mxu0 %v937
        %1344 = vmatmul.mubr.f32.gmra.mxu0 %v936
        %v1345 = vpop.f32.mrf.mxu0
        %v1346 = vadd.f32 %v1112, %v1345
        %v1347 = vpop.f32.mrf.mxu0
        %1348 = vmatprep.mubr.f32.mxu0 %v946
        %1349 = vmatmul.mubr.f32.gmra.mxu0 %v945
        %v1350 = vpop.f32.mrf.mxu0
        %v1351 = vadd.f32 %v1112, %v1350
        %v1352 = vpop.f32.mrf.mxu0
        %1353 = vmatprep.mubr.f32.mxu0 %v955
        %1354 = vmatmul.mubr.f32.gmra.mxu0 %v954
        %v1355 = vpop.f32.mrf.mxu0
        %v1356 = vadd.f32 %v1112, %v1355
        %v1357 = vpop.f32.mrf.mxu0
        %1358 = vdwg.mxu0
        %1359 = vmatprep.subr.mxu0 0.0
        %1360 = vmatpush1.msra.mxu0 %v1010
        %1361 = vmatprep.subr.mxu0 0.0
        %1362 = vmatpush1.msra.mxu0 %v1009
        %1363 = vmatprep.subr.mxu0 0.0
        %1364 = vmatpush1.msra.mxu0 %v1008
        %1365 = vmatprep.subr.mxu0 0.0
        %1366 = vmatpush1.msra.mxu0 %v1007
        %1367 = vmatprep.subr.mxu0 0.0
        %1368 = vmatpush1.msra.mxu0 %v1006
        %1369 = vmatprep.subr.mxu0 0.0
        %1370 = vmatpush1.msra.mxu0 %v1005
        %1371 = vmatprep.subr.mxu0 0.0
        %1372 = vmatpush1.msra.mxu0 %v1004
        %1373 = vmatprep.subr.mxu0 0.0
        %1374 = vmatpush1.msra.mxu0 %v1003
        %1375 = vmatprep.subr.mxu0 0.0
        %1376 = vmatpush1.msra.mxu0 %v1002
        %1377 = vmatprep.subr.mxu0 0.0
        %1378 = vmatpush1.msra.mxu0 %v1001
        %1379 = vmatprep.subr.mxu0 0.0
        %1380 = vmatpush1.msra.mxu0 %v1000
        %1381 = vmatprep.subr.mxu0 0.0
        %1382 = vmatpush1.msra.mxu0 %v999
        %1383 = vmatprep.subr.mxu0 0.0
        %1384 = vmatpush1.msra.mxu0 %v998
        %1385 = vmatprep.subr.mxu0 0.0
        %1386 = vmatpush1.msra.mxu0 %v997
        %1387 = vmatprep.subr.mxu0 0.0
        %1388 = vmatpush1.msra.mxu0 %v996
        %1389 = vmatprep.subr.mxu0 0.0
        %1390 = vmatpush1.msra.mxu0 %v995
        %1391 = vmatprep.subr.mxu0 0.0
        %1392 = vmatpush2.msra.mxu0 %v1026
        %1393 = vmatprep.subr.mxu0 0.0
        %1394 = vmatpush2.msra.mxu0 %v1025
        %1395 = vmatprep.subr.mxu0 0.0
        %1396 = vmatpush2.msra.mxu0 %v1024
        %1397 = vmatprep.subr.mxu0 0.0
        %1398 = vmatpush2.msra.mxu0 %v1023
        %1399 = vmatprep.subr.mxu0 0.0
        %1400 = vmatpush2.msra.mxu0 %v1022
        %1401 = vmatprep.subr.mxu0 0.0
        %1402 = vmatpush2.msra.mxu0 %v1021
        %1403 = vmatprep.subr.mxu0 0.0
        %1404 = vmatpush2.msra.mxu0 %v1020
        %1405 = vmatprep.subr.mxu0 0.0
        %1406 = vmatpush2.msra.mxu0 %v1019
        %1407 = vmatprep.subr.mxu0 0.0
        %1408 = vmatpush2.msra.mxu0 %v1018
        %1409 = vmatprep.subr.mxu0 0.0
        %1410 = vmatpush2.msra.mxu0 %v1017
        %1411 = vmatprep.subr.mxu0 0.0
        %1412 = vmatpush2.msra.mxu0 %v1016
        %1413 = vmatprep.subr.mxu0 0.0
        %1414 = vmatpush2.msra.mxu0 %v1015
        %1415 = vmatprep.subr.mxu0 0.0
        %1416 = vmatpush2.msra.mxu0 %v1014
        %1417 = vmatprep.subr.mxu0 0.0
        %1418 = vmatpush2.msra.mxu0 %v1013
        %1419 = vmatprep.subr.mxu0 0.0
        %1420 = vmatpush2.msra.mxu0 %v1012
        %1421 = vmatprep.subr.mxu0 0.0
        %1422 = vmatpush2.msra.mxu0 %v1011
        %1423 = vmatprep.mubr.f32.mxu0 %v642
        %1424 = vmatmul.mubr.f32.gmra.mxu0 %v641
        %v1425 = vpop.f32.mrf.mxu0
        %v1426 = vadd.f32 %v1181, %v1425
        %v1427 = vpop.f32.mrf.mxu0
        %1428 = vmatprep.mubr.f32.mxu0 %v651
        %1429 = vmatmul.mubr.f32.gmra.mxu0 %v650
        %v1430 = vpop.f32.mrf.mxu0
        %v1431 = vadd.f32 %v1186, %v1430
        %v1432 = vpop.f32.mrf.mxu0
        %1433 = vmatprep.mubr.f32.mxu0 %v660
        %1434 = vmatmul.mubr.f32.gmra.mxu0 %v659
        %v1435 = vpop.f32.mrf.mxu0
        %v1436 = vadd.f32 %v1191, %v1435
        %v1437 = vpop.f32.mrf.mxu0
        %1438 = vmatprep.mubr.f32.mxu0 %v669
        %1439 = vmatmul.mubr.f32.gmra.mxu0 %v668
        %v1440 = vpop.f32.mrf.mxu0
        %v1441 = vadd.f32 %v1196, %v1440
        %v1442 = vpop.f32.mrf.mxu0
        %1443 = vmatprep.mubr.f32.mxu0 %v678
        %1444 = vmatmul.mubr.f32.gmra.mxu0 %v677
        %v1445 = vpop.f32.mrf.mxu0
        %v1446 = vadd.f32 %v1201, %v1445
        %v1447 = vpop.f32.mrf.mxu0
        %1448 = vmatprep.mubr.f32.mxu0 %v687
        %1449 = vmatmul.mubr.f32.gmra.mxu0 %v686
        %v1450 = vpop.f32.mrf.mxu0
        %v1451 = vadd.f32 %v1206, %v1450
        %v1452 = vpop.f32.mrf.mxu0
        %1453 = vmatprep.mubr.f32.mxu0 %v696
        %1454 = vmatmul.mubr.f32.gmra.mxu0 %v695
        %v1455 = vpop.f32.mrf.mxu0
        %v1456 = vadd.f32 %v1211, %v1455
        %v1457 = vpop.f32.mrf.mxu0
        %1458 = vmatprep.mubr.f32.mxu0 %v705
        %1459 = vmatmul.mubr.f32.gmra.mxu0 %v704
        %v1460 = vpop.f32.mrf.mxu0
        %v1461 = vadd.f32 %v1216, %v1460
        %v1462 = vpop.f32.mrf.mxu0
        %1463 = vmatprep.mubr.f32.mxu0 %v714
        %1464 = vmatmul.mubr.f32.gmra.mxu0 %v713
        %v1465 = vpop.f32.mrf.mxu0
        %v1466 = vadd.f32 %v1221, %v1465
        %v1467 = vpop.f32.mrf.mxu0
        %1468 = vmatprep.mubr.f32.mxu0 %v723
        %1469 = vmatmul.mubr.f32.gmra.mxu0 %v722
        %v1470 = vpop.f32.mrf.mxu0
        %v1471 = vadd.f32 %v1226, %v1470
        %v1472 = vpop.f32.mrf.mxu0
        %1473 = vmatprep.mubr.f32.mxu0 %v732
        %1474 = vmatmul.mubr.f32.gmra.mxu0 %v731
        %v1475 = vpop.f32.mrf.mxu0
        %v1476 = vadd.f32 %v1231, %v1475
        %v1477 = vpop.f32.mrf.mxu0
        %1478 = vmatprep.mubr.f32.mxu0 %v741
        %1479 = vmatmul.mubr.f32.gmra.mxu0 %v740
        %v1480 = vpop.f32.mrf.mxu0
        %v1481 = vadd.f32 %v1236, %v1480
        %v1482 = vpop.f32.mrf.mxu0
        %1483 = vmatprep.mubr.f32.mxu0 %v750
        %1484 = vmatmul.mubr.f32.gmra.mxu0 %v749
        %v1485 = vpop.f32.mrf.mxu0
        %v1486 = vadd.f32 %v1241, %v1485
        %v1487 = vpop.f32.mrf.mxu0
        %1488 = vmatprep.mubr.f32.mxu0 %v759
        %1489 = vmatmul.mubr.f32.gmra.mxu0 %v758
        %v1490 = vpop.f32.mrf.mxu0
        %v1491 = vadd.f32 %v1246, %v1490
        %v1492 = vpop.f32.mrf.mxu0
        %1493 = vmatprep.mubr.f32.mxu0 %v768
        %1494 = vmatmul.mubr.f32.gmra.mxu0 %v767
        %v1495 = vpop.f32.mrf.mxu0
        %v1496 = vadd.f32 %v1251, %v1495
        %v1497 = vpop.f32.mrf.mxu0
        %1498 = vmatprep.mubr.f32.mxu0 %v777
        %1499 = vmatmul.mubr.f32.gmra.mxu0 %v776
        %v1500 = vpop.f32.mrf.mxu0
        %v1501 = vadd.f32 %v1256, %v1500
        %v1502 = vpop.f32.mrf.mxu0
        %1503 = vmatprep.mubr.f32.mxu0 %v786
        %1504 = vmatmul.mubr.f32.gmra.mxu0 %v785
        %v1505 = vpop.f32.mrf.mxu0
        %v1506 = vadd.f32 %v1261, %v1505
        %v1507 = vpop.f32.mrf.mxu0
        %1508 = vmatprep.mubr.f32.mxu0 %v795
        %1509 = vmatmul.mubr.f32.gmra.mxu0 %v794
        %v1510 = vpop.f32.mrf.mxu0
        %v1511 = vadd.f32 %v1266, %v1510
        %v1512 = vpop.f32.mrf.mxu0
        %1513 = vmatprep.mubr.f32.mxu0 %v804
        %1514 = vmatmul.mubr.f32.gmra.mxu0 %v803
        %v1515 = vpop.f32.mrf.mxu0
        %v1516 = vadd.f32 %v1271, %v1515
        %v1517 = vpop.f32.mrf.mxu0
        %1518 = vmatprep.mubr.f32.mxu0 %v813
        %1519 = vmatmul.mubr.f32.gmra.mxu0 %v812
        %v1520 = vpop.f32.mrf.mxu0
        %v1521 = vadd.f32 %v1276, %v1520
        %v1522 = vpop.f32.mrf.mxu0
        %1523 = vmatprep.mubr.f32.mxu0 %v822
        %1524 = vmatmul.mubr.f32.gmra.mxu0 %v821
        %v1525 = vpop.f32.mrf.mxu0
        %v1526 = vadd.f32 %v1281, %v1525
        %v1527 = vpop.f32.mrf.mxu0
        %1528 = vmatprep.mubr.f32.mxu0 %v831
        %1529 = vmatmul.mubr.f32.gmra.mxu0 %v830
        %v1530 = vpop.f32.mrf.mxu0
        %v1531 = vadd.f32 %v1286, %v1530
        %v1532 = vpop.f32.mrf.mxu0
        %1533 = vmatprep.mubr.f32.mxu0 %v840
        %1534 = vmatmul.mubr.f32.gmra.mxu0 %v839
        %v1535 = vpop.f32.mrf.mxu0
        %v1536 = vadd.f32 %v1291, %v1535
        %v1537 = vpop.f32.mrf.mxu0
        %1538 = vmatprep.mubr.f32.mxu0 %v849
        %1539 = vmatmul.mubr.f32.gmra.mxu0 %v848
        %v1540 = vpop.f32.mrf.mxu0
        %v1541 = vadd.f32 %v1296, %v1540
        %v1542 = vpop.f32.mrf.mxu0
        %1543 = vmatprep.mubr.f32.mxu0 %v858
        %1544 = vmatmul.mubr.f32.gmra.mxu0 %v857
        %v1545 = vpop.f32.mrf.mxu0
        %v1546 = vadd.f32 %v1301, %v1545
        %v1547 = vpop.f32.mrf.mxu0
        %1548 = vmatprep.mubr.f32.mxu0 %v867
        %1549 = vmatmul.mubr.f32.gmra.mxu0 %v866
        %v1550 = vpop.f32.mrf.mxu0
        %v1551 = vadd.f32 %v1306, %v1550
        %v1552 = vpop.f32.mrf.mxu0
        %1553 = vmatprep.mubr.f32.mxu0 %v876
        %1554 = vmatmul.mubr.f32.gmra.mxu0 %v875
        %v1555 = vpop.f32.mrf.mxu0
        %v1556 = vadd.f32 %v1311, %v1555
        %v1557 = vpop.f32.mrf.mxu0
        %1558 = vmatprep.mubr.f32.mxu0 %v885
        %1559 = vmatmul.mubr.f32.gmra.mxu0 %v884
        %v1560 = vpop.f32.mrf.mxu0
        %v1561 = vadd.f32 %v1316, %v1560
        %v1562 = vpop.f32.mrf.mxu0
        %1563 = vmatprep.mubr.f32.mxu0 %v894
        %1564 = vmatmul.mubr.f32.gmra.mxu0 %v893
        %v1565 = vpop.f32.mrf.mxu0
        %v1566 = vadd.f32 %v1321, %v1565
        %v1567 = vpop.f32.mrf.mxu0
        %1568 = vmatprep.mubr.f32.mxu0 %v903
        %1569 = vmatmul.mubr.f32.gmra.mxu0 %v902
        %v1570 = vpop.f32.mrf.mxu0
        %v1571 = vadd.f32 %v1326, %v1570
        %v1572 = vpop.f32.mrf.mxu0
        %1573 = vmatprep.mubr.f32.mxu0 %v912
        %1574 = vmatmul.mubr.f32.gmra.mxu0 %v911
        %v1575 = vpop.f32.mrf.mxu0
        %v1576 = vadd.f32 %v1331, %v1575
        %v1577 = vpop.f32.mrf.mxu0
        %1578 = vmatprep.mubr.f32.mxu0 %v921
        %1579 = vmatmul.mubr.f32.gmra.mxu0 %v920
        %v1580 = vpop.f32.mrf.mxu0
        %v1581 = vadd.f32 %v1336, %v1580
        %v1582 = vpop.f32.mrf.mxu0
        %1583 = vmatprep.mubr.f32.mxu0 %v930
        %1584 = vmatmul.mubr.f32.gmra.mxu0 %v929
        %v1585 = vpop.f32.mrf.mxu0
        %v1586 = vadd.f32 %v1341, %v1585
        %v1587 = vpop.f32.mrf.mxu0
        %1588 = vmatprep.mubr.f32.mxu0 %v939
        %1589 = vmatmul.mubr.f32.gmra.mxu0 %v938
        %v1590 = vpop.f32.mrf.mxu0
        %v1591 = vadd.f32 %v1346, %v1590
        %v1592 = vpop.f32.mrf.mxu0
        %1593 = vmatprep.mubr.f32.mxu0 %v948
        %1594 = vmatmul.mubr.f32.gmra.mxu0 %v947
        %v1595 = vpop.f32.mrf.mxu0
        %v1596 = vadd.f32 %v1351, %v1595
        %v1597 = vpop.f32.mrf.mxu0
        %1598 = vmatprep.mubr.f32.mxu0 %v957
        %1599 = vmatmul.mubr.f32.gmra.mxu0 %v956
        %v1600 = vpop.f32.mrf.mxu0
        %v1601 = vadd.f32 %v1356, %v1600
        %v1602 = vpop.f32.mrf.mxu0
        %1603 = vdwg.mxu0
        %1604 = vmatprep.subr.mxu0 0.0
        %1605 = vmatpush1.msra.mxu0 %v1042
        %1606 = vmatprep.subr.mxu0 0.0
        %1607 = vmatpush1.msra.mxu0 %v1041
        %1608 = vmatprep.subr.mxu0 0.0
        %1609 = vmatpush1.msra.mxu0 %v1040
        %1610 = vmatprep.subr.mxu0 0.0
        %1611 = vmatpush1.msra.mxu0 %v1039
        %1612 = vmatprep.subr.mxu0 0.0
        %1613 = vmatpush1.msra.mxu0 %v1038
        %1614 = vmatprep.subr.mxu0 0.0
        %1615 = vmatpush1.msra.mxu0 %v1037
        %1616 = vmatprep.subr.mxu0 0.0
        %1617 = vmatpush1.msra.mxu0 %v1036
        %1618 = vmatprep.subr.mxu0 0.0
        %1619 = vmatpush1.msra.mxu0 %v1035
        %1620 = vmatprep.subr.mxu0 0.0
        %1621 = vmatpush1.msra.mxu0 %v1034
        %1622 = vmatprep.subr.mxu0 0.0
        %1623 = vmatpush1.msra.mxu0 %v1033
        %1624 = vmatprep.subr.mxu0 0.0
        %1625 = vmatpush1.msra.mxu0 %v1032
        %1626 = vmatprep.subr.mxu0 0.0
        %1627 = vmatpush1.msra.mxu0 %v1031
        %1628 = vmatprep.subr.mxu0 0.0
        %1629 = vmatpush1.msra.mxu0 %v1030
        %1630 = vmatprep.subr.mxu0 0.0
        %1631 = vmatpush1.msra.mxu0 %v1029
        %1632 = vmatprep.subr.mxu0 0.0
        %1633 = vmatpush1.msra.mxu0 %v1028
        %1634 = vmatprep.subr.mxu0 0.0
        %1635 = vmatpush1.msra.mxu0 %v1027
        %1636 = vmatprep.subr.mxu0 0.0
        %1637 = vmatpush2.msra.mxu0 %v1058
        %1638 = vmatprep.subr.mxu0 0.0
        %1639 = vmatpush2.msra.mxu0 %v1057
        %1640 = vmatprep.subr.mxu0 0.0
        %1641 = vmatpush2.msra.mxu0 %v1056
        %1642 = vmatprep.subr.mxu0 0.0
        %1643 = vmatpush2.msra.mxu0 %v1055
        %1644 = vmatprep.subr.mxu0 0.0
        %1645 = vmatpush2.msra.mxu0 %v1054
        %1646 = vmatprep.subr.mxu0 0.0
        %1647 = vmatpush2.msra.mxu0 %v1053
        %1648 = vmatprep.subr.mxu0 0.0
        %1649 = vmatpush2.msra.mxu0 %v1052
        %1650 = vmatprep.subr.mxu0 0.0
        %1651 = vmatpush2.msra.mxu0 %v1051
        %1652 = vmatprep.subr.mxu0 0.0
        %1653 = vmatpush2.msra.mxu0 %v1050
        %1654 = vmatprep.subr.mxu0 0.0
        %1655 = vmatpush2.msra.mxu0 %v1049
        %1656 = vmatprep.subr.mxu0 0.0
        %1657 = vmatpush2.msra.mxu0 %v1048
        %1658 = vmatprep.subr.mxu0 0.0
        %1659 = vmatpush2.msra.mxu0 %v1047
        %1660 = vmatprep.subr.mxu0 0.0
        %1661 = vmatpush2.msra.mxu0 %v1046
        %1662 = vmatprep.subr.mxu0 0.0
        %1663 = vmatpush2.msra.mxu0 %v1045
        %1664 = vmatprep.subr.mxu0 0.0
        %1665 = vmatpush2.msra.mxu0 %v1044
        %1666 = vmatprep.subr.mxu0 0.0
        %1667 = vmatpush2.msra.mxu0 %v1043
        %1668 = vmatprep.mubr.f32.mxu0 %v644
        %1669 = vmatmul.mubr.f32.gmra.mxu0 %v643
        %v1670 = vpop.f32.mrf.mxu0
        %v1671 = vadd.f32 %v1426, %v1670
        %v1672 = vpop.f32.mrf.mxu0
        %1673 = vmatprep.mubr.f32.mxu0 %v653
        %1674 = vmatmul.mubr.f32.gmra.mxu0 %v652
        %v1675 = vpop.f32.mrf.mxu0
        %v1676 = vadd.f32 %v1431, %v1675
        %v1677 = vpop.f32.mrf.mxu0
        %1678 = vmatprep.mubr.f32.mxu0 %v662
        %1679 = vmatmul.mubr.f32.gmra.mxu0 %v661
        %v1680 = vpop.f32.mrf.mxu0
        %v1681 = vadd.f32 %v1436, %v1680
        %v1682 = vpop.f32.mrf.mxu0
        %1683 = vmatprep.mubr.f32.mxu0 %v671
        %1684 = vmatmul.mubr.f32.gmra.mxu0 %v670
        %v1685 = vpop.f32.mrf.mxu0
        %v1686 = vadd.f32 %v1441, %v1685
        %v1687 = vpop.f32.mrf.mxu0
        %1688 = vmatprep.mubr.f32.mxu0 %v680
        %1689 = vmatmul.mubr.f32.gmra.mxu0 %v679
        %v1690 = vpop.f32.mrf.mxu0
        %v1691 = vadd.f32 %v1446, %v1690
        %v1692 = vpop.f32.mrf.mxu0
        %1693 = vmatprep.mubr.f32.mxu0 %v689
        %1694 = vmatmul.mubr.f32.gmra.mxu0 %v688
        %v1695 = vpop.f32.mrf.mxu0
        %v1696 = vadd.f32 %v1451, %v1695
        %v1697 = vpop.f32.mrf.mxu0
        %1698 = vmatprep.mubr.f32.mxu0 %v698
        %1699 = vmatmul.mubr.f32.gmra.mxu0 %v697
        %v1700 = vpop.f32.mrf.mxu0
        %v1701 = vadd.f32 %v1456, %v1700
        %v1702 = vpop.f32.mrf.mxu0
        %1703 = vmatprep.mubr.f32.mxu0 %v707
        %1704 = vmatmul.mubr.f32.gmra.mxu0 %v706
        %v1705 = vpop.f32.mrf.mxu0
        %v1706 = vadd.f32 %v1461, %v1705
        %v1707 = vpop.f32.mrf.mxu0
        %1708 = vmatprep.mubr.f32.mxu0 %v716
        %1709 = vmatmul.mubr.f32.gmra.mxu0 %v715
        %v1710 = vpop.f32.mrf.mxu0
        %v1711 = vadd.f32 %v1466, %v1710
        %v1712 = vpop.f32.mrf.mxu0
        %1713 = vmatprep.mubr.f32.mxu0 %v725
        %1714 = vmatmul.mubr.f32.gmra.mxu0 %v724
        %v1715 = vpop.f32.mrf.mxu0
        %v1716 = vadd.f32 %v1471, %v1715
        %v1717 = vpop.f32.mrf.mxu0
        %1718 = vmatprep.mubr.f32.mxu0 %v734
        %1719 = vmatmul.mubr.f32.gmra.mxu0 %v733
        %v1720 = vpop.f32.mrf.mxu0
        %v1721 = vadd.f32 %v1476, %v1720
        %v1722 = vpop.f32.mrf.mxu0
        %1723 = vmatprep.mubr.f32.mxu0 %v743
        %1724 = vmatmul.mubr.f32.gmra.mxu0 %v742
        %v1725 = vpop.f32.mrf.mxu0
        %v1726 = vadd.f32 %v1481, %v1725
        %v1727 = vpop.f32.mrf.mxu0
        %1728 = vmatprep.mubr.f32.mxu0 %v752
        %1729 = vmatmul.mubr.f32.gmra.mxu0 %v751
        %v1730 = vpop.f32.mrf.mxu0
        %v1731 = vadd.f32 %v1486, %v1730
        %v1732 = vpop.f32.mrf.mxu0
        %1733 = vmatprep.mubr.f32.mxu0 %v761
        %1734 = vmatmul.mubr.f32.gmra.mxu0 %v760
        %v1735 = vpop.f32.mrf.mxu0
        %v1736 = vadd.f32 %v1491, %v1735
        %v1737 = vpop.f32.mrf.mxu0
        %1738 = vmatprep.mubr.f32.mxu0 %v770
        %1739 = vmatmul.mubr.f32.gmra.mxu0 %v769
        %v1740 = vpop.f32.mrf.mxu0
        %v1741 = vadd.f32 %v1496, %v1740
        %v1742 = vpop.f32.mrf.mxu0
        %1743 = vmatprep.mubr.f32.mxu0 %v779
        %1744 = vmatmul.mubr.f32.gmra.mxu0 %v778
        %v1745 = vpop.f32.mrf.mxu0
        %v1746 = vadd.f32 %v1501, %v1745
        %v1747 = vpop.f32.mrf.mxu0
        %1748 = vmatprep.mubr.f32.mxu0 %v788
        %1749 = vmatmul.mubr.f32.gmra.mxu0 %v787
        %v1750 = vpop.f32.mrf.mxu0
        %v1751 = vadd.f32 %v1506, %v1750
        %v1752 = vpop.f32.mrf.mxu0
        %1753 = vmatprep.mubr.f32.mxu0 %v797
        %1754 = vmatmul.mubr.f32.gmra.mxu0 %v796
        %v1755 = vpop.f32.mrf.mxu0
        %v1756 = vadd.f32 %v1511, %v1755
        %v1757 = vpop.f32.mrf.mxu0
        %1758 = vmatprep.mubr.f32.mxu0 %v806
        %1759 = vmatmul.mubr.f32.gmra.mxu0 %v805
        %v1760 = vpop.f32.mrf.mxu0
        %v1761 = vadd.f32 %v1516, %v1760
        %v1762 = vpop.f32.mrf.mxu0
        %1763 = vmatprep.mubr.f32.mxu0 %v815
        %1764 = vmatmul.mubr.f32.gmra.mxu0 %v814
        %v1765 = vpop.f32.mrf.mxu0
        %v1766 = vadd.f32 %v1521, %v1765
        %v1767 = vpop.f32.mrf.mxu0
        %1768 = vmatprep.mubr.f32.mxu0 %v824
        %1769 = vmatmul.mubr.f32.gmra.mxu0 %v823
        %v1770 = vpop.f32.mrf.mxu0
        %v1771 = vadd.f32 %v1526, %v1770
        %v1772 = vpop.f32.mrf.mxu0
        %1773 = vmatprep.mubr.f32.mxu0 %v833
        %1774 = vmatmul.mubr.f32.gmra.mxu0 %v832
        %v1775 = vpop.f32.mrf.mxu0
        %v1776 = vadd.f32 %v1531, %v1775
        %v1777 = vpop.f32.mrf.mxu0
        %1778 = vmatprep.mubr.f32.mxu0 %v842
        %1779 = vmatmul.mubr.f32.gmra.mxu0 %v841
        %v1780 = vpop.f32.mrf.mxu0
        %v1781 = vadd.f32 %v1536, %v1780
        %v1782 = vpop.f32.mrf.mxu0
        %1783 = vmatprep.mubr.f32.mxu0 %v851
        %1784 = vmatmul.mubr.f32.gmra.mxu0 %v850
        %v1785 = vpop.f32.mrf.mxu0
        %v1786 = vadd.f32 %v1541, %v1785
        %v1787 = vpop.f32.mrf.mxu0
        %1788 = vmatprep.mubr.f32.mxu0 %v860
        %1789 = vmatmul.mubr.f32.gmra.mxu0 %v859
        %v1790 = vpop.f32.mrf.mxu0
        %v1791 = vadd.f32 %v1546, %v1790
        %v1792 = vpop.f32.mrf.mxu0
        %1793 = vmatprep.mubr.f32.mxu0 %v869
        %1794 = vmatmul.mubr.f32.gmra.mxu0 %v868
        %v1795 = vpop.f32.mrf.mxu0
        %v1796 = vadd.f32 %v1551, %v1795
        %v1797 = vpop.f32.mrf.mxu0
        %1798 = vmatprep.mubr.f32.mxu0 %v878
        %1799 = vmatmul.mubr.f32.gmra.mxu0 %v877
        %v1800 = vpop.f32.mrf.mxu0
        %v1801 = vadd.f32 %v1556, %v1800
        %v1802 = vpop.f32.mrf.mxu0
        %1803 = vmatprep.mubr.f32.mxu0 %v887
        %1804 = vmatmul.mubr.f32.gmra.mxu0 %v886
        %v1805 = vpop.f32.mrf.mxu0
        %v1806 = vadd.f32 %v1561, %v1805
        %v1807 = vpop.f32.mrf.mxu0
        %1808 = vmatprep.mubr.f32.mxu0 %v896
        %1809 = vmatmul.mubr.f32.gmra.mxu0 %v895
        %v1810 = vpop.f32.mrf.mxu0
        %v1811 = vadd.f32 %v1566, %v1810
        %v1812 = vpop.f32.mrf.mxu0
        %1813 = vmatprep.mubr.f32.mxu0 %v905
        %1814 = vmatmul.mubr.f32.gmra.mxu0 %v904
        %v1815 = vpop.f32.mrf.mxu0
        %v1816 = vadd.f32 %v1571, %v1815
        %v1817 = vpop.f32.mrf.mxu0
        %1818 = vmatprep.mubr.f32.mxu0 %v914
        %1819 = vmatmul.mubr.f32.gmra.mxu0 %v913
        %v1820 = vpop.f32.mrf.mxu0
        %v1821 = vadd.f32 %v1576, %v1820
        %v1822 = vpop.f32.mrf.mxu0
        %1823 = vmatprep.mubr.f32.mxu0 %v923
        %1824 = vmatmul.mubr.f32.gmra.mxu0 %v922
        %v1825 = vpop.f32.mrf.mxu0
        %v1826 = vadd.f32 %v1581, %v1825
        %v1827 = vpop.f32.mrf.mxu0
        %1828 = vmatprep.mubr.f32.mxu0 %v932
        %1829 = vmatmul.mubr.f32.gmra.mxu0 %v931
        %v1830 = vpop.f32.mrf.mxu0
        %v1831 = vadd.f32 %v1586, %v1830
        %v1832 = vpop.f32.mrf.mxu0
        %1833 = vmatprep.mubr.f32.mxu0 %v941
        %1834 = vmatmul.mubr.f32.gmra.mxu0 %v940
        %v1835 = vpop.f32.mrf.mxu0
        %v1836 = vadd.f32 %v1591, %v1835
        %v1837 = vpop.f32.mrf.mxu0
        %1838 = vmatprep.mubr.f32.mxu0 %v950
        %1839 = vmatmul.mubr.f32.gmra.mxu0 %v949
        %v1840 = vpop.f32.mrf.mxu0
        %v1841 = vadd.f32 %v1596, %v1840
        %v1842 = vpop.f32.mrf.mxu0
        %1843 = vmatprep.mubr.f32.mxu0 %v959
        %1844 = vmatmul.mubr.f32.gmra.mxu0 %v958
        %v1845 = vpop.f32.mrf.mxu0
        %v1846 = vadd.f32 %v1601, %v1845
        %v1847 = vpop.f32.mrf.mxu0
        %1848 = vdwg.mxu0
        %1849 = vmatprep.subr.mxu0 0.0
        %1850 = vmatpush1.msra.mxu0 %v1074
        %1851 = vmatprep.subr.mxu0 0.0
        %1852 = vmatpush1.msra.mxu0 %v1073
        %1853 = vmatprep.subr.mxu0 0.0
        %1854 = vmatpush1.msra.mxu0 %v1072
        %1855 = vmatprep.subr.mxu0 0.0
        %1856 = vmatpush1.msra.mxu0 %v1071
        %1857 = vmatprep.subr.mxu0 0.0
        %1858 = vmatpush1.msra.mxu0 %v1070
        %1859 = vmatprep.subr.mxu0 0.0
        %1860 = vmatpush1.msra.mxu0 %v1069
        %1861 = vmatprep.subr.mxu0 0.0
        %1862 = vmatpush1.msra.mxu0 %v1068
        %1863 = vmatprep.subr.mxu0 0.0
        %1864 = vmatpush1.msra.mxu0 %v1067
        %1865 = vmatprep.subr.mxu0 0.0
        %1866 = vmatpush1.msra.mxu0 %v1066
        %1867 = vmatprep.subr.mxu0 0.0
        %1868 = vmatpush1.msra.mxu0 %v1065
        %1869 = vmatprep.subr.mxu0 0.0
        %1870 = vmatpush1.msra.mxu0 %v1064
        %1871 = vmatprep.subr.mxu0 0.0
        %1872 = vmatpush1.msra.mxu0 %v1063
        %1873 = vmatprep.subr.mxu0 0.0
        %1874 = vmatpush1.msra.mxu0 %v1062
        %1875 = vmatprep.subr.mxu0 0.0
        %1876 = vmatpush1.msra.mxu0 %v1061
        %1877 = vmatprep.subr.mxu0 0.0
        %1878 = vmatpush1.msra.mxu0 %v1060
        %1879 = vmatprep.subr.mxu0 0.0
        %1880 = vmatpush1.msra.mxu0 %v1059
        %1881 = vmatprep.subr.mxu0 0.0
        %1882 = vmatpush2.msra.mxu0 %v1090
        %1883 = vmatprep.subr.mxu0 0.0
        %1884 = vmatpush2.msra.mxu0 %v1089
        %1885 = vmatprep.subr.mxu0 0.0
        %1886 = vmatpush2.msra.mxu0 %v1088
        %1887 = vmatprep.subr.mxu0 0.0
        %1888 = vmatpush2.msra.mxu0 %v1087
        %1889 = vmatprep.subr.mxu0 0.0
        %1890 = vmatpush2.msra.mxu0 %v1086
        %1891 = vmatprep.subr.mxu0 0.0
        %1892 = vmatpush2.msra.mxu0 %v1085
        %1893 = vmatprep.subr.mxu0 0.0
        %1894 = vmatpush2.msra.mxu0 %v1084
        %1895 = vmatprep.subr.mxu0 0.0
        %1896 = vmatpush2.msra.mxu0 %v1083
        %1897 = vmatprep.subr.mxu0 0.0
        %1898 = vmatpush2.msra.mxu0 %v1082
        %1899 = vmatprep.subr.mxu0 0.0
        %1900 = vmatpush2.msra.mxu0 %v1081
        %1901 = vmatprep.subr.mxu0 0.0
        %1902 = vmatpush2.msra.mxu0 %v1080
        %1903 = vmatprep.subr.mxu0 0.0
        %1904 = vmatpush2.msra.mxu0 %v1079
        %1905 = vmatprep.subr.mxu0 0.0
        %1906 = vmatpush2.msra.mxu0 %v1078
        %1907 = vmatprep.subr.mxu0 0.0
        %1908 = vmatpush2.msra.mxu0 %v1077
        %1909 = vmatprep.subr.mxu0 0.0
        %1910 = vmatpush2.msra.mxu0 %v1076
        %1911 = vmatprep.subr.mxu0 0.0
        %1912 = vmatpush2.msra.mxu0 %v1075
        %1913 = vmatprep.mubr.f32.mxu0 %v646
        %1914 = vmatmul.mubr.f32.gmra.mxu0 %v645
        %v1915 = vpop.f32.mrf.mxu0
        %v1916 = vadd.f32 %v1671, %v1915
        %v1917 = vpop.f32.mrf.mxu0
        %1918 = vmatprep.mubr.f32.mxu0 %v655
        %1919 = vmatmul.mubr.f32.gmra.mxu0 %v654
        %v1920 = vpop.f32.mrf.mxu0
        %v1921 = vadd.f32 %v1676, %v1920
        %v1922 = vpop.f32.mrf.mxu0
        %1923 = vmatprep.mubr.f32.mxu0 %v664
        %1924 = vmatmul.mubr.f32.gmra.mxu0 %v663
        %v1925 = vpop.f32.mrf.mxu0
        %v1926 = vadd.f32 %v1681, %v1925
        %v1927 = vpop.f32.mrf.mxu0
        %1928 = vmatprep.mubr.f32.mxu0 %v673
        %1929 = vmatmul.mubr.f32.gmra.mxu0 %v672
        %v1930 = vpop.f32.mrf.mxu0
        %v1931 = vadd.f32 %v1686, %v1930
        %v1932 = vpop.f32.mrf.mxu0
        %1933 = vmatprep.mubr.f32.mxu0 %v682
        %1934 = vmatmul.mubr.f32.gmra.mxu0 %v681
        %v1935 = vpop.f32.mrf.mxu0
        %v1936 = vadd.f32 %v1691, %v1935
        %v1937 = vpop.f32.mrf.mxu0
        %1938 = vmatprep.mubr.f32.mxu0 %v691
        %1939 = vmatmul.mubr.f32.gmra.mxu0 %v690
        %v1940 = vpop.f32.mrf.mxu0
        %v1941 = vadd.f32 %v1696, %v1940
        %v1942 = vpop.f32.mrf.mxu0
        %1943 = vmatprep.mubr.f32.mxu0 %v700
        %1944 = vmatmul.mubr.f32.gmra.mxu0 %v699
        %v1945 = vpop.f32.mrf.mxu0
        %v1946 = vadd.f32 %v1701, %v1945
        %v1947 = vpop.f32.mrf.mxu0
        %1948 = vmatprep.mubr.f32.mxu0 %v709
        %1949 = vmatmul.mubr.f32.gmra.mxu0 %v708
        %v1950 = vpop.f32.mrf.mxu0
        %v1951 = vadd.f32 %v1706, %v1950
        %v1952 = vpop.f32.mrf.mxu0
        %1953 = vmatprep.mubr.f32.mxu0 %v718
        %1954 = vmatmul.mubr.f32.gmra.mxu0 %v717
        %v1955 = vpop.f32.mrf.mxu0
        %v1956 = vadd.f32 %v1711, %v1955
        %v1957 = vpop.f32.mrf.mxu0
        %1958 = vmatprep.mubr.f32.mxu0 %v727
        %1959 = vmatmul.mubr.f32.gmra.mxu0 %v726
        %v1960 = vpop.f32.mrf.mxu0
        %v1961 = vadd.f32 %v1716, %v1960
        %v1962 = vpop.f32.mrf.mxu0
        %1963 = vmatprep.mubr.f32.mxu0 %v736
        %1964 = vmatmul.mubr.f32.gmra.mxu0 %v735
        %v1965 = vpop.f32.mrf.mxu0
        %v1966 = vadd.f32 %v1721, %v1965
        %v1967 = vpop.f32.mrf.mxu0
        %1968 = vmatprep.mubr.f32.mxu0 %v745
        %1969 = vmatmul.mubr.f32.gmra.mxu0 %v744
        %v1970 = vpop.f32.mrf.mxu0
        %v1971 = vadd.f32 %v1726, %v1970
        %v1972 = vpop.f32.mrf.mxu0
        %1973 = vmatprep.mubr.f32.mxu0 %v754
        %1974 = vmatmul.mubr.f32.gmra.mxu0 %v753
        %v1975 = vpop.f32.mrf.mxu0
        %v1976 = vadd.f32 %v1731, %v1975
        %v1977 = vpop.f32.mrf.mxu0
        %1978 = vmatprep.mubr.f32.mxu0 %v763
        %1979 = vmatmul.mubr.f32.gmra.mxu0 %v762
        %v1980 = vpop.f32.mrf.mxu0
        %v1981 = vadd.f32 %v1736, %v1980
        %v1982 = vpop.f32.mrf.mxu0
        %1983 = vmatprep.mubr.f32.mxu0 %v772
        %1984 = vmatmul.mubr.f32.gmra.mxu0 %v771
        %v1985 = vpop.f32.mrf.mxu0
        %v1986 = vadd.f32 %v1741, %v1985
        %v1987 = vpop.f32.mrf.mxu0
        %1988 = vmatprep.mubr.f32.mxu0 %v781
        %1989 = vmatmul.mubr.f32.gmra.mxu0 %v780
        %v1990 = vpop.f32.mrf.mxu0
        %v1991 = vadd.f32 %v1746, %v1990
        %v1992 = vpop.f32.mrf.mxu0
        %1993 = vmatprep.mubr.f32.mxu0 %v790
        %1994 = vmatmul.mubr.f32.gmra.mxu0 %v789
        %v1995 = vpop.f32.mrf.mxu0
        %v1996 = vadd.f32 %v1751, %v1995
        %v1997 = vpop.f32.mrf.mxu0
        %1998 = vmatprep.mubr.f32.mxu0 %v799
        %1999 = vmatmul.mubr.f32.gmra.mxu0 %v798
        %v2000 = vpop.f32.mrf.mxu0
        %v2001 = vadd.f32 %v1756, %v2000
        %v2002 = vpop.f32.mrf.mxu0
        %2003 = vmatprep.mubr.f32.mxu0 %v808
        %2004 = vmatmul.mubr.f32.gmra.mxu0 %v807
        %v2005 = vpop.f32.mrf.mxu0
        %v2006 = vadd.f32 %v1761, %v2005
        %v2007 = vpop.f32.mrf.mxu0
        %2008 = vmatprep.mubr.f32.mxu0 %v817
        %2009 = vmatmul.mubr.f32.gmra.mxu0 %v816
        %v2010 = vpop.f32.mrf.mxu0
        %v2011 = vadd.f32 %v1766, %v2010
        %v2012 = vpop.f32.mrf.mxu0
        %2013 = vmatprep.mubr.f32.mxu0 %v826
        %2014 = vmatmul.mubr.f32.gmra.mxu0 %v825
        %v2015 = vpop.f32.mrf.mxu0
        %v2016 = vadd.f32 %v1771, %v2015
        %v2017 = vpop.f32.mrf.mxu0
        %2018 = vmatprep.mubr.f32.mxu0 %v835
        %2019 = vmatmul.mubr.f32.gmra.mxu0 %v834
        %v2020 = vpop.f32.mrf.mxu0
        %v2021 = vadd.f32 %v1776, %v2020
        %v2022 = vpop.f32.mrf.mxu0
        %2023 = vmatprep.mubr.f32.mxu0 %v844
        %2024 = vmatmul.mubr.f32.gmra.mxu0 %v843
        %v2025 = vpop.f32.mrf.mxu0
        %v2026 = vadd.f32 %v1781, %v2025
        %v2027 = vpop.f32.mrf.mxu0
        %2028 = vmatprep.mubr.f32.mxu0 %v853
        %2029 = vmatmul.mubr.f32.gmra.mxu0 %v852
        %v2030 = vpop.f32.mrf.mxu0
        %v2031 = vadd.f32 %v1786, %v2030
        %v2032 = vpop.f32.mrf.mxu0
        %2033 = vmatprep.mubr.f32.mxu0 %v862
        %2034 = vmatmul.mubr.f32.gmra.mxu0 %v861
        %v2035 = vpop.f32.mrf.mxu0
        %v2036 = vadd.f32 %v1791, %v2035
        %v2037 = vpop.f32.mrf.mxu0
        %2038 = vmatprep.mubr.f32.mxu0 %v871
        %2039 = vmatmul.mubr.f32.gmra.mxu0 %v870
        %v2040 = vpop.f32.mrf.mxu0
        %v2041 = vadd.f32 %v1796, %v2040
        %v2042 = vpop.f32.mrf.mxu0
        %2043 = vmatprep.mubr.f32.mxu0 %v880
        %2044 = vmatmul.mubr.f32.gmra.mxu0 %v879
        %v2045 = vpop.f32.mrf.mxu0
        %v2046 = vadd.f32 %v1801, %v2045
        %v2047 = vpop.f32.mrf.mxu0
        %2048 = vmatprep.mubr.f32.mxu0 %v889
        %2049 = vmatmul.mubr.f32.gmra.mxu0 %v888
        %v2050 = vpop.f32.mrf.mxu0
        %v2051 = vadd.f32 %v1806, %v2050
        %v2052 = vpop.f32.mrf.mxu0
        %2053 = vmatprep.mubr.f32.mxu0 %v898
        %2054 = vmatmul.mubr.f32.gmra.mxu0 %v897
        %v2055 = vpop.f32.mrf.mxu0
        %v2056 = vadd.f32 %v1811, %v2055
        %v2057 = vpop.f32.mrf.mxu0
        %2058 = vmatprep.mubr.f32.mxu0 %v907
        %2059 = vmatmul.mubr.f32.gmra.mxu0 %v906
        %v2060 = vpop.f32.mrf.mxu0
        %v2061 = vadd.f32 %v1816, %v2060
        %v2062 = vpop.f32.mrf.mxu0
        %2063 = vmatprep.mubr.f32.mxu0 %v916
        %2064 = vmatmul.mubr.f32.gmra.mxu0 %v915
        %v2065 = vpop.f32.mrf.mxu0
        %v2066 = vadd.f32 %v1821, %v2065
        %v2067 = vpop.f32.mrf.mxu0
        %2068 = vmatprep.mubr.f32.mxu0 %v925
        %2069 = vmatmul.mubr.f32.gmra.mxu0 %v924
        %v2070 = vpop.f32.mrf.mxu0
        %v2071 = vadd.f32 %v1826, %v2070
        %v2072 = vpop.f32.mrf.mxu0
        %2073 = vmatprep.mubr.f32.mxu0 %v934
        %2074 = vmatmul.mubr.f32.gmra.mxu0 %v933
        %v2075 = vpop.f32.mrf.mxu0
        %v2076 = vadd.f32 %v1831, %v2075
        %v2077 = vpop.f32.mrf.mxu0
        %2078 = vmatprep.mubr.f32.mxu0 %v943
        %2079 = vmatmul.mubr.f32.gmra.mxu0 %v942
        %v2080 = vpop.f32.mrf.mxu0
        %v2081 = vadd.f32 %v1836, %v2080
        %v2082 = vpop.f32.mrf.mxu0
        %2083 = vmatprep.mubr.f32.mxu0 %v952
        %2084 = vmatmul.mubr.f32.gmra.mxu0 %v951
        %v2085 = vpop.f32.mrf.mxu0
        %v2086 = vadd.f32 %v1841, %v2085
        %v2087 = vpop.f32.mrf.mxu0
        %2088 = vmatprep.mubr.f32.mxu0 %v961
        %2089 = vmatmul.mubr.f32.gmra.mxu0 %v960
        %v2090 = vpop.f32.mrf.mxu0
        %v2091 = vadd.f32 %v1846, %v2090
        %v2092 = vpop.f32.mrf.mxu0
        %2093 = vdwg.mxu0
        %2094 = vmatprep.subr.mxu0 0.0
        %2095 = vmatpush1.msra.mxu0 %v1106
        %2096 = vmatprep.subr.mxu0 0.0
        %2097 = vmatpush1.msra.mxu0 %v1105
        %2098 = vmatprep.subr.mxu0 0.0
        %2099 = vmatpush1.msra.mxu0 %v1104
        %2100 = vmatprep.subr.mxu0 0.0
        %2101 = vmatpush1.msra.mxu0 %v1103
        %2102 = vmatprep.subr.mxu0 0.0
        %2103 = vmatpush1.msra.mxu0 %v1102
        %2104 = vmatprep.subr.mxu0 0.0
        %2105 = vmatpush1.msra.mxu0 %v1101
        %2106 = vmatprep.subr.mxu0 0.0
        %2107 = vmatpush1.msra.mxu0 %v1100
        %2108 = vmatprep.subr.mxu0 0.0
        %2109 = vmatpush1.msra.mxu0 %v1099
        %2110 = vmatprep.subr.mxu0 0.0
        %2111 = vmatpush1.msra.mxu0 %v1098
        %2112 = vmatprep.subr.mxu0 0.0
        %2113 = vmatpush1.msra.mxu0 %v1097
        %2114 = vmatprep.subr.mxu0 0.0
        %2115 = vmatpush1.msra.mxu0 %v1096
        %2116 = vmatprep.subr.mxu0 0.0
        %2117 = vmatpush1.msra.mxu0 %v1095
        %2118 = vmatprep.subr.mxu0 0.0
        %2119 = vmatpush1.msra.mxu0 %v1094
        %2120 = vmatprep.subr.mxu0 0.0
        %2121 = vmatpush1.msra.mxu0 %v1093
        %2122 = vmatprep.subr.mxu0 0.0
        %2123 = vmatpush1.msra.mxu0 %v1092
        %2124 = vmatprep.subr.mxu0 0.0
        %2125 = vmatpush1.msra.mxu0 %v1091
        %2126 = vmatprep.subr.mxu0 0.0
        %2127 = vmatpush2.msra.mxu0 0.0
        %2128 = vmatprep.subr.mxu0 0.0
        %2129 = vmatpush2.msra.mxu0 0.0
        %2130 = vmatprep.subr.mxu0 0.0
        %2131 = vmatpush2.msra.mxu0 0.0
        %2132 = vmatprep.subr.mxu0 0.0
        %2133 = vmatpush2.msra.mxu0 0.0
        %2134 = vmatprep.subr.mxu0 0.0
        %2135 = vmatpush2.msra.mxu0 0.0
        %2136 = vmatprep.subr.mxu0 0.0
        %2137 = vmatpush2.msra.mxu0 0.0
        %2138 = vmatprep.subr.mxu0 0.0
        %2139 = vmatpush2.msra.mxu0 0.0
        %2140 = vmatprep.subr.mxu0 0.0
        %2141 = vmatpush2.msra.mxu0 0.0
        %2142 = vmatprep.subr.mxu0 0.0
        %2143 = vmatpush2.msra.mxu0 0.0
        %2144 = vmatprep.subr.mxu0 0.0
        %2145 = vmatpush2.msra.mxu0 0.0
        %2146 = vmatprep.subr.mxu0 0.0
        %2147 = vmatpush2.msra.mxu0 0.0
        %2148 = vmatprep.subr.mxu0 0.0
        %2149 = vmatpush2.msra.mxu0 0.0
        %2150 = vmatprep.subr.mxu0 0.0
        %2151 = vmatpush2.msra.mxu0 0.0
        %2152 = vmatprep.subr.mxu0 0.0
        %2153 = vmatpush2.msra.mxu0 0.0
        %2154 = vmatprep.subr.mxu0 0.0
        %2155 = vmatpush2.msra.mxu0 0.0
        %2156 = vmatprep.subr.mxu0 0.0
        %2157 = vmatpush2.msra.mxu0 0.0
        %2158 = vmatprep.mubr.f32.mxu0 0.0
        %2159 = vmatmul.mubr.f32.gmra.mxu0 %v647
        %v2160 = vpop.f32.mrf.mxu0
        %v2161 = vadd.f32 %v1916, %v2160
        %v2162 = vpop.f32.mrf.mxu0
        %2163 = vmatprep.mubr.f32.mxu0 0.0
        %2164 = vmatmul.mubr.f32.gmra.mxu0 %v656
        %v2165 = vpop.f32.mrf.mxu0
        %v2166 = vadd.f32 %v1921, %v2165
        %v2167 = vpop.f32.mrf.mxu0
        %2168 = vmatprep.mubr.f32.mxu0 0.0
        %2169 = vmatmul.mubr.f32.gmra.mxu0 %v665
        %v2170 = vpop.f32.mrf.mxu0
        %v2171 = vadd.f32 %v1926, %v2170
        %v2172 = vpop.f32.mrf.mxu0
        %2173 = vmatprep.mubr.f32.mxu0 0.0
        %2174 = vmatmul.mubr.f32.gmra.mxu0 %v674
        %v2175 = vpop.f32.mrf.mxu0
        %v2176 = vadd.f32 %v1931, %v2175
        %v2177 = vpop.f32.mrf.mxu0
        %2178 = vmatprep.mubr.f32.mxu0 0.0
        %2179 = vmatmul.mubr.f32.gmra.mxu0 %v683
        %v2180 = vpop.f32.mrf.mxu0
        %v2181 = vadd.f32 %v1936, %v2180
        %v2182 = vpop.f32.mrf.mxu0
        %2183 = vmatprep.mubr.f32.mxu0 0.0
        %2184 = vmatmul.mubr.f32.gmra.mxu0 %v692
        %v2185 = vpop.f32.mrf.mxu0
        %v2186 = vadd.f32 %v1941, %v2185
        %v2187 = vpop.f32.mrf.mxu0
        %2188 = vmatprep.mubr.f32.mxu0 0.0
        %2189 = vmatmul.mubr.f32.gmra.mxu0 %v701
        %v2190 = vpop.f32.mrf.mxu0
        %v2191 = vadd.f32 %v1946, %v2190
        %v2192 = vpop.f32.mrf.mxu0
        %2193 = vmatprep.mubr.f32.mxu0 0.0
        %2194 = vmatmul.mubr.f32.gmra.mxu0 %v710
        %v2195 = vpop.f32.mrf.mxu0
        %v2196 = vadd.f32 %v1951, %v2195
        %v2197 = vpop.f32.mrf.mxu0
        %2198 = vmatprep.mubr.f32.mxu0 0.0
        %2199 = vmatmul.mubr.f32.gmra.mxu0 %v719
        %v2200 = vpop.f32.mrf.mxu0
        %v2201 = vadd.f32 %v1956, %v2200
        %v2202 = vpop.f32.mrf.mxu0
        %2203 = vmatprep.mubr.f32.mxu0 0.0
        %2204 = vmatmul.mubr.f32.gmra.mxu0 %v728
        %v2205 = vpop.f32.mrf.mxu0
        %v2206 = vadd.f32 %v1961, %v2205
        %v2207 = vpop.f32.mrf.mxu0
        %2208 = vmatprep.mubr.f32.mxu0 0.0
        %2209 = vmatmul.mubr.f32.gmra.mxu0 %v737
        %v2210 = vpop.f32.mrf.mxu0
        %v2211 = vadd.f32 %v1966, %v2210
        %v2212 = vpop.f32.mrf.mxu0
        %2213 = vmatprep.mubr.f32.mxu0 0.0
        %2214 = vmatmul.mubr.f32.gmra.mxu0 %v746
        %v2215 = vpop.f32.mrf.mxu0
        %v2216 = vadd.f32 %v1971, %v2215
        %v2217 = vpop.f32.mrf.mxu0
        %2218 = vmatprep.mubr.f32.mxu0 0.0
        %2219 = vmatmul.mubr.f32.gmra.mxu0 %v755
        %v2220 = vpop.f32.mrf.mxu0
        %v2221 = vadd.f32 %v1976, %v2220
        %v2222 = vpop.f32.mrf.mxu0
        %2223 = vmatprep.mubr.f32.mxu0 0.0
        %2224 = vmatmul.mubr.f32.gmra.mxu0 %v764
        %v2225 = vpop.f32.mrf.mxu0
        %v2226 = vadd.f32 %v1981, %v2225
        %v2227 = vpop.f32.mrf.mxu0
        %2228 = vmatprep.mubr.f32.mxu0 0.0
        %2229 = vmatmul.mubr.f32.gmra.mxu0 %v773
        %v2230 = vpop.f32.mrf.mxu0
        %v2231 = vadd.f32 %v1986, %v2230
        %v2232 = vpop.f32.mrf.mxu0
        %2233 = vmatprep.mubr.f32.mxu0 0.0
        %2234 = vmatmul.mubr.f32.gmra.mxu0 %v782
        %v2235 = vpop.f32.mrf.mxu0
        %v2236 = vadd.f32 %v1991, %v2235
        %v2237 = vpop.f32.mrf.mxu0
        %2238 = vmatprep.mubr.f32.mxu0 0.0
        %2239 = vmatmul.mubr.f32.gmra.mxu0 %v791
        %v2240 = vpop.f32.mrf.mxu0
        %v2241 = vadd.f32 %v1996, %v2240
        %v2242 = vpop.f32.mrf.mxu0
        %2243 = vmatprep.mubr.f32.mxu0 0.0
        %2244 = vmatmul.mubr.f32.gmra.mxu0 %v800
        %v2245 = vpop.f32.mrf.mxu0
        %v2246 = vadd.f32 %v2001, %v2245
        %v2247 = vpop.f32.mrf.mxu0
        %2248 = vmatprep.mubr.f32.mxu0 0.0
        %2249 = vmatmul.mubr.f32.gmra.mxu0 %v809
        %v2250 = vpop.f32.mrf.mxu0
        %v2251 = vadd.f32 %v2006, %v2250
        %v2252 = vpop.f32.mrf.mxu0
        %2253 = vmatprep.mubr.f32.mxu0 0.0
        %2254 = vmatmul.mubr.f32.gmra.mxu0 %v818
        %v2255 = vpop.f32.mrf.mxu0
        %v2256 = vadd.f32 %v2011, %v2255
        %v2257 = vpop.f32.mrf.mxu0
        %2258 = vmatprep.mubr.f32.mxu0 0.0
        %2259 = vmatmul.mubr.f32.gmra.mxu0 %v827
        %v2260 = vpop.f32.mrf.mxu0
        %v2261 = vadd.f32 %v2016, %v2260
        %v2262 = vpop.f32.mrf.mxu0
        %2263 = vmatprep.mubr.f32.mxu0 0.0
        %2264 = vmatmul.mubr.f32.gmra.mxu0 %v836
        %v2265 = vpop.f32.mrf.mxu0
        %v2266 = vadd.f32 %v2021, %v2265
        %v2267 = vpop.f32.mrf.mxu0
        %2268 = vmatprep.mubr.f32.mxu0 0.0
        %2269 = vmatmul.mubr.f32.gmra.mxu0 %v845
        %v2270 = vpop.f32.mrf.mxu0
        %v2271 = vadd.f32 %v2026, %v2270
        %v2272 = vpop.f32.mrf.mxu0
        %2273 = vmatprep.mubr.f32.mxu0 0.0
        %2274 = vmatmul.mubr.f32.gmra.mxu0 %v854
        %v2275 = vpop.f32.mrf.mxu0
        %v2276 = vadd.f32 %v2031, %v2275
        %v2277 = vpop.f32.mrf.mxu0
        %2278 = vmatprep.mubr.f32.mxu0 0.0
        %2279 = vmatmul.mubr.f32.gmra.mxu0 %v863
        %v2280 = vpop.f32.mrf.mxu0
        %v2281 = vadd.f32 %v2036, %v2280
        %v2282 = vpop.f32.mrf.mxu0
        %2283 = vmatprep.mubr.f32.mxu0 0.0
        %2284 = vmatmul.mubr.f32.gmra.mxu0 %v872
        %v2285 = vpop.f32.mrf.mxu0
        %v2286 = vadd.f32 %v2041, %v2285
        %v2287 = vpop.f32.mrf.mxu0
        %2288 = vmatprep.mubr.f32.mxu0 0.0
        %2289 = vmatmul.mubr.f32.gmra.mxu0 %v881
        %v2290 = vpop.f32.mrf.mxu0
        %v2291 = vadd.f32 %v2046, %v2290
        %v2292 = vpop.f32.mrf.mxu0
        %2293 = vmatprep.mubr.f32.mxu0 0.0
        %2294 = vmatmul.mubr.f32.gmra.mxu0 %v890
        %v2295 = vpop.f32.mrf.mxu0
        %v2296 = vadd.f32 %v2051, %v2295
        %v2297 = vpop.f32.mrf.mxu0
        %2298 = vmatprep.mubr.f32.mxu0 0.0
        %2299 = vmatmul.mubr.f32.gmra.mxu0 %v899
        %v2300 = vpop.f32.mrf.mxu0
        %v2301 = vadd.f32 %v2056, %v2300
        %v2302 = vpop.f32.mrf.mxu0
        %2303 = vmatprep.mubr.f32.mxu0 0.0
        %2304 = vmatmul.mubr.f32.gmra.mxu0 %v908
        %v2305 = vpop.f32.mrf.mxu0
        %v2306 = vadd.f32 %v2061, %v2305
        %v2307 = vpop.f32.mrf.mxu0
        %2308 = vmatprep.mubr.f32.mxu0 0.0
        %2309 = vmatmul.mubr.f32.gmra.mxu0 %v917
        %v2310 = vpop.f32.mrf.mxu0
        %v2311 = vadd.f32 %v2066, %v2310
        %v2312 = vpop.f32.mrf.mxu0
        %2313 = vmatprep.mubr.f32.mxu0 0.0
        %2314 = vmatmul.mubr.f32.gmra.mxu0 %v926
        %v2315 = vpop.f32.mrf.mxu0
        %v2316 = vadd.f32 %v2071, %v2315
        %v2317 = vpop.f32.mrf.mxu0
        %2318 = vmatprep.mubr.f32.mxu0 0.0
        %2319 = vmatmul.mubr.f32.gmra.mxu0 %v935
        %v2320 = vpop.f32.mrf.mxu0
        %v2321 = vadd.f32 %v2076, %v2320
        %v2322 = vpop.f32.mrf.mxu0
        %2323 = vmatprep.mubr.f32.mxu0 0.0
        %2324 = vmatmul.mubr.f32.gmra.mxu0 %v944
        %v2325 = vpop.f32.mrf.mxu0
        %v2326 = vadd.f32 %v2081, %v2325
        %v2327 = vpop.f32.mrf.mxu0
        %2328 = vmatprep.mubr.f32.mxu0 0.0
        %2329 = vmatmul.mubr.f32.gmra.mxu0 %v953
        %v2330 = vpop.f32.mrf.mxu0
        %v2331 = vadd.f32 %v2086, %v2330
        %v2332 = vpop.f32.mrf.mxu0
        %2333 = vmatprep.mubr.f32.mxu0 0.0
        %2334 = vmatmul.mubr.f32.gmra.mxu0 %v962
        %v2335 = vpop.f32.mrf.mxu0
        %v2336 = vadd.f32 %v2091, %v2335
        %v2337 = vpop.f32.mrf.mxu0
        %2338 = vdwg.mxu0
        %s2339 = sld [smem:[#allocation3]]
        %vm2340 = vcmp.gt.f32.partialorder %v2161, 0.0
        %vm2341 = vcmp.gt.f32.partialorder %v2166, 0.0
        %vm2342 = vcmp.gt.f32.partialorder %v2171, 0.0
        %vm2343 = vcmp.gt.f32.partialorder %v2176, 0.0
        %vm2344 = vcmp.gt.f32.partialorder %v2181, 0.0
        %vm2345 = vcmp.gt.f32.partialorder %v2186, 0.0
        %vm2346 = vcmp.gt.f32.partialorder %v2191, 0.0
        %vm2347 = vcmp.gt.f32.partialorder %v2196, 0.0
        %vm2348 = vcmp.gt.f32.partialorder %v2201, 0.0
        %vm2349 = vcmp.gt.f32.partialorder %v2206, 0.0
        %vm2350 = vcmp.gt.f32.partialorder %v2211, 0.0
        %vm2351 = vcmp.gt.f32.partialorder %v2216, 0.0
        %vm2352 = vcmp.gt.f32.partialorder %v2221, 0.0
        %vm2353 = vcmp.gt.f32.partialorder %v2226, 0.0
        %vm2354 = vcmp.gt.f32.partialorder %v2231, 0.0
        %vm2355 = vcmp.gt.f32.partialorder %v2236, 0.0
        %vm2356 = vcmp.gt.f32.partialorder %v2241, 0.0
        %vm2357 = vcmp.gt.f32.partialorder %v2246, 0.0
        %vm2358 = vcmp.gt.f32.partialorder %v2251, 0.0
        %vm2359 = vcmp.gt.f32.partialorder %v2256, 0.0
        %vm2360 = vcmp.gt.f32.partialorder %v2261, 0.0
        %vm2361 = vcmp.gt.f32.partialorder %v2266, 0.0
        %vm2362 = vcmp.gt.f32.partialorder %v2271, 0.0
        %vm2363 = vcmp.gt.f32.partialorder %v2276, 0.0
        %vm2364 = vcmp.gt.f32.partialorder %v2281, 0.0
        %vm2365 = vcmp.gt.f32.partialorder %v2286, 0.0
        %vm2366 = vcmp.gt.f32.partialorder %v2291, 0.0
        %vm2367 = vcmp.gt.f32.partialorder %v2296, 0.0
        %vm2368 = vcmp.gt.f32.partialorder %v2301, 0.0
        %vm2369 = vcmp.gt.f32.partialorder %v2306, 0.0
        %vm2370 = vcmp.gt.f32.partialorder %v2311, 0.0
        %vm2371 = vcmp.gt.f32.partialorder %v2316, 0.0
        %vm2372 = vcmp.gt.f32.partialorder %v2321, 0.0
        %vm2373 = vcmp.gt.f32.partialorder %v2326, 0.0
        %vm2374 = vcmp.gt.f32.partialorder %v2331, 0.0
        %vm2375 = vcmp.gt.f32.partialorder %v2336, 0.0
        %v2376 = vstv %s2339
        %v2377 = vmul.f32 %v2376, %v2161
        %v2378 = vmul.f32 %v2376, %v2166
        %v2379 = vmul.f32 %v2376, %v2171
        %v2380 = vmul.f32 %v2376, %v2176
        %v2381 = vmul.f32 %v2376, %v2181
        %v2382 = vmul.f32 %v2376, %v2186
        %v2383 = vmul.f32 %v2376, %v2191
        %v2384 = vmul.f32 %v2376, %v2196
        %v2385 = vmul.f32 %v2376, %v2201
        %v2386 = vmul.f32 %v2376, %v2206
        %v2387 = vmul.f32 %v2376, %v2211
        %v2388 = vmul.f32 %v2376, %v2216
        %v2389 = vmul.f32 %v2376, %v2221
        %v2390 = vmul.f32 %v2376, %v2226
        %v2391 = vmul.f32 %v2376, %v2231
        %v2392 = vmul.f32 %v2376, %v2236
        %v2393 = vmul.f32 %v2376, %v2241
        %v2394 = vmul.f32 %v2376, %v2246
        %v2395 = vmul.f32 %v2376, %v2251
        %v2396 = vmul.f32 %v2376, %v2256
        %v2397 = vmul.f32 %v2376, %v2261
        %v2398 = vmul.f32 %v2376, %v2266
        %v2399 = vmul.f32 %v2376, %v2271
        %v2400 = vmul.f32 %v2376, %v2276
        %v2401 = vmul.f32 %v2376, %v2281
        %v2402 = vmul.f32 %v2376, %v2286
        %v2403 = vmul.f32 %v2376, %v2291
        %v2404 = vmul.f32 %v2376, %v2296
        %v2405 = vmul.f32 %v2376, %v2301
        %v2406 = vmul.f32 %v2376, %v2306
        %v2407 = vmul.f32 %v2376, %v2311
        %v2408 = vmul.f32 %v2376, %v2316
        %v2409 = vmul.f32 %v2376, %v2321
        %v2410 = vmul.f32 %v2376, %v2326
        %v2411 = vmul.f32 %v2376, %v2331
        %v2412 = vmul.f32 %v2376, %v2336
        %v2413 = vsel %vm2340, %v2161, %v2377
        %v2414 = vsel %vm2341, %v2166, %v2378
        %v2415 = vsel %vm2342, %v2171, %v2379
        %v2416 = vsel %vm2343, %v2176, %v2380
        %v2417 = vsel %vm2344, %v2181, %v2381
        %v2418 = vsel %vm2345, %v2186, %v2382
        %v2419 = vsel %vm2346, %v2191, %v2383
        %v2420 = vsel %vm2347, %v2196, %v2384
        %v2421 = vsel %vm2348, %v2201, %v2385
        %v2422 = vsel %vm2349, %v2206, %v2386
        %v2423 = vsel %vm2350, %v2211, %v2387
        %v2424 = vsel %vm2351, %v2216, %v2388
        %v2425 = vsel %vm2352, %v2221, %v2389
        %v2426 = vsel %vm2353, %v2226, %v2390
        %v2427 = vsel %vm2354, %v2231, %v2391
        %v2428 = vsel %vm2355, %v2236, %v2392
        %v2429 = vsel %vm2356, %v2241, %v2393
        %v2430 = vsel %vm2357, %v2246, %v2394
        %v2431 = vsel %vm2358, %v2251, %v2395
        %v2432 = vsel %vm2359, %v2256, %v2396
        %v2433 = vsel %vm2360, %v2261, %v2397
        %v2434 = vsel %vm2361, %v2266, %v2398
        %v2435 = vsel %vm2362, %v2271, %v2399
        %v2436 = vsel %vm2363, %v2276, %v2400
        %v2437 = vsel %vm2364, %v2281, %v2401
        %v2438 = vsel %vm2365, %v2286, %v2402
        %v2439 = vsel %vm2366, %v2291, %v2403
        %v2440 = vsel %vm2367, %v2296, %v2404
        %v2441 = vsel %vm2368, %v2301, %v2405
        %v2442 = vsel %vm2369, %v2306, %v2406
        %v2443 = vsel %vm2370, %v2311, %v2407
        %v2444 = vsel %vm2371, %v2316, %v2408
        %v2445 = vsel %vm2372, %v2321, %v2409
        %v2446 = vsel %vm2373, %v2326, %v2410
        %v2447 = vsel %vm2374, %v2331, %v2411
        %v2448 = vsel %vm2375, %v2336, %v2412
        %2450 = vset.pattern.permute.xlu0 0
        %2451 = vperm.xlu0 %2450, %v603
        %v2452 = vpop.permute.xlu0 %2451
        %2455 = vset.pattern.permute.xlu0 0
        %2456 = vperm.xlu0 %2455, %v604
        %v2457 = vpop.permute.xlu0 %2456
        %2460 = vset.pattern.permute.xlu0 0
        %2461 = vperm.xlu0 %2460, %v605
        %v2462 = vpop.permute.xlu0 %2461
        %2465 = vset.pattern.permute.xlu0 0
        %2466 = vperm.xlu0 %2465, %v606
        %v2467 = vpop.permute.xlu0 %2466
        %2470 = vset.pattern.permute.xlu0 0
        %2471 = vperm.xlu0 %2470, %v607
        %v2472 = vpop.permute.xlu0 %2471
        %2475 = vset.pattern.permute.xlu0 0
        %2476 = vperm.xlu0 %2475, %v608
        %v2477 = vpop.permute.xlu0 %2476
        %2480 = vset.pattern.permute.xlu0 0
        %2481 = vperm.xlu0 %2480, %v609
        %v2482 = vpop.permute.xlu0 %2481
        %2485 = vset.pattern.permute.xlu0 0
        %2486 = vperm.xlu0 %2485, %v610
        %v2487 = vpop.permute.xlu0 %2486
        %2490 = vset.pattern.permute.xlu0 0
        %2491 = vperm.xlu0 %2490, %v611
        %v2492 = vpop.permute.xlu0 %2491
        %2495 = vset.pattern.permute.xlu0 0
        %2496 = vperm.xlu0 %2495, %v612
        %v2497 = vpop.permute.xlu0 %2496
        %2500 = vset.pattern.permute.xlu0 0
        %2501 = vperm.xlu0 %2500, %v613
        %v2502 = vpop.permute.xlu0 %2501
        %2505 = vset.pattern.permute.xlu0 0
        %2506 = vperm.xlu0 %2505, %v614
        %v2507 = vpop.permute.xlu0 %2506
        %2510 = vset.pattern.permute.xlu0 0
        %2511 = vperm.xlu0 %2510, %v615
        %v2512 = vpop.permute.xlu0 %2511
        %2515 = vset.pattern.permute.xlu0 0
        %2516 = vperm.xlu0 %2515, %v616
        %v2517 = vpop.permute.xlu0 %2516
        %2520 = vset.pattern.permute.xlu0 0
        %2521 = vperm.xlu0 %2520, %v617
        %v2522 = vpop.permute.xlu0 %2521
        %2525 = vset.pattern.permute.xlu0 0
        %2526 = vperm.xlu0 %2525, %v618
        %v2527 = vpop.permute.xlu0 %2526
        %2530 = vset.pattern.permute.xlu0 0
        %2531 = vperm.xlu0 %2530, %v619
        %v2532 = vpop.permute.xlu0 %2531
        %2535 = vset.pattern.permute.xlu0 0
        %2536 = vperm.xlu0 %2535, %v620
        %v2537 = vpop.permute.xlu0 %2536
        %2540 = vset.pattern.permute.xlu0 0
        %2541 = vperm.xlu0 %2540, %v621
        %v2542 = vpop.permute.xlu0 %2541
        %2545 = vset.pattern.permute.xlu0 0
        %2546 = vperm.xlu0 %2545, %v622
        %v2547 = vpop.permute.xlu0 %2546
        %2550 = vset.pattern.permute.xlu0 0
        %2551 = vperm.xlu0 %2550, %v623
        %v2552 = vpop.permute.xlu0 %2551
        %2555 = vset.pattern.permute.xlu0 0
        %2556 = vperm.xlu0 %2555, %v624
        %v2557 = vpop.permute.xlu0 %2556
        %2560 = vset.pattern.permute.xlu0 0
        %2561 = vperm.xlu0 %2560, %v625
        %v2562 = vpop.permute.xlu0 %2561
        %2565 = vset.pattern.permute.xlu0 0
        %2566 = vperm.xlu0 %2565, %v626
        %v2567 = vpop.permute.xlu0 %2566
        %2570 = vset.pattern.permute.xlu0 0
        %2571 = vperm.xlu0 %2570, %v627
        %v2572 = vpop.permute.xlu0 %2571
        %2575 = vset.pattern.permute.xlu0 0
        %2576 = vperm.xlu0 %2575, %v628
        %v2577 = vpop.permute.xlu0 %2576
        %2580 = vset.pattern.permute.xlu0 0
        %2581 = vperm.xlu0 %2580, %v629
        %v2582 = vpop.permute.xlu0 %2581
        %2585 = vset.pattern.permute.xlu0 0
        %2586 = vperm.xlu0 %2585, %v630
        %v2587 = vpop.permute.xlu0 %2586
        %2590 = vset.pattern.permute.xlu0 0
        %2591 = vperm.xlu0 %2590, %v631
        %v2592 = vpop.permute.xlu0 %2591
        %2595 = vset.pattern.permute.xlu0 0
        %2596 = vperm.xlu0 %2595, %v632
        %v2597 = vpop.permute.xlu0 %2596
        %2600 = vset.pattern.permute.xlu0 0
        %2601 = vperm.xlu0 %2600, %v633
        %v2602 = vpop.permute.xlu0 %2601
        %2605 = vset.pattern.permute.xlu0 0
        %2606 = vperm.xlu0 %2605, %v634
        %v2607 = vpop.permute.xlu0 %2606
        %2610 = vset.pattern.permute.xlu0 0
        %2611 = vperm.xlu0 %2610, %v635
        %v2612 = vpop.permute.xlu0 %2611
        %2615 = vset.pattern.permute.xlu0 0
        %2616 = vperm.xlu0 %2615, %v636
        %v2617 = vpop.permute.xlu0 %2616
        %2620 = vset.pattern.permute.xlu0 0
        %2621 = vperm.xlu0 %2620, %v637
        %v2622 = vpop.permute.xlu0 %2621
        %2625 = vset.pattern.permute.xlu0 0
        %2626 = vperm.xlu0 %2625, %v638
        %v2627 = vpop.permute.xlu0 %2626
        %v2629 = vmul.f32 %v2413, %v2452
        %v2630 = vmul.f32 %v2414, %v2457
        %v2631 = vmul.f32 %v2415, %v2462
        %v2632 = vmul.f32 %v2416, %v2467
        %v2633 = vmul.f32 %v2417, %v2472
        %v2634 = vmul.f32 %v2418, %v2477
        %v2635 = vmul.f32 %v2419, %v2482
        %v2636 = vmul.f32 %v2420, %v2487
        %v2637 = vmul.f32 %v2421, %v2492
        %v2638 = vmul.f32 %v2422, %v2497
        %v2639 = vmul.f32 %v2423, %v2502
        %v2640 = vmul.f32 %v2424, %v2507
        %v2641 = vmul.f32 %v2425, %v2512
        %v2642 = vmul.f32 %v2426, %v2517
        %v2643 = vmul.f32 %v2427, %v2522
        %v2644 = vmul.f32 %v2428, %v2527
        %v2645 = vmul.f32 %v2429, %v2532
        %v2646 = vmul.f32 %v2430, %v2537
        %v2647 = vmul.f32 %v2431, %v2542
        %v2648 = vmul.f32 %v2432, %v2547
        %v2649 = vmul.f32 %v2433, %v2552
        %v2650 = vmul.f32 %v2434, %v2557
        %v2651 = vmul.f32 %v2435, %v2562
        %v2652 = vmul.f32 %v2436, %v2567
        %v2653 = vmul.f32 %v2437, %v2572
        %v2654 = vmul.f32 %v2438, %v2577
        %v2655 = vmul.f32 %v2439, %v2582
        %v2656 = vmul.f32 %v2440, %v2587
        %v2657 = vmul.f32 %v2441, %v2592
        %v2658 = vmul.f32 %v2442, %v2597
        %v2659 = vmul.f32 %v2443, %v2602
        %v2660 = vmul.f32 %v2444, %v2607
        %v2661 = vmul.f32 %v2445, %v2612
        %v2662 = vmul.f32 %v2446, %v2617
        %v2663 = vmul.f32 %v2447, %v2622
        %v2664 = vmul.f32 %v2448, %v2627
        %2665 = vst [vmem:[#allocation2 + $0x13] sm:$0xff] %v2629
        %2666 = vst [vmem:[#allocation2 + $0x1b] sm:$0xff] %v2630
        %2667 = vst [vmem:[#allocation2 + $0x23] sm:$0xff] %v2631
        %2668 = vst [vmem:[#allocation2 + $0x2b] sm:$0xff] %v2632
        %2669 = vst [vmem:[#allocation2 + $0x33] sm:$0xff] %v2633
        %2670 = vst [vmem:[#allocation2 + $0x3b] sm:$0xff] %v2634
        %2671 = vst [vmem:[#allocation2 + $0x43] sm:$0xff] %v2635
        %2672 = vst [vmem:[#allocation2 + $0x4b] sm:$0xff] %v2636
        %2673 = vst [vmem:[#allocation2 + $0x53] sm:$0xff] %v2637
        %2674 = vst [vmem:[#allocation2 + $0x5b] sm:$0xff] %v2638
        %2675 = vst [vmem:[#allocation2 + $0x63] sm:$0xff] %v2639
        %2676 = vst [vmem:[#allocation2 + $0x6b] sm:$0xff] %v2640
        %2677 = vst [vmem:[#allocation2 + $0x73] sm:$0xff] %v2641
        %2678 = vst [vmem:[#allocation2 + $0x7b] sm:$0xff] %v2642
        %2679 = vst [vmem:[#allocation2 + $0x83] sm:$0xff] %v2643
        %2680 = vst [vmem:[#allocation2 + $0x8b] sm:$0xff] %v2644
        %2681 = vst [vmem:[#allocation2 + $0x93] sm:$0xff] %v2645
        %2682 = vst [vmem:[#allocation2 + $0x9b] sm:$0xff] %v2646
        %2683 = vst [vmem:[#allocation2 + $0xa3] sm:$0xff] %v2647
        %2684 = vst [vmem:[#allocation2 + $0xab] sm:$0xff] %v2648
        %2685 = vst [vmem:[#allocation2 + $0xb3] sm:$0xff] %v2649
        %2686 = vst [vmem:[#allocation2 + $0xbb] sm:$0xff] %v2650
        %2687 = vst [vmem:[#allocation2 + $0xc3] sm:$0xff] %v2651
        %2688 = vst [vmem:[#allocation2 + $0xcb] sm:$0xff] %v2652
        %2689 = vst [vmem:[#allocation2 + $0xd3] sm:$0xff] %v2653
        %2690 = vst [vmem:[#allocation2 + $0xdb] sm:$0xff] %v2654
        %2691 = vst [vmem:[#allocation2 + $0xe3] sm:$0xff] %v2655
        %2692 = vst [vmem:[#allocation2 + $0xeb] sm:$0xff] %v2656
        %2693 = vst [vmem:[#allocation2 + $0xf3] sm:$0xff] %v2657
        %2694 = vst [vmem:[#allocation2 + $0xfb] sm:$0xff] %v2658
        %2695 = vst [vmem:[#allocation2 + $0x103] sm:$0xff] %v2659
        %2696 = vst [vmem:[#allocation2 + $0x10b] sm:$0xff] %v2660
        %2697 = vst [vmem:[#allocation2 + $0x113] sm:$0xff] %v2661
        %2698 = vst [vmem:[#allocation2 + $0x11b] sm:$0xff] %v2662
        %2699 = vst [vmem:[#allocation2 + $0x123] sm:$0xff] %v2663
        %2700 = vst [vmem:[#allocation2 + $0x12b] sm:$0xff] %v2664
        %v2701 = vld [vmem:[#allocation2] sm:$0xff]
        %v2702 = vld [vmem:[#allocation2 + $0x8] sm:$0xff]
        %v2703 = vld [vmem:[#allocation2 + $0x10] sm:$0xff]
        %v2704 = vld [vmem:[#allocation2 + $0x18] sm:$0xff]
        %v2705 = vld [vmem:[#allocation2 + $0x20] sm:$0xff]
        %v2706 = vld [vmem:[#allocation2 + $0x28] sm:$0xff]
        %v2707 = vld [vmem:[#allocation2 + $0x30] sm:$0xff]
        %v2708 = vld [vmem:[#allocation2 + $0x38] sm:$0xff]
        %v2709 = vld [vmem:[#allocation2 + $0x40] sm:$0xff]
        %v2710 = vld [vmem:[#allocation2 + $0x48] sm:$0xff]
        %v2711 = vld [vmem:[#allocation2 + $0x50] sm:$0xff]
        %v2712 = vld [vmem:[#allocation2 + $0x58] sm:$0xff]
        %v2713 = vld [vmem:[#allocation2 + $0x60] sm:$0xff]
        %v2714 = vld [vmem:[#allocation2 + $0x68] sm:$0xff]
        %v2715 = vld [vmem:[#allocation2 + $0x70] sm:$0xff]
        %v2716 = vld [vmem:[#allocation2 + $0x78] sm:$0xff]
        %v2717 = vld [vmem:[#allocation2 + $0x80] sm:$0xff]
        %v2718 = vld [vmem:[#allocation2 + $0x88] sm:$0xff]
        %v2719 = vld [vmem:[#allocation2 + $0x90] sm:$0xff]
        %v2720 = vld [vmem:[#allocation2 + $0x98] sm:$0xff]
        %v2721 = vld [vmem:[#allocation2 + $0xa0] sm:$0xff]
        %v2722 = vld [vmem:[#allocation2 + $0xa8] sm:$0xff]
        %v2723 = vld [vmem:[#allocation2 + $0xb0] sm:$0xff]
        %v2724 = vld [vmem:[#allocation2 + $0xb8] sm:$0xff]
        %v2725 = vld [vmem:[#allocation2 + $0xc0] sm:$0xff]
        %v2726 = vld [vmem:[#allocation2 + $0xc8] sm:$0xff]
        %v2727 = vld [vmem:[#allocation2 + $0xd0] sm:$0xff]
        %v2728 = vld [vmem:[#allocation2 + $0xd8] sm:$0xff]
        %v2729 = vld [vmem:[#allocation2 + $0xe0] sm:$0xff]
        %v2730 = vld [vmem:[#allocation2 + $0xe8] sm:$0xff]
        %v2731 = vld [vmem:[#allocation2 + $0xf0] sm:$0xff]
        %v2732 = vld [vmem:[#allocation2 + $0xf8] sm:$0xff]
        %v2733 = vld [vmem:[#allocation2 + $0x100] sm:$0xff]
        %v2734 = vld [vmem:[#allocation2 + $0x108] sm:$0xff]
        %v2735 = vld [vmem:[#allocation2 + $0x110] sm:$0xff]
        %v2736 = vld [vmem:[#allocation2 + $0x118] sm:$0xff]
        %v2737 = vld [vmem:[#allocation12] sm:$0xff]
        %v2738 = vld [vmem:[#allocation12 + $0x8] sm:$0xff]
        %v2739 = vld [vmem:[#allocation12 + $0x10] sm:$0xff]
        %v2740 = vld [vmem:[#allocation12 + $0x18] sm:$0xff]
        %v2741 = vld [vmem:[#allocation12 + $0x20] sm:$0xff]
        %v2742 = vld [vmem:[#allocation12 + $0x28] sm:$0xff]
        %v2743 = vld [vmem:[#allocation12 + $0x30] sm:$0xff]
        %v2744 = vld [vmem:[#allocation12 + $0x38] sm:$0xff]
        %v2745 = vld [vmem:[#allocation12 + $0x40] sm:$0xff]
        %v2746 = vld [vmem:[#allocation12 + $0x48] sm:$0xff]
        %v2747 = vld [vmem:[#allocation12 + $0x50] sm:$0xff]
        %v2748 = vld [vmem:[#allocation12 + $0x58] sm:$0xff]
        %v2749 = vld [vmem:[#allocation12 + $0x60] sm:$0xff]
        %v2750 = vld [vmem:[#allocation12 + $0x68] sm:$0xff]
        %v2751 = vld [vmem:[#allocation12 + $0x70] sm:$0xff]
        %v2752 = vld [vmem:[#allocation12 + $0x78] sm:$0xff]
        %v2753 = vld [vmem:[#allocation2 + $0x1] sm:$0xff]
        %v2754 = vld [vmem:[#allocation2 + $0x9] sm:$0xff]
        %v2755 = vld [vmem:[#allocation2 + $0x11] sm:$0xff]
        %v2756 = vld [vmem:[#allocation2 + $0x19] sm:$0xff]
        %v2757 = vld [vmem:[#allocation2 + $0x21] sm:$0xff]
        %v2758 = vld [vmem:[#allocation2 + $0x29] sm:$0xff]
        %v2759 = vld [vmem:[#allocation2 + $0x31] sm:$0xff]
        %v2760 = vld [vmem:[#allocation2 + $0x39] sm:$0xff]
        %v2761 = vld [vmem:[#allocation2 + $0x41] sm:$0xff]
        %v2762 = vld [vmem:[#allocation2 + $0x49] sm:$0xff]
        %v2763 = vld [vmem:[#allocation2 + $0x51] sm:$0xff]
        %v2764 = vld [vmem:[#allocation2 + $0x59] sm:$0xff]
        %v2765 = vld [vmem:[#allocation2 + $0x61] sm:$0xff]
        %v2766 = vld [vmem:[#allocation2 + $0x69] sm:$0xff]
        %v2767 = vld [vmem:[#allocation2 + $0x71] sm:$0xff]
        %v2768 = vld [vmem:[#allocation2 + $0x79] sm:$0xff]
        %v2769 = vld [vmem:[#allocation2 + $0x81] sm:$0xff]
        %v2770 = vld [vmem:[#allocation2 + $0x89] sm:$0xff]
        %v2771 = vld [vmem:[#allocation2 + $0x91] sm:$0xff]
        %v2772 = vld [vmem:[#allocation2 + $0x99] sm:$0xff]
        %v2773 = vld [vmem:[#allocation2 + $0xa1] sm:$0xff]
        %v2774 = vld [vmem:[#allocation2 + $0xa9] sm:$0xff]
        %v2775 = vld [vmem:[#allocation2 + $0xb1] sm:$0xff]
        %v2776 = vld [vmem:[#allocation2 + $0xb9] sm:$0xff]
        %v2777 = vld [vmem:[#allocation2 + $0xc1] sm:$0xff]
        %v2778 = vld [vmem:[#allocation2 + $0xc9] sm:$0xff]
        %v2779 = vld [vmem:[#allocation2 + $0xd1] sm:$0xff]
        %v2780 = vld [vmem:[#allocation2 + $0xd9] sm:$0xff]
        %v2781 = vld [vmem:[#allocation2 + $0xe1] sm:$0xff]
        %v2782 = vld [vmem:[#allocation2 + $0xe9] sm:$0xff]
        %v2783 = vld [vmem:[#allocation2 + $0xf1] sm:$0xff]
        %v2784 = vld [vmem:[#allocation2 + $0xf9] sm:$0xff]
        %v2785 = vld [vmem:[#allocation2 + $0x101] sm:$0xff]
        %v2786 = vld [vmem:[#allocation2 + $0x109] sm:$0xff]
        %v2787 = vld [vmem:[#allocation2 + $0x111] sm:$0xff]
        %v2788 = vld [vmem:[#allocation2 + $0x119] sm:$0xff]
        %s2789 = scalar_lea.vmem [#allocation12], 128
        %v2790 = vld [vmem:[%s2789] sm:$0xff]
        %v2791 = vld [vmem:[%s2789 + $0x8] sm:$0xff]
        %v2792 = vld [vmem:[%s2789 + $0x10] sm:$0xff]
        %v2793 = vld [vmem:[%s2789 + $0x18] sm:$0xff]
        %v2794 = vld [vmem:[%s2789 + $0x20] sm:$0xff]
        %v2795 = vld [vmem:[%s2789 + $0x28] sm:$0xff]
        %v2796 = vld [vmem:[%s2789 + $0x30] sm:$0xff]
        %v2797 = vld [vmem:[%s2789 + $0x38] sm:$0xff]
        %v2798 = vld [vmem:[%s2789 + $0x40] sm:$0xff]
        %v2799 = vld [vmem:[%s2789 + $0x48] sm:$0xff]
        %v2800 = vld [vmem:[%s2789 + $0x50] sm:$0xff]
        %v2801 = vld [vmem:[%s2789 + $0x58] sm:$0xff]
        %v2802 = vld [vmem:[%s2789 + $0x60] sm:$0xff]
        %v2803 = vld [vmem:[%s2789 + $0x68] sm:$0xff]
        %v2804 = vld [vmem:[%s2789 + $0x70] sm:$0xff]
        %v2805 = vld [vmem:[%s2789 + $0x78] sm:$0xff]
        %2806 = vmatprep.subr.mxu0 0.0
        %2807 = vmatpush1.msra.mxu0 %v2805
        %2808 = vmatprep.subr.mxu0 0.0
        %2809 = vmatpush1.msra.mxu0 %v2804
        %2810 = vmatprep.subr.mxu0 0.0
        %2811 = vmatpush1.msra.mxu0 %v2803
        %2812 = vmatprep.subr.mxu0 0.0
        %2813 = vmatpush1.msra.mxu0 %v2802
        %2814 = vmatprep.subr.mxu0 0.0
        %2815 = vmatpush1.msra.mxu0 %v2801
        %2816 = vmatprep.subr.mxu0 0.0
        %2817 = vmatpush1.msra.mxu0 %v2800
        %2818 = vmatprep.subr.mxu0 0.0
        %2819 = vmatpush1.msra.mxu0 %v2799
        %2820 = vmatprep.subr.mxu0 0.0
        %2821 = vmatpush1.msra.mxu0 %v2798
        %2822 = vmatprep.subr.mxu0 0.0
        %2823 = vmatpush1.msra.mxu0 %v2797
        %2824 = vmatprep.subr.mxu0 0.0
        %2825 = vmatpush1.msra.mxu0 %v2796
        %2826 = vmatprep.subr.mxu0 0.0
        %2827 = vmatpush1.msra.mxu0 %v2795
        %2828 = vmatprep.subr.mxu0 0.0
        %2829 = vmatpush1.msra.mxu0 %v2794
        %2830 = vmatprep.subr.mxu0 0.0
        %2831 = vmatpush1.msra.mxu0 %v2793
        %2832 = vmatprep.subr.mxu0 0.0
        %2833 = vmatpush1.msra.mxu0 %v2792
        %2834 = vmatprep.subr.mxu0 0.0
        %2835 = vmatpush1.msra.mxu0 %v2791
        %2836 = vmatprep.subr.mxu0 0.0
        %2837 = vmatpush1.msra.mxu0 %v2790
        %2838 = vmatprep.subr.mxu0 0.0
        %2839 = vmatpush2.msra.mxu0 0.0
        %2840 = vmatprep.subr.mxu0 0.0
        %2841 = vmatpush2.msra.mxu0 0.0
        %2842 = vmatprep.subr.mxu0 0.0
        %2843 = vmatpush2.msra.mxu0 0.0
        %2844 = vmatprep.subr.mxu0 0.0
        %2845 = vmatpush2.msra.mxu0 0.0
        %2846 = vmatprep.subr.mxu0 0.0
        %2847 = vmatpush2.msra.mxu0 0.0
        %2848 = vmatprep.subr.mxu0 0.0
        %2849 = vmatpush2.msra.mxu0 0.0
        %2850 = vmatprep.subr.mxu0 0.0
        %2851 = vmatpush2.msra.mxu0 0.0
        %2852 = vmatprep.subr.mxu0 0.0
        %2853 = vmatpush2.msra.mxu0 0.0
        %2854 = vmatprep.subr.mxu0 0.0
        %2855 = vmatpush2.msra.mxu0 0.0
        %2856 = vmatprep.subr.mxu0 0.0
        %2857 = vmatpush2.msra.mxu0 0.0
        %2858 = vmatprep.subr.mxu0 0.0
        %2859 = vmatpush2.msra.mxu0 0.0
        %2860 = vmatprep.subr.mxu0 0.0
        %2861 = vmatpush2.msra.mxu0 0.0
        %2862 = vmatprep.subr.mxu0 0.0
        %2863 = vmatpush2.msra.mxu0 0.0
        %2864 = vmatprep.subr.mxu0 0.0
        %2865 = vmatpush2.msra.mxu0 0.0
        %2866 = vmatprep.subr.mxu0 0.0
        %2867 = vmatpush2.msra.mxu0 0.0
        %2868 = vmatprep.subr.mxu0 0.0
        %2869 = vmatpush2.msra.mxu0 0.0
        %2870 = vmatprep.mubr.f32.mxu0 0.0
        %2871 = vmatmul.mubr.f32.gmra.mxu0 %v2753
        %v2872 = vpop.f32.mrf.mxu0
        %v2873 = vadd.f32 0.0, %v2872
        %v2874 = vpop.f32.mrf.mxu0
        %2875 = vmatprep.mubr.f32.mxu0 0.0
        %2876 = vmatmul.mubr.f32.gmra.mxu0 %v2754
        %v2877 = vpop.f32.mrf.mxu0
        %v2878 = vadd.f32 0.0, %v2877
        %v2879 = vpop.f32.mrf.mxu0
        %2880 = vmatprep.mubr.f32.mxu0 0.0
        %2881 = vmatmul.mubr.f32.gmra.mxu0 %v2755
        %v2882 = vpop.f32.mrf.mxu0
        %v2883 = vadd.f32 0.0, %v2882
        %v2884 = vpop.f32.mrf.mxu0
        %2885 = vmatprep.mubr.f32.mxu0 0.0
        %2886 = vmatmul.mubr.f32.gmra.mxu0 %v2756
        %v2887 = vpop.f32.mrf.mxu0
        %v2888 = vadd.f32 0.0, %v2887
        %v2889 = vpop.f32.mrf.mxu0
        %2890 = vmatprep.mubr.f32.mxu0 0.0
        %2891 = vmatmul.mubr.f32.gmra.mxu0 %v2757
        %v2892 = vpop.f32.mrf.mxu0
        %v2893 = vadd.f32 0.0, %v2892
        %v2894 = vpop.f32.mrf.mxu0
        %2895 = vmatprep.mubr.f32.mxu0 0.0
        %2896 = vmatmul.mubr.f32.gmra.mxu0 %v2758
        %v2897 = vpop.f32.mrf.mxu0
        %v2898 = vadd.f32 0.0, %v2897
        %v2899 = vpop.f32.mrf.mxu0
        %2900 = vmatprep.mubr.f32.mxu0 0.0
        %2901 = vmatmul.mubr.f32.gmra.mxu0 %v2759
        %v2902 = vpop.f32.mrf.mxu0
        %v2903 = vadd.f32 0.0, %v2902
        %v2904 = vpop.f32.mrf.mxu0
        %2905 = vmatprep.mubr.f32.mxu0 0.0
        %2906 = vmatmul.mubr.f32.gmra.mxu0 %v2760
        %v2907 = vpop.f32.mrf.mxu0
        %v2908 = vadd.f32 0.0, %v2907
        %v2909 = vpop.f32.mrf.mxu0
        %2910 = vmatprep.mubr.f32.mxu0 0.0
        %2911 = vmatmul.mubr.f32.gmra.mxu0 %v2761
        %v2912 = vpop.f32.mrf.mxu0
        %v2913 = vadd.f32 0.0, %v2912
        %v2914 = vpop.f32.mrf.mxu0
        %2915 = vmatprep.mubr.f32.mxu0 0.0
        %2916 = vmatmul.mubr.f32.gmra.mxu0 %v2762
        %v2917 = vpop.f32.mrf.mxu0
        %v2918 = vadd.f32 0.0, %v2917
        %v2919 = vpop.f32.mrf.mxu0
        %2920 = vmatprep.mubr.f32.mxu0 0.0
        %2921 = vmatmul.mubr.f32.gmra.mxu0 %v2763
        %v2922 = vpop.f32.mrf.mxu0
        %v2923 = vadd.f32 0.0, %v2922
        %v2924 = vpop.f32.mrf.mxu0
        %2925 = vmatprep.mubr.f32.mxu0 0.0
        %2926 = vmatmul.mubr.f32.gmra.mxu0 %v2764
        %v2927 = vpop.f32.mrf.mxu0
        %v2928 = vadd.f32 0.0, %v2927
        %v2929 = vpop.f32.mrf.mxu0
        %2930 = vmatprep.mubr.f32.mxu0 0.0
        %2931 = vmatmul.mubr.f32.gmra.mxu0 %v2765
        %v2932 = vpop.f32.mrf.mxu0
        %v2933 = vadd.f32 0.0, %v2932
        %v2934 = vpop.f32.mrf.mxu0
        %2935 = vmatprep.mubr.f32.mxu0 0.0
        %2936 = vmatmul.mubr.f32.gmra.mxu0 %v2766
        %v2937 = vpop.f32.mrf.mxu0
        %v2938 = vadd.f32 0.0, %v2937
        %v2939 = vpop.f32.mrf.mxu0
        %2940 = vmatprep.mubr.f32.mxu0 0.0
        %2941 = vmatmul.mubr.f32.gmra.mxu0 %v2767
        %v2942 = vpop.f32.mrf.mxu0
        %v2943 = vadd.f32 0.0, %v2942
        %v2944 = vpop.f32.mrf.mxu0
        %2945 = vmatprep.mubr.f32.mxu0 0.0
        %2946 = vmatmul.mubr.f32.gmra.mxu0 %v2768
        %v2947 = vpop.f32.mrf.mxu0
        %v2948 = vadd.f32 0.0, %v2947
        %v2949 = vpop.f32.mrf.mxu0
        %2950 = vmatprep.mubr.f32.mxu0 0.0
        %2951 = vmatmul.mubr.f32.gmra.mxu0 %v2769
        %v2952 = vpop.f32.mrf.mxu0
        %v2953 = vadd.f32 0.0, %v2952
        %v2954 = vpop.f32.mrf.mxu0
        %2955 = vmatprep.mubr.f32.mxu0 0.0
        %2956 = vmatmul.mubr.f32.gmra.mxu0 %v2770
        %v2957 = vpop.f32.mrf.mxu0
        %v2958 = vadd.f32 0.0, %v2957
        %v2959 = vpop.f32.mrf.mxu0
        %2960 = vmatprep.mubr.f32.mxu0 0.0
        %2961 = vmatmul.mubr.f32.gmra.mxu0 %v2771
        %v2962 = vpop.f32.mrf.mxu0
        %v2963 = vadd.f32 0.0, %v2962
        %v2964 = vpop.f32.mrf.mxu0
        %2965 = vmatprep.mubr.f32.mxu0 0.0
        %2966 = vmatmul.mubr.f32.gmra.mxu0 %v2772
        %v2967 = vpop.f32.mrf.mxu0
        %v2968 = vadd.f32 0.0, %v2967
        %v2969 = vpop.f32.mrf.mxu0
        %2970 = vmatprep.mubr.f32.mxu0 0.0
        %2971 = vmatmul.mubr.f32.gmra.mxu0 %v2773
        %v2972 = vpop.f32.mrf.mxu0
        %v2973 = vadd.f32 0.0, %v2972
        %v2974 = vpop.f32.mrf.mxu0
        %2975 = vmatprep.mubr.f32.mxu0 0.0
        %2976 = vmatmul.mubr.f32.gmra.mxu0 %v2774
        %v2977 = vpop.f32.mrf.mxu0
        %v2978 = vadd.f32 0.0, %v2977
        %v2979 = vpop.f32.mrf.mxu0
        %2980 = vmatprep.mubr.f32.mxu0 0.0
        %2981 = vmatmul.mubr.f32.gmra.mxu0 %v2775
        %v2982 = vpop.f32.mrf.mxu0
        %v2983 = vadd.f32 0.0, %v2982
        %v2984 = vpop.f32.mrf.mxu0
        %2985 = vmatprep.mubr.f32.mxu0 0.0
        %2986 = vmatmul.mubr.f32.gmra.mxu0 %v2776
        %v2987 = vpop.f32.mrf.mxu0
        %v2988 = vadd.f32 0.0, %v2987
        %v2989 = vpop.f32.mrf.mxu0
        %2990 = vmatprep.mubr.f32.mxu0 0.0
        %2991 = vmatmul.mubr.f32.gmra.mxu0 %v2777
        %v2992 = vpop.f32.mrf.mxu0
        %v2993 = vadd.f32 0.0, %v2992
        %v2994 = vpop.f32.mrf.mxu0
        %2995 = vmatprep.mubr.f32.mxu0 0.0
        %2996 = vmatmul.mubr.f32.gmra.mxu0 %v2778
        %v2997 = vpop.f32.mrf.mxu0
        %v2998 = vadd.f32 0.0, %v2997
        %v2999 = vpop.f32.mrf.mxu0
        %3000 = vmatprep.mubr.f32.mxu0 0.0
        %3001 = vmatmul.mubr.f32.gmra.mxu0 %v2779
        %v3002 = vpop.f32.mrf.mxu0
        %v3003 = vadd.f32 0.0, %v3002
        %v3004 = vpop.f32.mrf.mxu0
        %3005 = vmatprep.mubr.f32.mxu0 0.0
        %3006 = vmatmul.mubr.f32.gmra.mxu0 %v2780
        %v3007 = vpop.f32.mrf.mxu0
        %v3008 = vadd.f32 0.0, %v3007
        %v3009 = vpop.f32.mrf.mxu0
        %3010 = vmatprep.mubr.f32.mxu0 0.0
        %3011 = vmatmul.mubr.f32.gmra.mxu0 %v2781
        %v3012 = vpop.f32.mrf.mxu0
        %v3013 = vadd.f32 0.0, %v3012
        %v3014 = vpop.f32.mrf.mxu0
        %3015 = vmatprep.mubr.f32.mxu0 0.0
        %3016 = vmatmul.mubr.f32.gmra.mxu0 %v2782
        %v3017 = vpop.f32.mrf.mxu0
        %v3018 = vadd.f32 0.0, %v3017
        %v3019 = vpop.f32.mrf.mxu0
        %3020 = vmatprep.mubr.f32.mxu0 0.0
        %3021 = vmatmul.mubr.f32.gmra.mxu0 %v2783
        %v3022 = vpop.f32.mrf.mxu0
        %v3023 = vadd.f32 0.0, %v3022
        %v3024 = vpop.f32.mrf.mxu0
        %3025 = vmatprep.mubr.f32.mxu0 0.0
        %3026 = vmatmul.mubr.f32.gmra.mxu0 %v2784
        %v3027 = vpop.f32.mrf.mxu0
        %v3028 = vadd.f32 0.0, %v3027
        %v3029 = vpop.f32.mrf.mxu0
        %3030 = vmatprep.mubr.f32.mxu0 0.0
        %3031 = vmatmul.mubr.f32.gmra.mxu0 %v2785
        %v3032 = vpop.f32.mrf.mxu0
        %v3033 = vadd.f32 0.0, %v3032
        %v3034 = vpop.f32.mrf.mxu0
        %3035 = vmatprep.mubr.f32.mxu0 0.0
        %3036 = vmatmul.mubr.f32.gmra.mxu0 %v2786
        %v3037 = vpop.f32.mrf.mxu0
        %v3038 = vadd.f32 0.0, %v3037
        %v3039 = vpop.f32.mrf.mxu0
        %3040 = vmatprep.mubr.f32.mxu0 0.0
        %3041 = vmatmul.mubr.f32.gmra.mxu0 %v2787
        %v3042 = vpop.f32.mrf.mxu0
        %v3043 = vadd.f32 0.0, %v3042
        %v3044 = vpop.f32.mrf.mxu0
        %3045 = vmatprep.mubr.f32.mxu0 0.0
        %3046 = vmatmul.mubr.f32.gmra.mxu0 %v2788
        %v3047 = vpop.f32.mrf.mxu0
        %v3048 = vadd.f32 0.0, %v3047
        %v3049 = vpop.f32.mrf.mxu0
        %3050 = vdwg.mxu0
        %3051 = vmatprep.subr.mxu0 0.0
        %3052 = vmatpush1.msra.mxu0 %v2752
        %3053 = vmatprep.subr.mxu0 0.0
        %3054 = vmatpush1.msra.mxu0 %v2751
        %3055 = vmatprep.subr.mxu0 0.0
        %3056 = vmatpush1.msra.mxu0 %v2750
        %3057 = vmatprep.subr.mxu0 0.0
        %3058 = vmatpush1.msra.mxu0 %v2749
        %3059 = vmatprep.subr.mxu0 0.0
        %3060 = vmatpush1.msra.mxu0 %v2748
        %3061 = vmatprep.subr.mxu0 0.0
        %3062 = vmatpush1.msra.mxu0 %v2747
        %3063 = vmatprep.subr.mxu0 0.0
        %3064 = vmatpush1.msra.mxu0 %v2746
        %3065 = vmatprep.subr.mxu0 0.0
        %3066 = vmatpush1.msra.mxu0 %v2745
        %3067 = vmatprep.subr.mxu0 0.0
        %3068 = vmatpush1.msra.mxu0 %v2744
        %3069 = vmatprep.subr.mxu0 0.0
        %3070 = vmatpush1.msra.mxu0 %v2743
        %3071 = vmatprep.subr.mxu0 0.0
        %3072 = vmatpush1.msra.mxu0 %v2742
        %3073 = vmatprep.subr.mxu0 0.0
        %3074 = vmatpush1.msra.mxu0 %v2741
        %3075 = vmatprep.subr.mxu0 0.0
        %3076 = vmatpush1.msra.mxu0 %v2740
        %3077 = vmatprep.subr.mxu0 0.0
        %3078 = vmatpush1.msra.mxu0 %v2739
        %3079 = vmatprep.subr.mxu0 0.0
        %3080 = vmatpush1.msra.mxu0 %v2738
        %3081 = vmatprep.subr.mxu0 0.0
        %3082 = vmatpush1.msra.mxu0 %v2737
        %3083 = vmatprep.subr.mxu0 0.0
        %3084 = vmatpush2.msra.mxu0 0.0
        %3085 = vmatprep.subr.mxu0 0.0
        %3086 = vmatpush2.msra.mxu0 0.0
        %3087 = vmatprep.subr.mxu0 0.0
        %3088 = vmatpush2.msra.mxu0 0.0
        %3089 = vmatprep.subr.mxu0 0.0
        %3090 = vmatpush2.msra.mxu0 0.0
        %3091 = vmatprep.subr.mxu0 0.0
        %3092 = vmatpush2.msra.mxu0 0.0
        %3093 = vmatprep.subr.mxu0 0.0
        %3094 = vmatpush2.msra.mxu0 0.0
        %3095 = vmatprep.subr.mxu0 0.0
        %3096 = vmatpush2.msra.mxu0 0.0
        %3097 = vmatprep.subr.mxu0 0.0
        %3098 = vmatpush2.msra.mxu0 0.0
        %3099 = vmatprep.subr.mxu0 0.0
        %3100 = vmatpush2.msra.mxu0 0.0
        %3101 = vmatprep.subr.mxu0 0.0
        %3102 = vmatpush2.msra.mxu0 0.0
        %3103 = vmatprep.subr.mxu0 0.0
        %3104 = vmatpush2.msra.mxu0 0.0
        %3105 = vmatprep.subr.mxu0 0.0
        %3106 = vmatpush2.msra.mxu0 0.0
        %3107 = vmatprep.subr.mxu0 0.0
        %3108 = vmatpush2.msra.mxu0 0.0
        %3109 = vmatprep.subr.mxu0 0.0
        %3110 = vmatpush2.msra.mxu0 0.0
        %3111 = vmatprep.subr.mxu0 0.0
        %3112 = vmatpush2.msra.mxu0 0.0
        %3113 = vmatprep.subr.mxu0 0.0
        %3114 = vmatpush2.msra.mxu0 0.0
        %3115 = vmatprep.mubr.f32.mxu0 0.0
        %3116 = vmatmul.mubr.f32.gmra.mxu0 %v2701
        %v3117 = vpop.f32.mrf.mxu0
        %v3118 = vadd.f32 %v2873, %v3117
        %v3119 = vpop.f32.mrf.mxu0
        %3120 = vmatprep.mubr.f32.mxu0 0.0
        %3121 = vmatmul.mubr.f32.gmra.mxu0 %v2702
        %v3122 = vpop.f32.mrf.mxu0
        %v3123 = vadd.f32 %v2878, %v3122
        %v3124 = vpop.f32.mrf.mxu0
        %3125 = vmatprep.mubr.f32.mxu0 0.0
        %3126 = vmatmul.mubr.f32.gmra.mxu0 %v2703
        %v3127 = vpop.f32.mrf.mxu0
        %v3128 = vadd.f32 %v2883, %v3127
        %v3129 = vpop.f32.mrf.mxu0
        %3130 = vmatprep.mubr.f32.mxu0 0.0
        %3131 = vmatmul.mubr.f32.gmra.mxu0 %v2704
        %v3132 = vpop.f32.mrf.mxu0
        %v3133 = vadd.f32 %v2888, %v3132
        %v3134 = vpop.f32.mrf.mxu0
        %3135 = vmatprep.mubr.f32.mxu0 0.0
        %3136 = vmatmul.mubr.f32.gmra.mxu0 %v2705
        %v3137 = vpop.f32.mrf.mxu0
        %v3138 = vadd.f32 %v2893, %v3137
        %v3139 = vpop.f32.mrf.mxu0
        %3140 = vmatprep.mubr.f32.mxu0 0.0
        %3141 = vmatmul.mubr.f32.gmra.mxu0 %v2706
        %v3142 = vpop.f32.mrf.mxu0
        %v3143 = vadd.f32 %v2898, %v3142
        %v3144 = vpop.f32.mrf.mxu0
        %3145 = vmatprep.mubr.f32.mxu0 0.0
        %3146 = vmatmul.mubr.f32.gmra.mxu0 %v2707
        %v3147 = vpop.f32.mrf.mxu0
        %v3148 = vadd.f32 %v2903, %v3147
        %v3149 = vpop.f32.mrf.mxu0
        %3150 = vmatprep.mubr.f32.mxu0 0.0
        %3151 = vmatmul.mubr.f32.gmra.mxu0 %v2708
        %v3152 = vpop.f32.mrf.mxu0
        %v3153 = vadd.f32 %v2908, %v3152
        %v3154 = vpop.f32.mrf.mxu0
        %3155 = vmatprep.mubr.f32.mxu0 0.0
        %3156 = vmatmul.mubr.f32.gmra.mxu0 %v2709
        %v3157 = vpop.f32.mrf.mxu0
        %v3158 = vadd.f32 %v2913, %v3157
        %v3159 = vpop.f32.mrf.mxu0
        %3160 = vmatprep.mubr.f32.mxu0 0.0
        %3161 = vmatmul.mubr.f32.gmra.mxu0 %v2710
        %v3162 = vpop.f32.mrf.mxu0
        %v3163 = vadd.f32 %v2918, %v3162
        %v3164 = vpop.f32.mrf.mxu0
        %3165 = vmatprep.mubr.f32.mxu0 0.0
        %3166 = vmatmul.mubr.f32.gmra.mxu0 %v2711
        %v3167 = vpop.f32.mrf.mxu0
        %v3168 = vadd.f32 %v2923, %v3167
        %v3169 = vpop.f32.mrf.mxu0
        %3170 = vmatprep.mubr.f32.mxu0 0.0
        %3171 = vmatmul.mubr.f32.gmra.mxu0 %v2712
        %v3172 = vpop.f32.mrf.mxu0
        %v3173 = vadd.f32 %v2928, %v3172
        %v3174 = vpop.f32.mrf.mxu0
        %3175 = vmatprep.mubr.f32.mxu0 0.0
        %3176 = vmatmul.mubr.f32.gmra.mxu0 %v2713
        %v3177 = vpop.f32.mrf.mxu0
        %v3178 = vadd.f32 %v2933, %v3177
        %v3179 = vpop.f32.mrf.mxu0
        %3180 = vmatprep.mubr.f32.mxu0 0.0
        %3181 = vmatmul.mubr.f32.gmra.mxu0 %v2714
        %v3182 = vpop.f32.mrf.mxu0
        %v3183 = vadd.f32 %v2938, %v3182
        %v3184 = vpop.f32.mrf.mxu0
        %3185 = vmatprep.mubr.f32.mxu0 0.0
        %3186 = vmatmul.mubr.f32.gmra.mxu0 %v2715
        %v3187 = vpop.f32.mrf.mxu0
        %v3188 = vadd.f32 %v2943, %v3187
        %v3189 = vpop.f32.mrf.mxu0
        %3190 = vmatprep.mubr.f32.mxu0 0.0
        %3191 = vmatmul.mubr.f32.gmra.mxu0 %v2716
        %v3192 = vpop.f32.mrf.mxu0
        %v3193 = vadd.f32 %v2948, %v3192
        %v3194 = vpop.f32.mrf.mxu0
        %3195 = vmatprep.mubr.f32.mxu0 0.0
        %3196 = vmatmul.mubr.f32.gmra.mxu0 %v2717
        %v3197 = vpop.f32.mrf.mxu0
        %v3198 = vadd.f32 %v2953, %v3197
        %v3199 = vpop.f32.mrf.mxu0
        %3200 = vmatprep.mubr.f32.mxu0 0.0
        %3201 = vmatmul.mubr.f32.gmra.mxu0 %v2718
        %v3202 = vpop.f32.mrf.mxu0
        %v3203 = vadd.f32 %v2958, %v3202
        %v3204 = vpop.f32.mrf.mxu0
        %3205 = vmatprep.mubr.f32.mxu0 0.0
        %3206 = vmatmul.mubr.f32.gmra.mxu0 %v2719
        %v3207 = vpop.f32.mrf.mxu0
        %v3208 = vadd.f32 %v2963, %v3207
        %v3209 = vpop.f32.mrf.mxu0
        %3210 = vmatprep.mubr.f32.mxu0 0.0
        %3211 = vmatmul.mubr.f32.gmra.mxu0 %v2720
        %v3212 = vpop.f32.mrf.mxu0
        %v3213 = vadd.f32 %v2968, %v3212
        %v3214 = vpop.f32.mrf.mxu0
        %3215 = vmatprep.mubr.f32.mxu0 0.0
        %3216 = vmatmul.mubr.f32.gmra.mxu0 %v2721
        %v3217 = vpop.f32.mrf.mxu0
        %v3218 = vadd.f32 %v2973, %v3217
        %v3219 = vpop.f32.mrf.mxu0
        %3220 = vmatprep.mubr.f32.mxu0 0.0
        %3221 = vmatmul.mubr.f32.gmra.mxu0 %v2722
        %v3222 = vpop.f32.mrf.mxu0
        %v3223 = vadd.f32 %v2978, %v3222
        %v3224 = vpop.f32.mrf.mxu0
        %3225 = vmatprep.mubr.f32.mxu0 0.0
        %3226 = vmatmul.mubr.f32.gmra.mxu0 %v2723
        %v3227 = vpop.f32.mrf.mxu0
        %v3228 = vadd.f32 %v2983, %v3227
        %v3229 = vpop.f32.mrf.mxu0
        %3230 = vmatprep.mubr.f32.mxu0 0.0
        %3231 = vmatmul.mubr.f32.gmra.mxu0 %v2724
        %v3232 = vpop.f32.mrf.mxu0
        %v3233 = vadd.f32 %v2988, %v3232
        %v3234 = vpop.f32.mrf.mxu0
        %3235 = vmatprep.mubr.f32.mxu0 0.0
        %3236 = vmatmul.mubr.f32.gmra.mxu0 %v2725
        %v3237 = vpop.f32.mrf.mxu0
        %v3238 = vadd.f32 %v2993, %v3237
        %v3239 = vpop.f32.mrf.mxu0
        %3240 = vmatprep.mubr.f32.mxu0 0.0
        %3241 = vmatmul.mubr.f32.gmra.mxu0 %v2726
        %v3242 = vpop.f32.mrf.mxu0
        %v3243 = vadd.f32 %v2998, %v3242
        %v3244 = vpop.f32.mrf.mxu0
        %3245 = vmatprep.mubr.f32.mxu0 0.0
        %3246 = vmatmul.mubr.f32.gmra.mxu0 %v2727
        %v3247 = vpop.f32.mrf.mxu0
        %v3248 = vadd.f32 %v3003, %v3247
        %v3249 = vpop.f32.mrf.mxu0
        %3250 = vmatprep.mubr.f32.mxu0 0.0
        %3251 = vmatmul.mubr.f32.gmra.mxu0 %v2728
        %v3252 = vpop.f32.mrf.mxu0
        %v3253 = vadd.f32 %v3008, %v3252
        %v3254 = vpop.f32.mrf.mxu0
        %3255 = vmatprep.mubr.f32.mxu0 0.0
        %3256 = vmatmul.mubr.f32.gmra.mxu0 %v2729
        %v3257 = vpop.f32.mrf.mxu0
        %v3258 = vadd.f32 %v3013, %v3257
        %v3259 = vpop.f32.mrf.mxu0
        %3260 = vmatprep.mubr.f32.mxu0 0.0
        %3261 = vmatmul.mubr.f32.gmra.mxu0 %v2730
        %v3262 = vpop.f32.mrf.mxu0
        %v3263 = vadd.f32 %v3018, %v3262
        %v3264 = vpop.f32.mrf.mxu0
        %3265 = vmatprep.mubr.f32.mxu0 0.0
        %3266 = vmatmul.mubr.f32.gmra.mxu0 %v2731
        %v3267 = vpop.f32.mrf.mxu0
        %v3268 = vadd.f32 %v3023, %v3267
        %v3269 = vpop.f32.mrf.mxu0
        %3270 = vmatprep.mubr.f32.mxu0 0.0
        %3271 = vmatmul.mubr.f32.gmra.mxu0 %v2732
        %v3272 = vpop.f32.mrf.mxu0
        %v3273 = vadd.f32 %v3028, %v3272
        %v3274 = vpop.f32.mrf.mxu0
        %3275 = vmatprep.mubr.f32.mxu0 0.0
        %3276 = vmatmul.mubr.f32.gmra.mxu0 %v2733
        %v3277 = vpop.f32.mrf.mxu0
        %v3278 = vadd.f32 %v3033, %v3277
        %v3279 = vpop.f32.mrf.mxu0
        %3280 = vmatprep.mubr.f32.mxu0 0.0
        %3281 = vmatmul.mubr.f32.gmra.mxu0 %v2734
        %v3282 = vpop.f32.mrf.mxu0
        %v3283 = vadd.f32 %v3038, %v3282
        %v3284 = vpop.f32.mrf.mxu0
        %3285 = vmatprep.mubr.f32.mxu0 0.0
        %3286 = vmatmul.mubr.f32.gmra.mxu0 %v2735
        %v3287 = vpop.f32.mrf.mxu0
        %v3288 = vadd.f32 %v3043, %v3287
        %v3289 = vpop.f32.mrf.mxu0
        %3290 = vmatprep.mubr.f32.mxu0 0.0
        %3291 = vmatmul.mubr.f32.gmra.mxu0 %v2736
        %v3292 = vpop.f32.mrf.mxu0
        %v3293 = vadd.f32 %v3048, %v3292
        %v3294 = vpop.f32.mrf.mxu0
        %3295 = vdwg.mxu0
        %v3296 = vld [vmem:[#allocation2 + $0x2] sm:$0xff]
        %v3297 = vld [vmem:[#allocation2 + $0xa] sm:$0xff]
        %v3298 = vld [vmem:[#allocation2 + $0x12] sm:$0xff]
        %v3299 = vld [vmem:[#allocation2 + $0x1a] sm:$0xff]
        %v3300 = vld [vmem:[#allocation2 + $0x22] sm:$0xff]
        %v3301 = vld [vmem:[#allocation2 + $0x2a] sm:$0xff]
        %v3302 = vld [vmem:[#allocation2 + $0x32] sm:$0xff]
        %v3303 = vld [vmem:[#allocation2 + $0x3a] sm:$0xff]
        %v3304 = vld [vmem:[#allocation2 + $0x42] sm:$0xff]
        %v3305 = vld [vmem:[#allocation2 + $0x4a] sm:$0xff]
        %v3306 = vld [vmem:[#allocation2 + $0x52] sm:$0xff]
        %v3307 = vld [vmem:[#allocation2 + $0x5a] sm:$0xff]
        %v3308 = vld [vmem:[#allocation2 + $0x62] sm:$0xff]
        %v3309 = vld [vmem:[#allocation2 + $0x6a] sm:$0xff]
        %v3310 = vld [vmem:[#allocation2 + $0x72] sm:$0xff]
        %v3311 = vld [vmem:[#allocation2 + $0x7a] sm:$0xff]
        %v3312 = vld [vmem:[#allocation2 + $0x82] sm:$0xff]
        %v3313 = vld [vmem:[#allocation2 + $0x8a] sm:$0xff]
        %v3314 = vld [vmem:[#allocation2 + $0x92] sm:$0xff]
        %v3315 = vld [vmem:[#allocation2 + $0x9a] sm:$0xff]
        %v3316 = vld [vmem:[#allocation2 + $0xa2] sm:$0xff]
        %v3317 = vld [vmem:[#allocation2 + $0xaa] sm:$0xff]
        %v3318 = vld [vmem:[#allocation2 + $0xb2] sm:$0xff]
        %v3319 = vld [vmem:[#allocation2 + $0xba] sm:$0xff]
        %v3320 = vld [vmem:[#allocation2 + $0xc2] sm:$0xff]
        %v3321 = vld [vmem:[#allocation2 + $0xca] sm:$0xff]
        %v3322 = vld [vmem:[#allocation2 + $0xd2] sm:$0xff]
        %v3323 = vld [vmem:[#allocation2 + $0xda] sm:$0xff]
        %v3324 = vld [vmem:[#allocation2 + $0xe2] sm:$0xff]
        %v3325 = vld [vmem:[#allocation2 + $0xea] sm:$0xff]
        %v3326 = vld [vmem:[#allocation2 + $0xf2] sm:$0xff]
        %v3327 = vld [vmem:[#allocation2 + $0xfa] sm:$0xff]
        %v3328 = vld [vmem:[#allocation2 + $0x102] sm:$0xff]
        %v3329 = vld [vmem:[#allocation2 + $0x10a] sm:$0xff]
        %v3330 = vld [vmem:[#allocation2 + $0x112] sm:$0xff]
        %v3331 = vld [vmem:[#allocation2 + $0x11a] sm:$0xff]
        %s3332 = scalar_lea.vmem [#allocation12], 256
        %v3333 = vld [vmem:[%s3332] sm:$0xff]
        %v3334 = vld [vmem:[%s3332 + $0x8] sm:$0xff]
        %v3335 = vld [vmem:[%s3332 + $0x10] sm:$0xff]
        %v3336 = vld [vmem:[%s3332 + $0x18] sm:$0xff]
        %v3337 = vld [vmem:[%s3332 + $0x20] sm:$0xff]
        %v3338 = vld [vmem:[%s3332 + $0x28] sm:$0xff]
        %v3339 = vld [vmem:[%s3332 + $0x30] sm:$0xff]
        %v3340 = vld [vmem:[%s3332 + $0x38] sm:$0xff]
        %v3341 = vld [vmem:[%s3332 + $0x40] sm:$0xff]
        %v3342 = vld [vmem:[%s3332 + $0x48] sm:$0xff]
        %v3343 = vld [vmem:[%s3332 + $0x50] sm:$0xff]
        %v3344 = vld [vmem:[%s3332 + $0x58] sm:$0xff]
        %v3345 = vld [vmem:[%s3332 + $0x60] sm:$0xff]
        %v3346 = vld [vmem:[%s3332 + $0x68] sm:$0xff]
        %v3347 = vld [vmem:[%s3332 + $0x70] sm:$0xff]
        %v3348 = vld [vmem:[%s3332 + $0x78] sm:$0xff]
        %3349 = vmatprep.subr.mxu0 0.0
        %3350 = vmatpush1.msra.mxu0 %v3348
        %3351 = vmatprep.subr.mxu0 0.0
        %3352 = vmatpush1.msra.mxu0 %v3347
        %3353 = vmatprep.subr.mxu0 0.0
        %3354 = vmatpush1.msra.mxu0 %v3346
        %3355 = vmatprep.subr.mxu0 0.0
        %3356 = vmatpush1.msra.mxu0 %v3345
        %3357 = vmatprep.subr.mxu0 0.0
        %3358 = vmatpush1.msra.mxu0 %v3344
        %3359 = vmatprep.subr.mxu0 0.0
        %3360 = vmatpush1.msra.mxu0 %v3343
        %3361 = vmatprep.subr.mxu0 0.0
        %3362 = vmatpush1.msra.mxu0 %v3342
        %3363 = vmatprep.subr.mxu0 0.0
        %3364 = vmatpush1.msra.mxu0 %v3341
        %3365 = vmatprep.subr.mxu0 0.0
        %3366 = vmatpush1.msra.mxu0 %v3340
        %3367 = vmatprep.subr.mxu0 0.0
        %3368 = vmatpush1.msra.mxu0 %v3339
        %3369 = vmatprep.subr.mxu0 0.0
        %3370 = vmatpush1.msra.mxu0 %v3338
        %3371 = vmatprep.subr.mxu0 0.0
        %3372 = vmatpush1.msra.mxu0 %v3337
        %3373 = vmatprep.subr.mxu0 0.0
        %3374 = vmatpush1.msra.mxu0 %v3336
        %3375 = vmatprep.subr.mxu0 0.0
        %3376 = vmatpush1.msra.mxu0 %v3335
        %3377 = vmatprep.subr.mxu0 0.0
        %3378 = vmatpush1.msra.mxu0 %v3334
        %3379 = vmatprep.subr.mxu0 0.0
        %3380 = vmatpush1.msra.mxu0 %v3333
        %3381 = vmatprep.subr.mxu0 0.0
        %3382 = vmatpush2.msra.mxu0 0.0
        %3383 = vmatprep.subr.mxu0 0.0
        %3384 = vmatpush2.msra.mxu0 0.0
        %3385 = vmatprep.subr.mxu0 0.0
        %3386 = vmatpush2.msra.mxu0 0.0
        %3387 = vmatprep.subr.mxu0 0.0
        %3388 = vmatpush2.msra.mxu0 0.0
        %3389 = vmatprep.subr.mxu0 0.0
        %3390 = vmatpush2.msra.mxu0 0.0
        %3391 = vmatprep.subr.mxu0 0.0
        %3392 = vmatpush2.msra.mxu0 0.0
        %3393 = vmatprep.subr.mxu0 0.0
        %3394 = vmatpush2.msra.mxu0 0.0
        %3395 = vmatprep.subr.mxu0 0.0
        %3396 = vmatpush2.msra.mxu0 0.0
        %3397 = vmatprep.subr.mxu0 0.0
        %3398 = vmatpush2.msra.mxu0 0.0
        %3399 = vmatprep.subr.mxu0 0.0
        %3400 = vmatpush2.msra.mxu0 0.0
        %3401 = vmatprep.subr.mxu0 0.0
        %3402 = vmatpush2.msra.mxu0 0.0
        %3403 = vmatprep.subr.mxu0 0.0
        %3404 = vmatpush2.msra.mxu0 0.0
        %3405 = vmatprep.subr.mxu0 0.0
        %3406 = vmatpush2.msra.mxu0 0.0
        %3407 = vmatprep.subr.mxu0 0.0
        %3408 = vmatpush2.msra.mxu0 0.0
        %3409 = vmatprep.subr.mxu0 0.0
        %3410 = vmatpush2.msra.mxu0 0.0
        %3411 = vmatprep.subr.mxu0 0.0
        %3412 = vmatpush2.msra.mxu0 0.0
        %3413 = vmatprep.mubr.f32.mxu0 0.0
        %3414 = vmatmul.mubr.f32.gmra.mxu0 %v3296
        %v3415 = vpop.f32.mrf.mxu0
        %v3416 = vadd.f32 0.0, %v3415
        %v3417 = vpop.f32.mrf.mxu0
        %3418 = vmatprep.mubr.f32.mxu0 0.0
        %3419 = vmatmul.mubr.f32.gmra.mxu0 %v3297
        %v3420 = vpop.f32.mrf.mxu0
        %v3421 = vadd.f32 0.0, %v3420
        %v3422 = vpop.f32.mrf.mxu0
        %3423 = vmatprep.mubr.f32.mxu0 0.0
        %3424 = vmatmul.mubr.f32.gmra.mxu0 %v3298
        %v3425 = vpop.f32.mrf.mxu0
        %v3426 = vadd.f32 0.0, %v3425
        %v3427 = vpop.f32.mrf.mxu0
        %3428 = vmatprep.mubr.f32.mxu0 0.0
        %3429 = vmatmul.mubr.f32.gmra.mxu0 %v3299
        %v3430 = vpop.f32.mrf.mxu0
        %v3431 = vadd.f32 0.0, %v3430
        %v3432 = vpop.f32.mrf.mxu0
        %3433 = vmatprep.mubr.f32.mxu0 0.0
        %3434 = vmatmul.mubr.f32.gmra.mxu0 %v3300
        %v3435 = vpop.f32.mrf.mxu0
        %v3436 = vadd.f32 0.0, %v3435
        %v3437 = vpop.f32.mrf.mxu0
        %3438 = vmatprep.mubr.f32.mxu0 0.0
        %3439 = vmatmul.mubr.f32.gmra.mxu0 %v3301
        %v3440 = vpop.f32.mrf.mxu0
        %v3441 = vadd.f32 0.0, %v3440
        %v3442 = vpop.f32.mrf.mxu0
        %3443 = vmatprep.mubr.f32.mxu0 0.0
        %3444 = vmatmul.mubr.f32.gmra.mxu0 %v3302
        %v3445 = vpop.f32.mrf.mxu0
        %v3446 = vadd.f32 0.0, %v3445
        %v3447 = vpop.f32.mrf.mxu0
        %3448 = vmatprep.mubr.f32.mxu0 0.0
        %3449 = vmatmul.mubr.f32.gmra.mxu0 %v3303
        %v3450 = vpop.f32.mrf.mxu0
        %v3451 = vadd.f32 0.0, %v3450
        %v3452 = vpop.f32.mrf.mxu0
        %3453 = vmatprep.mubr.f32.mxu0 0.0
        %3454 = vmatmul.mubr.f32.gmra.mxu0 %v3304
        %v3455 = vpop.f32.mrf.mxu0
        %v3456 = vadd.f32 0.0, %v3455
        %v3457 = vpop.f32.mrf.mxu0
        %3458 = vmatprep.mubr.f32.mxu0 0.0
        %3459 = vmatmul.mubr.f32.gmra.mxu0 %v3305
        %v3460 = vpop.f32.mrf.mxu0
        %v3461 = vadd.f32 0.0, %v3460
        %v3462 = vpop.f32.mrf.mxu0
        %3463 = vmatprep.mubr.f32.mxu0 0.0
        %3464 = vmatmul.mubr.f32.gmra.mxu0 %v3306
        %v3465 = vpop.f32.mrf.mxu0
        %v3466 = vadd.f32 0.0, %v3465
        %v3467 = vpop.f32.mrf.mxu0
        %3468 = vmatprep.mubr.f32.mxu0 0.0
        %3469 = vmatmul.mubr.f32.gmra.mxu0 %v3307
        %v3470 = vpop.f32.mrf.mxu0
        %v3471 = vadd.f32 0.0, %v3470
        %v3472 = vpop.f32.mrf.mxu0
        %3473 = vmatprep.mubr.f32.mxu0 0.0
        %3474 = vmatmul.mubr.f32.gmra.mxu0 %v3308
        %v3475 = vpop.f32.mrf.mxu0
        %v3476 = vadd.f32 0.0, %v3475
        %v3477 = vpop.f32.mrf.mxu0
        %3478 = vmatprep.mubr.f32.mxu0 0.0
        %3479 = vmatmul.mubr.f32.gmra.mxu0 %v3309
        %v3480 = vpop.f32.mrf.mxu0
        %v3481 = vadd.f32 0.0, %v3480
        %v3482 = vpop.f32.mrf.mxu0
        %3483 = vmatprep.mubr.f32.mxu0 0.0
        %3484 = vmatmul.mubr.f32.gmra.mxu0 %v3310
        %v3485 = vpop.f32.mrf.mxu0
        %v3486 = vadd.f32 0.0, %v3485
        %v3487 = vpop.f32.mrf.mxu0
        %3488 = vmatprep.mubr.f32.mxu0 0.0
        %3489 = vmatmul.mubr.f32.gmra.mxu0 %v3311
        %v3490 = vpop.f32.mrf.mxu0
        %v3491 = vadd.f32 0.0, %v3490
        %v3492 = vpop.f32.mrf.mxu0
        %3493 = vmatprep.mubr.f32.mxu0 0.0
        %3494 = vmatmul.mubr.f32.gmra.mxu0 %v3312
        %v3495 = vpop.f32.mrf.mxu0
        %v3496 = vadd.f32 0.0, %v3495
        %v3497 = vpop.f32.mrf.mxu0
        %3498 = vmatprep.mubr.f32.mxu0 0.0
        %3499 = vmatmul.mubr.f32.gmra.mxu0 %v3313
        %v3500 = vpop.f32.mrf.mxu0
        %v3501 = vadd.f32 0.0, %v3500
        %v3502 = vpop.f32.mrf.mxu0
        %3503 = vmatprep.mubr.f32.mxu0 0.0
        %3504 = vmatmul.mubr.f32.gmra.mxu0 %v3314
        %v3505 = vpop.f32.mrf.mxu0
        %v3506 = vadd.f32 0.0, %v3505
        %v3507 = vpop.f32.mrf.mxu0
        %3508 = vmatprep.mubr.f32.mxu0 0.0
        %3509 = vmatmul.mubr.f32.gmra.mxu0 %v3315
        %v3510 = vpop.f32.mrf.mxu0
        %v3511 = vadd.f32 0.0, %v3510
        %v3512 = vpop.f32.mrf.mxu0
        %3513 = vmatprep.mubr.f32.mxu0 0.0
        %3514 = vmatmul.mubr.f32.gmra.mxu0 %v3316
        %v3515 = vpop.f32.mrf.mxu0
        %v3516 = vadd.f32 0.0, %v3515
        %v3517 = vpop.f32.mrf.mxu0
        %3518 = vmatprep.mubr.f32.mxu0 0.0
        %3519 = vmatmul.mubr.f32.gmra.mxu0 %v3317
        %v3520 = vpop.f32.mrf.mxu0
        %v3521 = vadd.f32 0.0, %v3520
        %v3522 = vpop.f32.mrf.mxu0
        %3523 = vmatprep.mubr.f32.mxu0 0.0
        %3524 = vmatmul.mubr.f32.gmra.mxu0 %v3318
        %v3525 = vpop.f32.mrf.mxu0
        %v3526 = vadd.f32 0.0, %v3525
        %v3527 = vpop.f32.mrf.mxu0
        %3528 = vmatprep.mubr.f32.mxu0 0.0
        %3529 = vmatmul.mubr.f32.gmra.mxu0 %v3319
        %v3530 = vpop.f32.mrf.mxu0
        %v3531 = vadd.f32 0.0, %v3530
        %v3532 = vpop.f32.mrf.mxu0
        %3533 = vmatprep.mubr.f32.mxu0 0.0
        %3534 = vmatmul.mubr.f32.gmra.mxu0 %v3320
        %v3535 = vpop.f32.mrf.mxu0
        %v3536 = vadd.f32 0.0, %v3535
        %v3537 = vpop.f32.mrf.mxu0
        %3538 = vmatprep.mubr.f32.mxu0 0.0
        %3539 = vmatmul.mubr.f32.gmra.mxu0 %v3321
        %v3540 = vpop.f32.mrf.mxu0
        %v3541 = vadd.f32 0.0, %v3540
        %v3542 = vpop.f32.mrf.mxu0
        %3543 = vmatprep.mubr.f32.mxu0 0.0
        %3544 = vmatmul.mubr.f32.gmra.mxu0 %v3322
        %v3545 = vpop.f32.mrf.mxu0
        %v3546 = vadd.f32 0.0, %v3545
        %v3547 = vpop.f32.mrf.mxu0
        %3548 = vmatprep.mubr.f32.mxu0 0.0
        %3549 = vmatmul.mubr.f32.gmra.mxu0 %v3323
        %v3550 = vpop.f32.mrf.mxu0
        %v3551 = vadd.f32 0.0, %v3550
        %v3552 = vpop.f32.mrf.mxu0
        %3553 = vmatprep.mubr.f32.mxu0 0.0
        %3554 = vmatmul.mubr.f32.gmra.mxu0 %v3324
        %v3555 = vpop.f32.mrf.mxu0
        %v3556 = vadd.f32 0.0, %v3555
        %v3557 = vpop.f32.mrf.mxu0
        %3558 = vmatprep.mubr.f32.mxu0 0.0
        %3559 = vmatmul.mubr.f32.gmra.mxu0 %v3325
        %v3560 = vpop.f32.mrf.mxu0
        %v3561 = vadd.f32 0.0, %v3560
        %v3562 = vpop.f32.mrf.mxu0
        %3563 = vmatprep.mubr.f32.mxu0 0.0
        %3564 = vmatmul.mubr.f32.gmra.mxu0 %v3326
        %v3565 = vpop.f32.mrf.mxu0
        %v3566 = vadd.f32 0.0, %v3565
        %v3567 = vpop.f32.mrf.mxu0
        %3568 = vmatprep.mubr.f32.mxu0 0.0
        %3569 = vmatmul.mubr.f32.gmra.mxu0 %v3327
        %v3570 = vpop.f32.mrf.mxu0
        %v3571 = vadd.f32 0.0, %v3570
        %v3572 = vpop.f32.mrf.mxu0
        %3573 = vmatprep.mubr.f32.mxu0 0.0
        %3574 = vmatmul.mubr.f32.gmra.mxu0 %v3328
        %v3575 = vpop.f32.mrf.mxu0
        %v3576 = vadd.f32 0.0, %v3575
        %v3577 = vpop.f32.mrf.mxu0
        %3578 = vmatprep.mubr.f32.mxu0 0.0
        %3579 = vmatmul.mubr.f32.gmra.mxu0 %v3329
        %v3580 = vpop.f32.mrf.mxu0
        %v3581 = vadd.f32 0.0, %v3580
        %v3582 = vpop.f32.mrf.mxu0
        %3583 = vmatprep.mubr.f32.mxu0 0.0
        %3584 = vmatmul.mubr.f32.gmra.mxu0 %v3330
        %v3585 = vpop.f32.mrf.mxu0
        %v3586 = vadd.f32 0.0, %v3585
        %v3587 = vpop.f32.mrf.mxu0
        %3588 = vmatprep.mubr.f32.mxu0 0.0
        %3589 = vmatmul.mubr.f32.gmra.mxu0 %v3331
        %v3590 = vpop.f32.mrf.mxu0
        %v3591 = vadd.f32 0.0, %v3590
        %v3592 = vpop.f32.mrf.mxu0
        %3593 = vdwg.mxu0
        %v3594 = vadd.f32 %v3118, %v3416
        %v3595 = vadd.f32 %v3123, %v3421
        %v3596 = vadd.f32 %v3128, %v3426
        %v3597 = vadd.f32 %v3133, %v3431
        %v3598 = vadd.f32 %v3138, %v3436
        %v3599 = vadd.f32 %v3143, %v3441
        %v3600 = vadd.f32 %v3148, %v3446
        %v3601 = vadd.f32 %v3153, %v3451
        %v3602 = vadd.f32 %v3158, %v3456
        %v3603 = vadd.f32 %v3163, %v3461
        %v3604 = vadd.f32 %v3168, %v3466
        %v3605 = vadd.f32 %v3173, %v3471
        %v3606 = vadd.f32 %v3178, %v3476
        %v3607 = vadd.f32 %v3183, %v3481
        %v3608 = vadd.f32 %v3188, %v3486
        %v3609 = vadd.f32 %v3193, %v3491
        %v3610 = vadd.f32 %v3198, %v3496
        %v3611 = vadd.f32 %v3203, %v3501
        %v3612 = vadd.f32 %v3208, %v3506
        %v3613 = vadd.f32 %v3213, %v3511
        %v3614 = vadd.f32 %v3218, %v3516
        %v3615 = vadd.f32 %v3223, %v3521
        %v3616 = vadd.f32 %v3228, %v3526
        %v3617 = vadd.f32 %v3233, %v3531
        %v3618 = vadd.f32 %v3238, %v3536
        %v3619 = vadd.f32 %v3243, %v3541
        %v3620 = vadd.f32 %v3248, %v3546
        %v3621 = vadd.f32 %v3253, %v3551
        %v3622 = vadd.f32 %v3258, %v3556
        %v3623 = vadd.f32 %v3263, %v3561
        %v3624 = vadd.f32 %v3268, %v3566
        %v3625 = vadd.f32 %v3273, %v3571
        %v3626 = vadd.f32 %v3278, %v3576
        %v3627 = vadd.f32 %v3283, %v3581
        %v3628 = vadd.f32 %v3288, %v3586
        %v3629 = vadd.f32 %v3293, %v3591
        %v3630 = vld [vmem:[#allocation2 + $0x12] sm:$0xff]
        %v3631 = vld [vmem:[#allocation2 + $0x1a] sm:$0xff]
        %v3632 = vld [vmem:[#allocation2 + $0x22] sm:$0xff]
        %v3633 = vld [vmem:[#allocation2 + $0x2a] sm:$0xff]
        %v3634 = vld [vmem:[#allocation2 + $0x32] sm:$0xff]
        %v3635 = vld [vmem:[#allocation2 + $0x3a] sm:$0xff]
        %v3636 = vld [vmem:[#allocation2 + $0x42] sm:$0xff]
        %v3637 = vld [vmem:[#allocation2 + $0x4a] sm:$0xff]
        %v3638 = vld [vmem:[#allocation2 + $0x52] sm:$0xff]
        %v3639 = vld [vmem:[#allocation2 + $0x5a] sm:$0xff]
        %v3640 = vld [vmem:[#allocation2 + $0x62] sm:$0xff]
        %v3641 = vld [vmem:[#allocation2 + $0x6a] sm:$0xff]
        %v3642 = vld [vmem:[#allocation2 + $0x72] sm:$0xff]
        %v3643 = vld [vmem:[#allocation2 + $0x7a] sm:$0xff]
        %v3644 = vld [vmem:[#allocation2 + $0x82] sm:$0xff]
        %v3645 = vld [vmem:[#allocation2 + $0x8a] sm:$0xff]
        %v3646 = vld [vmem:[#allocation2 + $0x92] sm:$0xff]
        %v3647 = vld [vmem:[#allocation2 + $0x9a] sm:$0xff]
        %v3648 = vld [vmem:[#allocation2 + $0xa2] sm:$0xff]
        %v3649 = vld [vmem:[#allocation2 + $0xaa] sm:$0xff]
        %v3650 = vld [vmem:[#allocation2 + $0xb2] sm:$0xff]
        %v3651 = vld [vmem:[#allocation2 + $0xba] sm:$0xff]
        %v3652 = vld [vmem:[#allocation2 + $0xc2] sm:$0xff]
        %v3653 = vld [vmem:[#allocation2 + $0xca] sm:$0xff]
        %v3654 = vld [vmem:[#allocation2 + $0xd2] sm:$0xff]
        %v3655 = vld [vmem:[#allocation2 + $0xda] sm:$0xff]
        %v3656 = vld [vmem:[#allocation2 + $0xe2] sm:$0xff]
        %v3657 = vld [vmem:[#allocation2 + $0xea] sm:$0xff]
        %v3658 = vld [vmem:[#allocation2 + $0xf2] sm:$0xff]
        %v3659 = vld [vmem:[#allocation2 + $0xfa] sm:$0xff]
        %v3660 = vld [vmem:[#allocation2 + $0x102] sm:$0xff]
        %v3661 = vld [vmem:[#allocation2 + $0x10a] sm:$0xff]
        %v3662 = vld [vmem:[#allocation2 + $0x112] sm:$0xff]
        %v3663 = vld [vmem:[#allocation2 + $0x11a] sm:$0xff]
        %v3664 = vld [vmem:[#allocation2 + $0x122] sm:$0xff]
        %v3665 = vld [vmem:[#allocation2 + $0x12a] sm:$0xff]
        %s3666 = scalar_lea.vmem [#allocation12], 384
        %v3667 = vld [vmem:[%s3666] sm:$0xff]
        %v3668 = vld [vmem:[%s3666 + $0x8] sm:$0xff]
        %v3669 = vld [vmem:[%s3666 + $0x10] sm:$0xff]
        %v3670 = vld [vmem:[%s3666 + $0x18] sm:$0xff]
        %v3671 = vld [vmem:[%s3666 + $0x20] sm:$0xff]
        %v3672 = vld [vmem:[%s3666 + $0x28] sm:$0xff]
        %v3673 = vld [vmem:[%s3666 + $0x30] sm:$0xff]
        %v3674 = vld [vmem:[%s3666 + $0x38] sm:$0xff]
        %v3675 = vld [vmem:[%s3666 + $0x40] sm:$0xff]
        %v3676 = vld [vmem:[%s3666 + $0x48] sm:$0xff]
        %v3677 = vld [vmem:[%s3666 + $0x50] sm:$0xff]
        %v3678 = vld [vmem:[%s3666 + $0x58] sm:$0xff]
        %v3679 = vld [vmem:[%s3666 + $0x60] sm:$0xff]
        %v3680 = vld [vmem:[%s3666 + $0x68] sm:$0xff]
        %v3681 = vld [vmem:[%s3666 + $0x70] sm:$0xff]
        %v3682 = vld [vmem:[%s3666 + $0x78] sm:$0xff]
        %3683 = vmatprep.subr.mxu0 0.0
        %3684 = vmatpush1.msra.mxu0 %v3682
        %3685 = vmatprep.subr.mxu0 0.0
        %3686 = vmatpush1.msra.mxu0 %v3681
        %3687 = vmatprep.subr.mxu0 0.0
        %3688 = vmatpush1.msra.mxu0 %v3680
        %3689 = vmatprep.subr.mxu0 0.0
        %3690 = vmatpush1.msra.mxu0 %v3679
        %3691 = vmatprep.subr.mxu0 0.0
        %3692 = vmatpush1.msra.mxu0 %v3678
        %3693 = vmatprep.subr.mxu0 0.0
        %3694 = vmatpush1.msra.mxu0 %v3677
        %3695 = vmatprep.subr.mxu0 0.0
        %3696 = vmatpush1.msra.mxu0 %v3676
        %3697 = vmatprep.subr.mxu0 0.0
        %3698 = vmatpush1.msra.mxu0 %v3675
        %3699 = vmatprep.subr.mxu0 0.0
        %3700 = vmatpush1.msra.mxu0 %v3674
        %3701 = vmatprep.subr.mxu0 0.0
        %3702 = vmatpush1.msra.mxu0 %v3673
        %3703 = vmatprep.subr.mxu0 0.0
        %3704 = vmatpush1.msra.mxu0 %v3672
        %3705 = vmatprep.subr.mxu0 0.0
        %3706 = vmatpush1.msra.mxu0 %v3671
        %3707 = vmatprep.subr.mxu0 0.0
        %3708 = vmatpush1.msra.mxu0 %v3670
        %3709 = vmatprep.subr.mxu0 0.0
        %3710 = vmatpush1.msra.mxu0 %v3669
        %3711 = vmatprep.subr.mxu0 0.0
        %3712 = vmatpush1.msra.mxu0 %v3668
        %3713 = vmatprep.subr.mxu0 0.0
        %3714 = vmatpush1.msra.mxu0 %v3667
        %3715 = vmatprep.subr.mxu0 0.0
        %3716 = vmatpush2.msra.mxu0 0.0
        %3717 = vmatprep.subr.mxu0 0.0
        %3718 = vmatpush2.msra.mxu0 0.0
        %3719 = vmatprep.subr.mxu0 0.0
        %3720 = vmatpush2.msra.mxu0 0.0
        %3721 = vmatprep.subr.mxu0 0.0
        %3722 = vmatpush2.msra.mxu0 0.0
        %3723 = vmatprep.subr.mxu0 0.0
        %3724 = vmatpush2.msra.mxu0 0.0
        %3725 = vmatprep.subr.mxu0 0.0
        %3726 = vmatpush2.msra.mxu0 0.0
        %3727 = vmatprep.subr.mxu0 0.0
        %3728 = vmatpush2.msra.mxu0 0.0
        %3729 = vmatprep.subr.mxu0 0.0
        %3730 = vmatpush2.msra.mxu0 0.0
        %3731 = vmatprep.subr.mxu0 0.0
        %3732 = vmatpush2.msra.mxu0 0.0
        %3733 = vmatprep.subr.mxu0 0.0
        %3734 = vmatpush2.msra.mxu0 0.0
        %3735 = vmatprep.subr.mxu0 0.0
        %3736 = vmatpush2.msra.mxu0 0.0
        %3737 = vmatprep.subr.mxu0 0.0
        %3738 = vmatpush2.msra.mxu0 0.0
        %3739 = vmatprep.subr.mxu0 0.0
        %3740 = vmatpush2.msra.mxu0 0.0
        %3741 = vmatprep.subr.mxu0 0.0
        %3742 = vmatpush2.msra.mxu0 0.0
        %3743 = vmatprep.subr.mxu0 0.0
        %3744 = vmatpush2.msra.mxu0 0.0
        %3745 = vmatprep.subr.mxu0 0.0
        %3746 = vmatpush2.msra.mxu0 0.0
        %3747 = vmatprep.mubr.f32.mxu0 0.0
        %3748 = vmatmul.mubr.f32.gmra.mxu0 %v3630
        %v3749 = vpop.f32.mrf.mxu0
        %v3750 = vadd.f32 0.0, %v3749
        %v3751 = vpop.f32.mrf.mxu0
        %3752 = vmatprep.mubr.f32.mxu0 0.0
        %3753 = vmatmul.mubr.f32.gmra.mxu0 %v3631
        %v3754 = vpop.f32.mrf.mxu0
        %v3755 = vadd.f32 0.0, %v3754
        %v3756 = vpop.f32.mrf.mxu0
        %3757 = vmatprep.mubr.f32.mxu0 0.0
        %3758 = vmatmul.mubr.f32.gmra.mxu0 %v3632
        %v3759 = vpop.f32.mrf.mxu0
        %v3760 = vadd.f32 0.0, %v3759
        %v3761 = vpop.f32.mrf.mxu0
        %3762 = vmatprep.mubr.f32.mxu0 0.0
        %3763 = vmatmul.mubr.f32.gmra.mxu0 %v3633
        %v3764 = vpop.f32.mrf.mxu0
        %v3765 = vadd.f32 0.0, %v3764
        %v3766 = vpop.f32.mrf.mxu0
        %3767 = vmatprep.mubr.f32.mxu0 0.0
        %3768 = vmatmul.mubr.f32.gmra.mxu0 %v3634
        %v3769 = vpop.f32.mrf.mxu0
        %v3770 = vadd.f32 0.0, %v3769
        %v3771 = vpop.f32.mrf.mxu0
        %3772 = vmatprep.mubr.f32.mxu0 0.0
        %3773 = vmatmul.mubr.f32.gmra.mxu0 %v3635
        %v3774 = vpop.f32.mrf.mxu0
        %v3775 = vadd.f32 0.0, %v3774
        %v3776 = vpop.f32.mrf.mxu0
        %3777 = vmatprep.mubr.f32.mxu0 0.0
        %3778 = vmatmul.mubr.f32.gmra.mxu0 %v3636
        %v3779 = vpop.f32.mrf.mxu0
        %v3780 = vadd.f32 0.0, %v3779
        %v3781 = vpop.f32.mrf.mxu0
        %3782 = vmatprep.mubr.f32.mxu0 0.0
        %3783 = vmatmul.mubr.f32.gmra.mxu0 %v3637
        %v3784 = vpop.f32.mrf.mxu0
        %v3785 = vadd.f32 0.0, %v3784
        %v3786 = vpop.f32.mrf.mxu0
        %3787 = vmatprep.mubr.f32.mxu0 0.0
        %3788 = vmatmul.mubr.f32.gmra.mxu0 %v3638
        %v3789 = vpop.f32.mrf.mxu0
        %v3790 = vadd.f32 0.0, %v3789
        %v3791 = vpop.f32.mrf.mxu0
        %3792 = vmatprep.mubr.f32.mxu0 0.0
        %3793 = vmatmul.mubr.f32.gmra.mxu0 %v3639
        %v3794 = vpop.f32.mrf.mxu0
        %v3795 = vadd.f32 0.0, %v3794
        %v3796 = vpop.f32.mrf.mxu0
        %3797 = vmatprep.mubr.f32.mxu0 0.0
        %3798 = vmatmul.mubr.f32.gmra.mxu0 %v3640
        %v3799 = vpop.f32.mrf.mxu0
        %v3800 = vadd.f32 0.0, %v3799
        %v3801 = vpop.f32.mrf.mxu0
        %3802 = vmatprep.mubr.f32.mxu0 0.0
        %3803 = vmatmul.mubr.f32.gmra.mxu0 %v3641
        %v3804 = vpop.f32.mrf.mxu0
        %v3805 = vadd.f32 0.0, %v3804
        %v3806 = vpop.f32.mrf.mxu0
        %3807 = vmatprep.mubr.f32.mxu0 0.0
        %3808 = vmatmul.mubr.f32.gmra.mxu0 %v3642
        %v3809 = vpop.f32.mrf.mxu0
        %v3810 = vadd.f32 0.0, %v3809
        %v3811 = vpop.f32.mrf.mxu0
        %3812 = vmatprep.mubr.f32.mxu0 0.0
        %3813 = vmatmul.mubr.f32.gmra.mxu0 %v3643
        %v3814 = vpop.f32.mrf.mxu0
        %v3815 = vadd.f32 0.0, %v3814
        %v3816 = vpop.f32.mrf.mxu0
        %3817 = vmatprep.mubr.f32.mxu0 0.0
        %3818 = vmatmul.mubr.f32.gmra.mxu0 %v3644
        %v3819 = vpop.f32.mrf.mxu0
        %v3820 = vadd.f32 0.0, %v3819
        %v3821 = vpop.f32.mrf.mxu0
        %3822 = vmatprep.mubr.f32.mxu0 0.0
        %3823 = vmatmul.mubr.f32.gmra.mxu0 %v3645
        %v3824 = vpop.f32.mrf.mxu0
        %v3825 = vadd.f32 0.0, %v3824
        %v3826 = vpop.f32.mrf.mxu0
        %3827 = vmatprep.mubr.f32.mxu0 0.0
        %3828 = vmatmul.mubr.f32.gmra.mxu0 %v3646
        %v3829 = vpop.f32.mrf.mxu0
        %v3830 = vadd.f32 0.0, %v3829
        %v3831 = vpop.f32.mrf.mxu0
        %3832 = vmatprep.mubr.f32.mxu0 0.0
        %3833 = vmatmul.mubr.f32.gmra.mxu0 %v3647
        %v3834 = vpop.f32.mrf.mxu0
        %v3835 = vadd.f32 0.0, %v3834
        %v3836 = vpop.f32.mrf.mxu0
        %3837 = vmatprep.mubr.f32.mxu0 0.0
        %3838 = vmatmul.mubr.f32.gmra.mxu0 %v3648
        %v3839 = vpop.f32.mrf.mxu0
        %v3840 = vadd.f32 0.0, %v3839
        %v3841 = vpop.f32.mrf.mxu0
        %3842 = vmatprep.mubr.f32.mxu0 0.0
        %3843 = vmatmul.mubr.f32.gmra.mxu0 %v3649
        %v3844 = vpop.f32.mrf.mxu0
        %v3845 = vadd.f32 0.0, %v3844
        %v3846 = vpop.f32.mrf.mxu0
        %3847 = vmatprep.mubr.f32.mxu0 0.0
        %3848 = vmatmul.mubr.f32.gmra.mxu0 %v3650
        %v3849 = vpop.f32.mrf.mxu0
        %v3850 = vadd.f32 0.0, %v3849
        %v3851 = vpop.f32.mrf.mxu0
        %3852 = vmatprep.mubr.f32.mxu0 0.0
        %3853 = vmatmul.mubr.f32.gmra.mxu0 %v3651
        %v3854 = vpop.f32.mrf.mxu0
        %v3855 = vadd.f32 0.0, %v3854
        %v3856 = vpop.f32.mrf.mxu0
        %3857 = vmatprep.mubr.f32.mxu0 0.0
        %3858 = vmatmul.mubr.f32.gmra.mxu0 %v3652
        %v3859 = vpop.f32.mrf.mxu0
        %v3860 = vadd.f32 0.0, %v3859
        %v3861 = vpop.f32.mrf.mxu0
        %3862 = vmatprep.mubr.f32.mxu0 0.0
        %3863 = vmatmul.mubr.f32.gmra.mxu0 %v3653
        %v3864 = vpop.f32.mrf.mxu0
        %v3865 = vadd.f32 0.0, %v3864
        %v3866 = vpop.f32.mrf.mxu0
        %3867 = vmatprep.mubr.f32.mxu0 0.0
        %3868 = vmatmul.mubr.f32.gmra.mxu0 %v3654
        %v3869 = vpop.f32.mrf.mxu0
        %v3870 = vadd.f32 0.0, %v3869
        %v3871 = vpop.f32.mrf.mxu0
        %3872 = vmatprep.mubr.f32.mxu0 0.0
        %3873 = vmatmul.mubr.f32.gmra.mxu0 %v3655
        %v3874 = vpop.f32.mrf.mxu0
        %v3875 = vadd.f32 0.0, %v3874
        %v3876 = vpop.f32.mrf.mxu0
        %3877 = vmatprep.mubr.f32.mxu0 0.0
        %3878 = vmatmul.mubr.f32.gmra.mxu0 %v3656
        %v3879 = vpop.f32.mrf.mxu0
        %v3880 = vadd.f32 0.0, %v3879
        %v3881 = vpop.f32.mrf.mxu0
        %3882 = vmatprep.mubr.f32.mxu0 0.0
        %3883 = vmatmul.mubr.f32.gmra.mxu0 %v3657
        %v3884 = vpop.f32.mrf.mxu0
        %v3885 = vadd.f32 0.0, %v3884
        %v3886 = vpop.f32.mrf.mxu0
        %3887 = vmatprep.mubr.f32.mxu0 0.0
        %3888 = vmatmul.mubr.f32.gmra.mxu0 %v3658
        %v3889 = vpop.f32.mrf.mxu0
        %v3890 = vadd.f32 0.0, %v3889
        %v3891 = vpop.f32.mrf.mxu0
        %3892 = vmatprep.mubr.f32.mxu0 0.0
        %3893 = vmatmul.mubr.f32.gmra.mxu0 %v3659
        %v3894 = vpop.f32.mrf.mxu0
        %v3895 = vadd.f32 0.0, %v3894
        %v3896 = vpop.f32.mrf.mxu0
        %3897 = vmatprep.mubr.f32.mxu0 0.0
        %3898 = vmatmul.mubr.f32.gmra.mxu0 %v3660
        %v3899 = vpop.f32.mrf.mxu0
        %v3900 = vadd.f32 0.0, %v3899
        %v3901 = vpop.f32.mrf.mxu0
        %3902 = vmatprep.mubr.f32.mxu0 0.0
        %3903 = vmatmul.mubr.f32.gmra.mxu0 %v3661
        %v3904 = vpop.f32.mrf.mxu0
        %v3905 = vadd.f32 0.0, %v3904
        %v3906 = vpop.f32.mrf.mxu0
        %3907 = vmatprep.mubr.f32.mxu0 0.0
        %3908 = vmatmul.mubr.f32.gmra.mxu0 %v3662
        %v3909 = vpop.f32.mrf.mxu0
        %v3910 = vadd.f32 0.0, %v3909
        %v3911 = vpop.f32.mrf.mxu0
        %3912 = vmatprep.mubr.f32.mxu0 0.0
        %3913 = vmatmul.mubr.f32.gmra.mxu0 %v3663
        %v3914 = vpop.f32.mrf.mxu0
        %v3915 = vadd.f32 0.0, %v3914
        %v3916 = vpop.f32.mrf.mxu0
        %3917 = vmatprep.mubr.f32.mxu0 0.0
        %3918 = vmatmul.mubr.f32.gmra.mxu0 %v3664
        %v3919 = vpop.f32.mrf.mxu0
        %v3920 = vadd.f32 0.0, %v3919
        %v3921 = vpop.f32.mrf.mxu0
        %3922 = vmatprep.mubr.f32.mxu0 0.0
        %3923 = vmatmul.mubr.f32.gmra.mxu0 %v3665
        %v3924 = vpop.f32.mrf.mxu0
        %v3925 = vadd.f32 0.0, %v3924
        %v3926 = vpop.f32.mrf.mxu0
        %3927 = vdwg.mxu0
        %v3928 = vadd.f32 %v3594, %v3750
        %v3929 = vadd.f32 %v3595, %v3755
        %v3930 = vadd.f32 %v3596, %v3760
        %v3931 = vadd.f32 %v3597, %v3765
        %v3932 = vadd.f32 %v3598, %v3770
        %v3933 = vadd.f32 %v3599, %v3775
        %v3934 = vadd.f32 %v3600, %v3780
        %v3935 = vadd.f32 %v3601, %v3785
        %v3936 = vadd.f32 %v3602, %v3790
        %v3937 = vadd.f32 %v3603, %v3795
        %v3938 = vadd.f32 %v3604, %v3800
        %v3939 = vadd.f32 %v3605, %v3805
        %v3940 = vadd.f32 %v3606, %v3810
        %v3941 = vadd.f32 %v3607, %v3815
        %v3942 = vadd.f32 %v3608, %v3820
        %v3943 = vadd.f32 %v3609, %v3825
        %v3944 = vadd.f32 %v3610, %v3830
        %v3945 = vadd.f32 %v3611, %v3835
        %v3946 = vadd.f32 %v3612, %v3840
        %v3947 = vadd.f32 %v3613, %v3845
        %v3948 = vadd.f32 %v3614, %v3850
        %v3949 = vadd.f32 %v3615, %v3855
        %v3950 = vadd.f32 %v3616, %v3860
        %v3951 = vadd.f32 %v3617, %v3865
        %v3952 = vadd.f32 %v3618, %v3870
        %v3953 = vadd.f32 %v3619, %v3875
        %v3954 = vadd.f32 %v3620, %v3880
        %v3955 = vadd.f32 %v3621, %v3885
        %v3956 = vadd.f32 %v3622, %v3890
        %v3957 = vadd.f32 %v3623, %v3895
        %v3958 = vadd.f32 %v3624, %v3900
        %v3959 = vadd.f32 %v3625, %v3905
        %v3960 = vadd.f32 %v3626, %v3910
        %v3961 = vadd.f32 %v3627, %v3915
        %v3962 = vadd.f32 %v3628, %v3920
        %v3963 = vadd.f32 %v3629, %v3925
        %v3964 = vld [vmem:[#allocation2 + $0x13] sm:$0xff]
        %v3965 = vld [vmem:[#allocation2 + $0x1b] sm:$0xff]
        %v3966 = vld [vmem:[#allocation2 + $0x23] sm:$0xff]
        %v3967 = vld [vmem:[#allocation2 + $0x2b] sm:$0xff]
        %v3968 = vld [vmem:[#allocation2 + $0x33] sm:$0xff]
        %v3969 = vld [vmem:[#allocation2 + $0x3b] sm:$0xff]
        %v3970 = vld [vmem:[#allocation2 + $0x43] sm:$0xff]
        %v3971 = vld [vmem:[#allocation2 + $0x4b] sm:$0xff]
        %v3972 = vld [vmem:[#allocation2 + $0x53] sm:$0xff]
        %v3973 = vld [vmem:[#allocation2 + $0x5b] sm:$0xff]
        %v3974 = vld [vmem:[#allocation2 + $0x63] sm:$0xff]
        %v3975 = vld [vmem:[#allocation2 + $0x6b] sm:$0xff]
        %v3976 = vld [vmem:[#allocation2 + $0x73] sm:$0xff]
        %v3977 = vld [vmem:[#allocation2 + $0x7b] sm:$0xff]
        %v3978 = vld [vmem:[#allocation2 + $0x83] sm:$0xff]
        %v3979 = vld [vmem:[#allocation2 + $0x8b] sm:$0xff]
        %v3980 = vld [vmem:[#allocation2 + $0x93] sm:$0xff]
        %v3981 = vld [vmem:[#allocation2 + $0x9b] sm:$0xff]
        %v3982 = vld [vmem:[#allocation2 + $0xa3] sm:$0xff]
        %v3983 = vld [vmem:[#allocation2 + $0xab] sm:$0xff]
        %v3984 = vld [vmem:[#allocation2 + $0xb3] sm:$0xff]
        %v3985 = vld [vmem:[#allocation2 + $0xbb] sm:$0xff]
        %v3986 = vld [vmem:[#allocation2 + $0xc3] sm:$0xff]
        %v3987 = vld [vmem:[#allocation2 + $0xcb] sm:$0xff]
        %v3988 = vld [vmem:[#allocation2 + $0xd3] sm:$0xff]
        %v3989 = vld [vmem:[#allocation2 + $0xdb] sm:$0xff]
        %v3990 = vld [vmem:[#allocation2 + $0xe3] sm:$0xff]
        %v3991 = vld [vmem:[#allocation2 + $0xeb] sm:$0xff]
        %v3992 = vld [vmem:[#allocation2 + $0xf3] sm:$0xff]
        %v3993 = vld [vmem:[#allocation2 + $0xfb] sm:$0xff]
        %v3994 = vld [vmem:[#allocation2 + $0x103] sm:$0xff]
        %v3995 = vld [vmem:[#allocation2 + $0x10b] sm:$0xff]
        %v3996 = vld [vmem:[#allocation2 + $0x113] sm:$0xff]
        %v3997 = vld [vmem:[#allocation2 + $0x11b] sm:$0xff]
        %v3998 = vld [vmem:[#allocation2 + $0x123] sm:$0xff]
        %v3999 = vld [vmem:[#allocation2 + $0x12b] sm:$0xff]
        %s4000 = scalar_lea.vmem [#allocation12], 512
        %v4001 = vld [vmem:[%s4000] sm:$0xff]
        %v4002 = vld [vmem:[%s4000 + $0x8] sm:$0xff]
        %v4003 = vld [vmem:[%s4000 + $0x10] sm:$0xff]
        %v4004 = vld [vmem:[%s4000 + $0x18] sm:$0xff]
        %v4005 = vld [vmem:[%s4000 + $0x20] sm:$0xff]
        %v4006 = vld [vmem:[%s4000 + $0x28] sm:$0xff]
        %v4007 = vld [vmem:[%s4000 + $0x30] sm:$0xff]
        %v4008 = vld [vmem:[%s4000 + $0x38] sm:$0xff]
        %v4009 = vld [vmem:[%s4000 + $0x40] sm:$0xff]
        %v4010 = vld [vmem:[%s4000 + $0x48] sm:$0xff]
        %v4011 = vld [vmem:[%s4000 + $0x50] sm:$0xff]
        %v4012 = vld [vmem:[%s4000 + $0x58] sm:$0xff]
        %v4013 = vld [vmem:[%s4000 + $0x60] sm:$0xff]
        %v4014 = vld [vmem:[%s4000 + $0x68] sm:$0xff]
        %v4015 = vld [vmem:[%s4000 + $0x70] sm:$0xff]
        %v4016 = vld [vmem:[%s4000 + $0x78] sm:$0xff]
        %4017 = vmatprep.subr.mxu0 0.0
        %4018 = vmatpush1.msra.mxu0 %v4016
        %4019 = vmatprep.subr.mxu0 0.0
        %4020 = vmatpush1.msra.mxu0 %v4015
        %4021 = vmatprep.subr.mxu0 0.0
        %4022 = vmatpush1.msra.mxu0 %v4014
        %4023 = vmatprep.subr.mxu0 0.0
        %4024 = vmatpush1.msra.mxu0 %v4013
        %4025 = vmatprep.subr.mxu0 0.0
        %4026 = vmatpush1.msra.mxu0 %v4012
        %4027 = vmatprep.subr.mxu0 0.0
        %4028 = vmatpush1.msra.mxu0 %v4011
        %4029 = vmatprep.subr.mxu0 0.0
        %4030 = vmatpush1.msra.mxu0 %v4010
        %4031 = vmatprep.subr.mxu0 0.0
        %4032 = vmatpush1.msra.mxu0 %v4009
        %4033 = vmatprep.subr.mxu0 0.0
        %4034 = vmatpush1.msra.mxu0 %v4008
        %4035 = vmatprep.subr.mxu0 0.0
        %4036 = vmatpush1.msra.mxu0 %v4007
        %4037 = vmatprep.subr.mxu0 0.0
        %4038 = vmatpush1.msra.mxu0 %v4006
        %4039 = vmatprep.subr.mxu0 0.0
        %4040 = vmatpush1.msra.mxu0 %v4005
        %4041 = vmatprep.subr.mxu0 0.0
        %4042 = vmatpush1.msra.mxu0 %v4004
        %4043 = vmatprep.subr.mxu0 0.0
        %4044 = vmatpush1.msra.mxu0 %v4003
        %4045 = vmatprep.subr.mxu0 0.0
        %4046 = vmatpush1.msra.mxu0 %v4002
        %4047 = vmatprep.subr.mxu0 0.0
        %4048 = vmatpush1.msra.mxu0 %v4001
        %4049 = vmatprep.subr.mxu0 0.0
        %4050 = vmatpush2.msra.mxu0 0.0
        %4051 = vmatprep.subr.mxu0 0.0
        %4052 = vmatpush2.msra.mxu0 0.0
        %4053 = vmatprep.subr.mxu0 0.0
        %4054 = vmatpush2.msra.mxu0 0.0
        %4055 = vmatprep.subr.mxu0 0.0
        %4056 = vmatpush2.msra.mxu0 0.0
        %4057 = vmatprep.subr.mxu0 0.0
        %4058 = vmatpush2.msra.mxu0 0.0
        %4059 = vmatprep.subr.mxu0 0.0
        %4060 = vmatpush2.msra.mxu0 0.0
        %4061 = vmatprep.subr.mxu0 0.0
        %4062 = vmatpush2.msra.mxu0 0.0
        %4063 = vmatprep.subr.mxu0 0.0
        %4064 = vmatpush2.msra.mxu0 0.0
        %4065 = vmatprep.subr.mxu0 0.0
        %4066 = vmatpush2.msra.mxu0 0.0
        %4067 = vmatprep.subr.mxu0 0.0
        %4068 = vmatpush2.msra.mxu0 0.0
        %4069 = vmatprep.subr.mxu0 0.0
        %4070 = vmatpush2.msra.mxu0 0.0
        %4071 = vmatprep.subr.mxu0 0.0
        %4072 = vmatpush2.msra.mxu0 0.0
        %4073 = vmatprep.subr.mxu0 0.0
        %4074 = vmatpush2.msra.mxu0 0.0
        %4075 = vmatprep.subr.mxu0 0.0
        %4076 = vmatpush2.msra.mxu0 0.0
        %4077 = vmatprep.subr.mxu0 0.0
        %4078 = vmatpush2.msra.mxu0 0.0
        %4079 = vmatprep.subr.mxu0 0.0
        %4080 = vmatpush2.msra.mxu0 0.0
        %4081 = vmatprep.mubr.f32.mxu0 0.0
        %4082 = vmatmul.mubr.f32.gmra.mxu0 %v3964
        %v4083 = vpop.f32.mrf.mxu0
        %v4084 = vadd.f32 0.0, %v4083
        %v4085 = vpop.f32.mrf.mxu0
        %4086 = vmatprep.mubr.f32.mxu0 0.0
        %4087 = vmatmul.mubr.f32.gmra.mxu0 %v3965
        %v4088 = vpop.f32.mrf.mxu0
        %v4089 = vadd.f32 0.0, %v4088
        %v4090 = vpop.f32.mrf.mxu0
        %4091 = vmatprep.mubr.f32.mxu0 0.0
        %4092 = vmatmul.mubr.f32.gmra.mxu0 %v3966
        %v4093 = vpop.f32.mrf.mxu0
        %v4094 = vadd.f32 0.0, %v4093
        %v4095 = vpop.f32.mrf.mxu0
        %4096 = vmatprep.mubr.f32.mxu0 0.0
        %4097 = vmatmul.mubr.f32.gmra.mxu0 %v3967
        %v4098 = vpop.f32.mrf.mxu0
        %v4099 = vadd.f32 0.0, %v4098
        %v4100 = vpop.f32.mrf.mxu0
        %4101 = vmatprep.mubr.f32.mxu0 0.0
        %4102 = vmatmul.mubr.f32.gmra.mxu0 %v3968
        %v4103 = vpop.f32.mrf.mxu0
        %v4104 = vadd.f32 0.0, %v4103
        %v4105 = vpop.f32.mrf.mxu0
        %4106 = vmatprep.mubr.f32.mxu0 0.0
        %4107 = vmatmul.mubr.f32.gmra.mxu0 %v3969
        %v4108 = vpop.f32.mrf.mxu0
        %v4109 = vadd.f32 0.0, %v4108
        %v4110 = vpop.f32.mrf.mxu0
        %4111 = vmatprep.mubr.f32.mxu0 0.0
        %4112 = vmatmul.mubr.f32.gmra.mxu0 %v3970
        %v4113 = vpop.f32.mrf.mxu0
        %v4114 = vadd.f32 0.0, %v4113
        %v4115 = vpop.f32.mrf.mxu0
        %4116 = vmatprep.mubr.f32.mxu0 0.0
        %4117 = vmatmul.mubr.f32.gmra.mxu0 %v3971
        %v4118 = vpop.f32.mrf.mxu0
        %v4119 = vadd.f32 0.0, %v4118
        %v4120 = vpop.f32.mrf.mxu0
        %4121 = vmatprep.mubr.f32.mxu0 0.0
        %4122 = vmatmul.mubr.f32.gmra.mxu0 %v3972
        %v4123 = vpop.f32.mrf.mxu0
        %v4124 = vadd.f32 0.0, %v4123
        %v4125 = vpop.f32.mrf.mxu0
        %4126 = vmatprep.mubr.f32.mxu0 0.0
        %4127 = vmatmul.mubr.f32.gmra.mxu0 %v3973
        %v4128 = vpop.f32.mrf.mxu0
        %v4129 = vadd.f32 0.0, %v4128
        %v4130 = vpop.f32.mrf.mxu0
        %4131 = vmatprep.mubr.f32.mxu0 0.0
        %4132 = vmatmul.mubr.f32.gmra.mxu0 %v3974
        %v4133 = vpop.f32.mrf.mxu0
        %v4134 = vadd.f32 0.0, %v4133
        %v4135 = vpop.f32.mrf.mxu0
        %4136 = vmatprep.mubr.f32.mxu0 0.0
        %4137 = vmatmul.mubr.f32.gmra.mxu0 %v3975
        %v4138 = vpop.f32.mrf.mxu0
        %v4139 = vadd.f32 0.0, %v4138
        %v4140 = vpop.f32.mrf.mxu0
        %4141 = vmatprep.mubr.f32.mxu0 0.0
        %4142 = vmatmul.mubr.f32.gmra.mxu0 %v3976
        %v4143 = vpop.f32.mrf.mxu0
        %v4144 = vadd.f32 0.0, %v4143
        %v4145 = vpop.f32.mrf.mxu0
        %4146 = vmatprep.mubr.f32.mxu0 0.0
        %4147 = vmatmul.mubr.f32.gmra.mxu0 %v3977
        %v4148 = vpop.f32.mrf.mxu0
        %v4149 = vadd.f32 0.0, %v4148
        %v4150 = vpop.f32.mrf.mxu0
        %4151 = vmatprep.mubr.f32.mxu0 0.0
        %4152 = vmatmul.mubr.f32.gmra.mxu0 %v3978
        %v4153 = vpop.f32.mrf.mxu0
        %v4154 = vadd.f32 0.0, %v4153
        %v4155 = vpop.f32.mrf.mxu0
        %4156 = vmatprep.mubr.f32.mxu0 0.0
        %4157 = vmatmul.mubr.f32.gmra.mxu0 %v3979
        %v4158 = vpop.f32.mrf.mxu0
        %v4159 = vadd.f32 0.0, %v4158
        %v4160 = vpop.f32.mrf.mxu0
        %4161 = vmatprep.mubr.f32.mxu0 0.0
        %4162 = vmatmul.mubr.f32.gmra.mxu0 %v3980
        %v4163 = vpop.f32.mrf.mxu0
        %v4164 = vadd.f32 0.0, %v4163
        %v4165 = vpop.f32.mrf.mxu0
        %4166 = vmatprep.mubr.f32.mxu0 0.0
        %4167 = vmatmul.mubr.f32.gmra.mxu0 %v3981
        %v4168 = vpop.f32.mrf.mxu0
        %v4169 = vadd.f32 0.0, %v4168
        %v4170 = vpop.f32.mrf.mxu0
        %4171 = vmatprep.mubr.f32.mxu0 0.0
        %4172 = vmatmul.mubr.f32.gmra.mxu0 %v3982
        %v4173 = vpop.f32.mrf.mxu0
        %v4174 = vadd.f32 0.0, %v4173
        %v4175 = vpop.f32.mrf.mxu0
        %4176 = vmatprep.mubr.f32.mxu0 0.0
        %4177 = vmatmul.mubr.f32.gmra.mxu0 %v3983
        %v4178 = vpop.f32.mrf.mxu0
        %v4179 = vadd.f32 0.0, %v4178
        %v4180 = vpop.f32.mrf.mxu0
        %4181 = vmatprep.mubr.f32.mxu0 0.0
        %4182 = vmatmul.mubr.f32.gmra.mxu0 %v3984
        %v4183 = vpop.f32.mrf.mxu0
        %v4184 = vadd.f32 0.0, %v4183
        %v4185 = vpop.f32.mrf.mxu0
        %4186 = vmatprep.mubr.f32.mxu0 0.0
        %4187 = vmatmul.mubr.f32.gmra.mxu0 %v3985
        %v4188 = vpop.f32.mrf.mxu0
        %v4189 = vadd.f32 0.0, %v4188
        %v4190 = vpop.f32.mrf.mxu0
        %4191 = vmatprep.mubr.f32.mxu0 0.0
        %4192 = vmatmul.mubr.f32.gmra.mxu0 %v3986
        %v4193 = vpop.f32.mrf.mxu0
        %v4194 = vadd.f32 0.0, %v4193
        %v4195 = vpop.f32.mrf.mxu0
        %4196 = vmatprep.mubr.f32.mxu0 0.0
        %4197 = vmatmul.mubr.f32.gmra.mxu0 %v3987
        %v4198 = vpop.f32.mrf.mxu0
        %v4199 = vadd.f32 0.0, %v4198
        %v4200 = vpop.f32.mrf.mxu0
        %4201 = vmatprep.mubr.f32.mxu0 0.0
        %4202 = vmatmul.mubr.f32.gmra.mxu0 %v3988
        %v4203 = vpop.f32.mrf.mxu0
        %v4204 = vadd.f32 0.0, %v4203
        %v4205 = vpop.f32.mrf.mxu0
        %4206 = vmatprep.mubr.f32.mxu0 0.0
        %4207 = vmatmul.mubr.f32.gmra.mxu0 %v3989
        %v4208 = vpop.f32.mrf.mxu0
        %v4209 = vadd.f32 0.0, %v4208
        %v4210 = vpop.f32.mrf.mxu0
        %4211 = vmatprep.mubr.f32.mxu0 0.0
        %4212 = vmatmul.mubr.f32.gmra.mxu0 %v3990
        %v4213 = vpop.f32.mrf.mxu0
        %v4214 = vadd.f32 0.0, %v4213
        %v4215 = vpop.f32.mrf.mxu0
        %4216 = vmatprep.mubr.f32.mxu0 0.0
        %4217 = vmatmul.mubr.f32.gmra.mxu0 %v3991
        %v4218 = vpop.f32.mrf.mxu0
        %v4219 = vadd.f32 0.0, %v4218
        %v4220 = vpop.f32.mrf.mxu0
        %4221 = vmatprep.mubr.f32.mxu0 0.0
        %4222 = vmatmul.mubr.f32.gmra.mxu0 %v3992
        %v4223 = vpop.f32.mrf.mxu0
        %v4224 = vadd.f32 0.0, %v4223
        %v4225 = vpop.f32.mrf.mxu0
        %4226 = vmatprep.mubr.f32.mxu0 0.0
        %4227 = vmatmul.mubr.f32.gmra.mxu0 %v3993
        %v4228 = vpop.f32.mrf.mxu0
        %v4229 = vadd.f32 0.0, %v4228
        %v4230 = vpop.f32.mrf.mxu0
        %4231 = vmatprep.mubr.f32.mxu0 0.0
        %4232 = vmatmul.mubr.f32.gmra.mxu0 %v3994
        %v4233 = vpop.f32.mrf.mxu0
        %v4234 = vadd.f32 0.0, %v4233
        %v4235 = vpop.f32.mrf.mxu0
        %4236 = vmatprep.mubr.f32.mxu0 0.0
        %4237 = vmatmul.mubr.f32.gmra.mxu0 %v3995
        %v4238 = vpop.f32.mrf.mxu0
        %v4239 = vadd.f32 0.0, %v4238
        %v4240 = vpop.f32.mrf.mxu0
        %4241 = vmatprep.mubr.f32.mxu0 0.0
        %4242 = vmatmul.mubr.f32.gmra.mxu0 %v3996
        %v4243 = vpop.f32.mrf.mxu0
        %v4244 = vadd.f32 0.0, %v4243
        %v4245 = vpop.f32.mrf.mxu0
        %4246 = vmatprep.mubr.f32.mxu0 0.0
        %4247 = vmatmul.mubr.f32.gmra.mxu0 %v3997
        %v4248 = vpop.f32.mrf.mxu0
        %v4249 = vadd.f32 0.0, %v4248
        %v4250 = vpop.f32.mrf.mxu0
        %4251 = vmatprep.mubr.f32.mxu0 0.0
        %4252 = vmatmul.mubr.f32.gmra.mxu0 %v3998
        %v4253 = vpop.f32.mrf.mxu0
        %v4254 = vadd.f32 0.0, %v4253
        %v4255 = vpop.f32.mrf.mxu0
        %4256 = vmatprep.mubr.f32.mxu0 0.0
        %4257 = vmatmul.mubr.f32.gmra.mxu0 %v3999
        %v4258 = vpop.f32.mrf.mxu0
        %v4259 = vadd.f32 0.0, %v4258
        %v4260 = vpop.f32.mrf.mxu0
        %4261 = vdwg.mxu0
        %v4262 = vadd.f32 %v3928, %v4084
        %v4263 = vadd.f32 %v3929, %v4089
        %v4264 = vadd.f32 %v3930, %v4094
        %v4265 = vadd.f32 %v3931, %v4099
        %v4266 = vadd.f32 %v3932, %v4104
        %v4267 = vadd.f32 %v3933, %v4109
        %v4268 = vadd.f32 %v3934, %v4114
        %v4269 = vadd.f32 %v3935, %v4119
        %v4270 = vadd.f32 %v3936, %v4124
        %v4271 = vadd.f32 %v3937, %v4129
        %v4272 = vadd.f32 %v3938, %v4134
        %v4273 = vadd.f32 %v3939, %v4139
        %v4274 = vadd.f32 %v3940, %v4144
        %v4275 = vadd.f32 %v3941, %v4149
        %v4276 = vadd.f32 %v3942, %v4154
        %v4277 = vadd.f32 %v3943, %v4159
        %v4278 = vadd.f32 %v3944, %v4164
        %v4279 = vadd.f32 %v3945, %v4169
        %v4280 = vadd.f32 %v3946, %v4174
        %v4281 = vadd.f32 %v3947, %v4179
        %v4282 = vadd.f32 %v3948, %v4184
        %v4283 = vadd.f32 %v3949, %v4189
        %v4284 = vadd.f32 %v3950, %v4194
        %v4285 = vadd.f32 %v3951, %v4199
        %v4286 = vadd.f32 %v3952, %v4204
        %v4287 = vadd.f32 %v3953, %v4209
        %v4288 = vadd.f32 %v3954, %v4214
        %v4289 = vadd.f32 %v3955, %v4219
        %v4290 = vadd.f32 %v3956, %v4224
        %v4291 = vadd.f32 %v3957, %v4229
        %v4292 = vadd.f32 %v3958, %v4234
        %v4293 = vadd.f32 %v3959, %v4239
        %v4294 = vadd.f32 %v3960, %v4244
        %v4295 = vadd.f32 %v3961, %v4249
        %v4296 = vadd.f32 %v3962, %v4254
        %v4297 = vadd.f32 %v3963, %v4259
        %v4298 = vld [vmem:[#allocation2 + $0x14] sm:$0xff]
        %v4299 = vld [vmem:[#allocation2 + $0x1c] sm:$0xff]
        %v4300 = vld [vmem:[#allocation2 + $0x24] sm:$0xff]
        %v4301 = vld [vmem:[#allocation2 + $0x2c] sm:$0xff]
        %v4302 = vld [vmem:[#allocation2 + $0x34] sm:$0xff]
        %v4303 = vld [vmem:[#allocation2 + $0x3c] sm:$0xff]
        %v4304 = vld [vmem:[#allocation2 + $0x44] sm:$0xff]
        %v4305 = vld [vmem:[#allocation2 + $0x4c] sm:$0xff]
        %v4306 = vld [vmem:[#allocation2 + $0x54] sm:$0xff]
        %v4307 = vld [vmem:[#allocation2 + $0x5c] sm:$0xff]
        %v4308 = vld [vmem:[#allocation2 + $0x64] sm:$0xff]
        %v4309 = vld [vmem:[#allocation2 + $0x6c] sm:$0xff]
        %v4310 = vld [vmem:[#allocation2 + $0x74] sm:$0xff]
        %v4311 = vld [vmem:[#allocation2 + $0x7c] sm:$0xff]
        %v4312 = vld [vmem:[#allocation2 + $0x84] sm:$0xff]
        %v4313 = vld [vmem:[#allocation2 + $0x8c] sm:$0xff]
        %v4314 = vld [vmem:[#allocation2 + $0x94] sm:$0xff]
        %v4315 = vld [vmem:[#allocation2 + $0x9c] sm:$0xff]
        %v4316 = vld [vmem:[#allocation2 + $0xa4] sm:$0xff]
        %v4317 = vld [vmem:[#allocation2 + $0xac] sm:$0xff]
        %v4318 = vld [vmem:[#allocation2 + $0xb4] sm:$0xff]
        %v4319 = vld [vmem:[#allocation2 + $0xbc] sm:$0xff]
        %v4320 = vld [vmem:[#allocation2 + $0xc4] sm:$0xff]
        %v4321 = vld [vmem:[#allocation2 + $0xcc] sm:$0xff]
        %v4322 = vld [vmem:[#allocation2 + $0xd4] sm:$0xff]
        %v4323 = vld [vmem:[#allocation2 + $0xdc] sm:$0xff]
        %v4324 = vld [vmem:[#allocation2 + $0xe4] sm:$0xff]
        %v4325 = vld [vmem:[#allocation2 + $0xec] sm:$0xff]
        %v4326 = vld [vmem:[#allocation2 + $0xf4] sm:$0xff]
        %v4327 = vld [vmem:[#allocation2 + $0xfc] sm:$0xff]
        %v4328 = vld [vmem:[#allocation2 + $0x104] sm:$0xff]
        %v4329 = vld [vmem:[#allocation2 + $0x10c] sm:$0xff]
        %v4330 = vld [vmem:[#allocation2 + $0x114] sm:$0xff]
        %v4331 = vld [vmem:[#allocation2 + $0x11c] sm:$0xff]
        %v4332 = vld [vmem:[#allocation2 + $0x124] sm:$0xff]
        %v4333 = vld [vmem:[#allocation2 + $0x12c] sm:$0xff]
        %s4334 = scalar_lea.vmem [#allocation12], 640
        %v4335 = vld [vmem:[%s4334] sm:$0xff]
        %v4336 = vld [vmem:[%s4334 + $0x8] sm:$0xff]
        %v4337 = vld [vmem:[%s4334 + $0x10] sm:$0xff]
        %v4338 = vld [vmem:[%s4334 + $0x18] sm:$0xff]
        %v4339 = vld [vmem:[%s4334 + $0x20] sm:$0xff]
        %v4340 = vld [vmem:[%s4334 + $0x28] sm:$0xff]
        %v4341 = vld [vmem:[%s4334 + $0x30] sm:$0xff]
        %v4342 = vld [vmem:[%s4334 + $0x38] sm:$0xff]
        %v4343 = vld [vmem:[%s4334 + $0x40] sm:$0xff]
        %v4344 = vld [vmem:[%s4334 + $0x48] sm:$0xff]
        %v4345 = vld [vmem:[%s4334 + $0x50] sm:$0xff]
        %v4346 = vld [vmem:[%s4334 + $0x58] sm:$0xff]
        %v4347 = vld [vmem:[%s4334 + $0x60] sm:$0xff]
        %v4348 = vld [vmem:[%s4334 + $0x68] sm:$0xff]
        %v4349 = vld [vmem:[%s4334 + $0x70] sm:$0xff]
        %v4350 = vld [vmem:[%s4334 + $0x78] sm:$0xff]
        %4351 = vmatprep.subr.mxu0 0.0
        %4352 = vmatpush1.msra.mxu0 %v4350
        %4353 = vmatprep.subr.mxu0 0.0
        %4354 = vmatpush1.msra.mxu0 %v4349
        %4355 = vmatprep.subr.mxu0 0.0
        %4356 = vmatpush1.msra.mxu0 %v4348
        %4357 = vmatprep.subr.mxu0 0.0
        %4358 = vmatpush1.msra.mxu0 %v4347
        %4359 = vmatprep.subr.mxu0 0.0
        %4360 = vmatpush1.msra.mxu0 %v4346
        %4361 = vmatprep.subr.mxu0 0.0
        %4362 = vmatpush1.msra.mxu0 %v4345
        %4363 = vmatprep.subr.mxu0 0.0
        %4364 = vmatpush1.msra.mxu0 %v4344
        %4365 = vmatprep.subr.mxu0 0.0
        %4366 = vmatpush1.msra.mxu0 %v4343
        %4367 = vmatprep.subr.mxu0 0.0
        %4368 = vmatpush1.msra.mxu0 %v4342
        %4369 = vmatprep.subr.mxu0 0.0
        %4370 = vmatpush1.msra.mxu0 %v4341
        %4371 = vmatprep.subr.mxu0 0.0
        %4372 = vmatpush1.msra.mxu0 %v4340
        %4373 = vmatprep.subr.mxu0 0.0
        %4374 = vmatpush1.msra.mxu0 %v4339
        %4375 = vmatprep.subr.mxu0 0.0
        %4376 = vmatpush1.msra.mxu0 %v4338
        %4377 = vmatprep.subr.mxu0 0.0
        %4378 = vmatpush1.msra.mxu0 %v4337
        %4379 = vmatprep.subr.mxu0 0.0
        %4380 = vmatpush1.msra.mxu0 %v4336
        %4381 = vmatprep.subr.mxu0 0.0
        %4382 = vmatpush1.msra.mxu0 %v4335
        %4383 = vmatprep.subr.mxu0 0.0
        %4384 = vmatpush2.msra.mxu0 0.0
        %4385 = vmatprep.subr.mxu0 0.0
        %4386 = vmatpush2.msra.mxu0 0.0
        %4387 = vmatprep.subr.mxu0 0.0
        %4388 = vmatpush2.msra.mxu0 0.0
        %4389 = vmatprep.subr.mxu0 0.0
        %4390 = vmatpush2.msra.mxu0 0.0
        %4391 = vmatprep.subr.mxu0 0.0
        %4392 = vmatpush2.msra.mxu0 0.0
        %4393 = vmatprep.subr.mxu0 0.0
        %4394 = vmatpush2.msra.mxu0 0.0
        %4395 = vmatprep.subr.mxu0 0.0
        %4396 = vmatpush2.msra.mxu0 0.0
        %4397 = vmatprep.subr.mxu0 0.0
        %4398 = vmatpush2.msra.mxu0 0.0
        %4399 = vmatprep.subr.mxu0 0.0
        %4400 = vmatpush2.msra.mxu0 0.0
        %4401 = vmatprep.subr.mxu0 0.0
        %4402 = vmatpush2.msra.mxu0 0.0
        %4403 = vmatprep.subr.mxu0 0.0
        %4404 = vmatpush2.msra.mxu0 0.0
        %4405 = vmatprep.subr.mxu0 0.0
        %4406 = vmatpush2.msra.mxu0 0.0
        %4407 = vmatprep.subr.mxu0 0.0
        %4408 = vmatpush2.msra.mxu0 0.0
        %4409 = vmatprep.subr.mxu0 0.0
        %4410 = vmatpush2.msra.mxu0 0.0
        %4411 = vmatprep.subr.mxu0 0.0
        %4412 = vmatpush2.msra.mxu0 0.0
        %4413 = vmatprep.subr.mxu0 0.0
        %4414 = vmatpush2.msra.mxu0 0.0
        %4415 = vmatprep.mubr.f32.mxu0 0.0
        %4416 = vmatmul.mubr.f32.gmra.mxu0 %v4298
        %v4417 = vpop.f32.mrf.mxu0
        %v4418 = vadd.f32 0.0, %v4417
        %v4419 = vpop.f32.mrf.mxu0
        %4420 = vmatprep.mubr.f32.mxu0 0.0
        %4421 = vmatmul.mubr.f32.gmra.mxu0 %v4299
        %v4422 = vpop.f32.mrf.mxu0
        %v4423 = vadd.f32 0.0, %v4422
        %v4424 = vpop.f32.mrf.mxu0
        %4425 = vmatprep.mubr.f32.mxu0 0.0
        %4426 = vmatmul.mubr.f32.gmra.mxu0 %v4300
        %v4427 = vpop.f32.mrf.mxu0
        %v4428 = vadd.f32 0.0, %v4427
        %v4429 = vpop.f32.mrf.mxu0
        %4430 = vmatprep.mubr.f32.mxu0 0.0
        %4431 = vmatmul.mubr.f32.gmra.mxu0 %v4301
        %v4432 = vpop.f32.mrf.mxu0
        %v4433 = vadd.f32 0.0, %v4432
        %v4434 = vpop.f32.mrf.mxu0
        %4435 = vmatprep.mubr.f32.mxu0 0.0
        %4436 = vmatmul.mubr.f32.gmra.mxu0 %v4302
        %v4437 = vpop.f32.mrf.mxu0
        %v4438 = vadd.f32 0.0, %v4437
        %v4439 = vpop.f32.mrf.mxu0
        %4440 = vmatprep.mubr.f32.mxu0 0.0
        %4441 = vmatmul.mubr.f32.gmra.mxu0 %v4303
        %v4442 = vpop.f32.mrf.mxu0
        %v4443 = vadd.f32 0.0, %v4442
        %v4444 = vpop.f32.mrf.mxu0
        %4445 = vmatprep.mubr.f32.mxu0 0.0
        %4446 = vmatmul.mubr.f32.gmra.mxu0 %v4304
        %v4447 = vpop.f32.mrf.mxu0
        %v4448 = vadd.f32 0.0, %v4447
        %v4449 = vpop.f32.mrf.mxu0
        %4450 = vmatprep.mubr.f32.mxu0 0.0
        %4451 = vmatmul.mubr.f32.gmra.mxu0 %v4305
        %v4452 = vpop.f32.mrf.mxu0
        %v4453 = vadd.f32 0.0, %v4452
        %v4454 = vpop.f32.mrf.mxu0
        %4455 = vmatprep.mubr.f32.mxu0 0.0
        %4456 = vmatmul.mubr.f32.gmra.mxu0 %v4306
        %v4457 = vpop.f32.mrf.mxu0
        %v4458 = vadd.f32 0.0, %v4457
        %v4459 = vpop.f32.mrf.mxu0
        %4460 = vmatprep.mubr.f32.mxu0 0.0
        %4461 = vmatmul.mubr.f32.gmra.mxu0 %v4307
        %v4462 = vpop.f32.mrf.mxu0
        %v4463 = vadd.f32 0.0, %v4462
        %v4464 = vpop.f32.mrf.mxu0
        %4465 = vmatprep.mubr.f32.mxu0 0.0
        %4466 = vmatmul.mubr.f32.gmra.mxu0 %v4308
        %v4467 = vpop.f32.mrf.mxu0
        %v4468 = vadd.f32 0.0, %v4467
        %v4469 = vpop.f32.mrf.mxu0
        %4470 = vmatprep.mubr.f32.mxu0 0.0
        %4471 = vmatmul.mubr.f32.gmra.mxu0 %v4309
        %v4472 = vpop.f32.mrf.mxu0
        %v4473 = vadd.f32 0.0, %v4472
        %v4474 = vpop.f32.mrf.mxu0
        %4475 = vmatprep.mubr.f32.mxu0 0.0
        %4476 = vmatmul.mubr.f32.gmra.mxu0 %v4310
        %v4477 = vpop.f32.mrf.mxu0
        %v4478 = vadd.f32 0.0, %v4477
        %v4479 = vpop.f32.mrf.mxu0
        %4480 = vmatprep.mubr.f32.mxu0 0.0
        %4481 = vmatmul.mubr.f32.gmra.mxu0 %v4311
        %v4482 = vpop.f32.mrf.mxu0
        %v4483 = vadd.f32 0.0, %v4482
        %v4484 = vpop.f32.mrf.mxu0
        %4485 = vmatprep.mubr.f32.mxu0 0.0
        %4486 = vmatmul.mubr.f32.gmra.mxu0 %v4312
        %v4487 = vpop.f32.mrf.mxu0
        %v4488 = vadd.f32 0.0, %v4487
        %v4489 = vpop.f32.mrf.mxu0
        %4490 = vmatprep.mubr.f32.mxu0 0.0
        %4491 = vmatmul.mubr.f32.gmra.mxu0 %v4313
        %v4492 = vpop.f32.mrf.mxu0
        %v4493 = vadd.f32 0.0, %v4492
        %v4494 = vpop.f32.mrf.mxu0
        %4495 = vmatprep.mubr.f32.mxu0 0.0
        %4496 = vmatmul.mubr.f32.gmra.mxu0 %v4314
        %v4497 = vpop.f32.mrf.mxu0
        %v4498 = vadd.f32 0.0, %v4497
        %v4499 = vpop.f32.mrf.mxu0
        %4500 = vmatprep.mubr.f32.mxu0 0.0
        %4501 = vmatmul.mubr.f32.gmra.mxu0 %v4315
        %v4502 = vpop.f32.mrf.mxu0
        %v4503 = vadd.f32 0.0, %v4502
        %v4504 = vpop.f32.mrf.mxu0
        %4505 = vmatprep.mubr.f32.mxu0 0.0
        %4506 = vmatmul.mubr.f32.gmra.mxu0 %v4316
        %v4507 = vpop.f32.mrf.mxu0
        %v4508 = vadd.f32 0.0, %v4507
        %v4509 = vpop.f32.mrf.mxu0
        %4510 = vmatprep.mubr.f32.mxu0 0.0
        %4511 = vmatmul.mubr.f32.gmra.mxu0 %v4317
        %v4512 = vpop.f32.mrf.mxu0
        %v4513 = vadd.f32 0.0, %v4512
        %v4514 = vpop.f32.mrf.mxu0
        %4515 = vmatprep.mubr.f32.mxu0 0.0
        %4516 = vmatmul.mubr.f32.gmra.mxu0 %v4318
        %v4517 = vpop.f32.mrf.mxu0
        %v4518 = vadd.f32 0.0, %v4517
        %v4519 = vpop.f32.mrf.mxu0
        %4520 = vmatprep.mubr.f32.mxu0 0.0
        %4521 = vmatmul.mubr.f32.gmra.mxu0 %v4319
        %v4522 = vpop.f32.mrf.mxu0
        %v4523 = vadd.f32 0.0, %v4522
        %v4524 = vpop.f32.mrf.mxu0
        %4525 = vmatprep.mubr.f32.mxu0 0.0
        %4526 = vmatmul.mubr.f32.gmra.mxu0 %v4320
        %v4527 = vpop.f32.mrf.mxu0
        %v4528 = vadd.f32 0.0, %v4527
        %v4529 = vpop.f32.mrf.mxu0
        %4530 = vmatprep.mubr.f32.mxu0 0.0
        %4531 = vmatmul.mubr.f32.gmra.mxu0 %v4321
        %v4532 = vpop.f32.mrf.mxu0
        %v4533 = vadd.f32 0.0, %v4532
        %v4534 = vpop.f32.mrf.mxu0
        %4535 = vmatprep.mubr.f32.mxu0 0.0
        %4536 = vmatmul.mubr.f32.gmra.mxu0 %v4322
        %v4537 = vpop.f32.mrf.mxu0
        %v4538 = vadd.f32 0.0, %v4537
        %v4539 = vpop.f32.mrf.mxu0
        %4540 = vmatprep.mubr.f32.mxu0 0.0
        %4541 = vmatmul.mubr.f32.gmra.mxu0 %v4323
        %v4542 = vpop.f32.mrf.mxu0
        %v4543 = vadd.f32 0.0, %v4542
        %v4544 = vpop.f32.mrf.mxu0
        %4545 = vmatprep.mubr.f32.mxu0 0.0
        %4546 = vmatmul.mubr.f32.gmra.mxu0 %v4324
        %v4547 = vpop.f32.mrf.mxu0
        %v4548 = vadd.f32 0.0, %v4547
        %v4549 = vpop.f32.mrf.mxu0
        %4550 = vmatprep.mubr.f32.mxu0 0.0
        %4551 = vmatmul.mubr.f32.gmra.mxu0 %v4325
        %v4552 = vpop.f32.mrf.mxu0
        %v4553 = vadd.f32 0.0, %v4552
        %v4554 = vpop.f32.mrf.mxu0
        %4555 = vmatprep.mubr.f32.mxu0 0.0
        %4556 = vmatmul.mubr.f32.gmra.mxu0 %v4326
        %v4557 = vpop.f32.mrf.mxu0
        %v4558 = vadd.f32 0.0, %v4557
        %v4559 = vpop.f32.mrf.mxu0
        %4560 = vmatprep.mubr.f32.mxu0 0.0
        %4561 = vmatmul.mubr.f32.gmra.mxu0 %v4327
        %v4562 = vpop.f32.mrf.mxu0
        %v4563 = vadd.f32 0.0, %v4562
        %v4564 = vpop.f32.mrf.mxu0
        %4565 = vmatprep.mubr.f32.mxu0 0.0
        %4566 = vmatmul.mubr.f32.gmra.mxu0 %v4328
        %v4567 = vpop.f32.mrf.mxu0
        %v4568 = vadd.f32 0.0, %v4567
        %v4569 = vpop.f32.mrf.mxu0
        %4570 = vmatprep.mubr.f32.mxu0 0.0
        %4571 = vmatmul.mubr.f32.gmra.mxu0 %v4329
        %v4572 = vpop.f32.mrf.mxu0
        %v4573 = vadd.f32 0.0, %v4572
        %v4574 = vpop.f32.mrf.mxu0
        %4575 = vmatprep.mubr.f32.mxu0 0.0
        %4576 = vmatmul.mubr.f32.gmra.mxu0 %v4330
        %v4577 = vpop.f32.mrf.mxu0
        %v4578 = vadd.f32 0.0, %v4577
        %v4579 = vpop.f32.mrf.mxu0
        %4580 = vmatprep.mubr.f32.mxu0 0.0
        %4581 = vmatmul.mubr.f32.gmra.mxu0 %v4331
        %v4582 = vpop.f32.mrf.mxu0
        %v4583 = vadd.f32 0.0, %v4582
        %v4584 = vpop.f32.mrf.mxu0
        %4585 = vmatprep.mubr.f32.mxu0 0.0
        %4586 = vmatmul.mubr.f32.gmra.mxu0 %v4332
        %v4587 = vpop.f32.mrf.mxu0
        %v4588 = vadd.f32 0.0, %v4587
        %v4589 = vpop.f32.mrf.mxu0
        %4590 = vmatprep.mubr.f32.mxu0 0.0
        %4591 = vmatmul.mubr.f32.gmra.mxu0 %v4333
        %v4592 = vpop.f32.mrf.mxu0
        %v4593 = vadd.f32 0.0, %v4592
        %v4594 = vpop.f32.mrf.mxu0
        %4595 = vdwg.mxu0
        %v4596 = vadd.f32 %v4262, %v4418
        %v4597 = vadd.f32 %v4263, %v4423
        %v4598 = vadd.f32 %v4264, %v4428
        %v4599 = vadd.f32 %v4265, %v4433
        %v4600 = vadd.f32 %v4266, %v4438
        %v4601 = vadd.f32 %v4267, %v4443
        %v4602 = vadd.f32 %v4268, %v4448
        %v4603 = vadd.f32 %v4269, %v4453
        %v4604 = vadd.f32 %v4270, %v4458
        %v4605 = vadd.f32 %v4271, %v4463
        %v4606 = vadd.f32 %v4272, %v4468
        %v4607 = vadd.f32 %v4273, %v4473
        %v4608 = vadd.f32 %v4274, %v4478
        %v4609 = vadd.f32 %v4275, %v4483
        %v4610 = vadd.f32 %v4276, %v4488
        %v4611 = vadd.f32 %v4277, %v4493
        %v4612 = vadd.f32 %v4278, %v4498
        %v4613 = vadd.f32 %v4279, %v4503
        %v4614 = vadd.f32 %v4280, %v4508
        %v4615 = vadd.f32 %v4281, %v4513
        %v4616 = vadd.f32 %v4282, %v4518
        %v4617 = vadd.f32 %v4283, %v4523
        %v4618 = vadd.f32 %v4284, %v4528
        %v4619 = vadd.f32 %v4285, %v4533
        %v4620 = vadd.f32 %v4286, %v4538
        %v4621 = vadd.f32 %v4287, %v4543
        %v4622 = vadd.f32 %v4288, %v4548
        %v4623 = vadd.f32 %v4289, %v4553
        %v4624 = vadd.f32 %v4290, %v4558
        %v4625 = vadd.f32 %v4291, %v4563
        %v4626 = vadd.f32 %v4292, %v4568
        %v4627 = vadd.f32 %v4293, %v4573
        %v4628 = vadd.f32 %v4294, %v4578
        %v4629 = vadd.f32 %v4295, %v4583
        %v4630 = vadd.f32 %v4296, %v4588
        %v4631 = vadd.f32 %v4297, %v4593
        %v4632 = vld [vmem:[#allocation2 + $0x24] sm:$0xff]
        %v4633 = vld [vmem:[#allocation2 + $0x2c] sm:$0xff]
        %v4634 = vld [vmem:[#allocation2 + $0x34] sm:$0xff]
        %v4635 = vld [vmem:[#allocation2 + $0x3c] sm:$0xff]
        %v4636 = vld [vmem:[#allocation2 + $0x44] sm:$0xff]
        %v4637 = vld [vmem:[#allocation2 + $0x4c] sm:$0xff]
        %v4638 = vld [vmem:[#allocation2 + $0x54] sm:$0xff]
        %v4639 = vld [vmem:[#allocation2 + $0x5c] sm:$0xff]
        %v4640 = vld [vmem:[#allocation2 + $0x64] sm:$0xff]
        %v4641 = vld [vmem:[#allocation2 + $0x6c] sm:$0xff]
        %v4642 = vld [vmem:[#allocation2 + $0x74] sm:$0xff]
        %v4643 = vld [vmem:[#allocation2 + $0x7c] sm:$0xff]
        %v4644 = vld [vmem:[#allocation2 + $0x84] sm:$0xff]
        %v4645 = vld [vmem:[#allocation2 + $0x8c] sm:$0xff]
        %v4646 = vld [vmem:[#allocation2 + $0x94] sm:$0xff]
        %v4647 = vld [vmem:[#allocation2 + $0x9c] sm:$0xff]
        %v4648 = vld [vmem:[#allocation2 + $0xa4] sm:$0xff]
        %v4649 = vld [vmem:[#allocation2 + $0xac] sm:$0xff]
        %v4650 = vld [vmem:[#allocation2 + $0xb4] sm:$0xff]
        %v4651 = vld [vmem:[#allocation2 + $0xbc] sm:$0xff]
        %v4652 = vld [vmem:[#allocation2 + $0xc4] sm:$0xff]
        %v4653 = vld [vmem:[#allocation2 + $0xcc] sm:$0xff]
        %v4654 = vld [vmem:[#allocation2 + $0xd4] sm:$0xff]
        %v4655 = vld [vmem:[#allocation2 + $0xdc] sm:$0xff]
        %v4656 = vld [vmem:[#allocation2 + $0xe4] sm:$0xff]
        %v4657 = vld [vmem:[#allocation2 + $0xec] sm:$0xff]
        %v4658 = vld [vmem:[#allocation2 + $0xf4] sm:$0xff]
        %v4659 = vld [vmem:[#allocation2 + $0xfc] sm:$0xff]
        %v4660 = vld [vmem:[#allocation2 + $0x104] sm:$0xff]
        %v4661 = vld [vmem:[#allocation2 + $0x10c] sm:$0xff]
        %v4662 = vld [vmem:[#allocation2 + $0x114] sm:$0xff]
        %v4663 = vld [vmem:[#allocation2 + $0x11c] sm:$0xff]
        %v4664 = vld [vmem:[#allocation2 + $0x124] sm:$0xff]
        %v4665 = vld [vmem:[#allocation2 + $0x12c] sm:$0xff]
        %v4666 = vld [vmem:[#allocation2 + $0x134] sm:$0xff]
        %v4667 = vld [vmem:[#allocation2 + $0x13c] sm:$0xff]
        %s4668 = scalar_lea.vmem [#allocation12], 768
        %v4669 = vld [vmem:[%s4668] sm:$0xff]
        %v4670 = vld [vmem:[%s4668 + $0x8] sm:$0xff]
        %v4671 = vld [vmem:[%s4668 + $0x10] sm:$0xff]
        %v4672 = vld [vmem:[%s4668 + $0x18] sm:$0xff]
        %v4673 = vld [vmem:[%s4668 + $0x20] sm:$0xff]
        %v4674 = vld [vmem:[%s4668 + $0x28] sm:$0xff]
        %v4675 = vld [vmem:[%s4668 + $0x30] sm:$0xff]
        %v4676 = vld [vmem:[%s4668 + $0x38] sm:$0xff]
        %v4677 = vld [vmem:[%s4668 + $0x40] sm:$0xff]
        %v4678 = vld [vmem:[%s4668 + $0x48] sm:$0xff]
        %v4679 = vld [vmem:[%s4668 + $0x50] sm:$0xff]
        %v4680 = vld [vmem:[%s4668 + $0x58] sm:$0xff]
        %v4681 = vld [vmem:[%s4668 + $0x60] sm:$0xff]
        %v4682 = vld [vmem:[%s4668 + $0x68] sm:$0xff]
        %v4683 = vld [vmem:[%s4668 + $0x70] sm:$0xff]
        %v4684 = vld [vmem:[%s4668 + $0x78] sm:$0xff]
        %4685 = vmatprep.subr.mxu0 0.0
        %4686 = vmatpush1.msra.mxu0 %v4684
        %4687 = vmatprep.subr.mxu0 0.0
        %4688 = vmatpush1.msra.mxu0 %v4683
        %4689 = vmatprep.subr.mxu0 0.0
        %4690 = vmatpush1.msra.mxu0 %v4682
        %4691 = vmatprep.subr.mxu0 0.0
        %4692 = vmatpush1.msra.mxu0 %v4681
        %4693 = vmatprep.subr.mxu0 0.0
        %4694 = vmatpush1.msra.mxu0 %v4680
        %4695 = vmatprep.subr.mxu0 0.0
        %4696 = vmatpush1.msra.mxu0 %v4679
        %4697 = vmatprep.subr.mxu0 0.0
        %4698 = vmatpush1.msra.mxu0 %v4678
        %4699 = vmatprep.subr.mxu0 0.0
        %4700 = vmatpush1.msra.mxu0 %v4677
        %4701 = vmatprep.subr.mxu0 0.0
        %4702 = vmatpush1.msra.mxu0 %v4676
        %4703 = vmatprep.subr.mxu0 0.0
        %4704 = vmatpush1.msra.mxu0 %v4675
        %4705 = vmatprep.subr.mxu0 0.0
        %4706 = vmatpush1.msra.mxu0 %v4674
        %4707 = vmatprep.subr.mxu0 0.0
        %4708 = vmatpush1.msra.mxu0 %v4673
        %4709 = vmatprep.subr.mxu0 0.0
        %4710 = vmatpush1.msra.mxu0 %v4672
        %4711 = vmatprep.subr.mxu0 0.0
        %4712 = vmatpush1.msra.mxu0 %v4671
        %4713 = vmatprep.subr.mxu0 0.0
        %4714 = vmatpush1.msra.mxu0 %v4670
        %4715 = vmatprep.subr.mxu0 0.0
        %4716 = vmatpush1.msra.mxu0 %v4669
        %4717 = vmatprep.subr.mxu0 0.0
        %4718 = vmatpush2.msra.mxu0 0.0
        %4719 = vmatprep.subr.mxu0 0.0
        %4720 = vmatpush2.msra.mxu0 0.0
        %4721 = vmatprep.subr.mxu0 0.0
        %4722 = vmatpush2.msra.mxu0 0.0
        %4723 = vmatprep.subr.mxu0 0.0
        %4724 = vmatpush2.msra.mxu0 0.0
        %4725 = vmatprep.subr.mxu0 0.0
        %4726 = vmatpush2.msra.mxu0 0.0
        %4727 = vmatprep.subr.mxu0 0.0
        %4728 = vmatpush2.msra.mxu0 0.0
        %4729 = vmatprep.subr.mxu0 0.0
        %4730 = vmatpush2.msra.mxu0 0.0
        %4731 = vmatprep.subr.mxu0 0.0
        %4732 = vmatpush2.msra.mxu0 0.0
        %4733 = vmatprep.subr.mxu0 0.0
        %4734 = vmatpush2.msra.mxu0 0.0
        %4735 = vmatprep.subr.mxu0 0.0
        %4736 = vmatpush2.msra.mxu0 0.0
        %4737 = vmatprep.subr.mxu0 0.0
        %4738 = vmatpush2.msra.mxu0 0.0
        %4739 = vmatprep.subr.mxu0 0.0
        %4740 = vmatpush2.msra.mxu0 0.0
        %4741 = vmatprep.subr.mxu0 0.0
        %4742 = vmatpush2.msra.mxu0 0.0
        %4743 = vmatprep.subr.mxu0 0.0
        %4744 = vmatpush2.msra.mxu0 0.0
        %4745 = vmatprep.subr.mxu0 0.0
        %4746 = vmatpush2.msra.mxu0 0.0
        %4747 = vmatprep.subr.mxu0 0.0
        %4748 = vmatpush2.msra.mxu0 0.0
        %4749 = vmatprep.mubr.f32.mxu0 0.0
        %4750 = vmatmul.mubr.f32.gmra.mxu0 %v4632
        %v4751 = vpop.f32.mrf.mxu0
        %v4752 = vadd.f32 0.0, %v4751
        %v4753 = vpop.f32.mrf.mxu0
        %4754 = vmatprep.mubr.f32.mxu0 0.0
        %4755 = vmatmul.mubr.f32.gmra.mxu0 %v4633
        %v4756 = vpop.f32.mrf.mxu0
        %v4757 = vadd.f32 0.0, %v4756
        %v4758 = vpop.f32.mrf.mxu0
        %4759 = vmatprep.mubr.f32.mxu0 0.0
        %4760 = vmatmul.mubr.f32.gmra.mxu0 %v4634
        %v4761 = vpop.f32.mrf.mxu0
        %v4762 = vadd.f32 0.0, %v4761
        %v4763 = vpop.f32.mrf.mxu0
        %4764 = vmatprep.mubr.f32.mxu0 0.0
        %4765 = vmatmul.mubr.f32.gmra.mxu0 %v4635
        %v4766 = vpop.f32.mrf.mxu0
        %v4767 = vadd.f32 0.0, %v4766
        %v4768 = vpop.f32.mrf.mxu0
        %4769 = vmatprep.mubr.f32.mxu0 0.0
        %4770 = vmatmul.mubr.f32.gmra.mxu0 %v4636
        %v4771 = vpop.f32.mrf.mxu0
        %v4772 = vadd.f32 0.0, %v4771
        %v4773 = vpop.f32.mrf.mxu0
        %4774 = vmatprep.mubr.f32.mxu0 0.0
        %4775 = vmatmul.mubr.f32.gmra.mxu0 %v4637
        %v4776 = vpop.f32.mrf.mxu0
        %v4777 = vadd.f32 0.0, %v4776
        %v4778 = vpop.f32.mrf.mxu0
        %4779 = vmatprep.mubr.f32.mxu0 0.0
        %4780 = vmatmul.mubr.f32.gmra.mxu0 %v4638
        %v4781 = vpop.f32.mrf.mxu0
        %v4782 = vadd.f32 0.0, %v4781
        %v4783 = vpop.f32.mrf.mxu0
        %4784 = vmatprep.mubr.f32.mxu0 0.0
        %4785 = vmatmul.mubr.f32.gmra.mxu0 %v4639
        %v4786 = vpop.f32.mrf.mxu0
        %v4787 = vadd.f32 0.0, %v4786
        %v4788 = vpop.f32.mrf.mxu0
        %4789 = vmatprep.mubr.f32.mxu0 0.0
        %4790 = vmatmul.mubr.f32.gmra.mxu0 %v4640
        %v4791 = vpop.f32.mrf.mxu0
        %v4792 = vadd.f32 0.0, %v4791
        %v4793 = vpop.f32.mrf.mxu0
        %4794 = vmatprep.mubr.f32.mxu0 0.0
        %4795 = vmatmul.mubr.f32.gmra.mxu0 %v4641
        %v4796 = vpop.f32.mrf.mxu0
        %v4797 = vadd.f32 0.0, %v4796
        %v4798 = vpop.f32.mrf.mxu0
        %4799 = vmatprep.mubr.f32.mxu0 0.0
        %4800 = vmatmul.mubr.f32.gmra.mxu0 %v4642
        %v4801 = vpop.f32.mrf.mxu0
        %v4802 = vadd.f32 0.0, %v4801
        %v4803 = vpop.f32.mrf.mxu0
        %4804 = vmatprep.mubr.f32.mxu0 0.0
        %4805 = vmatmul.mubr.f32.gmra.mxu0 %v4643
        %v4806 = vpop.f32.mrf.mxu0
        %v4807 = vadd.f32 0.0, %v4806
        %v4808 = vpop.f32.mrf.mxu0
        %4809 = vmatprep.mubr.f32.mxu0 0.0
        %4810 = vmatmul.mubr.f32.gmra.mxu0 %v4644
        %v4811 = vpop.f32.mrf.mxu0
        %v4812 = vadd.f32 0.0, %v4811
        %v4813 = vpop.f32.mrf.mxu0
        %4814 = vmatprep.mubr.f32.mxu0 0.0
        %4815 = vmatmul.mubr.f32.gmra.mxu0 %v4645
        %v4816 = vpop.f32.mrf.mxu0
        %v4817 = vadd.f32 0.0, %v4816
        %v4818 = vpop.f32.mrf.mxu0
        %4819 = vmatprep.mubr.f32.mxu0 0.0
        %4820 = vmatmul.mubr.f32.gmra.mxu0 %v4646
        %v4821 = vpop.f32.mrf.mxu0
        %v4822 = vadd.f32 0.0, %v4821
        %v4823 = vpop.f32.mrf.mxu0
        %4824 = vmatprep.mubr.f32.mxu0 0.0
        %4825 = vmatmul.mubr.f32.gmra.mxu0 %v4647
        %v4826 = vpop.f32.mrf.mxu0
        %v4827 = vadd.f32 0.0, %v4826
        %v4828 = vpop.f32.mrf.mxu0
        %4829 = vmatprep.mubr.f32.mxu0 0.0
        %4830 = vmatmul.mubr.f32.gmra.mxu0 %v4648
        %v4831 = vpop.f32.mrf.mxu0
        %v4832 = vadd.f32 0.0, %v4831
        %v4833 = vpop.f32.mrf.mxu0
        %4834 = vmatprep.mubr.f32.mxu0 0.0
        %4835 = vmatmul.mubr.f32.gmra.mxu0 %v4649
        %v4836 = vpop.f32.mrf.mxu0
        %v4837 = vadd.f32 0.0, %v4836
        %v4838 = vpop.f32.mrf.mxu0
        %4839 = vmatprep.mubr.f32.mxu0 0.0
        %4840 = vmatmul.mubr.f32.gmra.mxu0 %v4650
        %v4841 = vpop.f32.mrf.mxu0
        %v4842 = vadd.f32 0.0, %v4841
        %v4843 = vpop.f32.mrf.mxu0
        %4844 = vmatprep.mubr.f32.mxu0 0.0
        %4845 = vmatmul.mubr.f32.gmra.mxu0 %v4651
        %v4846 = vpop.f32.mrf.mxu0
        %v4847 = vadd.f32 0.0, %v4846
        %v4848 = vpop.f32.mrf.mxu0
        %4849 = vmatprep.mubr.f32.mxu0 0.0
        %4850 = vmatmul.mubr.f32.gmra.mxu0 %v4652
        %v4851 = vpop.f32.mrf.mxu0
        %v4852 = vadd.f32 0.0, %v4851
        %v4853 = vpop.f32.mrf.mxu0
        %4854 = vmatprep.mubr.f32.mxu0 0.0
        %4855 = vmatmul.mubr.f32.gmra.mxu0 %v4653
        %v4856 = vpop.f32.mrf.mxu0
        %v4857 = vadd.f32 0.0, %v4856
        %v4858 = vpop.f32.mrf.mxu0
        %4859 = vmatprep.mubr.f32.mxu0 0.0
        %4860 = vmatmul.mubr.f32.gmra.mxu0 %v4654
        %v4861 = vpop.f32.mrf.mxu0
        %v4862 = vadd.f32 0.0, %v4861
        %v4863 = vpop.f32.mrf.mxu0
        %4864 = vmatprep.mubr.f32.mxu0 0.0
        %4865 = vmatmul.mubr.f32.gmra.mxu0 %v4655
        %v4866 = vpop.f32.mrf.mxu0
        %v4867 = vadd.f32 0.0, %v4866
        %v4868 = vpop.f32.mrf.mxu0
        %4869 = vmatprep.mubr.f32.mxu0 0.0
        %4870 = vmatmul.mubr.f32.gmra.mxu0 %v4656
        %v4871 = vpop.f32.mrf.mxu0
        %v4872 = vadd.f32 0.0, %v4871
        %v4873 = vpop.f32.mrf.mxu0
        %4874 = vmatprep.mubr.f32.mxu0 0.0
        %4875 = vmatmul.mubr.f32.gmra.mxu0 %v4657
        %v4876 = vpop.f32.mrf.mxu0
        %v4877 = vadd.f32 0.0, %v4876
        %v4878 = vpop.f32.mrf.mxu0
        %4879 = vmatprep.mubr.f32.mxu0 0.0
        %4880 = vmatmul.mubr.f32.gmra.mxu0 %v4658
        %v4881 = vpop.f32.mrf.mxu0
        %v4882 = vadd.f32 0.0, %v4881
        %v4883 = vpop.f32.mrf.mxu0
        %4884 = vmatprep.mubr.f32.mxu0 0.0
        %4885 = vmatmul.mubr.f32.gmra.mxu0 %v4659
        %v4886 = vpop.f32.mrf.mxu0
        %v4887 = vadd.f32 0.0, %v4886
        %v4888 = vpop.f32.mrf.mxu0
        %4889 = vmatprep.mubr.f32.mxu0 0.0
        %4890 = vmatmul.mubr.f32.gmra.mxu0 %v4660
        %v4891 = vpop.f32.mrf.mxu0
        %v4892 = vadd.f32 0.0, %v4891
        %v4893 = vpop.f32.mrf.mxu0
        %4894 = vmatprep.mubr.f32.mxu0 0.0
        %4895 = vmatmul.mubr.f32.gmra.mxu0 %v4661
        %v4896 = vpop.f32.mrf.mxu0
        %v4897 = vadd.f32 0.0, %v4896
        %v4898 = vpop.f32.mrf.mxu0
        %4899 = vmatprep.mubr.f32.mxu0 0.0
        %4900 = vmatmul.mubr.f32.gmra.mxu0 %v4662
        %v4901 = vpop.f32.mrf.mxu0
        %v4902 = vadd.f32 0.0, %v4901
        %v4903 = vpop.f32.mrf.mxu0
        %4904 = vmatprep.mubr.f32.mxu0 0.0
        %4905 = vmatmul.mubr.f32.gmra.mxu0 %v4663
        %v4906 = vpop.f32.mrf.mxu0
        %v4907 = vadd.f32 0.0, %v4906
        %v4908 = vpop.f32.mrf.mxu0
        %4909 = vmatprep.mubr.f32.mxu0 0.0
        %4910 = vmatmul.mubr.f32.gmra.mxu0 %v4664
        %v4911 = vpop.f32.mrf.mxu0
        %v4912 = vadd.f32 0.0, %v4911
        %v4913 = vpop.f32.mrf.mxu0
        %4914 = vmatprep.mubr.f32.mxu0 0.0
        %4915 = vmatmul.mubr.f32.gmra.mxu0 %v4665
        %v4916 = vpop.f32.mrf.mxu0
        %v4917 = vadd.f32 0.0, %v4916
        %v4918 = vpop.f32.mrf.mxu0
        %4919 = vmatprep.mubr.f32.mxu0 0.0
        %4920 = vmatmul.mubr.f32.gmra.mxu0 %v4666
        %v4921 = vpop.f32.mrf.mxu0
        %v4922 = vadd.f32 0.0, %v4921
        %v4923 = vpop.f32.mrf.mxu0
        %4924 = vmatprep.mubr.f32.mxu0 0.0
        %4925 = vmatmul.mubr.f32.gmra.mxu0 %v4667
        %v4926 = vpop.f32.mrf.mxu0
        %v4927 = vadd.f32 0.0, %v4926
        %v4928 = vpop.f32.mrf.mxu0
        %4929 = vdwg.mxu0
        %v4930 = vadd.f32 %v4596, %v4752
        %v4931 = vadd.f32 %v4597, %v4757
        %v4932 = vadd.f32 %v4598, %v4762
        %v4933 = vadd.f32 %v4599, %v4767
        %v4934 = vadd.f32 %v4600, %v4772
        %v4935 = vadd.f32 %v4601, %v4777
        %v4936 = vadd.f32 %v4602, %v4782
        %v4937 = vadd.f32 %v4603, %v4787
        %v4938 = vadd.f32 %v4604, %v4792
        %v4939 = vadd.f32 %v4605, %v4797
        %v4940 = vadd.f32 %v4606, %v4802
        %v4941 = vadd.f32 %v4607, %v4807
        %v4942 = vadd.f32 %v4608, %v4812
        %v4943 = vadd.f32 %v4609, %v4817
        %v4944 = vadd.f32 %v4610, %v4822
        %v4945 = vadd.f32 %v4611, %v4827
        %v4946 = vadd.f32 %v4612, %v4832
        %v4947 = vadd.f32 %v4613, %v4837
        %v4948 = vadd.f32 %v4614, %v4842
        %v4949 = vadd.f32 %v4615, %v4847
        %v4950 = vadd.f32 %v4616, %v4852
        %v4951 = vadd.f32 %v4617, %v4857
        %v4952 = vadd.f32 %v4618, %v4862
        %v4953 = vadd.f32 %v4619, %v4867
        %v4954 = vadd.f32 %v4620, %v4872
        %v4955 = vadd.f32 %v4621, %v4877
        %v4956 = vadd.f32 %v4622, %v4882
        %v4957 = vadd.f32 %v4623, %v4887
        %v4958 = vadd.f32 %v4624, %v4892
        %v4959 = vadd.f32 %v4625, %v4897
        %v4960 = vadd.f32 %v4626, %v4902
        %v4961 = vadd.f32 %v4627, %v4907
        %v4962 = vadd.f32 %v4628, %v4912
        %v4963 = vadd.f32 %v4629, %v4917
        %v4964 = vadd.f32 %v4630, %v4922
        %v4965 = vadd.f32 %v4631, %v4927
        %v4966 = vld [vmem:[#allocation2 + $0x25] sm:$0xff]
        %v4967 = vld [vmem:[#allocation2 + $0x2d] sm:$0xff]
        %v4968 = vld [vmem:[#allocation2 + $0x35] sm:$0xff]
        %v4969 = vld [vmem:[#allocation2 + $0x3d] sm:$0xff]
        %v4970 = vld [vmem:[#allocation2 + $0x45] sm:$0xff]
        %v4971 = vld [vmem:[#allocation2 + $0x4d] sm:$0xff]
        %v4972 = vld [vmem:[#allocation2 + $0x55] sm:$0xff]
        %v4973 = vld [vmem:[#allocation2 + $0x5d] sm:$0xff]
        %v4974 = vld [vmem:[#allocation2 + $0x65] sm:$0xff]
        %v4975 = vld [vmem:[#allocation2 + $0x6d] sm:$0xff]
        %v4976 = vld [vmem:[#allocation2 + $0x75] sm:$0xff]
        %v4977 = vld [vmem:[#allocation2 + $0x7d] sm:$0xff]
        %v4978 = vld [vmem:[#allocation2 + $0x85] sm:$0xff]
        %v4979 = vld [vmem:[#allocation2 + $0x8d] sm:$0xff]
        %v4980 = vld [vmem:[#allocation2 + $0x95] sm:$0xff]
        %v4981 = vld [vmem:[#allocation2 + $0x9d] sm:$0xff]
        %v4982 = vld [vmem:[#allocation2 + $0xa5] sm:$0xff]
        %v4983 = vld [vmem:[#allocation2 + $0xad] sm:$0xff]
        %v4984 = vld [vmem:[#allocation2 + $0xb5] sm:$0xff]
        %v4985 = vld [vmem:[#allocation2 + $0xbd] sm:$0xff]
        %v4986 = vld [vmem:[#allocation2 + $0xc5] sm:$0xff]
        %v4987 = vld [vmem:[#allocation2 + $0xcd] sm:$0xff]
        %v4988 = vld [vmem:[#allocation2 + $0xd5] sm:$0xff]
        %v4989 = vld [vmem:[#allocation2 + $0xdd] sm:$0xff]
        %v4990 = vld [vmem:[#allocation2 + $0xe5] sm:$0xff]
        %v4991 = vld [vmem:[#allocation2 + $0xed] sm:$0xff]
        %v4992 = vld [vmem:[#allocation2 + $0xf5] sm:$0xff]
        %v4993 = vld [vmem:[#allocation2 + $0xfd] sm:$0xff]
        %v4994 = vld [vmem:[#allocation2 + $0x105] sm:$0xff]
        %v4995 = vld [vmem:[#allocation2 + $0x10d] sm:$0xff]
        %v4996 = vld [vmem:[#allocation2 + $0x115] sm:$0xff]
        %v4997 = vld [vmem:[#allocation2 + $0x11d] sm:$0xff]
        %v4998 = vld [vmem:[#allocation2 + $0x125] sm:$0xff]
        %v4999 = vld [vmem:[#allocation2 + $0x12d] sm:$0xff]
        %v5000 = vld [vmem:[#allocation2 + $0x135] sm:$0xff]
        %v5001 = vld [vmem:[#allocation2 + $0x13d] sm:$0xff]
        %s5002 = scalar_lea.vmem [#allocation12], 896
        %v5003 = vld [vmem:[%s5002] sm:$0xff]
        %v5004 = vld [vmem:[%s5002 + $0x8] sm:$0xff]
        %v5005 = vld [vmem:[%s5002 + $0x10] sm:$0xff]
        %v5006 = vld [vmem:[%s5002 + $0x18] sm:$0xff]
        %v5007 = vld [vmem:[%s5002 + $0x20] sm:$0xff]
        %v5008 = vld [vmem:[%s5002 + $0x28] sm:$0xff]
        %v5009 = vld [vmem:[%s5002 + $0x30] sm:$0xff]
        %v5010 = vld [vmem:[%s5002 + $0x38] sm:$0xff]
        %v5011 = vld [vmem:[%s5002 + $0x40] sm:$0xff]
        %v5012 = vld [vmem:[%s5002 + $0x48] sm:$0xff]
        %v5013 = vld [vmem:[%s5002 + $0x50] sm:$0xff]
        %v5014 = vld [vmem:[%s5002 + $0x58] sm:$0xff]
        %v5015 = vld [vmem:[%s5002 + $0x60] sm:$0xff]
        %v5016 = vld [vmem:[%s5002 + $0x68] sm:$0xff]
        %v5017 = vld [vmem:[%s5002 + $0x70] sm:$0xff]
        %v5018 = vld [vmem:[%s5002 + $0x78] sm:$0xff]
        %5019 = vmatprep.subr.mxu0 0.0
        %5020 = vmatpush1.msra.mxu0 %v5018
        %5021 = vmatprep.subr.mxu0 0.0
        %5022 = vmatpush1.msra.mxu0 %v5017
        %5023 = vmatprep.subr.mxu0 0.0
        %5024 = vmatpush1.msra.mxu0 %v5016
        %5025 = vmatprep.subr.mxu0 0.0
        %5026 = vmatpush1.msra.mxu0 %v5015
        %5027 = vmatprep.subr.mxu0 0.0
        %5028 = vmatpush1.msra.mxu0 %v5014
        %5029 = vmatprep.subr.mxu0 0.0
        %5030 = vmatpush1.msra.mxu0 %v5013
        %5031 = vmatprep.subr.mxu0 0.0
        %5032 = vmatpush1.msra.mxu0 %v5012
        %5033 = vmatprep.subr.mxu0 0.0
        %5034 = vmatpush1.msra.mxu0 %v5011
        %5035 = vmatprep.subr.mxu0 0.0
        %5036 = vmatpush1.msra.mxu0 %v5010
        %5037 = vmatprep.subr.mxu0 0.0
        %5038 = vmatpush1.msra.mxu0 %v5009
        %5039 = vmatprep.subr.mxu0 0.0
        %5040 = vmatpush1.msra.mxu0 %v5008
        %5041 = vmatprep.subr.mxu0 0.0
        %5042 = vmatpush1.msra.mxu0 %v5007
        %5043 = vmatprep.subr.mxu0 0.0
        %5044 = vmatpush1.msra.mxu0 %v5006
        %5045 = vmatprep.subr.mxu0 0.0
        %5046 = vmatpush1.msra.mxu0 %v5005
        %5047 = vmatprep.subr.mxu0 0.0
        %5048 = vmatpush1.msra.mxu0 %v5004
        %5049 = vmatprep.subr.mxu0 0.0
        %5050 = vmatpush1.msra.mxu0 %v5003
        %5051 = vmatprep.subr.mxu0 0.0
        %5052 = vmatpush2.msra.mxu0 0.0
        %5053 = vmatprep.subr.mxu0 0.0
        %5054 = vmatpush2.msra.mxu0 0.0
        %5055 = vmatprep.subr.mxu0 0.0
        %5056 = vmatpush2.msra.mxu0 0.0
        %5057 = vmatprep.subr.mxu0 0.0
        %5058 = vmatpush2.msra.mxu0 0.0
        %5059 = vmatprep.subr.mxu0 0.0
        %5060 = vmatpush2.msra.mxu0 0.0
        %5061 = vmatprep.subr.mxu0 0.0
        %5062 = vmatpush2.msra.mxu0 0.0
        %5063 = vmatprep.subr.mxu0 0.0
        %5064 = vmatpush2.msra.mxu0 0.0
        %5065 = vmatprep.subr.mxu0 0.0
        %5066 = vmatpush2.msra.mxu0 0.0
        %5067 = vmatprep.subr.mxu0 0.0
        %5068 = vmatpush2.msra.mxu0 0.0
        %5069 = vmatprep.subr.mxu0 0.0
        %5070 = vmatpush2.msra.mxu0 0.0
        %5071 = vmatprep.subr.mxu0 0.0
        %5072 = vmatpush2.msra.mxu0 0.0
        %5073 = vmatprep.subr.mxu0 0.0
        %5074 = vmatpush2.msra.mxu0 0.0
        %5075 = vmatprep.subr.mxu0 0.0
        %5076 = vmatpush2.msra.mxu0 0.0
        %5077 = vmatprep.subr.mxu0 0.0
        %5078 = vmatpush2.msra.mxu0 0.0
        %5079 = vmatprep.subr.mxu0 0.0
        %5080 = vmatpush2.msra.mxu0 0.0
        %5081 = vmatprep.subr.mxu0 0.0
        %5082 = vmatpush2.msra.mxu0 0.0
        %5083 = vmatprep.mubr.f32.mxu0 0.0
        %5084 = vmatmul.mubr.f32.gmra.mxu0 %v4966
        %v5085 = vpop.f32.mrf.mxu0
        %v5086 = vadd.f32 0.0, %v5085
        %v5087 = vpop.f32.mrf.mxu0
        %5088 = vmatprep.mubr.f32.mxu0 0.0
        %5089 = vmatmul.mubr.f32.gmra.mxu0 %v4967
        %v5090 = vpop.f32.mrf.mxu0
        %v5091 = vadd.f32 0.0, %v5090
        %v5092 = vpop.f32.mrf.mxu0
        %5093 = vmatprep.mubr.f32.mxu0 0.0
        %5094 = vmatmul.mubr.f32.gmra.mxu0 %v4968
        %v5095 = vpop.f32.mrf.mxu0
        %v5096 = vadd.f32 0.0, %v5095
        %v5097 = vpop.f32.mrf.mxu0
        %5098 = vmatprep.mubr.f32.mxu0 0.0
        %5099 = vmatmul.mubr.f32.gmra.mxu0 %v4969
        %v5100 = vpop.f32.mrf.mxu0
        %v5101 = vadd.f32 0.0, %v5100
        %v5102 = vpop.f32.mrf.mxu0
        %5103 = vmatprep.mubr.f32.mxu0 0.0
        %5104 = vmatmul.mubr.f32.gmra.mxu0 %v4970
        %v5105 = vpop.f32.mrf.mxu0
        %v5106 = vadd.f32 0.0, %v5105
        %v5107 = vpop.f32.mrf.mxu0
        %5108 = vmatprep.mubr.f32.mxu0 0.0
        %5109 = vmatmul.mubr.f32.gmra.mxu0 %v4971
        %v5110 = vpop.f32.mrf.mxu0
        %v5111 = vadd.f32 0.0, %v5110
        %v5112 = vpop.f32.mrf.mxu0
        %5113 = vmatprep.mubr.f32.mxu0 0.0
        %5114 = vmatmul.mubr.f32.gmra.mxu0 %v4972
        %v5115 = vpop.f32.mrf.mxu0
        %v5116 = vadd.f32 0.0, %v5115
        %v5117 = vpop.f32.mrf.mxu0
        %5118 = vmatprep.mubr.f32.mxu0 0.0
        %5119 = vmatmul.mubr.f32.gmra.mxu0 %v4973
        %v5120 = vpop.f32.mrf.mxu0
        %v5121 = vadd.f32 0.0, %v5120
        %v5122 = vpop.f32.mrf.mxu0
        %5123 = vmatprep.mubr.f32.mxu0 0.0
        %5124 = vmatmul.mubr.f32.gmra.mxu0 %v4974
        %v5125 = vpop.f32.mrf.mxu0
        %v5126 = vadd.f32 0.0, %v5125
        %v5127 = vpop.f32.mrf.mxu0
        %5128 = vmatprep.mubr.f32.mxu0 0.0
        %5129 = vmatmul.mubr.f32.gmra.mxu0 %v4975
        %v5130 = vpop.f32.mrf.mxu0
        %v5131 = vadd.f32 0.0, %v5130
        %v5132 = vpop.f32.mrf.mxu0
        %5133 = vmatprep.mubr.f32.mxu0 0.0
        %5134 = vmatmul.mubr.f32.gmra.mxu0 %v4976
        %v5135 = vpop.f32.mrf.mxu0
        %v5136 = vadd.f32 0.0, %v5135
        %v5137 = vpop.f32.mrf.mxu0
        %5138 = vmatprep.mubr.f32.mxu0 0.0
        %5139 = vmatmul.mubr.f32.gmra.mxu0 %v4977
        %v5140 = vpop.f32.mrf.mxu0
        %v5141 = vadd.f32 0.0, %v5140
        %v5142 = vpop.f32.mrf.mxu0
        %5143 = vmatprep.mubr.f32.mxu0 0.0
        %5144 = vmatmul.mubr.f32.gmra.mxu0 %v4978
        %v5145 = vpop.f32.mrf.mxu0
        %v5146 = vadd.f32 0.0, %v5145
        %v5147 = vpop.f32.mrf.mxu0
        %5148 = vmatprep.mubr.f32.mxu0 0.0
        %5149 = vmatmul.mubr.f32.gmra.mxu0 %v4979
        %v5150 = vpop.f32.mrf.mxu0
        %v5151 = vadd.f32 0.0, %v5150
        %v5152 = vpop.f32.mrf.mxu0
        %5153 = vmatprep.mubr.f32.mxu0 0.0
        %5154 = vmatmul.mubr.f32.gmra.mxu0 %v4980
        %v5155 = vpop.f32.mrf.mxu0
        %v5156 = vadd.f32 0.0, %v5155
        %v5157 = vpop.f32.mrf.mxu0
        %5158 = vmatprep.mubr.f32.mxu0 0.0
        %5159 = vmatmul.mubr.f32.gmra.mxu0 %v4981
        %v5160 = vpop.f32.mrf.mxu0
        %v5161 = vadd.f32 0.0, %v5160
        %v5162 = vpop.f32.mrf.mxu0
        %5163 = vmatprep.mubr.f32.mxu0 0.0
        %5164 = vmatmul.mubr.f32.gmra.mxu0 %v4982
        %v5165 = vpop.f32.mrf.mxu0
        %v5166 = vadd.f32 0.0, %v5165
        %v5167 = vpop.f32.mrf.mxu0
        %5168 = vmatprep.mubr.f32.mxu0 0.0
        %5169 = vmatmul.mubr.f32.gmra.mxu0 %v4983
        %v5170 = vpop.f32.mrf.mxu0
        %v5171 = vadd.f32 0.0, %v5170
        %v5172 = vpop.f32.mrf.mxu0
        %5173 = vmatprep.mubr.f32.mxu0 0.0
        %5174 = vmatmul.mubr.f32.gmra.mxu0 %v4984
        %v5175 = vpop.f32.mrf.mxu0
        %v5176 = vadd.f32 0.0, %v5175
        %v5177 = vpop.f32.mrf.mxu0
        %5178 = vmatprep.mubr.f32.mxu0 0.0
        %5179 = vmatmul.mubr.f32.gmra.mxu0 %v4985
        %v5180 = vpop.f32.mrf.mxu0
        %v5181 = vadd.f32 0.0, %v5180
        %v5182 = vpop.f32.mrf.mxu0
        %5183 = vmatprep.mubr.f32.mxu0 0.0
        %5184 = vmatmul.mubr.f32.gmra.mxu0 %v4986
        %v5185 = vpop.f32.mrf.mxu0
        %v5186 = vadd.f32 0.0, %v5185
        %v5187 = vpop.f32.mrf.mxu0
        %5188 = vmatprep.mubr.f32.mxu0 0.0
        %5189 = vmatmul.mubr.f32.gmra.mxu0 %v4987
        %v5190 = vpop.f32.mrf.mxu0
        %v5191 = vadd.f32 0.0, %v5190
        %v5192 = vpop.f32.mrf.mxu0
        %5193 = vmatprep.mubr.f32.mxu0 0.0
        %5194 = vmatmul.mubr.f32.gmra.mxu0 %v4988
        %v5195 = vpop.f32.mrf.mxu0
        %v5196 = vadd.f32 0.0, %v5195
        %v5197 = vpop.f32.mrf.mxu0
        %5198 = vmatprep.mubr.f32.mxu0 0.0
        %5199 = vmatmul.mubr.f32.gmra.mxu0 %v4989
        %v5200 = vpop.f32.mrf.mxu0
        %v5201 = vadd.f32 0.0, %v5200
        %v5202 = vpop.f32.mrf.mxu0
        %5203 = vmatprep.mubr.f32.mxu0 0.0
        %5204 = vmatmul.mubr.f32.gmra.mxu0 %v4990
        %v5205 = vpop.f32.mrf.mxu0
        %v5206 = vadd.f32 0.0, %v5205
        %v5207 = vpop.f32.mrf.mxu0
        %5208 = vmatprep.mubr.f32.mxu0 0.0
        %5209 = vmatmul.mubr.f32.gmra.mxu0 %v4991
        %v5210 = vpop.f32.mrf.mxu0
        %v5211 = vadd.f32 0.0, %v5210
        %v5212 = vpop.f32.mrf.mxu0
        %5213 = vmatprep.mubr.f32.mxu0 0.0
        %5214 = vmatmul.mubr.f32.gmra.mxu0 %v4992
        %v5215 = vpop.f32.mrf.mxu0
        %v5216 = vadd.f32 0.0, %v5215
        %v5217 = vpop.f32.mrf.mxu0
        %5218 = vmatprep.mubr.f32.mxu0 0.0
        %5219 = vmatmul.mubr.f32.gmra.mxu0 %v4993
        %v5220 = vpop.f32.mrf.mxu0
        %v5221 = vadd.f32 0.0, %v5220
        %v5222 = vpop.f32.mrf.mxu0
        %5223 = vmatprep.mubr.f32.mxu0 0.0
        %5224 = vmatmul.mubr.f32.gmra.mxu0 %v4994
        %v5225 = vpop.f32.mrf.mxu0
        %v5226 = vadd.f32 0.0, %v5225
        %v5227 = vpop.f32.mrf.mxu0
        %5228 = vmatprep.mubr.f32.mxu0 0.0
        %5229 = vmatmul.mubr.f32.gmra.mxu0 %v4995
        %v5230 = vpop.f32.mrf.mxu0
        %v5231 = vadd.f32 0.0, %v5230
        %v5232 = vpop.f32.mrf.mxu0
        %5233 = vmatprep.mubr.f32.mxu0 0.0
        %5234 = vmatmul.mubr.f32.gmra.mxu0 %v4996
        %v5235 = vpop.f32.mrf.mxu0
        %v5236 = vadd.f32 0.0, %v5235
        %v5237 = vpop.f32.mrf.mxu0
        %5238 = vmatprep.mubr.f32.mxu0 0.0
        %5239 = vmatmul.mubr.f32.gmra.mxu0 %v4997
        %v5240 = vpop.f32.mrf.mxu0
        %v5241 = vadd.f32 0.0, %v5240
        %v5242 = vpop.f32.mrf.mxu0
        %5243 = vmatprep.mubr.f32.mxu0 0.0
        %5244 = vmatmul.mubr.f32.gmra.mxu0 %v4998
        %v5245 = vpop.f32.mrf.mxu0
        %v5246 = vadd.f32 0.0, %v5245
        %v5247 = vpop.f32.mrf.mxu0
        %5248 = vmatprep.mubr.f32.mxu0 0.0
        %5249 = vmatmul.mubr.f32.gmra.mxu0 %v4999
        %v5250 = vpop.f32.mrf.mxu0
        %v5251 = vadd.f32 0.0, %v5250
        %v5252 = vpop.f32.mrf.mxu0
        %5253 = vmatprep.mubr.f32.mxu0 0.0
        %5254 = vmatmul.mubr.f32.gmra.mxu0 %v5000
        %v5255 = vpop.f32.mrf.mxu0
        %v5256 = vadd.f32 0.0, %v5255
        %v5257 = vpop.f32.mrf.mxu0
        %5258 = vmatprep.mubr.f32.mxu0 0.0
        %5259 = vmatmul.mubr.f32.gmra.mxu0 %v5001
        %v5260 = vpop.f32.mrf.mxu0
        %v5261 = vadd.f32 0.0, %v5260
        %v5262 = vpop.f32.mrf.mxu0
        %5263 = vdwg.mxu0
        %v5264 = vadd.f32 %v4930, %v5086
        %v5265 = vadd.f32 %v4931, %v5091
        %v5266 = vadd.f32 %v4932, %v5096
        %v5267 = vadd.f32 %v4933, %v5101
        %v5268 = vadd.f32 %v4934, %v5106
        %v5269 = vadd.f32 %v4935, %v5111
        %v5270 = vadd.f32 %v4936, %v5116
        %v5271 = vadd.f32 %v4937, %v5121
        %v5272 = vadd.f32 %v4938, %v5126
        %v5273 = vadd.f32 %v4939, %v5131
        %v5274 = vadd.f32 %v4940, %v5136
        %v5275 = vadd.f32 %v4941, %v5141
        %v5276 = vadd.f32 %v4942, %v5146
        %v5277 = vadd.f32 %v4943, %v5151
        %v5278 = vadd.f32 %v4944, %v5156
        %v5279 = vadd.f32 %v4945, %v5161
        %v5280 = vadd.f32 %v4946, %v5166
        %v5281 = vadd.f32 %v4947, %v5171
        %v5282 = vadd.f32 %v4948, %v5176
        %v5283 = vadd.f32 %v4949, %v5181
        %v5284 = vadd.f32 %v4950, %v5186
        %v5285 = vadd.f32 %v4951, %v5191
        %v5286 = vadd.f32 %v4952, %v5196
        %v5287 = vadd.f32 %v4953, %v5201
        %v5288 = vadd.f32 %v4954, %v5206
        %v5289 = vadd.f32 %v4955, %v5211
        %v5290 = vadd.f32 %v4956, %v5216
        %v5291 = vadd.f32 %v4957, %v5221
        %v5292 = vadd.f32 %v4958, %v5226
        %v5293 = vadd.f32 %v4959, %v5231
        %v5294 = vadd.f32 %v4960, %v5236
        %v5295 = vadd.f32 %v4961, %v5241
        %v5296 = vadd.f32 %v4962, %v5246
        %v5297 = vadd.f32 %v4963, %v5251
        %v5298 = vadd.f32 %v4964, %v5256
        %v5299 = vadd.f32 %v4965, %v5261
        %v5300 = vld [vmem:[#allocation2 + $0x26] sm:$0xff]
        %v5301 = vld [vmem:[#allocation2 + $0x2e] sm:$0xff]
        %v5302 = vld [vmem:[#allocation2 + $0x36] sm:$0xff]
        %v5303 = vld [vmem:[#allocation2 + $0x3e] sm:$0xff]
        %v5304 = vld [vmem:[#allocation2 + $0x46] sm:$0xff]
        %v5305 = vld [vmem:[#allocation2 + $0x4e] sm:$0xff]
        %v5306 = vld [vmem:[#allocation2 + $0x56] sm:$0xff]
        %v5307 = vld [vmem:[#allocation2 + $0x5e] sm:$0xff]
        %v5308 = vld [vmem:[#allocation2 + $0x66] sm:$0xff]
        %v5309 = vld [vmem:[#allocation2 + $0x6e] sm:$0xff]
        %v5310 = vld [vmem:[#allocation2 + $0x76] sm:$0xff]
        %v5311 = vld [vmem:[#allocation2 + $0x7e] sm:$0xff]
        %v5312 = vld [vmem:[#allocation2 + $0x86] sm:$0xff]
        %v5313 = vld [vmem:[#allocation2 + $0x8e] sm:$0xff]
        %v5314 = vld [vmem:[#allocation2 + $0x96] sm:$0xff]
        %v5315 = vld [vmem:[#allocation2 + $0x9e] sm:$0xff]
        %v5316 = vld [vmem:[#allocation2 + $0xa6] sm:$0xff]
        %v5317 = vld [vmem:[#allocation2 + $0xae] sm:$0xff]
        %v5318 = vld [vmem:[#allocation2 + $0xb6] sm:$0xff]
        %v5319 = vld [vmem:[#allocation2 + $0xbe] sm:$0xff]
        %v5320 = vld [vmem:[#allocation2 + $0xc6] sm:$0xff]
        %v5321 = vld [vmem:[#allocation2 + $0xce] sm:$0xff]
        %v5322 = vld [vmem:[#allocation2 + $0xd6] sm:$0xff]
        %v5323 = vld [vmem:[#allocation2 + $0xde] sm:$0xff]
        %v5324 = vld [vmem:[#allocation2 + $0xe6] sm:$0xff]
        %v5325 = vld [vmem:[#allocation2 + $0xee] sm:$0xff]
        %v5326 = vld [vmem:[#allocation2 + $0xf6] sm:$0xff]
        %v5327 = vld [vmem:[#allocation2 + $0xfe] sm:$0xff]
        %v5328 = vld [vmem:[#allocation2 + $0x106] sm:$0xff]
        %v5329 = vld [vmem:[#allocation2 + $0x10e] sm:$0xff]
        %v5330 = vld [vmem:[#allocation2 + $0x116] sm:$0xff]
        %v5331 = vld [vmem:[#allocation2 + $0x11e] sm:$0xff]
        %v5332 = vld [vmem:[#allocation2 + $0x126] sm:$0xff]
        %v5333 = vld [vmem:[#allocation2 + $0x12e] sm:$0xff]
        %v5334 = vld [vmem:[#allocation2 + $0x136] sm:$0xff]
        %v5335 = vld [vmem:[#allocation2 + $0x13e] sm:$0xff]
        %s5336 = scalar_lea.vmem [#allocation12], 1024
        %v5337 = vld [vmem:[%s5336] sm:$0xff]
        %v5338 = vld [vmem:[%s5336 + $0x8] sm:$0xff]
        %v5339 = vld [vmem:[%s5336 + $0x10] sm:$0xff]
        %v5340 = vld [vmem:[%s5336 + $0x18] sm:$0xff]
        %v5341 = vld [vmem:[%s5336 + $0x20] sm:$0xff]
        %v5342 = vld [vmem:[%s5336 + $0x28] sm:$0xff]
        %v5343 = vld [vmem:[%s5336 + $0x30] sm:$0xff]
        %v5344 = vld [vmem:[%s5336 + $0x38] sm:$0xff]
        %v5345 = vld [vmem:[%s5336 + $0x40] sm:$0xff]
        %v5346 = vld [vmem:[%s5336 + $0x48] sm:$0xff]
        %v5347 = vld [vmem:[%s5336 + $0x50] sm:$0xff]
        %v5348 = vld [vmem:[%s5336 + $0x58] sm:$0xff]
        %v5349 = vld [vmem:[%s5336 + $0x60] sm:$0xff]
        %v5350 = vld [vmem:[%s5336 + $0x68] sm:$0xff]
        %v5351 = vld [vmem:[%s5336 + $0x70] sm:$0xff]
        %v5352 = vld [vmem:[%s5336 + $0x78] sm:$0xff]
        %5353 = vmatprep.subr.mxu0 0.0
        %5354 = vmatpush1.msra.mxu0 %v5352
        %5355 = vmatprep.subr.mxu0 0.0
        %5356 = vmatpush1.msra.mxu0 %v5351
        %5357 = vmatprep.subr.mxu0 0.0
        %5358 = vmatpush1.msra.mxu0 %v5350
        %5359 = vmatprep.subr.mxu0 0.0
        %5360 = vmatpush1.msra.mxu0 %v5349
        %5361 = vmatprep.subr.mxu0 0.0
        %5362 = vmatpush1.msra.mxu0 %v5348
        %5363 = vmatprep.subr.mxu0 0.0
        %5364 = vmatpush1.msra.mxu0 %v5347
        %5365 = vmatprep.subr.mxu0 0.0
        %5366 = vmatpush1.msra.mxu0 %v5346
        %5367 = vmatprep.subr.mxu0 0.0
        %5368 = vmatpush1.msra.mxu0 %v5345
        %5369 = vmatprep.subr.mxu0 0.0
        %5370 = vmatpush1.msra.mxu0 %v5344
        %5371 = vmatprep.subr.mxu0 0.0
        %5372 = vmatpush1.msra.mxu0 %v5343
        %5373 = vmatprep.subr.mxu0 0.0
        %5374 = vmatpush1.msra.mxu0 %v5342
        %5375 = vmatprep.subr.mxu0 0.0
        %5376 = vmatpush1.msra.mxu0 %v5341
        %5377 = vmatprep.subr.mxu0 0.0
        %5378 = vmatpush1.msra.mxu0 %v5340
        %5379 = vmatprep.subr.mxu0 0.0
        %5380 = vmatpush1.msra.mxu0 %v5339
        %5381 = vmatprep.subr.mxu0 0.0
        %5382 = vmatpush1.msra.mxu0 %v5338
        %5383 = vmatprep.subr.mxu0 0.0
        %5384 = vmatpush1.msra.mxu0 %v5337
        %5385 = vmatprep.subr.mxu0 0.0
        %5386 = vmatpush2.msra.mxu0 0.0
        %5387 = vmatprep.subr.mxu0 0.0
        %5388 = vmatpush2.msra.mxu0 0.0
        %5389 = vmatprep.subr.mxu0 0.0
        %5390 = vmatpush2.msra.mxu0 0.0
        %5391 = vmatprep.subr.mxu0 0.0
        %5392 = vmatpush2.msra.mxu0 0.0
        %5393 = vmatprep.subr.mxu0 0.0
        %5394 = vmatpush2.msra.mxu0 0.0
        %5395 = vmatprep.subr.mxu0 0.0
        %5396 = vmatpush2.msra.mxu0 0.0
        %5397 = vmatprep.subr.mxu0 0.0
        %5398 = vmatpush2.msra.mxu0 0.0
        %5399 = vmatprep.subr.mxu0 0.0
        %5400 = vmatpush2.msra.mxu0 0.0
        %5401 = vmatprep.subr.mxu0 0.0
        %5402 = vmatpush2.msra.mxu0 0.0
        %5403 = vmatprep.subr.mxu0 0.0
        %5404 = vmatpush2.msra.mxu0 0.0
        %5405 = vmatprep.subr.mxu0 0.0
        %5406 = vmatpush2.msra.mxu0 0.0
        %5407 = vmatprep.subr.mxu0 0.0
        %5408 = vmatpush2.msra.mxu0 0.0
        %5409 = vmatprep.subr.mxu0 0.0
        %5410 = vmatpush2.msra.mxu0 0.0
        %5411 = vmatprep.subr.mxu0 0.0
        %5412 = vmatpush2.msra.mxu0 0.0
        %5413 = vmatprep.subr.mxu0 0.0
        %5414 = vmatpush2.msra.mxu0 0.0
        %5415 = vmatprep.subr.mxu0 0.0
        %5416 = vmatpush2.msra.mxu0 0.0
        %5417 = vmatprep.mubr.f32.mxu0 0.0
        %5418 = vmatmul.mubr.f32.gmra.mxu0 %v5300
        %v5419 = vpop.f32.mrf.mxu0
        %v5420 = vadd.f32 0.0, %v5419
        %v5421 = vpop.f32.mrf.mxu0
        %5422 = vmatprep.mubr.f32.mxu0 0.0
        %5423 = vmatmul.mubr.f32.gmra.mxu0 %v5301
        %v5424 = vpop.f32.mrf.mxu0
        %v5425 = vadd.f32 0.0, %v5424
        %v5426 = vpop.f32.mrf.mxu0
        %5427 = vmatprep.mubr.f32.mxu0 0.0
        %5428 = vmatmul.mubr.f32.gmra.mxu0 %v5302
        %v5429 = vpop.f32.mrf.mxu0
        %v5430 = vadd.f32 0.0, %v5429
        %v5431 = vpop.f32.mrf.mxu0
        %5432 = vmatprep.mubr.f32.mxu0 0.0
        %5433 = vmatmul.mubr.f32.gmra.mxu0 %v5303
        %v5434 = vpop.f32.mrf.mxu0
        %v5435 = vadd.f32 0.0, %v5434
        %v5436 = vpop.f32.mrf.mxu0
        %5437 = vmatprep.mubr.f32.mxu0 0.0
        %5438 = vmatmul.mubr.f32.gmra.mxu0 %v5304
        %v5439 = vpop.f32.mrf.mxu0
        %v5440 = vadd.f32 0.0, %v5439
        %v5441 = vpop.f32.mrf.mxu0
        %5442 = vmatprep.mubr.f32.mxu0 0.0
        %5443 = vmatmul.mubr.f32.gmra.mxu0 %v5305
        %v5444 = vpop.f32.mrf.mxu0
        %v5445 = vadd.f32 0.0, %v5444
        %v5446 = vpop.f32.mrf.mxu0
        %5447 = vmatprep.mubr.f32.mxu0 0.0
        %5448 = vmatmul.mubr.f32.gmra.mxu0 %v5306
        %v5449 = vpop.f32.mrf.mxu0
        %v5450 = vadd.f32 0.0, %v5449
        %v5451 = vpop.f32.mrf.mxu0
        %5452 = vmatprep.mubr.f32.mxu0 0.0
        %5453 = vmatmul.mubr.f32.gmra.mxu0 %v5307
        %v5454 = vpop.f32.mrf.mxu0
        %v5455 = vadd.f32 0.0, %v5454
        %v5456 = vpop.f32.mrf.mxu0
        %5457 = vmatprep.mubr.f32.mxu0 0.0
        %5458 = vmatmul.mubr.f32.gmra.mxu0 %v5308
        %v5459 = vpop.f32.mrf.mxu0
        %v5460 = vadd.f32 0.0, %v5459
        %v5461 = vpop.f32.mrf.mxu0
        %5462 = vmatprep.mubr.f32.mxu0 0.0
        %5463 = vmatmul.mubr.f32.gmra.mxu0 %v5309
        %v5464 = vpop.f32.mrf.mxu0
        %v5465 = vadd.f32 0.0, %v5464
        %v5466 = vpop.f32.mrf.mxu0
        %5467 = vmatprep.mubr.f32.mxu0 0.0
        %5468 = vmatmul.mubr.f32.gmra.mxu0 %v5310
        %v5469 = vpop.f32.mrf.mxu0
        %v5470 = vadd.f32 0.0, %v5469
        %v5471 = vpop.f32.mrf.mxu0
        %5472 = vmatprep.mubr.f32.mxu0 0.0
        %5473 = vmatmul.mubr.f32.gmra.mxu0 %v5311
        %v5474 = vpop.f32.mrf.mxu0
        %v5475 = vadd.f32 0.0, %v5474
        %v5476 = vpop.f32.mrf.mxu0
        %5477 = vmatprep.mubr.f32.mxu0 0.0
        %5478 = vmatmul.mubr.f32.gmra.mxu0 %v5312
        %v5479 = vpop.f32.mrf.mxu0
        %v5480 = vadd.f32 0.0, %v5479
        %v5481 = vpop.f32.mrf.mxu0
        %5482 = vmatprep.mubr.f32.mxu0 0.0
        %5483 = vmatmul.mubr.f32.gmra.mxu0 %v5313
        %v5484 = vpop.f32.mrf.mxu0
        %v5485 = vadd.f32 0.0, %v5484
        %v5486 = vpop.f32.mrf.mxu0
        %5487 = vmatprep.mubr.f32.mxu0 0.0
        %5488 = vmatmul.mubr.f32.gmra.mxu0 %v5314
        %v5489 = vpop.f32.mrf.mxu0
        %v5490 = vadd.f32 0.0, %v5489
        %v5491 = vpop.f32.mrf.mxu0
        %5492 = vmatprep.mubr.f32.mxu0 0.0
        %5493 = vmatmul.mubr.f32.gmra.mxu0 %v5315
        %v5494 = vpop.f32.mrf.mxu0
        %v5495 = vadd.f32 0.0, %v5494
        %v5496 = vpop.f32.mrf.mxu0
        %5497 = vmatprep.mubr.f32.mxu0 0.0
        %5498 = vmatmul.mubr.f32.gmra.mxu0 %v5316
        %v5499 = vpop.f32.mrf.mxu0
        %v5500 = vadd.f32 0.0, %v5499
        %v5501 = vpop.f32.mrf.mxu0
        %5502 = vmatprep.mubr.f32.mxu0 0.0
        %5503 = vmatmul.mubr.f32.gmra.mxu0 %v5317
        %v5504 = vpop.f32.mrf.mxu0
        %v5505 = vadd.f32 0.0, %v5504
        %v5506 = vpop.f32.mrf.mxu0
        %5507 = vmatprep.mubr.f32.mxu0 0.0
        %5508 = vmatmul.mubr.f32.gmra.mxu0 %v5318
        %v5509 = vpop.f32.mrf.mxu0
        %v5510 = vadd.f32 0.0, %v5509
        %v5511 = vpop.f32.mrf.mxu0
        %5512 = vmatprep.mubr.f32.mxu0 0.0
        %5513 = vmatmul.mubr.f32.gmra.mxu0 %v5319
        %v5514 = vpop.f32.mrf.mxu0
        %v5515 = vadd.f32 0.0, %v5514
        %v5516 = vpop.f32.mrf.mxu0
        %5517 = vmatprep.mubr.f32.mxu0 0.0
        %5518 = vmatmul.mubr.f32.gmra.mxu0 %v5320
        %v5519 = vpop.f32.mrf.mxu0
        %v5520 = vadd.f32 0.0, %v5519
        %v5521 = vpop.f32.mrf.mxu0
        %5522 = vmatprep.mubr.f32.mxu0 0.0
        %5523 = vmatmul.mubr.f32.gmra.mxu0 %v5321
        %v5524 = vpop.f32.mrf.mxu0
        %v5525 = vadd.f32 0.0, %v5524
        %v5526 = vpop.f32.mrf.mxu0
        %5527 = vmatprep.mubr.f32.mxu0 0.0
        %5528 = vmatmul.mubr.f32.gmra.mxu0 %v5322
        %v5529 = vpop.f32.mrf.mxu0
        %v5530 = vadd.f32 0.0, %v5529
        %v5531 = vpop.f32.mrf.mxu0
        %5532 = vmatprep.mubr.f32.mxu0 0.0
        %5533 = vmatmul.mubr.f32.gmra.mxu0 %v5323
        %v5534 = vpop.f32.mrf.mxu0
        %v5535 = vadd.f32 0.0, %v5534
        %v5536 = vpop.f32.mrf.mxu0
        %5537 = vmatprep.mubr.f32.mxu0 0.0
        %5538 = vmatmul.mubr.f32.gmra.mxu0 %v5324
        %v5539 = vpop.f32.mrf.mxu0
        %v5540 = vadd.f32 0.0, %v5539
        %v5541 = vpop.f32.mrf.mxu0
        %5542 = vmatprep.mubr.f32.mxu0 0.0
        %5543 = vmatmul.mubr.f32.gmra.mxu0 %v5325
        %v5544 = vpop.f32.mrf.mxu0
        %v5545 = vadd.f32 0.0, %v5544
        %v5546 = vpop.f32.mrf.mxu0
        %5547 = vmatprep.mubr.f32.mxu0 0.0
        %5548 = vmatmul.mubr.f32.gmra.mxu0 %v5326
        %v5549 = vpop.f32.mrf.mxu0
        %v5550 = vadd.f32 0.0, %v5549
        %v5551 = vpop.f32.mrf.mxu0
        %5552 = vmatprep.mubr.f32.mxu0 0.0
        %5553 = vmatmul.mubr.f32.gmra.mxu0 %v5327
        %v5554 = vpop.f32.mrf.mxu0
        %v5555 = vadd.f32 0.0, %v5554
        %v5556 = vpop.f32.mrf.mxu0
        %5557 = vmatprep.mubr.f32.mxu0 0.0
        %5558 = vmatmul.mubr.f32.gmra.mxu0 %v5328
        %v5559 = vpop.f32.mrf.mxu0
        %v5560 = vadd.f32 0.0, %v5559
        %v5561 = vpop.f32.mrf.mxu0
        %5562 = vmatprep.mubr.f32.mxu0 0.0
        %5563 = vmatmul.mubr.f32.gmra.mxu0 %v5329
        %v5564 = vpop.f32.mrf.mxu0
        %v5565 = vadd.f32 0.0, %v5564
        %v5566 = vpop.f32.mrf.mxu0
        %5567 = vmatprep.mubr.f32.mxu0 0.0
        %5568 = vmatmul.mubr.f32.gmra.mxu0 %v5330
        %v5569 = vpop.f32.mrf.mxu0
        %v5570 = vadd.f32 0.0, %v5569
        %v5571 = vpop.f32.mrf.mxu0
        %5572 = vmatprep.mubr.f32.mxu0 0.0
        %5573 = vmatmul.mubr.f32.gmra.mxu0 %v5331
        %v5574 = vpop.f32.mrf.mxu0
        %v5575 = vadd.f32 0.0, %v5574
        %v5576 = vpop.f32.mrf.mxu0
        %5577 = vmatprep.mubr.f32.mxu0 0.0
        %5578 = vmatmul.mubr.f32.gmra.mxu0 %v5332
        %v5579 = vpop.f32.mrf.mxu0
        %v5580 = vadd.f32 0.0, %v5579
        %v5581 = vpop.f32.mrf.mxu0
        %5582 = vmatprep.mubr.f32.mxu0 0.0
        %5583 = vmatmul.mubr.f32.gmra.mxu0 %v5333
        %v5584 = vpop.f32.mrf.mxu0
        %v5585 = vadd.f32 0.0, %v5584
        %v5586 = vpop.f32.mrf.mxu0
        %5587 = vmatprep.mubr.f32.mxu0 0.0
        %5588 = vmatmul.mubr.f32.gmra.mxu0 %v5334
        %v5589 = vpop.f32.mrf.mxu0
        %v5590 = vadd.f32 0.0, %v5589
        %v5591 = vpop.f32.mrf.mxu0
        %5592 = vmatprep.mubr.f32.mxu0 0.0
        %5593 = vmatmul.mubr.f32.gmra.mxu0 %v5335
        %v5594 = vpop.f32.mrf.mxu0
        %v5595 = vadd.f32 0.0, %v5594
        %v5596 = vpop.f32.mrf.mxu0
        %5597 = vdwg.mxu0
        %v5598 = vadd.f32 %v5264, %v5420
        %v5599 = vadd.f32 %v5265, %v5425
        %v5600 = vadd.f32 %v5266, %v5430
        %v5601 = vadd.f32 %v5267, %v5435
        %v5602 = vadd.f32 %v5268, %v5440
        %v5603 = vadd.f32 %v5269, %v5445
        %v5604 = vadd.f32 %v5270, %v5450
        %v5605 = vadd.f32 %v5271, %v5455
        %v5606 = vadd.f32 %v5272, %v5460
        %v5607 = vadd.f32 %v5273, %v5465
        %v5608 = vadd.f32 %v5274, %v5470
        %v5609 = vadd.f32 %v5275, %v5475
        %v5610 = vadd.f32 %v5276, %v5480
        %v5611 = vadd.f32 %v5277, %v5485
        %v5612 = vadd.f32 %v5278, %v5490
        %v5613 = vadd.f32 %v5279, %v5495
        %v5614 = vadd.f32 %v5280, %v5500
        %v5615 = vadd.f32 %v5281, %v5505
        %v5616 = vadd.f32 %v5282, %v5510
        %v5617 = vadd.f32 %v5283, %v5515
        %v5618 = vadd.f32 %v5284, %v5520
        %v5619 = vadd.f32 %v5285, %v5525
        %v5620 = vadd.f32 %v5286, %v5530
        %v5621 = vadd.f32 %v5287, %v5535
        %v5622 = vadd.f32 %v5288, %v5540
        %v5623 = vadd.f32 %v5289, %v5545
        %v5624 = vadd.f32 %v5290, %v5550
        %v5625 = vadd.f32 %v5291, %v5555
        %v5626 = vadd.f32 %v5292, %v5560
        %v5627 = vadd.f32 %v5293, %v5565
        %v5628 = vadd.f32 %v5294, %v5570
        %v5629 = vadd.f32 %v5295, %v5575
        %v5630 = vadd.f32 %v5296, %v5580
        %v5631 = vadd.f32 %v5297, %v5585
        %v5632 = vadd.f32 %v5298, %v5590
        %v5633 = vadd.f32 %v5299, %v5595
        %v5634 = vld [vmem:[#allocation13] sm:$0x1]
        %v5636 = vlaneseq
        %v5637 = vshrl.u32 %v5636, 7
        %v5638 = vsub.s32 0, %v5637
        %v5639 = vrot.slane %v5634, %v5638
        %v5641 = vadd.f32 %v5598, %v5639
        %v5642 = vadd.f32 %v5599, %v5639
        %v5643 = vadd.f32 %v5600, %v5639
        %v5644 = vadd.f32 %v5601, %v5639
        %v5645 = vadd.f32 %v5602, %v5639
        %v5646 = vadd.f32 %v5603, %v5639
        %v5647 = vadd.f32 %v5604, %v5639
        %v5648 = vadd.f32 %v5605, %v5639
        %v5649 = vadd.f32 %v5606, %v5639
        %v5650 = vadd.f32 %v5607, %v5639
        %v5651 = vadd.f32 %v5608, %v5639
        %v5652 = vadd.f32 %v5609, %v5639
        %v5653 = vadd.f32 %v5610, %v5639
        %v5654 = vadd.f32 %v5611, %v5639
        %v5655 = vadd.f32 %v5612, %v5639
        %v5656 = vadd.f32 %v5613, %v5639
        %v5657 = vadd.f32 %v5614, %v5639
        %v5658 = vadd.f32 %v5615, %v5639
        %v5659 = vadd.f32 %v5616, %v5639
        %v5660 = vadd.f32 %v5617, %v5639
        %v5661 = vadd.f32 %v5618, %v5639
        %v5662 = vadd.f32 %v5619, %v5639
        %v5663 = vadd.f32 %v5620, %v5639
        %v5664 = vadd.f32 %v5621, %v5639
        %v5665 = vadd.f32 %v5622, %v5639
        %v5666 = vadd.f32 %v5623, %v5639
        %v5667 = vadd.f32 %v5624, %v5639
        %v5668 = vadd.f32 %v5625, %v5639
        %v5669 = vadd.f32 %v5626, %v5639
        %v5670 = vadd.f32 %v5627, %v5639
        %v5671 = vadd.f32 %v5628, %v5639
        %v5672 = vadd.f32 %v5629, %v5639
        %v5673 = vadd.f32 %v5630, %v5639
        %v5674 = vadd.f32 %v5631, %v5639
        %v5675 = vadd.f32 %v5632, %v5639
        %v5676 = vadd.f32 %v5633, %v5639
        %v5677 = vld [vmem:[%s12] sm:$0xff]
        %v5678 = vld [vmem:[%s12 + $0x8] sm:$0xff]
        %v5679 = vld [vmem:[%s12 + $0x10] sm:$0xff]
        %v5680 = vld [vmem:[%s12 + $0x18] sm:$0xff]
        %v5681 = vld [vmem:[%s12 + $0x20] sm:$0xff]
        %v5682 = vld [vmem:[%s12 + $0x28] sm:$0xff]
        %v5683 = vld [vmem:[%s12 + $0x30] sm:$0xff]
        %v5684 = vld [vmem:[%s12 + $0x38] sm:$0xff]
        %v5685 = vld [vmem:[%s12 + $0x40] sm:$0xff]
        %v5686 = vld [vmem:[%s12 + $0x48] sm:$0xff]
        %v5687 = vld [vmem:[%s12 + $0x50] sm:$0xff]
        %v5688 = vld [vmem:[%s12 + $0x58] sm:$0xff]
        %v5689 = vld [vmem:[%s12 + $0x60] sm:$0xff]
        %v5690 = vld [vmem:[%s12 + $0x68] sm:$0xff]
        %v5691 = vld [vmem:[%s12 + $0x70] sm:$0xff]
        %v5692 = vld [vmem:[%s12 + $0x78] sm:$0xff]
        %v5693 = vld [vmem:[%s12 + $0x80] sm:$0xff]
        %v5694 = vld [vmem:[%s12 + $0x88] sm:$0xff]
        %v5695 = vld [vmem:[%s12 + $0x90] sm:$0xff]
        %v5696 = vld [vmem:[%s12 + $0x98] sm:$0xff]
        %v5697 = vld [vmem:[%s12 + $0xa0] sm:$0xff]
        %v5698 = vld [vmem:[%s12 + $0xa8] sm:$0xff]
        %v5699 = vld [vmem:[%s12 + $0xb0] sm:$0xff]
        %v5700 = vld [vmem:[%s12 + $0xb8] sm:$0xff]
        %v5701 = vld [vmem:[%s12 + $0xc0] sm:$0xff]
        %v5702 = vld [vmem:[%s12 + $0xc8] sm:$0xff]
        %v5703 = vld [vmem:[%s12 + $0xd0] sm:$0xff]
        %v5704 = vld [vmem:[%s12 + $0xd8] sm:$0xff]
        %v5705 = vld [vmem:[%s12 + $0xe0] sm:$0xff]
        %v5706 = vld [vmem:[%s12 + $0xe8] sm:$0xff]
        %v5707 = vld [vmem:[%s12 + $0xf0] sm:$0xff]
        %v5708 = vld [vmem:[%s12 + $0xf8] sm:$0xff]
        %v5709 = vld [vmem:[%s12 + $0x100] sm:$0xff]
        %v5710 = vld [vmem:[%s12 + $0x108] sm:$0xff]
        %v5711 = vld [vmem:[%s12 + $0x110] sm:$0xff]
        %v5712 = vld [vmem:[%s12 + $0x118] sm:$0xff]
        %5714 = vset.pattern.permute.xlu0 0
        %5715 = vperm.xlu0 %5714, %v5677
        %v5716 = vpop.permute.xlu0 %5715
        %5719 = vset.pattern.permute.xlu0 0
        %5720 = vperm.xlu0 %5719, %v5678
        %v5721 = vpop.permute.xlu0 %5720
        %5724 = vset.pattern.permute.xlu0 0
        %5725 = vperm.xlu0 %5724, %v5679
        %v5726 = vpop.permute.xlu0 %5725
        %5729 = vset.pattern.permute.xlu0 0
        %5730 = vperm.xlu0 %5729, %v5680
        %v5731 = vpop.permute.xlu0 %5730
        %5734 = vset.pattern.permute.xlu0 0
        %5735 = vperm.xlu0 %5734, %v5681
        %v5736 = vpop.permute.xlu0 %5735
        %5739 = vset.pattern.permute.xlu0 0
        %5740 = vperm.xlu0 %5739, %v5682
        %v5741 = vpop.permute.xlu0 %5740
        %5744 = vset.pattern.permute.xlu0 0
        %5745 = vperm.xlu0 %5744, %v5683
        %v5746 = vpop.permute.xlu0 %5745
        %5749 = vset.pattern.permute.xlu0 0
        %5750 = vperm.xlu0 %5749, %v5684
        %v5751 = vpop.permute.xlu0 %5750
        %5754 = vset.pattern.permute.xlu0 0
        %5755 = vperm.xlu0 %5754, %v5685
        %v5756 = vpop.permute.xlu0 %5755
        %5759 = vset.pattern.permute.xlu0 0
        %5760 = vperm.xlu0 %5759, %v5686
        %v5761 = vpop.permute.xlu0 %5760
        %5764 = vset.pattern.permute.xlu0 0
        %5765 = vperm.xlu0 %5764, %v5687
        %v5766 = vpop.permute.xlu0 %5765
        %5769 = vset.pattern.permute.xlu0 0
        %5770 = vperm.xlu0 %5769, %v5688
        %v5771 = vpop.permute.xlu0 %5770
        %5774 = vset.pattern.permute.xlu0 0
        %5775 = vperm.xlu0 %5774, %v5689
        %v5776 = vpop.permute.xlu0 %5775
        %5779 = vset.pattern.permute.xlu0 0
        %5780 = vperm.xlu0 %5779, %v5690
        %v5781 = vpop.permute.xlu0 %5780
        %5784 = vset.pattern.permute.xlu0 0
        %5785 = vperm.xlu0 %5784, %v5691
        %v5786 = vpop.permute.xlu0 %5785
        %5789 = vset.pattern.permute.xlu0 0
        %5790 = vperm.xlu0 %5789, %v5692
        %v5791 = vpop.permute.xlu0 %5790
        %5794 = vset.pattern.permute.xlu0 0
        %5795 = vperm.xlu0 %5794, %v5693
        %v5796 = vpop.permute.xlu0 %5795
        %5799 = vset.pattern.permute.xlu0 0
        %5800 = vperm.xlu0 %5799, %v5694
        %v5801 = vpop.permute.xlu0 %5800
        %5804 = vset.pattern.permute.xlu0 0
        %5805 = vperm.xlu0 %5804, %v5695
        %v5806 = vpop.permute.xlu0 %5805
        %5809 = vset.pattern.permute.xlu0 0
        %5810 = vperm.xlu0 %5809, %v5696
        %v5811 = vpop.permute.xlu0 %5810
        %5814 = vset.pattern.permute.xlu0 0
        %5815 = vperm.xlu0 %5814, %v5697
        %v5816 = vpop.permute.xlu0 %5815
        %5819 = vset.pattern.permute.xlu0 0
        %5820 = vperm.xlu0 %5819, %v5698
        %v5821 = vpop.permute.xlu0 %5820
        %5824 = vset.pattern.permute.xlu0 0
        %5825 = vperm.xlu0 %5824, %v5699
        %v5826 = vpop.permute.xlu0 %5825
        %5829 = vset.pattern.permute.xlu0 0
        %5830 = vperm.xlu0 %5829, %v5700
        %v5831 = vpop.permute.xlu0 %5830
        %5834 = vset.pattern.permute.xlu0 0
        %5835 = vperm.xlu0 %5834, %v5701
        %v5836 = vpop.permute.xlu0 %5835
        %5839 = vset.pattern.permute.xlu0 0
        %5840 = vperm.xlu0 %5839, %v5702
        %v5841 = vpop.permute.xlu0 %5840
        %5844 = vset.pattern.permute.xlu0 0
        %5845 = vperm.xlu0 %5844, %v5703
        %v5846 = vpop.permute.xlu0 %5845
        %5849 = vset.pattern.permute.xlu0 0
        %5850 = vperm.xlu0 %5849, %v5704
        %v5851 = vpop.permute.xlu0 %5850
        %5854 = vset.pattern.permute.xlu0 0
        %5855 = vperm.xlu0 %5854, %v5705
        %v5856 = vpop.permute.xlu0 %5855
        %5859 = vset.pattern.permute.xlu0 0
        %5860 = vperm.xlu0 %5859, %v5706
        %v5861 = vpop.permute.xlu0 %5860
        %5864 = vset.pattern.permute.xlu0 0
        %5865 = vperm.xlu0 %5864, %v5707
        %v5866 = vpop.permute.xlu0 %5865
        %5869 = vset.pattern.permute.xlu0 0
        %5870 = vperm.xlu0 %5869, %v5708
        %v5871 = vpop.permute.xlu0 %5870
        %5874 = vset.pattern.permute.xlu0 0
        %5875 = vperm.xlu0 %5874, %v5709
        %v5876 = vpop.permute.xlu0 %5875
        %5879 = vset.pattern.permute.xlu0 0
        %5880 = vperm.xlu0 %5879, %v5710
        %v5881 = vpop.permute.xlu0 %5880
        %5884 = vset.pattern.permute.xlu0 0
        %5885 = vperm.xlu0 %5884, %v5711
        %v5886 = vpop.permute.xlu0 %5885
        %5889 = vset.pattern.permute.xlu0 0
        %5890 = vperm.xlu0 %5889, %v5712
        %v5891 = vpop.permute.xlu0 %5890
        %v5893 = vmul.f32 %v5641, %v5716
        %v5894 = vmul.f32 %v5642, %v5721
        %v5895 = vmul.f32 %v5643, %v5726
        %v5896 = vmul.f32 %v5644, %v5731
        %v5897 = vmul.f32 %v5645, %v5736
        %v5898 = vmul.f32 %v5646, %v5741
        %v5899 = vmul.f32 %v5647, %v5746
        %v5900 = vmul.f32 %v5648, %v5751
        %v5901 = vmul.f32 %v5649, %v5756
        %v5902 = vmul.f32 %v5650, %v5761
        %v5903 = vmul.f32 %v5651, %v5766
        %v5904 = vmul.f32 %v5652, %v5771
        %v5905 = vmul.f32 %v5653, %v5776
        %v5906 = vmul.f32 %v5654, %v5781
        %v5907 = vmul.f32 %v5655, %v5786
        %v5908 = vmul.f32 %v5656, %v5791
        %v5909 = vmul.f32 %v5657, %v5796
        %v5910 = vmul.f32 %v5658, %v5801
        %v5911 = vmul.f32 %v5659, %v5806
        %v5912 = vmul.f32 %v5660, %v5811
        %v5913 = vmul.f32 %v5661, %v5816
        %v5914 = vmul.f32 %v5662, %v5821
        %v5915 = vmul.f32 %v5663, %v5826
        %v5916 = vmul.f32 %v5664, %v5831
        %v5917 = vmul.f32 %v5665, %v5836
        %v5918 = vmul.f32 %v5666, %v5841
        %v5919 = vmul.f32 %v5667, %v5846
        %v5920 = vmul.f32 %v5668, %v5851
        %v5921 = vmul.f32 %v5669, %v5856
        %v5922 = vmul.f32 %v5670, %v5861
        %v5923 = vmul.f32 %v5671, %v5866
        %v5924 = vmul.f32 %v5672, %v5871
        %v5925 = vmul.f32 %v5673, %v5876
        %v5926 = vmul.f32 %v5674, %v5881
        %v5927 = vmul.f32 %v5675, %v5886
        %v5928 = vmul.f32 %v5676, %v5891
        %v5929 = vadd.f32 %v5893, %v5894
        %v5930 = vadd.f32 %v5929, %v5895
        %v5931 = vadd.f32 %v5930, %v5896
        %v5932 = vadd.f32 %v5931, %v5897
        %v5933 = vadd.f32 %v5932, %v5898
        %v5934 = vadd.f32 %v5933, %v5899
        %v5935 = vadd.f32 %v5934, %v5900
        %v5936 = vadd.f32 %v5935, %v5901
        %v5937 = vadd.f32 %v5936, %v5902
        %v5938 = vadd.f32 %v5937, %v5903
        %v5939 = vadd.f32 %v5938, %v5904
        %v5940 = vadd.f32 %v5939, %v5905
        %v5941 = vadd.f32 %v5940, %v5906
        %v5942 = vadd.f32 %v5941, %v5907
        %v5943 = vadd.f32 %v5942, %v5908
        %v5944 = vadd.f32 %v5943, %v5909
        %v5945 = vadd.f32 %v5944, %v5910
        %v5946 = vadd.f32 %v5945, %v5911
        %v5947 = vadd.f32 %v5946, %v5912
        %v5948 = vadd.f32 %v5947, %v5913
        %v5949 = vadd.f32 %v5948, %v5914
        %v5950 = vadd.f32 %v5949, %v5915
        %v5951 = vadd.f32 %v5950, %v5916
        %v5952 = vadd.f32 %v5951, %v5917
        %v5953 = vadd.f32 %v5952, %v5918
        %v5954 = vadd.f32 %v5953, %v5919
        %v5955 = vadd.f32 %v5954, %v5920
        %v5956 = vadd.f32 %v5955, %v5921
        %v5957 = vadd.f32 %v5956, %v5922
        %v5958 = vadd.f32 %v5957, %v5923
        %v5959 = vadd.f32 %v5958, %v5924
        %v5960 = vadd.f32 %v5959, %v5925
        %v5961 = vadd.f32 %v5960, %v5926
        %v5962 = vadd.f32 %v5961, %v5927
        %v5963 = vadd.f32 %v5962, %v5928
        %v5964 = vrot.slane %v5963, 4
        %v5965 = vadd.f32 %v5963, %v5964
        %v5966 = vrot.slane %v5965, 2
        %v5967 = vadd.f32 %v5965, %v5966
        %v5968 = vrot.slane %v5967, 1
        %v5969 = vadd.f32 %v5967, %v5968
        %v5970 = vld [vmem:[%s7] sm:$0xff]
        %v5971 = vld [vmem:[%s7 + $0x8] sm:$0xff]
        %v5972 = vld [vmem:[%s7 + $0x10] sm:$0xff]
        %v5973 = vld [vmem:[%s7 + $0x18] sm:$0xff]
        %v5974 = vld [vmem:[%s7 + $0x20] sm:$0xff]
        %v5975 = vld [vmem:[%s7 + $0x28] sm:$0xff]
        %v5976 = vld [vmem:[%s7 + $0x30] sm:$0xff]
        %v5977 = vld [vmem:[%s7 + $0x38] sm:$0xff]
        %v5978 = vld [vmem:[%s7 + $0x40] sm:$0xff]
        %v5979 = vld [vmem:[%s7 + $0x48] sm:$0xff]
        %v5980 = vld [vmem:[%s7 + $0x50] sm:$0xff]
        %v5981 = vld [vmem:[%s7 + $0x58] sm:$0xff]
        %v5982 = vld [vmem:[%s7 + $0x60] sm:$0xff]
        %v5983 = vld [vmem:[%s7 + $0x68] sm:$0xff]
        %v5984 = vld [vmem:[%s7 + $0x70] sm:$0xff]
        %v5985 = vld [vmem:[%s7 + $0x78] sm:$0xff]
        %v5986 = vld [vmem:[#allocation15] sm:$0x1]
        %5987 = vmatprep.subr.mxu0 0.0
        %5988 = vmatpush1.msra.mxu0 %v5985
        %5989 = vmatprep.subr.mxu0 0.0
        %5990 = vmatpush1.msra.mxu0 %v5984
        %5991 = vmatprep.subr.mxu0 0.0
        %5992 = vmatpush1.msra.mxu0 %v5983
        %5993 = vmatprep.subr.mxu0 0.0
        %5994 = vmatpush1.msra.mxu0 %v5982
        %5995 = vmatprep.subr.mxu0 0.0
        %5996 = vmatpush1.msra.mxu0 %v5981
        %5997 = vmatprep.subr.mxu0 0.0
        %5998 = vmatpush1.msra.mxu0 %v5980
        %5999 = vmatprep.subr.mxu0 0.0
        %6000 = vmatpush1.msra.mxu0 %v5979
        %6001 = vmatprep.subr.mxu0 0.0
        %6002 = vmatpush1.msra.mxu0 %v5978
        %6003 = vmatprep.subr.mxu0 0.0
        %6004 = vmatpush1.msra.mxu0 %v5977
        %6005 = vmatprep.subr.mxu0 0.0
        %6006 = vmatpush1.msra.mxu0 %v5976
        %6007 = vmatprep.subr.mxu0 0.0
        %6008 = vmatpush1.msra.mxu0 %v5975
        %6009 = vmatprep.subr.mxu0 0.0
        %6010 = vmatpush1.msra.mxu0 %v5974
        %6011 = vmatprep.subr.mxu0 0.0
        %6012 = vmatpush1.msra.mxu0 %v5973
        %6013 = vmatprep.subr.mxu0 0.0
        %6014 = vmatpush1.msra.mxu0 %v5972
        %6015 = vmatprep.subr.mxu0 0.0
        %6016 = vmatpush1.msra.mxu0 %v5971
        %6017 = vmatprep.subr.mxu0 0.0
        %6018 = vmatpush1.msra.mxu0 %v5970
        %6019 = vmatprep.subr.mxu0 0.0
        %6020 = vmatpush2.msra.mxu0 0.0
        %6021 = vmatprep.subr.mxu0 0.0
        %6022 = vmatpush2.msra.mxu0 0.0
        %6023 = vmatprep.subr.mxu0 0.0
        %6024 = vmatpush2.msra.mxu0 0.0
        %6025 = vmatprep.subr.mxu0 0.0
        %6026 = vmatpush2.msra.mxu0 0.0
        %6027 = vmatprep.subr.mxu0 0.0
        %6028 = vmatpush2.msra.mxu0 0.0
        %6029 = vmatprep.subr.mxu0 0.0
        %6030 = vmatpush2.msra.mxu0 0.0
        %6031 = vmatprep.subr.mxu0 0.0
        %6032 = vmatpush2.msra.mxu0 0.0
        %6033 = vmatprep.subr.mxu0 0.0
        %6034 = vmatpush2.msra.mxu0 0.0
        %6035 = vmatprep.subr.mxu0 0.0
        %6036 = vmatpush2.msra.mxu0 0.0
        %6037 = vmatprep.subr.mxu0 0.0
        %6038 = vmatpush2.msra.mxu0 0.0
        %6039 = vmatprep.subr.mxu0 0.0
        %6040 = vmatpush2.msra.mxu0 0.0
        %6041 = vmatprep.subr.mxu0 0.0
        %6042 = vmatpush2.msra.mxu0 0.0
        %6043 = vmatprep.subr.mxu0 0.0
        %6044 = vmatpush2.msra.mxu0 0.0
        %6045 = vmatprep.subr.mxu0 0.0
        %6046 = vmatpush2.msra.mxu0 0.0
        %6047 = vmatprep.subr.mxu0 0.0
        %6048 = vmatpush2.msra.mxu0 0.0
        %6049 = vmatprep.subr.mxu0 0.0
        %6050 = vmatpush2.msra.mxu0 0.0
        %6051 = vmatprep.mubr.f32.mxu0 0.0
        %6052 = vmatmul.mubr.f32.gmra.mxu0 %v5969
        %v6053 = vpop.f32.mrf.mxu0
        %v6054 = vadd.f32 %v5986, %v6053
        %v6055 = vpop.f32.mrf.mxu0
        %6056 = vdwg.mxu0
        %v6057 = vmax.f32 %v6054, 0.0
        %v6058 = vld [vmem:[#allocation16] sm:$0xff]
        %v6059 = vld [vmem:[#allocation18] sm:$0x1]
        %vm6060 = vcmask 64512
        %v6062 = vsel %vm6060, %v6057, 0
        %6064 = vmatprep.subr.mxu0 0.0
        %6065 = vmatpush1.msra.mxu0 0.0
        %6066 = vmatprep.subr.mxu0 0.0
        %6067 = vmatpush1.msra.mxu0 0.0
        %6068 = vmatprep.subr.mxu0 0.0
        %6069 = vmatpush1.msra.mxu0 0.0
        %6070 = vmatprep.subr.mxu0 0.0
        %6071 = vmatpush1.msra.mxu0 0.0
        %6072 = vmatprep.subr.mxu0 0.0
        %6073 = vmatpush1.msra.mxu0 0.0
        %6074 = vmatprep.subr.mxu0 0.0
        %6075 = vmatpush1.msra.mxu0 0.0
        %6076 = vmatprep.subr.mxu0 0.0
        %6077 = vmatpush1.msra.mxu0 0.0
        %6078 = vmatprep.subr.mxu0 0.0
        %6079 = vmatpush1.msra.mxu0 0.0
        %6080 = vmatprep.subr.mxu0 0.0
        %6081 = vmatpush1.msra.mxu0 0.0
        %6082 = vmatprep.subr.mxu0 0.0
        %6083 = vmatpush1.msra.mxu0 0.0
        %6084 = vmatprep.subr.mxu0 0.0
        %6085 = vmatpush1.msra.mxu0 0.0
        %6086 = vmatprep.subr.mxu0 0.0
        %6087 = vmatpush1.msra.mxu0 0.0
        %6088 = vmatprep.subr.mxu0 0.0
        %6089 = vmatpush1.msra.mxu0 0.0
        %6090 = vmatprep.subr.mxu0 0.0
        %6091 = vmatpush1.msra.mxu0 0.0
        %6092 = vmatprep.subr.mxu0 0.0
        %6093 = vmatpush1.msra.mxu0 0.0
        %6094 = vmatprep.subr.mxu0 0.0
        %6095 = vmatpush1.msra.mxu0 %v6058
        %6096 = vmatprep.subr.mxu0 0.0
        %6097 = vmatpush2.msra.mxu0 0.0
        %6098 = vmatprep.subr.mxu0 0.0
        %6099 = vmatpush2.msra.mxu0 0.0
        %6100 = vmatprep.subr.mxu0 0.0
        %6101 = vmatpush2.msra.mxu0 0.0
        %6102 = vmatprep.subr.mxu0 0.0
        %6103 = vmatpush2.msra.mxu0 0.0
        %6104 = vmatprep.subr.mxu0 0.0
        %6105 = vmatpush2.msra.mxu0 0.0
        %6106 = vmatprep.subr.mxu0 0.0
        %6107 = vmatpush2.msra.mxu0 0.0
        %6108 = vmatprep.subr.mxu0 0.0
        %6109 = vmatpush2.msra.mxu0 0.0
        %6110 = vmatprep.subr.mxu0 0.0
        %6111 = vmatpush2.msra.mxu0 0.0
        %6112 = vmatprep.subr.mxu0 0.0
        %6113 = vmatpush2.msra.mxu0 0.0
        %6114 = vmatprep.subr.mxu0 0.0
        %6115 = vmatpush2.msra.mxu0 0.0
        %6116 = vmatprep.subr.mxu0 0.0
        %6117 = vmatpush2.msra.mxu0 0.0
        %6118 = vmatprep.subr.mxu0 0.0
        %6119 = vmatpush2.msra.mxu0 0.0
        %6120 = vmatprep.subr.mxu0 0.0
        %6121 = vmatpush2.msra.mxu0 0.0
        %6122 = vmatprep.subr.mxu0 0.0
        %6123 = vmatpush2.msra.mxu0 0.0
        %6124 = vmatprep.subr.mxu0 0.0
        %6125 = vmatpush2.msra.mxu0 0.0
        %6126 = vmatprep.subr.mxu0 0.0
        %6127 = vmatpush2.msra.mxu0 0.0
        %6128 = vmatprep.mubr.f32.mxu0 0.0
        %6129 = vmatmul.mubr.f32.gmra.mxu0 %v6062
        %v6130 = vpop.f32.mrf.mxu0
        %v6131 = vadd.f32 %v6059, %v6130
        %v6132 = vpop.f32.mrf.mxu0
        %6133 = vdwg.mxu0
        %v6134 = vxor.u32 %v6131, 2147483648
        %v6135 = vmul.f32 %v6134, 1.442695
        %v6136 = vpow.pop %v6135
        %v6137 = vadd.f32 %v6136, 1.0
        %v6138 = vrcp.pop %v6137
        %v6139 = vmul.f32 1.0, %v6138
        %v6140 = vld [vmem:[%s515] sm:$0xff]
        %v6141 = vld [vmem:[%s515 + $0x8] sm:$0xff]
        %v6142 = vld [vmem:[%s515 + $0x10] sm:$0xff]
        %v6143 = vld [vmem:[%s515 + $0x18] sm:$0xff]
        %v6144 = vld [vmem:[%s515 + $0x20] sm:$0xff]
        %v6145 = vld [vmem:[%s515 + $0x28] sm:$0xff]
        %v6146 = vld [vmem:[%s515 + $0x30] sm:$0xff]
        %v6147 = vld [vmem:[%s515 + $0x38] sm:$0xff]
        %v6148 = vld [vmem:[%s515 + $0x40] sm:$0xff]
        %v6149 = vld [vmem:[%s515 + $0x48] sm:$0xff]
        %v6150 = vld [vmem:[%s515 + $0x50] sm:$0xff]
        %v6151 = vld [vmem:[%s515 + $0x58] sm:$0xff]
        %v6152 = vld [vmem:[%s515 + $0x60] sm:$0xff]
        %v6153 = vld [vmem:[%s515 + $0x68] sm:$0xff]
        %v6154 = vld [vmem:[%s515 + $0x70] sm:$0xff]
        %v6155 = vld [vmem:[%s515 + $0x78] sm:$0xff]
        %v6156 = vld [vmem:[%s515 + $0x80] sm:$0xff]
        %v6157 = vld [vmem:[%s515 + $0x88] sm:$0xff]
        %v6158 = vld [vmem:[%s515 + $0x90] sm:$0xff]
        %v6159 = vld [vmem:[%s515 + $0x98] sm:$0xff]
        %v6160 = vld [vmem:[%s515 + $0xa0] sm:$0xff]
        %v6161 = vld [vmem:[%s515 + $0xa8] sm:$0xff]
        %v6162 = vld [vmem:[%s515 + $0xb0] sm:$0xff]
        %v6163 = vld [vmem:[%s515 + $0xb8] sm:$0xff]
        %v6164 = vld [vmem:[%s515 + $0xc0] sm:$0xff]
        %v6165 = vld [vmem:[%s515 + $0xc8] sm:$0xff]
        %v6166 = vld [vmem:[%s515 + $0xd0] sm:$0xff]
        %v6167 = vld [vmem:[%s515 + $0xd8] sm:$0xff]
        %v6168 = vld [vmem:[%s515 + $0xe0] sm:$0xff]
        %v6169 = vld [vmem:[%s515 + $0xe8] sm:$0xff]
        %v6170 = vld [vmem:[%s515 + $0xf0] sm:$0xff]
        %v6171 = vld [vmem:[%s515 + $0xf8] sm:$0xff]
        %v6172 = vld [vmem:[%s515 + $0x100] sm:$0xff]
        %v6173 = vld [vmem:[%s515 + $0x108] sm:$0xff]
        %v6174 = vld [vmem:[%s515 + $0x110] sm:$0xff]
        %v6175 = vld [vmem:[%s515 + $0x118] sm:$0xff]
        %v6176 = vlaneseq
        %v6177 = vshrl.u32 %v6176, 7
        %v6178 = vsub.s32 0, %v6177
        %v6179 = vrot.slane %v6139, %v6178
        %v6180 = vmul.f32 %v5641, %v6179
        %v6181 = vmul.f32 %v5642, %v6179
        %v6182 = vmul.f32 %v5643, %v6179
        %v6183 = vmul.f32 %v5644, %v6179
        %v6184 = vmul.f32 %v5645, %v6179
        %v6185 = vmul.f32 %v5646, %v6179
        %v6186 = vmul.f32 %v5647, %v6179
        %v6187 = vmul.f32 %v5648, %v6179
        %v6188 = vmul.f32 %v5649, %v6179
        %v6189 = vmul.f32 %v5650, %v6179
        %v6190 = vmul.f32 %v5651, %v6179
        %v6191 = vmul.f32 %v5652, %v6179
        %v6192 = vmul.f32 %v5653, %v6179
        %v6193 = vmul.f32 %v5654, %v6179
        %v6194 = vmul.f32 %v5655, %v6179
        %v6195 = vmul.f32 %v5656, %v6179
        %v6196 = vmul.f32 %v5657, %v6179
        %v6197 = vmul.f32 %v5658, %v6179
        %v6198 = vmul.f32 %v5659, %v6179
        %v6199 = vmul.f32 %v5660, %v6179
        %v6200 = vmul.f32 %v5661, %v6179
        %v6201 = vmul.f32 %v5662, %v6179
        %v6202 = vmul.f32 %v5663, %v6179
        %v6203 = vmul.f32 %v5664, %v6179
        %v6204 = vmul.f32 %v5665, %v6179
        %v6205 = vmul.f32 %v5666, %v6179
        %v6206 = vmul.f32 %v5667, %v6179
        %v6207 = vmul.f32 %v5668, %v6179
        %v6208 = vmul.f32 %v5669, %v6179
        %v6209 = vmul.f32 %v5670, %v6179
        %v6210 = vmul.f32 %v5671, %v6179
        %v6211 = vmul.f32 %v5672, %v6179
        %v6212 = vmul.f32 %v5673, %v6179
        %v6213 = vmul.f32 %v5674, %v6179
        %v6214 = vmul.f32 %v5675, %v6179
        %v6215 = vmul.f32 %v5676, %v6179
        %v6216 = vadd.f32 %v6140, %v6180
        %v6217 = vadd.f32 %v6141, %v6181
        %v6218 = vadd.f32 %v6142, %v6182
        %v6219 = vadd.f32 %v6143, %v6183
        %v6220 = vadd.f32 %v6144, %v6184
        %v6221 = vadd.f32 %v6145, %v6185
        %v6222 = vadd.f32 %v6146, %v6186
        %v6223 = vadd.f32 %v6147, %v6187
        %v6224 = vadd.f32 %v6148, %v6188
        %v6225 = vadd.f32 %v6149, %v6189
        %v6226 = vadd.f32 %v6150, %v6190
        %v6227 = vadd.f32 %v6151, %v6191
        %v6228 = vadd.f32 %v6152, %v6192
        %v6229 = vadd.f32 %v6153, %v6193
        %v6230 = vadd.f32 %v6154, %v6194
        %v6231 = vadd.f32 %v6155, %v6195
        %v6232 = vadd.f32 %v6156, %v6196
        %v6233 = vadd.f32 %v6157, %v6197
        %v6234 = vadd.f32 %v6158, %v6198
        %v6235 = vadd.f32 %v6159, %v6199
        %v6236 = vadd.f32 %v6160, %v6200
        %v6237 = vadd.f32 %v6161, %v6201
        %v6238 = vadd.f32 %v6162, %v6202
        %v6239 = vadd.f32 %v6163, %v6203
        %v6240 = vadd.f32 %v6164, %v6204
        %v6241 = vadd.f32 %v6165, %v6205
        %v6242 = vadd.f32 %v6166, %v6206
        %v6243 = vadd.f32 %v6167, %v6207
        %v6244 = vadd.f32 %v6168, %v6208
        %v6245 = vadd.f32 %v6169, %v6209
        %v6246 = vadd.f32 %v6170, %v6210
        %v6247 = vadd.f32 %v6171, %v6211
        %v6248 = vadd.f32 %v6172, %v6212
        %v6249 = vadd.f32 %v6173, %v6213
        %v6250 = vadd.f32 %v6174, %v6214
        %v6251 = vadd.f32 %v6175, %v6215
        %6252 = vst [vmem:[%s590] sm:$0xff] %v6216
        %6253 = vst [vmem:[%s590 + $0x8] sm:$0xff] %v6217
        %6254 = vst [vmem:[%s590 + $0x10] sm:$0xff] %v6218
        %6255 = vst [vmem:[%s590 + $0x18] sm:$0xff] %v6219
        %6256 = vst [vmem:[%s590 + $0x20] sm:$0xff] %v6220
        %6257 = vst [vmem:[%s590 + $0x28] sm:$0xff] %v6221
        %6258 = vst [vmem:[%s590 + $0x30] sm:$0xff] %v6222
        %6259 = vst [vmem:[%s590 + $0x38] sm:$0xff] %v6223
        %6260 = vst [vmem:[%s590 + $0x40] sm:$0xff] %v6224
        %6261 = vst [vmem:[%s590 + $0x48] sm:$0xff] %v6225
        %6262 = vst [vmem:[%s590 + $0x50] sm:$0xff] %v6226
        %6263 = vst [vmem:[%s590 + $0x58] sm:$0xff] %v6227
        %6264 = vst [vmem:[%s590 + $0x60] sm:$0xff] %v6228
        %6265 = vst [vmem:[%s590 + $0x68] sm:$0xff] %v6229
        %6266 = vst [vmem:[%s590 + $0x70] sm:$0xff] %v6230
        %6267 = vst [vmem:[%s590 + $0x78] sm:$0xff] %v6231
        %6268 = vst [vmem:[%s590 + $0x80] sm:$0xff] %v6232
        %6269 = vst [vmem:[%s590 + $0x88] sm:$0xff] %v6233
        %6270 = vst [vmem:[%s590 + $0x90] sm:$0xff] %v6234
        %6271 = vst [vmem:[%s590 + $0x98] sm:$0xff] %v6235
        %6272 = vst [vmem:[%s590 + $0xa0] sm:$0xff] %v6236
        %6273 = vst [vmem:[%s590 + $0xa8] sm:$0xff] %v6237
        %6274 = vst [vmem:[%s590 + $0xb0] sm:$0xff] %v6238
        %6275 = vst [vmem:[%s590 + $0xb8] sm:$0xff] %v6239
        %6276 = vst [vmem:[%s590 + $0xc0] sm:$0xff] %v6240
        %6277 = vst [vmem:[%s590 + $0xc8] sm:$0xff] %v6241
        %6278 = vst [vmem:[%s590 + $0xd0] sm:$0xff] %v6242
        %6279 = vst [vmem:[%s590 + $0xd8] sm:$0xff] %v6243
        %6280 = vst [vmem:[%s590 + $0xe0] sm:$0xff] %v6244
        %6281 = vst [vmem:[%s590 + $0xe8] sm:$0xff] %v6245
        %6282 = vst [vmem:[%s590 + $0xf0] sm:$0xff] %v6246
        %6283 = vst [vmem:[%s590 + $0xf8] sm:$0xff] %v6247
        %6284 = vst [vmem:[%s590 + $0x100] sm:$0xff] %v6248
        %6285 = vst [vmem:[%s590 + $0x108] sm:$0xff] %v6249
        %6286 = vst [vmem:[%s590 + $0x110] sm:$0xff] %v6250
        %6287 = vst [vmem:[%s590 + $0x118] sm:$0xff] %v6251
        %s6288 = sand.u32 %s328, 1
        %s6289 = scalar_lea.sflag [#allocation6], %s6288
        %s6290 = sand.u32 %s328, 1
        %s6291 = smul.addr %s6290, 288
        %s6292 = scalar_lea.vmem [#allocation19], %s6291
        // Predicated region
        $region113: #{tpu_custom_call.1} parent=71 // pred_check
          %p6293 = pneg %p338
        $region114: #{tpu_custom_call.1} parent=71 // pred_check_branch
          %6295 = sbr.rel (%p6293) target = $region116
        $region115: #{tpu_custom_call.1} parent=71 // pred_region
          %s6297 = ssub.s32 4608, 4608
          %6298 = vsyncadd %s6289, %s6297
          %s6299 = smul.addr %s37, 36
          %s6300 = smul.addr %s6299, 128
          %s6301 = scalar_lea.hbm %s13, %s6300
          %s6302 = sshll.u32 %s6292, 4
          %s6303 = int_to_ptr.vmem [resolvable:$true] %s6302
          %6308 = dma.vmem_to_hbm [thread:$0]  %s6303, 4608, %s6301, %s6289, 128, 128, 8
        $region116: #{tpu_custom_call.1} parent=71 // pred_fallthru
          _
      $region72: #{tpu_custom_call.1} parent=5 // pred_fallthru
        _
      %p6309 = scmp.le.s32.totalorder 2, %s32
      // Predicated region
      $region117: #{tpu_custom_call.1} parent=5 // pred_check
        %p6310 = pneg %p6309
      $region118: #{tpu_custom_call.1} parent=5 // pred_check_branch
        %6312 = sbr.rel (%p6310) target = $region120
      $region119: #{tpu_custom_call.1} parent=5 // pred_region
        %s6313 = ssub.s32 %s32, 2
        // Predicated region
        $region121: #{tpu_custom_call.1} parent=119 // pred_check
          %p6314 = pneg %p344
        $region122: #{tpu_custom_call.1} parent=119 // pred_check_branch
          %6316 = sbr.rel (%p6314) target = $region124
        $region123: #{tpu_custom_call.1} parent=119 // pred_region
          %s6317 = sand.u32 %s329, 1
          %s6318 = scalar_lea.sflag [#allocation6], %s6317
          %s6319 = sand.u32 %s329, 1
          %s6320 = smul.addr %s6319, 288
          %s6321 = scalar_lea.vmem [#allocation19], %s6320
          %6322 = dma.done %s6318, 4608
        $region124: #{tpu_custom_call.1} parent=119 // pred_fallthru
          _
      $region120: #{tpu_custom_call.1} parent=5 // pred_fallthru
        _
    $region6: #{tpu_custom_call.1} parent=1 // loop_footer
      %s36 = sadd.s32 1, %s32
    $region7: #{tpu_custom_call.1} parent=1 // loop_footer_branch
      %31 = sbr.rel target = $region3
    $region8: #{tpu_custom_call.1} parent=1 // loop_exit
      _
    %6323 = vsyncpa [#allocation5], 1
    %s6324 = scalar_lea.sflag [#allocation5], 1
    %6325 = vsyncpa %s6324, 1
    %6326 = vsyncpa [#allocation8], 1
    %s6327 = scalar_lea.sflag [#allocation8], 1
    %6328 = vsyncpa %s6327, 1
    %6329 = vsyncpa [#allocation11], 1
    %6330 = vsyncpa [#allocation14], 1
    %6331 = vsyncpa [#allocation17], 1
    %6332 = vsyncpa [#allocation6], 1
    %s6333 = scalar_lea.sflag [#allocation6], 1
    %6334 = vsyncpa %s6333, 1

</llo_original>
